<compile_context>
chip_gen: v7x
topology: tpu7x:2x2x1
jax: 0.10.0
libtpu: 0.0.40
codegen_flags: <defaults>
</compile_context>

<pallas_src>
import math
import functools

import jax
import jax.numpy as jnp
from jax import lax
from jax.experimental import pallas as pl
from jax.experimental.pallas import tpu as pltpu


# ----------------------------------------------------------------------------
# Fused kernel: block_b batch elements per grid program, everything VMEM-resident.
# ----------------------------------------------------------------------------
def _backbone_kernel(x_ref, w1_ref, s1_ref, b1_ref, w2_ref, s2_ref, b2_ref,
                     wqkv_ref, bv_ref, wt_ref, bt_ref, sas_ref, sab_ref,
                     wh_ref, sh_ref, bh_ref,
                     y_ref, ymax_ref, ymean_ref,
                     cat_ref, *, n_sa, block_b):
    BB = block_b
    N = x_ref.shape[1]
    in_dim = x_ref.shape[2]
    C = w2_ref.shape[0]
    qpad = wqkv_ref.shape[2] - C          # lane-padded q width (128)
    M = BB * N

    # ---- Embedding: two 1x1 convs (bias-free) + folded BN + ReLU -------------
    xx = x_ref[...].reshape(M, in_dim)                              # (M, 3) f32
    # K=3 "matmul" as broadcast FMAs on the VPU (avoids an oddly-shaped MXU pass).
    h = xx[:, 0:1] * w1_ref[0:1, :]
    for d in range(1, in_dim):
        h = h + xx[:, d:d + 1] * w1_ref[d:d + 1, :]
    h = jnp.maximum(h * s1_ref[...] + b1_ref[...], 0.0)
    h = jnp.dot(h.astype(jnp.bfloat16), w2_ref[...],
                preferred_element_type=jnp.float32)
    h = jnp.maximum(h * s2_ref[...] + b2_ref[...], 0.0)            # (M, C) f32

    cur = h
    for i in range(n_sa):
        xb = cur.astype(jnp.bfloat16)
        # Fused q/k + v projection: one 256-wide matmul fills the MXU columns.
        # q_conv.weight == k_conv.weight and both are bias-free in the reference
        # SA layer, so a single projection serves both q and k; 1/sqrt(da) is
        # pre-folded into the (zero-lane-padded) q weights on the host.
        qv = jnp.dot(xb, wqkv_ref[i], preferred_element_type=jnp.float32)  # (M, qpad+C)
        qb = qv[:, :qpad].astype(jnp.bfloat16)
        vb = (qv[:, qpad:] + bv_ref[i]).astype(jnp.bfloat16)

        xs_parts = []
        for b in range(BB):
            qbb = qb[b * N:(b + 1) * N, :]
            # energy[n,m] = q[n].k[m]; q == k exactly -> energy exactly symmetric,
            # so transpose(row-softmax(E)) == column-softmax(E): attn^T is formed
            # directly and x_s = attn^T @ v is a plain last-dim MXU contraction.
            energy = lax.dot_general(qbb, qbb, (((1,), (1,)), ((), ())),
                                     preferred_element_type=jnp.float32)   # (N, N)
            cmax = jnp.max(energy, axis=0, keepdims=True)
            e = jnp.exp(energy - cmax)
            r = pl.reciprocal(jnp.sum(e, axis=0, keepdims=True), approx=True)
            attn_t = (e * r).astype(jnp.bfloat16)
            xs_parts.append(jnp.dot(attn_t, vb[b * N:(b + 1) * N, :],
                                    preferred_element_type=jnp.float32))   # (N, C)
        x_s = xs_parts[0] if BB == 1 else jnp.concatenate(xs_parts, axis=0)  # (M, C)

        x_t = jnp.dot(x_s.astype(jnp.bfloat16), wt_ref[i],
                      preferred_element_type=jnp.float32) + bt_ref[i]
        x_t = jnp.maximum(x_t * sas_ref[i] + sab_ref[i], 0.0)               # BN + ReLU
        cur = cur + x_t                                                      # residual
        # write directly into the concat slab (no host-side concatenate)
        cat_ref[:, i * C:(i + 1) * C] = cur.astype(jnp.bfloat16)

    # ---- Head: Conv1d(4C -> d_out, bias=False) + BN + LeakyReLU(0.2) ---------
    y = jnp.dot(cat_ref[...], wh_ref[...], preferred_element_type=jnp.float32)
    y = y * sh_ref[...] + bh_ref[...]
    y = jnp.where(y >= 0.0, y, jnp.float32(0.2) * y)                         # (M, d_out)
    for b in range(BB):
        yb = y[b * N:(b + 1) * N, :]
        y_ref[b, :, :] = yb
        ymax_ref[b, :, :] = jnp.max(yb, axis=0, keepdims=True)
        ymean_ref[b, :, :] = jnp.mean(yb, axis=0, keepdims=True)


# ----------------------------------------------------------------------------
# Wrapper: single pallas_call, grid=(B // block_b,)
# ----------------------------------------------------------------------------
def backbone_forward(params, x, block_b=None):
    """x: (B, N, input_dim) channels-last point cloud (f32)."""
    B, N, in_dim = x.shape
    C = params["w2"].shape[0]
    d_out = params["head_w"].shape[1]
    n_sa = params["sa_wqkv"].shape[0]
    qkv_cols = params["sa_wqkv"].shape[2]
    qpad = qkv_cols - C

    if block_b is None:
        # Fill the 256-row MXU (M = block_b*N) on v6e/v7x, but keep >= 2 grid steps
        # so dimension_semantics=("parallel",) can still use both v7x TensorCores.
        block_b = 2 if (B % 2 == 0 and B >= 4) else 1
    assert B % block_b == 0, "batch size must be divisible by block_b"
    n_prog = B // block_b

    args = (x,
            params["w1"], params["bn1_scale"], params["bn1_bias"],
            params["w2"], params["bn2_scale"], params["bn2_bias"],
            params["sa_wqkv"], params["sa_bv"],
            params["sa_wt"], params["sa_bt"], params["sa_scale"], params["sa_bias"],
            params["head_w"], params["head_scale"], params["head_bias"])

    # advisory cost estimate
    flops = B * (2 * N * in_dim * C + 2 * N * C * C
                 + n_sa * (2 * N * C * qkv_cols + 2 * N * N * qpad
                           + 2 * N * N * C + 2 * N * C * C)
                 + 2 * N * (n_sa * C) * d_out)
    transcendentals = B * n_sa * N * N
    bytes_accessed = sum(int(a.size) * a.dtype.itemsize for a in args)
    bytes_accessed += B * N * d_out * 4 + 2 * B * d_out * 4

    const2 = lambda b: (0, 0)
    const3 = lambda b: (0, 0, 0)
    in_specs = [
        pl.BlockSpec((block_b, N, in_dim), lambda b: (b, 0, 0)),   # x
        pl.BlockSpec((in_dim, C), const2),                         # w1 (f32, VPU FMAs)
        pl.BlockSpec((1, C), const2),                              # bn1 scale
        pl.BlockSpec((1, C), const2),                              # bn1 bias
        pl.BlockSpec((C, C), const2),                              # w2
        pl.BlockSpec((1, C), const2),                              # bn2 scale
        pl.BlockSpec((1, C), const2),                              # bn2 bias
        pl.BlockSpec((n_sa, C, qkv_cols), const3),                 # fused q/k + v weights
        pl.BlockSpec((n_sa, 1, C), const3),                        # v bias
        pl.BlockSpec((n_sa, C, C), const3),                        # trans conv weight
        pl.BlockSpec((n_sa, 1, C), const3),                        # trans conv bias
        pl.BlockSpec((n_sa, 1, C), const3),                        # sa bn scale
        pl.BlockSpec((n_sa, 1, C), const3),                        # sa bn bias
        pl.BlockSpec((n_sa * C, d_out), const2),                   # head weight
        pl.BlockSpec((1, d_out), const2),                          # head bn scale
        pl.BlockSpec((1, d_out), const2),                          # head bn bias
    ]
    out_shape = (
        jax.ShapeDtypeStruct((B, N, d_out), jnp.float32),
        jax.ShapeDtypeStruct((B, 1, d_out), jnp.float32),          # lane-dense stores
        jax.ShapeDtypeStruct((B, 1, d_out), jnp.float32),
    )
    out_specs = (
        pl.BlockSpec((block_b, N, d_out), lambda b: (b, 0, 0)),
        pl.BlockSpec((block_b, 1, d_out), lambda b: (b, 0, 0)),
        pl.BlockSpec((block_b, 1, d_out), lambda b: (b, 0, 0)),
    )

    y, ymax, ymean = pl.pallas_call(
        functools.partial(_backbone_kernel, n_sa=n_sa, block_b=block_b),
        out_shape=out_shape,
        grid=(n_prog,),
        in_specs=in_specs,
        out_specs=out_specs,
        scratch_shapes=[pltpu.VMEM((block_b * N, n_sa * C), jnp.bfloat16)],  # concat slab
        compiler_params=pltpu.CompilerParams(
            dimension_semantics=("parallel",),        # v7x: programs split across 2 TCs
            vmem_limit_bytes=32 * 1024 * 1024),
        cost_estimate=pl.CostEstimate(flops=flops,
                                      transcendentals=transcendentals,
                                      bytes_accessed=bytes_accessed),
    )(*args)
    return y, ymax.reshape(B, d_out), ymean.reshape(B, d_out)


# ----------------------------------------------------------------------------
# Parameter init (deterministic), kernel-ready layout/dtypes
# ----------------------------------------------------------------------------
def _fold_bn(key, c, eps=1e-5):
    k1, k2, k3, k4 = jax.random.split(key, 4)
    gamma = 1.0 + 0.1 * jax.random.normal(k1, (c,), jnp.float32)
    beta = 0.1 * jax.random.normal(k2, (c,), jnp.float32)
    mean = 0.1 * jax.random.normal(k3, (c,), jnp.float32)
    var = 1.0 + 0.1 * jnp.abs(jax.random.normal(k4, (c,), jnp.float32))
    scale = gamma / jnp.sqrt(var + eps)
    bias = beta - mean * scale
    return scale[None, :], bias[None, :]


def _w(key, cin, cout):
    return jax.random.normal(key, (cin, cout), jnp.float32) * (1.0 / math.sqrt(cin))


def init_params(key, input_dim=3, channels=128, d_out=256, n_sa=4, q_lane_pad=128):
    C = channels
    da = C // 4
    keys = iter(jax.random.split(key, 64))
    p = {"da": da}

    # Embedding (bias-free convs; BN folded)
    p["w1"] = _w(next(keys), input_dim, C)                    # f32 (VPU FMA path)
    p["bn1_scale"], p["bn1_bias"] = _fold_bn(next(keys), C)
    p["w2"] = _w(next(keys), C, C).astype(jnp.bfloat16)
    p["bn2_scale"], p["bn2_bias"] = _fold_bn(next(keys), C)

    # SA blocks (stacked along leading axis). The kernel's transpose-free attention
    # relies on q_conv.weight == k_conv.weight (tied) and both being bias-free, as
    # in the reference PCT SA layer.
    wqkv, bv, wt, bt, ss, sb = [], [], [], [], [], []
    qscale = float(da) ** -0.25       # energy picks up qscale^2 == 1/sqrt(da)
    for _ in range(n_sa):
        wq = _w(next(keys), C, da) * qscale                   # shared q/k weight
        wq_pad = jnp.zeros((C, q_lane_pad), jnp.float32).at[:, :da].set(wq)
        wv = _w(next(keys), C, C)
        wqkv.append(jnp.concatenate([wq_pad, wv], axis=1))    # (C, 128 + C) fused weight
        bv.append(0.1 * jax.random.normal(next(keys), (1, C), jnp.float32))
        wt.append(_w(next(keys), C, C))
        bt.append(0.1 * jax.random.normal(next(keys), (1, C), jnp.float32))
        s, b = _fold_bn(next(keys), C)
        ss.append(s)
        sb.append(b)
    p["sa_wqkv"] = jnp.stack(wqkv).astype(jnp.bfloat16)       # (n_sa, C, 128 + C)
    p["sa_bv"] = jnp.stack(bv)                                # (n_sa, 1, C) f32
    p["sa_wt"] = jnp.stack(wt).astype(jnp.bfloat16)           # (n_sa, C, C)
    p["sa_bt"] = jnp.stack(bt)                                # (n_sa, 1, C) f32
    p["sa_scale"] = jnp.stack(ss)                             # (n_sa, 1, C) f32
    p["sa_bias"] = jnp.stack(sb)                              # (n_sa, 1, C) f32

    # Head: Conv1d(4C -> d_out, bias=False) + BN + LeakyReLU(0.2)
    p["head_w"] = _w(next(keys), n_sa * C, d_out).astype(jnp.bfloat16)
    p["head_scale"], p["head_bias"] = _fold_bn(next(keys), d_out)
    return p


# ----------------------------------------------------------------------------
if __name__ == "__main__":
    B, N, input_dim = 4, 128, 3
    channels, d_out = 128, 256

    key = jax.random.PRNGKey(0)
    k_param, k_x = jax.random.split(key)
    params = init_params(k_param, input_dim=input_dim, channels=channels, d_out=d_out)
    x = jax.random.normal(k_x, (B, N, input_dim), jnp.float32)

    y, y_max, y_mean = backbone_forward(params, x)
    jax.block_until_ready((y, y_max, y_mean))

    assert y.shape == (B, N, d_out)
    assert y_max.shape == (B, d_out)
    assert y_mean.shape == (B, d_out)
    assert bool(jnp.all(jnp.isfinite(y)))
    assert bool(jnp.all(jnp.isfinite(y_max)))
    assert bool(jnp.all(jnp.isfinite(y_mean)))
    print("KERNEL_OK")
</pallas_src>

<mosaic_0001>
module attributes {stable_mosaic.version = 11 : i64} {
  func.func @_backbone_kernel(%arg0: i32, %arg1: memref<2x128x3xf32, #tpu.memory_space<vmem>>, %arg2: memref<3x128xf32, #tpu.memory_space<vmem>>, %arg3: memref<1x128xf32, #tpu.memory_space<vmem>>, %arg4: memref<1x128xf32, #tpu.memory_space<vmem>>, %arg5: memref<128x128xbf16, #tpu.memory_space<vmem>>, %arg6: memref<1x128xf32, #tpu.memory_space<vmem>>, %arg7: memref<1x128xf32, #tpu.memory_space<vmem>>, %arg8: memref<4x128x256xbf16, #tpu.memory_space<vmem>>, %arg9: memref<4x1x128xf32, #tpu.memory_space<vmem>>, %arg10: memref<4x128x128xbf16, #tpu.memory_space<vmem>>, %arg11: memref<4x1x128xf32, #tpu.memory_space<vmem>>, %arg12: memref<4x1x128xf32, #tpu.memory_space<vmem>>, %arg13: memref<4x1x128xf32, #tpu.memory_space<vmem>>, %arg14: memref<512x256xbf16, #tpu.memory_space<vmem>>, %arg15: memref<1x256xf32, #tpu.memory_space<vmem>>, %arg16: memref<1x256xf32, #tpu.memory_space<vmem>>, %arg17: memref<2x128x256xf32, #tpu.memory_space<vmem>>, %arg18: memref<2x1x256xf32, #tpu.memory_space<vmem>>, %arg19: memref<2x1x256xf32, #tpu.memory_space<vmem>>, %arg20: memref<256x512xbf16, #tpu.memory_space<vmem>>) attributes {dimension_semantics = [#tpu.dimension_semantics<parallel>], iteration_bounds = array<i64: 2>, scalar_prefetch = 0 : i64, scratch_operands = 1 : i64, tpu.core_type = #tpu.core_type<tc>, window_params = [{transform_indices = @transform_0, window_bounds = array<i64: 2, 128, 3>}, {pipeline_mode = #tpu.pipeline_mode<synchronous>, transform_indices = @transform_1, window_bounds = array<i64: 3, 128>}, {pipeline_mode = #tpu.pipeline_mode<synchronous>, transform_indices = @transform_2, window_bounds = array<i64: 1, 128>}, {pipeline_mode = #tpu.pipeline_mode<synchronous>, transform_indices = @transform_3, window_bounds = array<i64: 1, 128>}, {pipeline_mode = #tpu.pipeline_mode<synchronous>, transform_indices = @transform_4, window_bounds = array<i64: 128, 128>}, {pipeline_mode = #tpu.pipeline_mode<synchronous>, transform_indices = @transform_5, window_bounds = array<i64: 1, 128>}, {pipeline_mode = #tpu.pipeline_mode<synchronous>, transform_indices = @transform_6, window_bounds = array<i64: 1, 128>}, {pipeline_mode = #tpu.pipeline_mode<synchronous>, transform_indices = @transform_7, window_bounds = array<i64: 4, 128, 256>}, {pipeline_mode = #tpu.pipeline_mode<synchronous>, transform_indices = @transform_8, window_bounds = array<i64: 4, 1, 128>}, {pipeline_mode = #tpu.pipeline_mode<synchronous>, transform_indices = @transform_9, window_bounds = array<i64: 4, 128, 128>}, {pipeline_mode = #tpu.pipeline_mode<synchronous>, transform_indices = @transform_10, window_bounds = array<i64: 4, 1, 128>}, {pipeline_mode = #tpu.pipeline_mode<synchronous>, transform_indices = @transform_11, window_bounds = array<i64: 4, 1, 128>}, {pipeline_mode = #tpu.pipeline_mode<synchronous>, transform_indices = @transform_12, window_bounds = array<i64: 4, 1, 128>}, {pipeline_mode = #tpu.pipeline_mode<synchronous>, transform_indices = @transform_13, window_bounds = array<i64: 512, 256>}, {pipeline_mode = #tpu.pipeline_mode<synchronous>, transform_indices = @transform_14, window_bounds = array<i64: 1, 256>}, {pipeline_mode = #tpu.pipeline_mode<synchronous>, transform_indices = @transform_15, window_bounds = array<i64: 1, 256>}, {transform_indices = @transform_16, window_bounds = array<i64: 2, 128, 256>}, {transform_indices = @transform_17, window_bounds = array<i64: 2, 1, 256>}, {transform_indices = @transform_18, window_bounds = array<i64: 2, 1, 256>}]} {
    %c0 = arith.constant 0 : index
    %c0_0 = arith.constant 0 : index
    %c0_1 = arith.constant 0 : index
    %0 = vector.load %arg1[%c0, %c0_0, %c0_1] : memref<2x128x3xf32, #tpu.memory_space<vmem>>, vector<2x128x3xf32>
    %1 = vector.shape_cast %0 : vector<2x128x3xf32> to vector<256x3xf32>
    %2 = vector.extract_strided_slice %1 {offsets = [0, 0], sizes = [256, 1], strides = [1, 1]} : vector<256x3xf32> to vector<256x1xf32>
    %c0_2 = arith.constant 0 : index
    %c0_3 = arith.constant 0 : index
    %3 = vector.load %arg2[%c0_2, %c0_3] : memref<3x128xf32, #tpu.memory_space<vmem>>, vector<1x128xf32>
    %4 = vector.broadcast %2 : vector<256x1xf32> to vector<256x128xf32>
    %5 = vector.broadcast %3 : vector<1x128xf32> to vector<256x128xf32>
    %6 = arith.mulf %4, %5 : vector<256x128xf32>
    %7 = vector.extract_strided_slice %1 {offsets = [0, 1], sizes = [256, 1], strides = [1, 1]} : vector<256x3xf32> to vector<256x1xf32>
    %c1 = arith.constant 1 : index
    %c0_4 = arith.constant 0 : index
    %8 = vector.load %arg2[%c1, %c0_4] : memref<3x128xf32, #tpu.memory_space<vmem>>, vector<1x128xf32>
    %9 = vector.broadcast %7 : vector<256x1xf32> to vector<256x128xf32>
    %10 = vector.broadcast %8 : vector<1x128xf32> to vector<256x128xf32>
    %11 = arith.mulf %9, %10 : vector<256x128xf32>
    %12 = arith.addf %6, %11 : vector<256x128xf32>
    %13 = vector.extract_strided_slice %1 {offsets = [0, 2], sizes = [256, 1], strides = [1, 1]} : vector<256x3xf32> to vector<256x1xf32>
    %c2 = arith.constant 2 : index
    %c0_5 = arith.constant 0 : index
    %14 = vector.load %arg2[%c2, %c0_5] : memref<3x128xf32, #tpu.memory_space<vmem>>, vector<1x128xf32>
    %15 = vector.broadcast %13 : vector<256x1xf32> to vector<256x128xf32>
    %16 = vector.broadcast %14 : vector<1x128xf32> to vector<256x128xf32>
    %17 = arith.mulf %15, %16 : vector<256x128xf32>
    %18 = arith.addf %12, %17 : vector<256x128xf32>
    %c0_6 = arith.constant 0 : index
    %c0_7 = arith.constant 0 : index
    %19 = vector.load %arg3[%c0_6, %c0_7] : memref<1x128xf32, #tpu.memory_space<vmem>>, vector<1x128xf32>
    %20 = vector.broadcast %19 : vector<1x128xf32> to vector<256x128xf32>
    %21 = arith.mulf %18, %20 : vector<256x128xf32>
    %c0_8 = arith.constant 0 : index
    %c0_9 = arith.constant 0 : index
    %22 = vector.load %arg4[%c0_8, %c0_9] : memref<1x128xf32, #tpu.memory_space<vmem>>, vector<1x128xf32>
    %23 = vector.broadcast %22 : vector<1x128xf32> to vector<256x128xf32>
    %24 = arith.addf %21, %23 : vector<256x128xf32>
    %cst = arith.constant 0.000000e+00 : f32
    %25 = vector.broadcast %cst : f32 to vector<256x128xf32>
    %26 = arith.maximumf %24, %25 : vector<256x128xf32>
    %27 = arith.truncf %26 : vector<256x128xf32> to vector<256x128xbf16>
    %c0_10 = arith.constant 0 : index
    %c0_11 = arith.constant 0 : index
    %28 = vector.load %arg5[%c0_10, %c0_11] : memref<128x128xbf16, #tpu.memory_space<vmem>>, vector<128x128xbf16>
    %cst_12 = arith.constant dense<0.000000e+00> : vector<256x128xf32>
    %29 = tpu.matmul %27, %28, %cst_12 {dimension_numbers = #tpu.dot_dimension_numbers<[1], [0], [0], [1], [0, 0, 1, 1], [], []>} : vector<256x128xbf16>, vector<128x128xbf16>, vector<256x128xf32> -> vector<256x128xf32>
    %c0_13 = arith.constant 0 : index
    %c0_14 = arith.constant 0 : index
    %30 = vector.load %arg6[%c0_13, %c0_14] : memref<1x128xf32, #tpu.memory_space<vmem>>, vector<1x128xf32>
    %31 = vector.broadcast %30 : vector<1x128xf32> to vector<256x128xf32>
    %32 = arith.mulf %29, %31 : vector<256x128xf32>
    %c0_15 = arith.constant 0 : index
    %c0_16 = arith.constant 0 : index
    %33 = vector.load %arg7[%c0_15, %c0_16] : memref<1x128xf32, #tpu.memory_space<vmem>>, vector<1x128xf32>
    %34 = vector.broadcast %33 : vector<1x128xf32> to vector<256x128xf32>
    %35 = arith.addf %32, %34 : vector<256x128xf32>
    %cst_17 = arith.constant 0.000000e+00 : f32
    %36 = vector.broadcast %cst_17 : f32 to vector<256x128xf32>
    %37 = arith.maximumf %35, %36 : vector<256x128xf32>
    %38 = arith.truncf %37 : vector<256x128xf32> to vector<256x128xbf16>
    %c0_18 = arith.constant 0 : index
    %c0_19 = arith.constant 0 : index
    %c0_20 = arith.constant 0 : index
    %39 = vector.load %arg8[%c0_18, %c0_19, %c0_20] : memref<4x128x256xbf16, #tpu.memory_space<vmem>>, vector<1x128x256xbf16>
    %40 = vector.shape_cast %39 : vector<1x128x256xbf16> to vector<128x256xbf16>
    %cst_21 = arith.constant dense<0.000000e+00> : vector<256x256xf32>
    %41 = tpu.matmul %38, %40, %cst_21 {dimension_numbers = #tpu.dot_dimension_numbers<[1], [0], [0], [1], [0, 0, 1, 1], [], []>} : vector<256x128xbf16>, vector<128x256xbf16>, vector<256x256xf32> -> vector<256x256xf32>
    %42 = vector.extract_strided_slice %41 {offsets = [0, 0], sizes = [256, 128], strides = [1, 1]} : vector<256x256xf32> to vector<256x128xf32>
    %43 = arith.truncf %42 : vector<256x128xf32> to vector<256x128xbf16>
    %44 = vector.extract_strided_slice %41 {offsets = [0, 128], sizes = [256, 128], strides = [1, 1]} : vector<256x256xf32> to vector<256x128xf32>
    %c0_22 = arith.constant 0 : index
    %c0_23 = arith.constant 0 : index
    %c0_24 = arith.constant 0 : index
    %45 = vector.load %arg9[%c0_22, %c0_23, %c0_24] : memref<4x1x128xf32, #tpu.memory_space<vmem>>, vector<1x1x128xf32>
    %46 = vector.shape_cast %45 : vector<1x1x128xf32> to vector<1x128xf32>
    %47 = vector.broadcast %46 : vector<1x128xf32> to vector<256x128xf32>
    %48 = arith.addf %44, %47 : vector<256x128xf32>
    %49 = arith.truncf %48 : vector<256x128xf32> to vector<256x128xbf16>
    %50 = vector.extract_strided_slice %43 {offsets = [0, 0], sizes = [128, 128], strides = [1, 1]} : vector<256x128xbf16> to vector<128x128xbf16>
    %cst_25 = arith.constant dense<0.000000e+00> : vector<128x128xf32>
    %51 = tpu.matmul %50, %50, %cst_25 {dimension_numbers = #tpu.dot_dimension_numbers<[1], [1], [0], [0], [0, 0, 1, 0], [], []>} : vector<128x128xbf16>, vector<128x128xbf16>, vector<128x128xf32> -> vector<128x128xf32>
    %cst_26 = arith.constant dense<0xFF800000> : vector<128xf32>
    %52 = vector.multi_reduction <maximumf>, %51, %cst_26 [0] : vector<128x128xf32> to vector<128xf32>
    %53 = vector.shape_cast %52 : vector<128xf32> to vector<1x128xf32>
    %54 = vector.broadcast %53 : vector<1x128xf32> to vector<128x128xf32>
    %55 = arith.subf %51, %54 : vector<128x128xf32>
    %56 = math.exp %55 : vector<128x128xf32>
    %cst_27 = arith.constant dense<0.000000e+00> : vector<128xf32>
    %57 = vector.multi_reduction <add>, %56, %cst_27 [0] : vector<128x128xf32> to vector<128xf32>
    %58 = vector.shape_cast %57 : vector<128xf32> to vector<1x128xf32>
    %59 = tpu.reciprocal %58 {approx = true} : vector<1x128xf32> -> vector<1x128xf32>
    %60 = vector.broadcast %59 : vector<1x128xf32> to vector<128x128xf32>
    %61 = arith.mulf %56, %60 : vector<128x128xf32>
    %62 = arith.truncf %61 : vector<128x128xf32> to vector<128x128xbf16>
    %63 = vector.extract_strided_slice %49 {offsets = [0, 0], sizes = [128, 128], strides = [1, 1]} : vector<256x128xbf16> to vector<128x128xbf16>
    %cst_28 = arith.constant dense<0.000000e+00> : vector<128x128xf32>
    %64 = tpu.matmul %62, %63, %cst_28 {dimension_numbers = #tpu.dot_dimension_numbers<[1], [0], [0], [1], [0, 0, 1, 1], [], []>} : vector<128x128xbf16>, vector<128x128xbf16>, vector<128x128xf32> -> vector<128x128xf32>
    %65 = vector.extract_strided_slice %43 {offsets = [128, 0], sizes = [128, 128], strides = [1, 1]} : vector<256x128xbf16> to vector<128x128xbf16>
    %cst_29 = arith.constant dense<0.000000e+00> : vector<128x128xf32>
    %66 = tpu.matmul %65, %65, %cst_29 {dimension_numbers = #tpu.dot_dimension_numbers<[1], [1], [0], [0], [0, 0, 1, 0], [], []>} : vector<128x128xbf16>, vector<128x128xbf16>, vector<128x128xf32> -> vector<128x128xf32>
    %cst_30 = arith.constant dense<0xFF800000> : vector<128xf32>
    %67 = vector.multi_reduction <maximumf>, %66, %cst_30 [0] : vector<128x128xf32> to vector<128xf32>
    %68 = vector.shape_cast %67 : vector<128xf32> to vector<1x128xf32>
    %69 = vector.broadcast %68 : vector<1x128xf32> to vector<128x128xf32>
    %70 = arith.subf %66, %69 : vector<128x128xf32>
    %71 = math.exp %70 : vector<128x128xf32>
    %cst_31 = arith.constant dense<0.000000e+00> : vector<128xf32>
    %72 = vector.multi_reduction <add>, %71, %cst_31 [0] : vector<128x128xf32> to vector<128xf32>
    %73 = vector.shape_cast %72 : vector<128xf32> to vector<1x128xf32>
    %74 = tpu.reciprocal %73 {approx = true} : vector<1x128xf32> -> vector<1x128xf32>
    %75 = vector.broadcast %74 : vector<1x128xf32> to vector<128x128xf32>
    %76 = arith.mulf %71, %75 : vector<128x128xf32>
    %77 = arith.truncf %76 : vector<128x128xf32> to vector<128x128xbf16>
    %78 = vector.extract_strided_slice %49 {offsets = [128, 0], sizes = [128, 128], strides = [1, 1]} : vector<256x128xbf16> to vector<128x128xbf16>
    %cst_32 = arith.constant dense<0.000000e+00> : vector<128x128xf32>
    %79 = tpu.matmul %77, %78, %cst_32 {dimension_numbers = #tpu.dot_dimension_numbers<[1], [0], [0], [1], [0, 0, 1, 1], [], []>} : vector<128x128xbf16>, vector<128x128xbf16>, vector<128x128xf32> -> vector<128x128xf32>
    %80 = tpu.concatenate %64, %79 in 0 : vector<128x128xf32>, vector<128x128xf32> -> vector<256x128xf32>
    %81 = arith.truncf %80 : vector<256x128xf32> to vector<256x128xbf16>
    %c0_33 = arith.constant 0 : index
    %c0_34 = arith.constant 0 : index
    %c0_35 = arith.constant 0 : index
    %82 = vector.load %arg10[%c0_33, %c0_34, %c0_35] : memref<4x128x128xbf16, #tpu.memory_space<vmem>>, vector<1x128x128xbf16>
    %83 = vector.shape_cast %82 : vector<1x128x128xbf16> to vector<128x128xbf16>
    %cst_36 = arith.constant dense<0.000000e+00> : vector<256x128xf32>
    %84 = tpu.matmul %81, %83, %cst_36 {dimension_numbers = #tpu.dot_dimension_numbers<[1], [0], [0], [1], [0, 0, 1, 1], [], []>} : vector<256x128xbf16>, vector<128x128xbf16>, vector<256x128xf32> -> vector<256x128xf32>
    %c0_37 = arith.constant 0 : index
    %c0_38 = arith.constant 0 : index
    %c0_39 = arith.constant 0 : index
    %85 = vector.load %arg11[%c0_37, %c0_38, %c0_39] : memref<4x1x128xf32, #tpu.memory_space<vmem>>, vector<1x1x128xf32>
    %86 = vector.shape_cast %85 : vector<1x1x128xf32> to vector<1x128xf32>
    %87 = vector.broadcast %86 : vector<1x128xf32> to vector<256x128xf32>
    %88 = arith.addf %84, %87 : vector<256x128xf32>
    %c0_40 = arith.constant 0 : index
    %c0_41 = arith.constant 0 : index
    %c0_42 = arith.constant 0 : index
    %89 = vector.load %arg12[%c0_40, %c0_41, %c0_42] : memref<4x1x128xf32, #tpu.memory_space<vmem>>, vector<1x1x128xf32>
    %90 = vector.shape_cast %89 : vector<1x1x128xf32> to vector<1x128xf32>
    %91 = vector.broadcast %90 : vector<1x128xf32> to vector<256x128xf32>
    %92 = arith.mulf %88, %91 : vector<256x128xf32>
    %c0_43 = arith.constant 0 : index
    %c0_44 = arith.constant 0 : index
    %c0_45 = arith.constant 0 : index
    %93 = vector.load %arg13[%c0_43, %c0_44, %c0_45] : memref<4x1x128xf32, #tpu.memory_space<vmem>>, vector<1x1x128xf32>
    %94 = vector.shape_cast %93 : vector<1x1x128xf32> to vector<1x128xf32>
    %95 = vector.broadcast %94 : vector<1x128xf32> to vector<256x128xf32>
    %96 = arith.addf %92, %95 : vector<256x128xf32>
    %cst_46 = arith.constant 0.000000e+00 : f32
    %97 = vector.broadcast %cst_46 : f32 to vector<256x128xf32>
    %98 = arith.maximumf %96, %97 : vector<256x128xf32>
    %99 = arith.addf %37, %98 : vector<256x128xf32>
    %100 = arith.truncf %99 : vector<256x128xf32> to vector<256x128xbf16>
    %c0_47 = arith.constant 0 : index
    %c0_48 = arith.constant 0 : index
    %101 = vector.load %arg20[%c0_47, %c0_48] : memref<256x512xbf16, #tpu.memory_space<vmem>>, vector<256x128xbf16>
    tpu.vector_store %arg20[%c0_47, %c0_48], %100 {strides = array<i32>} : memref<256x512xbf16, #tpu.memory_space<vmem>>, vector<256x128xbf16>,
    %102 = arith.truncf %99 : vector<256x128xf32> to vector<256x128xbf16>
    %c1_49 = arith.constant 1 : index
    %c0_50 = arith.constant 0 : index
    %c0_51 = arith.constant 0 : index
    %103 = vector.load %arg8[%c1_49, %c0_50, %c0_51] : memref<4x128x256xbf16, #tpu.memory_space<vmem>>, vector<1x128x256xbf16>
    %104 = vector.shape_cast %103 : vector<1x128x256xbf16> to vector<128x256xbf16>
    %cst_52 = arith.constant dense<0.000000e+00> : vector<256x256xf32>
    %105 = tpu.matmul %102, %104, %cst_52 {dimension_numbers = #tpu.dot_dimension_numbers<[1], [0], [0], [1], [0, 0, 1, 1], [], []>} : vector<256x128xbf16>, vector<128x256xbf16>, vector<256x256xf32> -> vector<256x256xf32>
    %106 = vector.extract_strided_slice %105 {offsets = [0, 0], sizes = [256, 128], strides = [1, 1]} : vector<256x256xf32> to vector<256x128xf32>
    %107 = arith.truncf %106 : vector<256x128xf32> to vector<256x128xbf16>
    %108 = vector.extract_strided_slice %105 {offsets = [0, 128], sizes = [256, 128], strides = [1, 1]} : vector<256x256xf32> to vector<256x128xf32>
    %c1_53 = arith.constant 1 : index
    %c0_54 = arith.constant 0 : index
    %c0_55 = arith.constant 0 : index
    %109 = vector.load %arg9[%c1_53, %c0_54, %c0_55] : memref<4x1x128xf32, #tpu.memory_space<vmem>>, vector<1x1x128xf32>
    %110 = vector.shape_cast %109 : vector<1x1x128xf32> to vector<1x128xf32>
    %111 = vector.broadcast %110 : vector<1x128xf32> to vector<256x128xf32>
    %112 = arith.addf %108, %111 : vector<256x128xf32>
    %113 = arith.truncf %112 : vector<256x128xf32> to vector<256x128xbf16>
    %114 = vector.extract_strided_slice %107 {offsets = [0, 0], sizes = [128, 128], strides = [1, 1]} : vector<256x128xbf16> to vector<128x128xbf16>
    %cst_56 = arith.constant dense<0.000000e+00> : vector<128x128xf32>
    %115 = tpu.matmul %114, %114, %cst_56 {dimension_numbers = #tpu.dot_dimension_numbers<[1], [1], [0], [0], [0, 0, 1, 0], [], []>} : vector<128x128xbf16>, vector<128x128xbf16>, vector<128x128xf32> -> vector<128x128xf32>
    %cst_57 = arith.constant dense<0xFF800000> : vector<128xf32>
    %116 = vector.multi_reduction <maximumf>, %115, %cst_57 [0] : vector<128x128xf32> to vector<128xf32>
    %117 = vector.shape_cast %116 : vector<128xf32> to vector<1x128xf32>
    %118 = vector.broadcast %117 : vector<1x128xf32> to vector<128x128xf32>
    %119 = arith.subf %115, %118 : vector<128x128xf32>
    %120 = math.exp %119 : vector<128x128xf32>
    %cst_58 = arith.constant dense<0.000000e+00> : vector<128xf32>
    %121 = vector.multi_reduction <add>, %120, %cst_58 [0] : vector<128x128xf32> to vector<128xf32>
    %122 = vector.shape_cast %121 : vector<128xf32> to vector<1x128xf32>
    %123 = tpu.reciprocal %122 {approx = true} : vector<1x128xf32> -> vector<1x128xf32>
    %124 = vector.broadcast %123 : vector<1x128xf32> to vector<128x128xf32>
    %125 = arith.mulf %120, %124 : vector<128x128xf32>
    %126 = arith.truncf %125 : vector<128x128xf32> to vector<128x128xbf16>
    %127 = vector.extract_strided_slice %113 {offsets = [0, 0], sizes = [128, 128], strides = [1, 1]} : vector<256x128xbf16> to vector<128x128xbf16>
    %cst_59 = arith.constant dense<0.000000e+00> : vector<128x128xf32>
    %128 = tpu.matmul %126, %127, %cst_59 {dimension_numbers = #tpu.dot_dimension_numbers<[1], [0], [0], [1], [0, 0, 1, 1], [], []>} : vector<128x128xbf16>, vector<128x128xbf16>, vector<128x128xf32> -> vector<128x128xf32>
    %129 = vector.extract_strided_slice %107 {offsets = [128, 0], sizes = [128, 128], strides = [1, 1]} : vector<256x128xbf16> to vector<128x128xbf16>
    %cst_60 = arith.constant dense<0.000000e+00> : vector<128x128xf32>
    %130 = tpu.matmul %129, %129, %cst_60 {dimension_numbers = #tpu.dot_dimension_numbers<[1], [1], [0], [0], [0, 0, 1, 0], [], []>} : vector<128x128xbf16>, vector<128x128xbf16>, vector<128x128xf32> -> vector<128x128xf32>
    %cst_61 = arith.constant dense<0xFF800000> : vector<128xf32>
    %131 = vector.multi_reduction <maximumf>, %130, %cst_61 [0] : vector<128x128xf32> to vector<128xf32>
    %132 = vector.shape_cast %131 : vector<128xf32> to vector<1x128xf32>
    %133 = vector.broadcast %132 : vector<1x128xf32> to vector<128x128xf32>
    %134 = arith.subf %130, %133 : vector<128x128xf32>
    %135 = math.exp %134 : vector<128x128xf32>
    %cst_62 = arith.constant dense<0.000000e+00> : vector<128xf32>
    %136 = vector.multi_reduction <add>, %135, %cst_62 [0] : vector<128x128xf32> to vector<128xf32>
    %137 = vector.shape_cast %136 : vector<128xf32> to vector<1x128xf32>
    %138 = tpu.reciprocal %137 {approx = true} : vector<1x128xf32> -> vector<1x128xf32>
    %139 = vector.broadcast %138 : vector<1x128xf32> to vector<128x128xf32>
    %140 = arith.mulf %135, %139 : vector<128x128xf32>
    %141 = arith.truncf %140 : vector<128x128xf32> to vector<128x128xbf16>
    %142 = vector.extract_strided_slice %113 {offsets = [128, 0], sizes = [128, 128], strides = [1, 1]} : vector<256x128xbf16> to vector<128x128xbf16>
    %cst_63 = arith.constant dense<0.000000e+00> : vector<128x128xf32>
    %143 = tpu.matmul %141, %142, %cst_63 {dimension_numbers = #tpu.dot_dimension_numbers<[1], [0], [0], [1], [0, 0, 1, 1], [], []>} : vector<128x128xbf16>, vector<128x128xbf16>, vector<128x128xf32> -> vector<128x128xf32>
    %144 = tpu.concatenate %128, %143 in 0 : vector<128x128xf32>, vector<128x128xf32> -> vector<256x128xf32>
    %145 = arith.truncf %144 : vector<256x128xf32> to vector<256x128xbf16>
    %c1_64 = arith.constant 1 : index
    %c0_65 = arith.constant 0 : index
    %c0_66 = arith.constant 0 : index
    %146 = vector.load %arg10[%c1_64, %c0_65, %c0_66] : memref<4x128x128xbf16, #tpu.memory_space<vmem>>, vector<1x128x128xbf16>
    %147 = vector.shape_cast %146 : vector<1x128x128xbf16> to vector<128x128xbf16>
    %cst_67 = arith.constant dense<0.000000e+00> : vector<256x128xf32>
    %148 = tpu.matmul %145, %147, %cst_67 {dimension_numbers = #tpu.dot_dimension_numbers<[1], [0], [0], [1], [0, 0, 1, 1], [], []>} : vector<256x128xbf16>, vector<128x128xbf16>, vector<256x128xf32> -> vector<256x128xf32>
    %c1_68 = arith.constant 1 : index
    %c0_69 = arith.constant 0 : index
    %c0_70 = arith.constant 0 : index
    %149 = vector.load %arg11[%c1_68, %c0_69, %c0_70] : memref<4x1x128xf32, #tpu.memory_space<vmem>>, vector<1x1x128xf32>
    %150 = vector.shape_cast %149 : vector<1x1x128xf32> to vector<1x128xf32>
    %151 = vector.broadcast %150 : vector<1x128xf32> to vector<256x128xf32>
    %152 = arith.addf %148, %151 : vector<256x128xf32>
    %c1_71 = arith.constant 1 : index
    %c0_72 = arith.constant 0 : index
    %c0_73 = arith.constant 0 : index
    %153 = vector.load %arg12[%c1_71, %c0_72, %c0_73] : memref<4x1x128xf32, #tpu.memory_space<vmem>>, vector<1x1x128xf32>
    %154 = vector.shape_cast %153 : vector<1x1x128xf32> to vector<1x128xf32>
    %155 = vector.broadcast %154 : vector<1x128xf32> to vector<256x128xf32>
    %156 = arith.mulf %152, %155 : vector<256x128xf32>
    %c1_74 = arith.constant 1 : index
    %c0_75 = arith.constant 0 : index
    %c0_76 = arith.constant 0 : index
    %157 = vector.load %arg13[%c1_74, %c0_75, %c0_76] : memref<4x1x128xf32, #tpu.memory_space<vmem>>, vector<1x1x128xf32>
    %158 = vector.shape_cast %157 : vector<1x1x128xf32> to vector<1x128xf32>
    %159 = vector.broadcast %158 : vector<1x128xf32> to vector<256x128xf32>
    %160 = arith.addf %156, %159 : vector<256x128xf32>
    %cst_77 = arith.constant 0.000000e+00 : f32
    %161 = vector.broadcast %cst_77 : f32 to vector<256x128xf32>
    %162 = arith.maximumf %160, %161 : vector<256x128xf32>
    %163 = arith.addf %99, %162 : vector<256x128xf32>
    %164 = arith.truncf %163 : vector<256x128xf32> to vector<256x128xbf16>
    %c0_78 = arith.constant 0 : index
    %c128 = arith.constant 128 : index
    %165 = vector.load %arg20[%c0_78, %c128] : memref<256x512xbf16, #tpu.memory_space<vmem>>, vector<256x128xbf16>
    tpu.vector_store %arg20[%c0_78, %c128], %164 {strides = array<i32>} : memref<256x512xbf16, #tpu.memory_space<vmem>>, vector<256x128xbf16>,
    %166 = arith.truncf %163 : vector<256x128xf32> to vector<256x128xbf16>
    %c2_79 = arith.constant 2 : index
    %c0_80 = arith.constant 0 : index
    %c0_81 = arith.constant 0 : index
    %167 = vector.load %arg8[%c2_79, %c0_80, %c0_81] : memref<4x128x256xbf16, #tpu.memory_space<vmem>>, vector<1x128x256xbf16>
    %168 = vector.shape_cast %167 : vector<1x128x256xbf16> to vector<128x256xbf16>
    %cst_82 = arith.constant dense<0.000000e+00> : vector<256x256xf32>
    %169 = tpu.matmul %166, %168, %cst_82 {dimension_numbers = #tpu.dot_dimension_numbers<[1], [0], [0], [1], [0, 0, 1, 1], [], []>} : vector<256x128xbf16>, vector<128x256xbf16>, vector<256x256xf32> -> vector<256x256xf32>
    %170 = vector.extract_strided_slice %169 {offsets = [0, 0], sizes = [256, 128], strides = [1, 1]} : vector<256x256xf32> to vector<256x128xf32>
    %171 = arith.truncf %170 : vector<256x128xf32> to vector<256x128xbf16>
    %172 = vector.extract_strided_slice %169 {offsets = [0, 128], sizes = [256, 128], strides = [1, 1]} : vector<256x256xf32> to vector<256x128xf32>
    %c2_83 = arith.constant 2 : index
    %c0_84 = arith.constant 0 : index
    %c0_85 = arith.constant 0 : index
    %173 = vector.load %arg9[%c2_83, %c0_84, %c0_85] : memref<4x1x128xf32, #tpu.memory_space<vmem>>, vector<1x1x128xf32>
    %174 = vector.shape_cast %173 : vector<1x1x128xf32> to vector<1x128xf32>
    %175 = vector.broadcast %174 : vector<1x128xf32> to vector<256x128xf32>
    %176 = arith.addf %172, %175 : vector<256x128xf32>
    %177 = arith.truncf %176 : vector<256x128xf32> to vector<256x128xbf16>
    %178 = vector.extract_strided_slice %171 {offsets = [0, 0], sizes = [128, 128], strides = [1, 1]} : vector<256x128xbf16> to vector<128x128xbf16>
    %cst_86 = arith.constant dense<0.000000e+00> : vector<128x128xf32>
    %179 = tpu.matmul %178, %178, %cst_86 {dimension_numbers = #tpu.dot_dimension_numbers<[1], [1], [0], [0], [0, 0, 1, 0], [], []>} : vector<128x128xbf16>, vector<128x128xbf16>, vector<128x128xf32> -> vector<128x128xf32>
    %cst_87 = arith.constant dense<0xFF800000> : vector<128xf32>
    %180 = vector.multi_reduction <maximumf>, %179, %cst_87 [0] : vector<128x128xf32> to vector<128xf32>
    %181 = vector.shape_cast %180 : vector<128xf32> to vector<1x128xf32>
    %182 = vector.broadcast %181 : vector<1x128xf32> to vector<128x128xf32>
    %183 = arith.subf %179, %182 : vector<128x128xf32>
    %184 = math.exp %183 : vector<128x128xf32>
    %cst_88 = arith.constant dense<0.000000e+00> : vector<128xf32>
    %185 = vector.multi_reduction <add>, %184, %cst_88 [0] : vector<128x128xf32> to vector<128xf32>
    %186 = vector.shape_cast %185 : vector<128xf32> to vector<1x128xf32>
    %187 = tpu.reciprocal %186 {approx = true} : vector<1x128xf32> -> vector<1x128xf32>
    %188 = vector.broadcast %187 : vector<1x128xf32> to vector<128x128xf32>
    %189 = arith.mulf %184, %188 : vector<128x128xf32>
    %190 = arith.truncf %189 : vector<128x128xf32> to vector<128x128xbf16>
    %191 = vector.extract_strided_slice %177 {offsets = [0, 0], sizes = [128, 128], strides = [1, 1]} : vector<256x128xbf16> to vector<128x128xbf16>
    %cst_89 = arith.constant dense<0.000000e+00> : vector<128x128xf32>
    %192 = tpu.matmul %190, %191, %cst_89 {dimension_numbers = #tpu.dot_dimension_numbers<[1], [0], [0], [1], [0, 0, 1, 1], [], []>} : vector<128x128xbf16>, vector<128x128xbf16>, vector<128x128xf32> -> vector<128x128xf32>
    %193 = vector.extract_strided_slice %171 {offsets = [128, 0], sizes = [128, 128], strides = [1, 1]} : vector<256x128xbf16> to vector<128x128xbf16>
    %cst_90 = arith.constant dense<0.000000e+00> : vector<128x128xf32>
    %194 = tpu.matmul %193, %193, %cst_90 {dimension_numbers = #tpu.dot_dimension_numbers<[1], [1], [0], [0], [0, 0, 1, 0], [], []>} : vector<128x128xbf16>, vector<128x128xbf16>, vector<128x128xf32> -> vector<128x128xf32>
    %cst_91 = arith.constant dense<0xFF800000> : vector<128xf32>
    %195 = vector.multi_reduction <maximumf>, %194, %cst_91 [0] : vector<128x128xf32> to vector<128xf32>
    %196 = vector.shape_cast %195 : vector<128xf32> to vector<1x128xf32>
    %197 = vector.broadcast %196 : vector<1x128xf32> to vector<128x128xf32>
    %198 = arith.subf %194, %197 : vector<128x128xf32>
    %199 = math.exp %198 : vector<128x128xf32>
    %cst_92 = arith.constant dense<0.000000e+00> : vector<128xf32>
    %200 = vector.multi_reduction <add>, %199, %cst_92 [0] : vector<128x128xf32> to vector<128xf32>
    %201 = vector.shape_cast %200 : vector<128xf32> to vector<1x128xf32>
    %202 = tpu.reciprocal %201 {approx = true} : vector<1x128xf32> -> vector<1x128xf32>
    %203 = vector.broadcast %202 : vector<1x128xf32> to vector<128x128xf32>
    %204 = arith.mulf %199, %203 : vector<128x128xf32>
    %205 = arith.truncf %204 : vector<128x128xf32> to vector<128x128xbf16>
    %206 = vector.extract_strided_slice %177 {offsets = [128, 0], sizes = [128, 128], strides = [1, 1]} : vector<256x128xbf16> to vector<128x128xbf16>
    %cst_93 = arith.constant dense<0.000000e+00> : vector<128x128xf32>
    %207 = tpu.matmul %205, %206, %cst_93 {dimension_numbers = #tpu.dot_dimension_numbers<[1], [0], [0], [1], [0, 0, 1, 1], [], []>} : vector<128x128xbf16>, vector<128x128xbf16>, vector<128x128xf32> -> vector<128x128xf32>
    %208 = tpu.concatenate %192, %207 in 0 : vector<128x128xf32>, vector<128x128xf32> -> vector<256x128xf32>
    %209 = arith.truncf %208 : vector<256x128xf32> to vector<256x128xbf16>
    %c2_94 = arith.constant 2 : index
    %c0_95 = arith.constant 0 : index
    %c0_96 = arith.constant 0 : index
    %210 = vector.load %arg10[%c2_94, %c0_95, %c0_96] : memref<4x128x128xbf16, #tpu.memory_space<vmem>>, vector<1x128x128xbf16>
    %211 = vector.shape_cast %210 : vector<1x128x128xbf16> to vector<128x128xbf16>
    %cst_97 = arith.constant dense<0.000000e+00> : vector<256x128xf32>
    %212 = tpu.matmul %209, %211, %cst_97 {dimension_numbers = #tpu.dot_dimension_numbers<[1], [0], [0], [1], [0, 0, 1, 1], [], []>} : vector<256x128xbf16>, vector<128x128xbf16>, vector<256x128xf32> -> vector<256x128xf32>
    %c2_98 = arith.constant 2 : index
    %c0_99 = arith.constant 0 : index
    %c0_100 = arith.constant 0 : index
    %213 = vector.load %arg11[%c2_98, %c0_99, %c0_100] : memref<4x1x128xf32, #tpu.memory_space<vmem>>, vector<1x1x128xf32>
    %214 = vector.shape_cast %213 : vector<1x1x128xf32> to vector<1x128xf32>
    %215 = vector.broadcast %214 : vector<1x128xf32> to vector<256x128xf32>
    %216 = arith.addf %212, %215 : vector<256x128xf32>
    %c2_101 = arith.constant 2 : index
    %c0_102 = arith.constant 0 : index
    %c0_103 = arith.constant 0 : index
    %217 = vector.load %arg12[%c2_101, %c0_102, %c0_103] : memref<4x1x128xf32, #tpu.memory_space<vmem>>, vector<1x1x128xf32>
    %218 = vector.shape_cast %217 : vector<1x1x128xf32> to vector<1x128xf32>
    %219 = vector.broadcast %218 : vector<1x128xf32> to vector<256x128xf32>
    %220 = arith.mulf %216, %219 : vector<256x128xf32>
    %c2_104 = arith.constant 2 : index
    %c0_105 = arith.constant 0 : index
    %c0_106 = arith.constant 0 : index
    %221 = vector.load %arg13[%c2_104, %c0_105, %c0_106] : memref<4x1x128xf32, #tpu.memory_space<vmem>>, vector<1x1x128xf32>
    %222 = vector.shape_cast %221 : vector<1x1x128xf32> to vector<1x128xf32>
    %223 = vector.broadcast %222 : vector<1x128xf32> to vector<256x128xf32>
    %224 = arith.addf %220, %223 : vector<256x128xf32>
    %cst_107 = arith.constant 0.000000e+00 : f32
    %225 = vector.broadcast %cst_107 : f32 to vector<256x128xf32>
    %226 = arith.maximumf %224, %225 : vector<256x128xf32>
    %227 = arith.addf %163, %226 : vector<256x128xf32>
    %228 = arith.truncf %227 : vector<256x128xf32> to vector<256x128xbf16>
    %c0_108 = arith.constant 0 : index
    %c256 = arith.constant 256 : index
    %229 = vector.load %arg20[%c0_108, %c256] : memref<256x512xbf16, #tpu.memory_space<vmem>>, vector<256x128xbf16>
    tpu.vector_store %arg20[%c0_108, %c256], %228 {strides = array<i32>} : memref<256x512xbf16, #tpu.memory_space<vmem>>, vector<256x128xbf16>,
    %230 = arith.truncf %227 : vector<256x128xf32> to vector<256x128xbf16>
    %c3 = arith.constant 3 : index
    %c0_109 = arith.constant 0 : index
    %c0_110 = arith.constant 0 : index
    %231 = vector.load %arg8[%c3, %c0_109, %c0_110] : memref<4x128x256xbf16, #tpu.memory_space<vmem>>, vector<1x128x256xbf16>
    %232 = vector.shape_cast %231 : vector<1x128x256xbf16> to vector<128x256xbf16>
    %cst_111 = arith.constant dense<0.000000e+00> : vector<256x256xf32>
    %233 = tpu.matmul %230, %232, %cst_111 {dimension_numbers = #tpu.dot_dimension_numbers<[1], [0], [0], [1], [0, 0, 1, 1], [], []>} : vector<256x128xbf16>, vector<128x256xbf16>, vector<256x256xf32> -> vector<256x256xf32>
    %234 = vector.extract_strided_slice %233 {offsets = [0, 0], sizes = [256, 128], strides = [1, 1]} : vector<256x256xf32> to vector<256x128xf32>
    %235 = arith.truncf %234 : vector<256x128xf32> to vector<256x128xbf16>
    %236 = vector.extract_strided_slice %233 {offsets = [0, 128], sizes = [256, 128], strides = [1, 1]} : vector<256x256xf32> to vector<256x128xf32>
    %c3_112 = arith.constant 3 : index
    %c0_113 = arith.constant 0 : index
    %c0_114 = arith.constant 0 : index
    %237 = vector.load %arg9[%c3_112, %c0_113, %c0_114] : memref<4x1x128xf32, #tpu.memory_space<vmem>>, vector<1x1x128xf32>
    %238 = vector.shape_cast %237 : vector<1x1x128xf32> to vector<1x128xf32>
    %239 = vector.broadcast %238 : vector<1x128xf32> to vector<256x128xf32>
    %240 = arith.addf %236, %239 : vector<256x128xf32>
    %241 = arith.truncf %240 : vector<256x128xf32> to vector<256x128xbf16>
    %242 = vector.extract_strided_slice %235 {offsets = [0, 0], sizes = [128, 128], strides = [1, 1]} : vector<256x128xbf16> to vector<128x128xbf16>
    %cst_115 = arith.constant dense<0.000000e+00> : vector<128x128xf32>
    %243 = tpu.matmul %242, %242, %cst_115 {dimension_numbers = #tpu.dot_dimension_numbers<[1], [1], [0], [0], [0, 0, 1, 0], [], []>} : vector<128x128xbf16>, vector<128x128xbf16>, vector<128x128xf32> -> vector<128x128xf32>
    %cst_116 = arith.constant dense<0xFF800000> : vector<128xf32>
    %244 = vector.multi_reduction <maximumf>, %243, %cst_116 [0] : vector<128x128xf32> to vector<128xf32>
    %245 = vector.shape_cast %244 : vector<128xf32> to vector<1x128xf32>
    %246 = vector.broadcast %245 : vector<1x128xf32> to vector<128x128xf32>
    %247 = arith.subf %243, %246 : vector<128x128xf32>
    %248 = math.exp %247 : vector<128x128xf32>
    %cst_117 = arith.constant dense<0.000000e+00> : vector<128xf32>
    %249 = vector.multi_reduction <add>, %248, %cst_117 [0] : vector<128x128xf32> to vector<128xf32>
    %250 = vector.shape_cast %249 : vector<128xf32> to vector<1x128xf32>
    %251 = tpu.reciprocal %250 {approx = true} : vector<1x128xf32> -> vector<1x128xf32>
    %252 = vector.broadcast %251 : vector<1x128xf32> to vector<128x128xf32>
    %253 = arith.mulf %248, %252 : vector<128x128xf32>
    %254 = arith.truncf %253 : vector<128x128xf32> to vector<128x128xbf16>
    %255 = vector.extract_strided_slice %241 {offsets = [0, 0], sizes = [128, 128], strides = [1, 1]} : vector<256x128xbf16> to vector<128x128xbf16>
    %cst_118 = arith.constant dense<0.000000e+00> : vector<128x128xf32>
    %256 = tpu.matmul %254, %255, %cst_118 {dimension_numbers = #tpu.dot_dimension_numbers<[1], [0], [0], [1], [0, 0, 1, 1], [], []>} : vector<128x128xbf16>, vector<128x128xbf16>, vector<128x128xf32> -> vector<128x128xf32>
    %257 = vector.extract_strided_slice %235 {offsets = [128, 0], sizes = [128, 128], strides = [1, 1]} : vector<256x128xbf16> to vector<128x128xbf16>
    %cst_119 = arith.constant dense<0.000000e+00> : vector<128x128xf32>
    %258 = tpu.matmul %257, %257, %cst_119 {dimension_numbers = #tpu.dot_dimension_numbers<[1], [1], [0], [0], [0, 0, 1, 0], [], []>} : vector<128x128xbf16>, vector<128x128xbf16>, vector<128x128xf32> -> vector<128x128xf32>
    %cst_120 = arith.constant dense<0xFF800000> : vector<128xf32>
    %259 = vector.multi_reduction <maximumf>, %258, %cst_120 [0] : vector<128x128xf32> to vector<128xf32>
    %260 = vector.shape_cast %259 : vector<128xf32> to vector<1x128xf32>
    %261 = vector.broadcast %260 : vector<1x128xf32> to vector<128x128xf32>
    %262 = arith.subf %258, %261 : vector<128x128xf32>
    %263 = math.exp %262 : vector<128x128xf32>
    %cst_121 = arith.constant dense<0.000000e+00> : vector<128xf32>
    %264 = vector.multi_reduction <add>, %263, %cst_121 [0] : vector<128x128xf32> to vector<128xf32>
    %265 = vector.shape_cast %264 : vector<128xf32> to vector<1x128xf32>
    %266 = tpu.reciprocal %265 {approx = true} : vector<1x128xf32> -> vector<1x128xf32>
    %267 = vector.broadcast %266 : vector<1x128xf32> to vector<128x128xf32>
    %268 = arith.mulf %263, %267 : vector<128x128xf32>
    %269 = arith.truncf %268 : vector<128x128xf32> to vector<128x128xbf16>
    %270 = vector.extract_strided_slice %241 {offsets = [128, 0], sizes = [128, 128], strides = [1, 1]} : vector<256x128xbf16> to vector<128x128xbf16>
    %cst_122 = arith.constant dense<0.000000e+00> : vector<128x128xf32>
    %271 = tpu.matmul %269, %270, %cst_122 {dimension_numbers = #tpu.dot_dimension_numbers<[1], [0], [0], [1], [0, 0, 1, 1], [], []>} : vector<128x128xbf16>, vector<128x128xbf16>, vector<128x128xf32> -> vector<128x128xf32>
    %272 = tpu.concatenate %256, %271 in 0 : vector<128x128xf32>, vector<128x128xf32> -> vector<256x128xf32>
    %273 = arith.truncf %272 : vector<256x128xf32> to vector<256x128xbf16>
    %c3_123 = arith.constant 3 : index
    %c0_124 = arith.constant 0 : index
    %c0_125 = arith.constant 0 : index
    %274 = vector.load %arg10[%c3_123, %c0_124, %c0_125] : memref<4x128x128xbf16, #tpu.memory_space<vmem>>, vector<1x128x128xbf16>
    %275 = vector.shape_cast %274 : vector<1x128x128xbf16> to vector<128x128xbf16>
    %cst_126 = arith.constant dense<0.000000e+00> : vector<256x128xf32>
    %276 = tpu.matmul %273, %275, %cst_126 {dimension_numbers = #tpu.dot_dimension_numbers<[1], [0], [0], [1], [0, 0, 1, 1], [], []>} : vector<256x128xbf16>, vector<128x128xbf16>, vector<256x128xf32> -> vector<256x128xf32>
    %c3_127 = arith.constant 3 : index
    %c0_128 = arith.constant 0 : index
    %c0_129 = arith.constant 0 : index
    %277 = vector.load %arg11[%c3_127, %c0_128, %c0_129] : memref<4x1x128xf32, #tpu.memory_space<vmem>>, vector<1x1x128xf32>
    %278 = vector.shape_cast %277 : vector<1x1x128xf32> to vector<1x128xf32>
    %279 = vector.broadcast %278 : vector<1x128xf32> to vector<256x128xf32>
    %280 = arith.addf %276, %279 : vector<256x128xf32>
    %c3_130 = arith.constant 3 : index
    %c0_131 = arith.constant 0 : index
    %c0_132 = arith.constant 0 : index
    %281 = vector.load %arg12[%c3_130, %c0_131, %c0_132] : memref<4x1x128xf32, #tpu.memory_space<vmem>>, vector<1x1x128xf32>
    %282 = vector.shape_cast %281 : vector<1x1x128xf32> to vector<1x128xf32>
    %283 = vector.broadcast %282 : vector<1x128xf32> to vector<256x128xf32>
    %284 = arith.mulf %280, %283 : vector<256x128xf32>
    %c3_133 = arith.constant 3 : index
    %c0_134 = arith.constant 0 : index
    %c0_135 = arith.constant 0 : index
    %285 = vector.load %arg13[%c3_133, %c0_134, %c0_135] : memref<4x1x128xf32, #tpu.memory_space<vmem>>, vector<1x1x128xf32>
    %286 = vector.shape_cast %285 : vector<1x1x128xf32> to vector<1x128xf32>
    %287 = vector.broadcast %286 : vector<1x128xf32> to vector<256x128xf32>
    %288 = arith.addf %284, %287 : vector<256x128xf32>
    %cst_136 = arith.constant 0.000000e+00 : f32
    %289 = vector.broadcast %cst_136 : f32 to vector<256x128xf32>
    %290 = arith.maximumf %288, %289 : vector<256x128xf32>
    %291 = arith.addf %227, %290 : vector<256x128xf32>
    %292 = arith.truncf %291 : vector<256x128xf32> to vector<256x128xbf16>
    %c0_137 = arith.constant 0 : index
    %c384 = arith.constant 384 : index
    %293 = vector.load %arg20[%c0_137, %c384] : memref<256x512xbf16, #tpu.memory_space<vmem>>, vector<256x128xbf16>
    tpu.vector_store %arg20[%c0_137, %c384], %292 {strides = array<i32>} : memref<256x512xbf16, #tpu.memory_space<vmem>>, vector<256x128xbf16>,
    %c0_138 = arith.constant 0 : index
    %c0_139 = arith.constant 0 : index
    %294 = vector.load %arg20[%c0_138, %c0_139] : memref<256x512xbf16, #tpu.memory_space<vmem>>, vector<256x512xbf16>
    %c0_140 = arith.constant 0 : index
    %c0_141 = arith.constant 0 : index
    %295 = vector.load %arg14[%c0_140, %c0_141] : memref<512x256xbf16, #tpu.memory_space<vmem>>, vector<512x256xbf16>
    %cst_142 = arith.constant dense<0.000000e+00> : vector<256x256xf32>
    %296 = tpu.matmul %294, %295, %cst_142 {dimension_numbers = #tpu.dot_dimension_numbers<[1], [0], [0], [1], [0, 0, 1, 1], [], []>} : vector<256x512xbf16>, vector<512x256xbf16>, vector<256x256xf32> -> vector<256x256xf32>
    %c0_143 = arith.constant 0 : index
    %c0_144 = arith.constant 0 : index
    %297 = vector.load %arg15[%c0_143, %c0_144] : memref<1x256xf32, #tpu.memory_space<vmem>>, vector<1x256xf32>
    %298 = vector.broadcast %297 : vector<1x256xf32> to vector<256x256xf32>
    %299 = arith.mulf %296, %298 : vector<256x256xf32>
    %c0_145 = arith.constant 0 : index
    %c0_146 = arith.constant 0 : index
    %300 = vector.load %arg16[%c0_145, %c0_146] : memref<1x256xf32, #tpu.memory_space<vmem>>, vector<1x256xf32>
    %301 = vector.broadcast %300 : vector<1x256xf32> to vector<256x256xf32>
    %302 = arith.addf %299, %301 : vector<256x256xf32>
    %cst_147 = arith.constant 0.000000e+00 : f32
    %303 = vector.broadcast %cst_147 : f32 to vector<256x256xf32>
    %304 = arith.cmpf oge, %302, %303 : vector<256x256xf32>
    %cst_148 = arith.constant 2.000000e-01 : f32
    %305 = vector.broadcast %cst_148 : f32 to vector<256x256xf32>
    %306 = arith.mulf %305, %302 : vector<256x256xf32>
    %307 = arith.select %304, %302, %306 : vector<256x256xi1>, vector<256x256xf32>
    %308 = vector.extract_strided_slice %307 {offsets = [0, 0], sizes = [128, 256], strides = [1, 1]} : vector<256x256xf32> to vector<128x256xf32>
    %c0_149 = arith.constant 0 : index
    %c0_150 = arith.constant 0 : index
    %c0_151 = arith.constant 0 : index
    %309 = vector.load %arg17[%c0_149, %c0_150, %c0_151] : memref<2x128x256xf32, #tpu.memory_space<vmem>>, vector<1x128x256xf32>
    %310 = vector.shape_cast %309 : vector<1x128x256xf32> to vector<128x256xf32>
    %311 = vector.shape_cast %308 : vector<128x256xf32> to vector<1x128x256xf32>
    tpu.vector_store %arg17[%c0_149, %c0_150, %c0_151], %311 {strides = array<i32>} : memref<2x128x256xf32, #tpu.memory_space<vmem>>, vector<1x128x256xf32>,
    %cst_152 = arith.constant dense<0xFF800000> : vector<256xf32>
    %312 = vector.multi_reduction <maximumf>, %308, %cst_152 [0] : vector<128x256xf32> to vector<256xf32>
    %313 = vector.shape_cast %312 : vector<256xf32> to vector<1x256xf32>
    %c0_153 = arith.constant 0 : index
    %c0_154 = arith.constant 0 : index
    %c0_155 = arith.constant 0 : index
    %314 = vector.load %arg18[%c0_153, %c0_154, %c0_155] : memref<2x1x256xf32, #tpu.memory_space<vmem>>, vector<1x1x256xf32>
    %315 = vector.shape_cast %314 : vector<1x1x256xf32> to vector<1x256xf32>
    %316 = vector.shape_cast %313 : vector<1x256xf32> to vector<1x1x256xf32>
    tpu.vector_store %arg18[%c0_153, %c0_154, %c0_155], %316 {strides = array<i32>} : memref<2x1x256xf32, #tpu.memory_space<vmem>>, vector<1x1x256xf32>,
    %cst_156 = arith.constant dense<0.000000e+00> : vector<256xf32>
    %317 = vector.multi_reduction <add>, %308, %cst_156 [0] : vector<128x256xf32> to vector<256xf32>
    %318 = vector.shape_cast %317 : vector<256xf32> to vector<1x256xf32>
    %cst_157 = arith.constant 1.280000e+02 : f32
    %319 = vector.broadcast %cst_157 : f32 to vector<1x256xf32>
    %320 = arith.divf %318, %319 : vector<1x256xf32>
    %c0_158 = arith.constant 0 : index
    %c0_159 = arith.constant 0 : index
    %c0_160 = arith.constant 0 : index
    %321 = vector.load %arg19[%c0_158, %c0_159, %c0_160] : memref<2x1x256xf32, #tpu.memory_space<vmem>>, vector<1x1x256xf32>
    %322 = vector.shape_cast %321 : vector<1x1x256xf32> to vector<1x256xf32>
    %323 = vector.shape_cast %320 : vector<1x256xf32> to vector<1x1x256xf32>
    tpu.vector_store %arg19[%c0_158, %c0_159, %c0_160], %323 {strides = array<i32>} : memref<2x1x256xf32, #tpu.memory_space<vmem>>, vector<1x1x256xf32>,
    %324 = vector.extract_strided_slice %307 {offsets = [128, 0], sizes = [128, 256], strides = [1, 1]} : vector<256x256xf32> to vector<128x256xf32>
    %c1_161 = arith.constant 1 : index
    %c0_162 = arith.constant 0 : index
    %c0_163 = arith.constant 0 : index
    %325 = vector.load %arg17[%c1_161, %c0_162, %c0_163] : memref<2x128x256xf32, #tpu.memory_space<vmem>>, vector<1x128x256xf32>
    %326 = vector.shape_cast %325 : vector<1x128x256xf32> to vector<128x256xf32>
    %327 = vector.shape_cast %324 : vector<128x256xf32> to vector<1x128x256xf32>
    tpu.vector_store %arg17[%c1_161, %c0_162, %c0_163], %327 {strides = array<i32>} : memref<2x128x256xf32, #tpu.memory_space<vmem>>, vector<1x128x256xf32>,
    %cst_164 = arith.constant dense<0xFF800000> : vector<256xf32>
    %328 = vector.multi_reduction <maximumf>, %324, %cst_164 [0] : vector<128x256xf32> to vector<256xf32>
    %329 = vector.shape_cast %328 : vector<256xf32> to vector<1x256xf32>
    %c1_165 = arith.constant 1 : index
    %c0_166 = arith.constant 0 : index
    %c0_167 = arith.constant 0 : index
    %330 = vector.load %arg18[%c1_165, %c0_166, %c0_167] : memref<2x1x256xf32, #tpu.memory_space<vmem>>, vector<1x1x256xf32>
    %331 = vector.shape_cast %330 : vector<1x1x256xf32> to vector<1x256xf32>
    %332 = vector.shape_cast %329 : vector<1x256xf32> to vector<1x1x256xf32>
    tpu.vector_store %arg18[%c1_165, %c0_166, %c0_167], %332 {strides = array<i32>} : memref<2x1x256xf32, #tpu.memory_space<vmem>>, vector<1x1x256xf32>,
    %cst_168 = arith.constant dense<0.000000e+00> : vector<256xf32>
    %333 = vector.multi_reduction <add>, %324, %cst_168 [0] : vector<128x256xf32> to vector<256xf32>
    %334 = vector.shape_cast %333 : vector<256xf32> to vector<1x256xf32>
    %cst_169 = arith.constant 1.280000e+02 : f32
    %335 = vector.broadcast %cst_169 : f32 to vector<1x256xf32>
    %336 = arith.divf %334, %335 : vector<1x256xf32>
    %c1_170 = arith.constant 1 : index
    %c0_171 = arith.constant 0 : index
    %c0_172 = arith.constant 0 : index
    %337 = vector.load %arg19[%c1_170, %c0_171, %c0_172] : memref<2x1x256xf32, #tpu.memory_space<vmem>>, vector<1x1x256xf32>
    %338 = vector.shape_cast %337 : vector<1x1x256xf32> to vector<1x256xf32>
    %339 = vector.shape_cast %336 : vector<1x256xf32> to vector<1x1x256xf32>
    tpu.vector_store %arg19[%c1_170, %c0_171, %c0_172], %339 {strides = array<i32>} : memref<2x1x256xf32, #tpu.memory_space<vmem>>, vector<1x1x256xf32>,
    return
  }
  func.func @transform_0(%arg0: i32) -> (i32, i32, i32) {
    %c0_i32 = arith.constant 0 : i32
    %c0_i32_0 = arith.constant 0 : i32
    %c0_i32_1 = arith.constant 0 : i32
    return %arg0, %c0_i32, %c0_i32_0 : i32, i32, i32
  }
  func.func @transform_1(%arg0: i32) -> (i32, i32) {
    %c0_i32 = arith.constant 0 : i32
    %c0_i32_0 = arith.constant 0 : i32
    %c0_i32_1 = arith.constant 0 : i32
    return %c0_i32, %c0_i32_0 : i32, i32
  }
  func.func @transform_2(%arg0: i32) -> (i32, i32) {
    %c0_i32 = arith.constant 0 : i32
    %c0_i32_0 = arith.constant 0 : i32
    %c0_i32_1 = arith.constant 0 : i32
    return %c0_i32, %c0_i32_0 : i32, i32
  }
  func.func @transform_3(%arg0: i32) -> (i32, i32) {
    %c0_i32 = arith.constant 0 : i32
    %c0_i32_0 = arith.constant 0 : i32
    %c0_i32_1 = arith.constant 0 : i32
    return %c0_i32, %c0_i32_0 : i32, i32
  }
  func.func @transform_4(%arg0: i32) -> (i32, i32) {
    %c0_i32 = arith.constant 0 : i32
    %c0_i32_0 = arith.constant 0 : i32
    %c0_i32_1 = arith.constant 0 : i32
    return %c0_i32, %c0_i32_0 : i32, i32
  }
  func.func @transform_5(%arg0: i32) -> (i32, i32) {
    %c0_i32 = arith.constant 0 : i32
    %c0_i32_0 = arith.constant 0 : i32
    %c0_i32_1 = arith.constant 0 : i32
    return %c0_i32, %c0_i32_0 : i32, i32
  }
  func.func @transform_6(%arg0: i32) -> (i32, i32) {
    %c0_i32 = arith.constant 0 : i32
    %c0_i32_0 = arith.constant 0 : i32
    %c0_i32_1 = arith.constant 0 : i32
    return %c0_i32, %c0_i32_0 : i32, i32
  }
  func.func @transform_7(%arg0: i32) -> (i32, i32, i32) {
    %c0_i32 = arith.constant 0 : i32
    %c0_i32_0 = arith.constant 0 : i32
    %c0_i32_1 = arith.constant 0 : i32
    %c0_i32_2 = arith.constant 0 : i32
    return %c0_i32, %c0_i32_0, %c0_i32_1 : i32, i32, i32
  }
  func.func @transform_8(%arg0: i32) -> (i32, i32, i32) {
    %c0_i32 = arith.constant 0 : i32
    %c0_i32_0 = arith.constant 0 : i32
    %c0_i32_1 = arith.constant 0 : i32
    %c0_i32_2 = arith.constant 0 : i32
    return %c0_i32, %c0_i32_0, %c0_i32_1 : i32, i32, i32
  }
  func.func @transform_9(%arg0: i32) -> (i32, i32, i32) {
    %c0_i32 = arith.constant 0 : i32
    %c0_i32_0 = arith.constant 0 : i32
    %c0_i32_1 = arith.constant 0 : i32
    %c0_i32_2 = arith.constant 0 : i32
    return %c0_i32, %c0_i32_0, %c0_i32_1 : i32, i32, i32
  }
  func.func @transform_10(%arg0: i32) -> (i32, i32, i32) {
    %c0_i32 = arith.constant 0 : i32
    %c0_i32_0 = arith.constant 0 : i32
    %c0_i32_1 = arith.constant 0 : i32
    %c0_i32_2 = arith.constant 0 : i32
    return %c0_i32, %c0_i32_0, %c0_i32_1 : i32, i32, i32
  }
  func.func @transform_11(%arg0: i32) -> (i32, i32, i32) {
    %c0_i32 = arith.constant 0 : i32
    %c0_i32_0 = arith.constant 0 : i32
    %c0_i32_1 = arith.constant 0 : i32
    %c0_i32_2 = arith.constant 0 : i32
    return %c0_i32, %c0_i32_0, %c0_i32_1 : i32, i32, i32
  }
  func.func @transform_12(%arg0: i32) -> (i32, i32, i32) {
    %c0_i32 = arith.constant 0 : i32
    %c0_i32_0 = arith.constant 0 : i32
    %c0_i32_1 = arith.constant 0 : i32
    %c0_i32_2 = arith.constant 0 : i32
    return %c0_i32, %c0_i32_0, %c0_i32_1 : i32, i32, i32
  }
  func.func @transform_13(%arg0: i32) -> (i32, i32) {
    %c0_i32 = arith.constant 0 : i32
    %c0_i32_0 = arith.constant 0 : i32
    %c0_i32_1 = arith.constant 0 : i32
    return %c0_i32, %c0_i32_0 : i32, i32
  }
  func.func @transform_14(%arg0: i32) -> (i32, i32) {
    %c0_i32 = arith.constant 0 : i32
    %c0_i32_0 = arith.constant 0 : i32
    %c0_i32_1 = arith.constant 0 : i32
    return %c0_i32, %c0_i32_0 : i32, i32
  }
  func.func @transform_15(%arg0: i32) -> (i32, i32) {
    %c0_i32 = arith.constant 0 : i32
    %c0_i32_0 = arith.constant 0 : i32
    %c0_i32_1 = arith.constant 0 : i32
    return %c0_i32, %c0_i32_0 : i32, i32
  }
  func.func @transform_16(%arg0: i32) -> (i32, i32, i32) {
    %c0_i32 = arith.constant 0 : i32
    %c0_i32_0 = arith.constant 0 : i32
    %c0_i32_1 = arith.constant 0 : i32
    return %arg0, %c0_i32, %c0_i32_0 : i32, i32, i32
  }
  func.func @transform_17(%arg0: i32) -> (i32, i32, i32) {
    %c0_i32 = arith.constant 0 : i32
    %c0_i32_0 = arith.constant 0 : i32
    %c0_i32_1 = arith.constant 0 : i32
    return %arg0, %c0_i32, %c0_i32_0 : i32, i32, i32
  }
  func.func @transform_18(%arg0: i32) -> (i32, i32, i32) {
    %c0_i32 = arith.constant 0 : i32
    %c0_i32_0 = arith.constant 0 : i32
    %c0_i32_1 = arith.constant 0 : i32
    return %arg0, %c0_i32, %c0_i32_0 : i32, i32, i32
  }
}

</mosaic_0001>

<llo_original>
// kernel: tpu_custom_call.1
$region0: #{tpu_custom_call.1}
  #allocation0 [shape = 'u32[]', space=smem, size = 0x4, offset = 0x4, fixed_abs, tag = 'smem constant byte address 0x4 - core index']
  #allocation1 [shape = 'u32[144,128]{1,0:T(1,128)}', space=vmem, size = 0x12000, scoped, tag = 'internal scratch']
  #allocation2 [shape = 'bf16[256,512]{1,0:T(16,128)(2,1)}', space=vmem, size = 0x40000, scoped, tag = 'scratch operand']
  %s0 = inlined_call_operand.vmem [shape: f32[4,128,3], index: 0, kind: input, shape index: {}]
  %s1 = inlined_call_operand.vmem [shape: f32[3,128], index: 1, kind: input, shape index: {}]
  %s2 = inlined_call_operand.vmem [shape: f32[1,128], index: 2, kind: input, shape index: {}]
  %s3 = inlined_call_operand.vmem [shape: f32[1,128], index: 3, kind: input, shape index: {}]
  %s4 = inlined_call_operand.hbm [shape: bf16[128,128], index: 4, kind: input, shape index: {}]
  %s5 = inlined_call_operand.vmem [shape: f32[1,128], index: 5, kind: input, shape index: {}]
  %s6 = inlined_call_operand.vmem [shape: f32[1,128], index: 6, kind: input, shape index: {}]
  %s7 = inlined_call_operand.vmem [shape: bf16[4,128,256], index: 7, kind: input, shape index: {}]
  %s8 = inlined_call_operand.vmem [shape: f32[4,1,128], index: 8, kind: input, shape index: {}]
  %s9 = inlined_call_operand.hbm [shape: bf16[4,128,128], index: 9, kind: input, shape index: {}]
  %s10 = inlined_call_operand.vmem [shape: f32[4,1,128], index: 10, kind: input, shape index: {}]
  %s11 = inlined_call_operand.vmem [shape: f32[4,1,128], index: 11, kind: input, shape index: {}]
  %s12 = inlined_call_operand.vmem [shape: f32[4,1,128], index: 12, kind: input, shape index: {}]
  %s13 = inlined_call_operand.hbm [shape: bf16[512,256], index: 13, kind: input, shape index: {}]
  %s14 = inlined_call_operand.vmem [shape: f32[1,256], index: 14, kind: input, shape index: {}]
  %s15 = inlined_call_operand.vmem [shape: f32[1,256], index: 15, kind: input, shape index: {}]
  %s16 = inlined_call_operand.hbm [shape: f32[4,128,256], index: 16, kind: output, shape index: {0}]
  %s17 = inlined_call_operand.hbm [shape: f32[4,1,256], index: 17, kind: output, shape index: {1}]
  %s18 = inlined_call_operand.hbm [shape: f32[4,1,256], index: 18, kind: output, shape index: {2}]
  %19 = xla_tuple %s16, %s17, %s18
  %s20 = sld [smem:[#allocation0]]
  $region125: #{tpu_custom_call.1} parent=0
    _
  %s22 = ssub.s32 1, %s20
  %s23 = scalar_select 0, %s22, %s20
  $region1: #{tpu_custom_call.1} parent=0
    #allocation3 [shape = 'u8[32768]{0}', space=vmem, size = 0x8000, scoped, tag = 'input window, operand 4, single buffered']
    #allocation4 [shape = 's32[2]{0}', space=sflag, size = 0x8, scoped, tag = 'scoped memory for tpu_custom_call.1']
    #allocation5 [shape = 's32[2]{0}', space=sflag, size = 0x8, scoped, tag = 'scoped memory for tpu_custom_call.1']
    #allocation6 [shape = 'u8[131072]{0}', space=vmem, size = 0x20000, scoped, tag = 'input window, operand 9, single buffered']
    #allocation7 [shape = 's32[1]{0}', space=sflag, size = 0x4, scoped, tag = 'scoped memory for tpu_custom_call.1']
    #allocation8 [shape = 'u8[262144]{0}', space=vmem, size = 0x40000, scoped, tag = 'input window, operand 13, single buffered']
    #allocation9 [shape = 'u8[524288]{0}', space=vmem, size = 0x80000, scoped, tag = 'output window, operand 0']
    #allocation10 [shape = 'u8[4096]{0}', space=vmem, size = 0x1000, scoped, tag = 'output window, operand 1']
    #allocation11 [shape = 's32[2]{0}', space=sflag, size = 0x8, scoped, tag = 'scoped memory for tpu_custom_call.1']
    #allocation12 [shape = 'u8[4096]{0}', space=vmem, size = 0x1000, scoped, tag = 'output window, operand 2']
    %24 = vsyncpa [#allocation4], 0
    %25 = vsyncpa [#allocation7], 0
    %26 = vsyncpa [#allocation5], 0
    %s27 = scalar_lea.sflag [#allocation5], 1
    %28 = vsyncpa %s27, 0
    %29 = vsyncpa [#allocation11], 0
    %s30 = scalar_lea.sflag [#allocation11], 1
    %31 = vsyncpa %s30, 0
    loop: start=0, step=1, limit=4
    $region2: #{tpu_custom_call.1} parent=1 // loop_pre_header
      _
    $region3: #{tpu_custom_call.1} parent=1 // loop_header
      %s33 = sphi 0, %s37
      %p34 = scmp.ge.s32.totalorder %s33, 4
      %s43 = sphi 0, %s45
      %s46 = sphi 0, %s43
      %s47 = sphi 0, %s46
      %s63 = sphi 0, %s47
      %s67 = sphi 0, %s67
      %s69 = sphi 0, %s67
      %s70 = sphi 0, %s69
      %s84 = sphi 0, %s70
      %s88 = sphi 0, %s88
      %s90 = sphi 0, %s88
      %s91 = sphi 0, %s90
      %s105 = sphi 0, %s91
      %s109 = sphi 0, %s109
      %s111 = sphi 0, %s109
      %s112 = sphi 0, %s111
      %s126 = sphi 0, %s112
      %s130 = sphi 0, %s130
      %s132 = sphi 0, %s130
      %s133 = sphi 0, %s132
      %s147 = sphi 0, %s133
      %s151 = sphi 0, %s151
      %s153 = sphi 0, %s151
      %s154 = sphi 0, %s153
      %s168 = sphi 0, %s154
      %s172 = sphi 0, %s172
      %s174 = sphi 0, %s172
      %s175 = sphi 0, %s174
      %s189 = sphi 0, %s175
      %s193 = sphi 0, %s193
      %s195 = sphi 0, %s193
      %s196 = sphi 0, %s195
      %s210 = sphi 0, %s196
      %s214 = sphi 0, %s214
      %s216 = sphi 0, %s214
      %s217 = sphi 0, %s216
      %s231 = sphi 0, %s217
      %s235 = sphi 0, %s235
      %s237 = sphi 0, %s235
      %s238 = sphi 0, %s237
      %s252 = sphi 0, %s238
      %s256 = sphi 0, %s256
      %s258 = sphi 0, %s256
      %s259 = sphi 0, %s258
      %s273 = sphi 0, %s259
      %s277 = sphi 0, %s277
      %s279 = sphi 0, %s277
      %s280 = sphi 0, %s279
      %s294 = sphi 0, %s280
      %s298 = sphi 0, %s298
      %s300 = sphi 0, %s298
      %s301 = sphi 0, %s300
      %s315 = sphi 0, %s301
      %s319 = sphi 0, %s319
      %s321 = sphi 0, %s319
      %s322 = sphi 0, %s321
      %s336 = sphi 0, %s322
      %s340 = sphi 0, %s340
      %s342 = sphi 0, %s340
      %s343 = sphi 0, %s342
      %s357 = sphi 0, %s343
      %s361 = sphi 0, %s361
      %s363 = sphi 0, %s361
      %s364 = sphi 0, %s363
      %s378 = sphi 0, %s364
      %s384 = sphi 0, %s386
      %s387 = sphi 0, %s384
      %s388 = sphi 0, %s387
      %s404 = sphi 0, %s388
      %s410 = sphi 0, %s412
      %s413 = sphi 0, %s410
      %s414 = sphi 0, %s413
      %s430 = sphi 0, %s414
      %s436 = sphi 0, %s438
      %s439 = sphi 0, %s436
      %s440 = sphi 0, %s439
      %s456 = sphi 0, %s440
    $region4: #{tpu_custom_call.1} parent=1 // loop_header_branch
      %36 = sbr.rel (%p34) target = $region8
    $region5: #{tpu_custom_call.1} parent=1 // loop_body
      %s38 = ssub.s32 %s33, 1
      %s39 = ssub.s32 %s33, 2
      %s40 = sadd.s32 %s33, 1
      %s41 = ssub.s32 %s33, %s40
      %p42 = scmp.eq.s32.totalorder %s41, 0
      %s44 = sadd.s32 %s43, 1
      %s45 = scalar_select %p42, %s43, %s44
      %p48 = pneg %p42
      %p49 = scmp.eq.s32.totalorder %s33, 1
      %p50 = por %p48, %p49
      %p51 = scmp.ne.s32.totalorder %s43, %s46
      %p52 = scmp.eq.s32.totalorder %s33, 0
      %p53 = por %p51, %p52
      %p54 = scmp.ne.s32.totalorder %s43, %s46
      %p55 = scmp.eq.s32.totalorder %s38, 1
      %p56 = por %p54, %p55
      %p57 = scmp.ne.s32.totalorder %s46, %s47
      %p58 = scmp.eq.s32.totalorder %s38, 0
      %p59 = por %p57, %p58
      %p60 = scmp.ne.s32.totalorder %s46, %s47
      %p61 = scmp.eq.s32.totalorder %s39, 1
      %p62 = por %p60, %p61
      %p64 = scmp.ne.s32.totalorder %s47, %s63
      %p65 = scmp.eq.s32.totalorder %s39, 0
      %p66 = por %p64, %p65
      %s68 = sadd.s32 %s67, 1
      %p71 = scmp.eq.s32.totalorder %s33, 1
      %p72 = scmp.ne.s32.totalorder %s67, %s69
      %p73 = scmp.eq.s32.totalorder %s33, 0
      %p74 = por %p72, %p73
      %p75 = scmp.ne.s32.totalorder %s67, %s69
      %p76 = scmp.eq.s32.totalorder %s38, 1
      %p77 = por %p75, %p76
      %p78 = scmp.ne.s32.totalorder %s69, %s70
      %p79 = scmp.eq.s32.totalorder %s38, 0
      %p80 = por %p78, %p79
      %p81 = scmp.ne.s32.totalorder %s69, %s70
      %p82 = scmp.eq.s32.totalorder %s39, 1
      %p83 = por %p81, %p82
      %p85 = scmp.ne.s32.totalorder %s70, %s84
      %p86 = scmp.eq.s32.totalorder %s39, 0
      %p87 = por %p85, %p86
      %s89 = sadd.s32 %s88, 1
      %p92 = scmp.eq.s32.totalorder %s33, 1
      %p93 = scmp.ne.s32.totalorder %s88, %s90
      %p94 = scmp.eq.s32.totalorder %s33, 0
      %p95 = por %p93, %p94
      %p96 = scmp.ne.s32.totalorder %s88, %s90
      %p97 = scmp.eq.s32.totalorder %s38, 1
      %p98 = por %p96, %p97
      %p99 = scmp.ne.s32.totalorder %s90, %s91
      %p100 = scmp.eq.s32.totalorder %s38, 0
      %p101 = por %p99, %p100
      %p102 = scmp.ne.s32.totalorder %s90, %s91
      %p103 = scmp.eq.s32.totalorder %s39, 1
      %p104 = por %p102, %p103
      %p106 = scmp.ne.s32.totalorder %s91, %s105
      %p107 = scmp.eq.s32.totalorder %s39, 0
      %p108 = por %p106, %p107
      %s110 = sadd.s32 %s109, 1
      %p113 = scmp.eq.s32.totalorder %s33, 1
      %p114 = scmp.ne.s32.totalorder %s109, %s111
      %p115 = scmp.eq.s32.totalorder %s33, 0
      %p116 = por %p114, %p115
      %p117 = scmp.ne.s32.totalorder %s109, %s111
      %p118 = scmp.eq.s32.totalorder %s38, 1
      %p119 = por %p117, %p118
      %p120 = scmp.ne.s32.totalorder %s111, %s112
      %p121 = scmp.eq.s32.totalorder %s38, 0
      %p122 = por %p120, %p121
      %p123 = scmp.ne.s32.totalorder %s111, %s112
      %p124 = scmp.eq.s32.totalorder %s39, 1
      %p125 = por %p123, %p124
      %p127 = scmp.ne.s32.totalorder %s112, %s126
      %p128 = scmp.eq.s32.totalorder %s39, 0
      %p129 = por %p127, %p128
      %s131 = sadd.s32 %s130, 1
      %p134 = scmp.eq.s32.totalorder %s33, 1
      %p135 = scmp.ne.s32.totalorder %s130, %s132
      %p136 = scmp.eq.s32.totalorder %s33, 0
      %p137 = por %p135, %p136
      %p138 = scmp.ne.s32.totalorder %s130, %s132
      %p139 = scmp.eq.s32.totalorder %s38, 1
      %p140 = por %p138, %p139
      %p141 = scmp.ne.s32.totalorder %s132, %s133
      %p142 = scmp.eq.s32.totalorder %s38, 0
      %p143 = por %p141, %p142
      %p144 = scmp.ne.s32.totalorder %s132, %s133
      %p145 = scmp.eq.s32.totalorder %s39, 1
      %p146 = por %p144, %p145
      %p148 = scmp.ne.s32.totalorder %s133, %s147
      %p149 = scmp.eq.s32.totalorder %s39, 0
      %p150 = por %p148, %p149
      %s152 = sadd.s32 %s151, 1
      %p155 = scmp.eq.s32.totalorder %s33, 1
      %p156 = scmp.ne.s32.totalorder %s151, %s153
      %p157 = scmp.eq.s32.totalorder %s33, 0
      %p158 = por %p156, %p157
      %p159 = scmp.ne.s32.totalorder %s151, %s153
      %p160 = scmp.eq.s32.totalorder %s38, 1
      %p161 = por %p159, %p160
      %p162 = scmp.ne.s32.totalorder %s153, %s154
      %p163 = scmp.eq.s32.totalorder %s38, 0
      %p164 = por %p162, %p163
      %p165 = scmp.ne.s32.totalorder %s153, %s154
      %p166 = scmp.eq.s32.totalorder %s39, 1
      %p167 = por %p165, %p166
      %p169 = scmp.ne.s32.totalorder %s154, %s168
      %p170 = scmp.eq.s32.totalorder %s39, 0
      %p171 = por %p169, %p170
      %s173 = sadd.s32 %s172, 1
      %p176 = scmp.eq.s32.totalorder %s33, 1
      %p177 = scmp.ne.s32.totalorder %s172, %s174
      %p178 = scmp.eq.s32.totalorder %s33, 0
      %p179 = por %p177, %p178
      %p180 = scmp.ne.s32.totalorder %s172, %s174
      %p181 = scmp.eq.s32.totalorder %s38, 1
      %p182 = por %p180, %p181
      %p183 = scmp.ne.s32.totalorder %s174, %s175
      %p184 = scmp.eq.s32.totalorder %s38, 0
      %p185 = por %p183, %p184
      %p186 = scmp.ne.s32.totalorder %s174, %s175
      %p187 = scmp.eq.s32.totalorder %s39, 1
      %p188 = por %p186, %p187
      %p190 = scmp.ne.s32.totalorder %s175, %s189
      %p191 = scmp.eq.s32.totalorder %s39, 0
      %p192 = por %p190, %p191
      %s194 = sadd.s32 %s193, 1
      %p197 = scmp.eq.s32.totalorder %s33, 1
      %p198 = scmp.ne.s32.totalorder %s193, %s195
      %p199 = scmp.eq.s32.totalorder %s33, 0
      %p200 = por %p198, %p199
      %p201 = scmp.ne.s32.totalorder %s193, %s195
      %p202 = scmp.eq.s32.totalorder %s38, 1
      %p203 = por %p201, %p202
      %p204 = scmp.ne.s32.totalorder %s195, %s196
      %p205 = scmp.eq.s32.totalorder %s38, 0
      %p206 = por %p204, %p205
      %p207 = scmp.ne.s32.totalorder %s195, %s196
      %p208 = scmp.eq.s32.totalorder %s39, 1
      %p209 = por %p207, %p208
      %p211 = scmp.ne.s32.totalorder %s196, %s210
      %p212 = scmp.eq.s32.totalorder %s39, 0
      %p213 = por %p211, %p212
      %s215 = sadd.s32 %s214, 1
      %p218 = scmp.eq.s32.totalorder %s33, 1
      %p219 = scmp.ne.s32.totalorder %s214, %s216
      %p220 = scmp.eq.s32.totalorder %s33, 0
      %p221 = por %p219, %p220
      %p222 = scmp.ne.s32.totalorder %s214, %s216
      %p223 = scmp.eq.s32.totalorder %s38, 1
      %p224 = por %p222, %p223
      %p225 = scmp.ne.s32.totalorder %s216, %s217
      %p226 = scmp.eq.s32.totalorder %s38, 0
      %p227 = por %p225, %p226
      %p228 = scmp.ne.s32.totalorder %s216, %s217
      %p229 = scmp.eq.s32.totalorder %s39, 1
      %p230 = por %p228, %p229
      %p232 = scmp.ne.s32.totalorder %s217, %s231
      %p233 = scmp.eq.s32.totalorder %s39, 0
      %p234 = por %p232, %p233
      %s236 = sadd.s32 %s235, 1
      %p239 = scmp.eq.s32.totalorder %s33, 1
      %p240 = scmp.ne.s32.totalorder %s235, %s237
      %p241 = scmp.eq.s32.totalorder %s33, 0
      %p242 = por %p240, %p241
      %p243 = scmp.ne.s32.totalorder %s235, %s237
      %p244 = scmp.eq.s32.totalorder %s38, 1
      %p245 = por %p243, %p244
      %p246 = scmp.ne.s32.totalorder %s237, %s238
      %p247 = scmp.eq.s32.totalorder %s38, 0
      %p248 = por %p246, %p247
      %p249 = scmp.ne.s32.totalorder %s237, %s238
      %p250 = scmp.eq.s32.totalorder %s39, 1
      %p251 = por %p249, %p250
      %p253 = scmp.ne.s32.totalorder %s238, %s252
      %p254 = scmp.eq.s32.totalorder %s39, 0
      %p255 = por %p253, %p254
      %s257 = sadd.s32 %s256, 1
      %p260 = scmp.eq.s32.totalorder %s33, 1
      %p261 = scmp.ne.s32.totalorder %s256, %s258
      %p262 = scmp.eq.s32.totalorder %s33, 0
      %p263 = por %p261, %p262
      %p264 = scmp.ne.s32.totalorder %s256, %s258
      %p265 = scmp.eq.s32.totalorder %s38, 1
      %p266 = por %p264, %p265
      %p267 = scmp.ne.s32.totalorder %s258, %s259
      %p268 = scmp.eq.s32.totalorder %s38, 0
      %p269 = por %p267, %p268
      %p270 = scmp.ne.s32.totalorder %s258, %s259
      %p271 = scmp.eq.s32.totalorder %s39, 1
      %p272 = por %p270, %p271
      %p274 = scmp.ne.s32.totalorder %s259, %s273
      %p275 = scmp.eq.s32.totalorder %s39, 0
      %p276 = por %p274, %p275
      %s278 = sadd.s32 %s277, 1
      %p281 = scmp.eq.s32.totalorder %s33, 1
      %p282 = scmp.ne.s32.totalorder %s277, %s279
      %p283 = scmp.eq.s32.totalorder %s33, 0
      %p284 = por %p282, %p283
      %p285 = scmp.ne.s32.totalorder %s277, %s279
      %p286 = scmp.eq.s32.totalorder %s38, 1
      %p287 = por %p285, %p286
      %p288 = scmp.ne.s32.totalorder %s279, %s280
      %p289 = scmp.eq.s32.totalorder %s38, 0
      %p290 = por %p288, %p289
      %p291 = scmp.ne.s32.totalorder %s279, %s280
      %p292 = scmp.eq.s32.totalorder %s39, 1
      %p293 = por %p291, %p292
      %p295 = scmp.ne.s32.totalorder %s280, %s294
      %p296 = scmp.eq.s32.totalorder %s39, 0
      %p297 = por %p295, %p296
      %s299 = sadd.s32 %s298, 1
      %p302 = scmp.eq.s32.totalorder %s33, 1
      %p303 = scmp.ne.s32.totalorder %s298, %s300
      %p304 = scmp.eq.s32.totalorder %s33, 0
      %p305 = por %p303, %p304
      %p306 = scmp.ne.s32.totalorder %s298, %s300
      %p307 = scmp.eq.s32.totalorder %s38, 1
      %p308 = por %p306, %p307
      %p309 = scmp.ne.s32.totalorder %s300, %s301
      %p310 = scmp.eq.s32.totalorder %s38, 0
      %p311 = por %p309, %p310
      %p312 = scmp.ne.s32.totalorder %s300, %s301
      %p313 = scmp.eq.s32.totalorder %s39, 1
      %p314 = por %p312, %p313
      %p316 = scmp.ne.s32.totalorder %s301, %s315
      %p317 = scmp.eq.s32.totalorder %s39, 0
      %p318 = por %p316, %p317
      %s320 = sadd.s32 %s319, 1
      %p323 = scmp.eq.s32.totalorder %s33, 1
      %p324 = scmp.ne.s32.totalorder %s319, %s321
      %p325 = scmp.eq.s32.totalorder %s33, 0
      %p326 = por %p324, %p325
      %p327 = scmp.ne.s32.totalorder %s319, %s321
      %p328 = scmp.eq.s32.totalorder %s38, 1
      %p329 = por %p327, %p328
      %p330 = scmp.ne.s32.totalorder %s321, %s322
      %p331 = scmp.eq.s32.totalorder %s38, 0
      %p332 = por %p330, %p331
      %p333 = scmp.ne.s32.totalorder %s321, %s322
      %p334 = scmp.eq.s32.totalorder %s39, 1
      %p335 = por %p333, %p334
      %p337 = scmp.ne.s32.totalorder %s322, %s336
      %p338 = scmp.eq.s32.totalorder %s39, 0
      %p339 = por %p337, %p338
      %s341 = sadd.s32 %s340, 1
      %p344 = scmp.eq.s32.totalorder %s33, 1
      %p345 = scmp.ne.s32.totalorder %s340, %s342
      %p346 = scmp.eq.s32.totalorder %s33, 0
      %p347 = por %p345, %p346
      %p348 = scmp.ne.s32.totalorder %s340, %s342
      %p349 = scmp.eq.s32.totalorder %s38, 1
      %p350 = por %p348, %p349
      %p351 = scmp.ne.s32.totalorder %s342, %s343
      %p352 = scmp.eq.s32.totalorder %s38, 0
      %p353 = por %p351, %p352
      %p354 = scmp.ne.s32.totalorder %s342, %s343
      %p355 = scmp.eq.s32.totalorder %s39, 1
      %p356 = por %p354, %p355
      %p358 = scmp.ne.s32.totalorder %s343, %s357
      %p359 = scmp.eq.s32.totalorder %s39, 0
      %p360 = por %p358, %p359
      %s362 = sadd.s32 %s361, 1
      %p365 = scmp.eq.s32.totalorder %s33, 1
      %p366 = scmp.ne.s32.totalorder %s361, %s363
      %p367 = scmp.eq.s32.totalorder %s33, 0
      %p368 = por %p366, %p367
      %p369 = scmp.ne.s32.totalorder %s361, %s363
      %p370 = scmp.eq.s32.totalorder %s38, 1
      %p371 = por %p369, %p370
      %p372 = scmp.ne.s32.totalorder %s363, %s364
      %p373 = scmp.eq.s32.totalorder %s38, 0
      %p374 = por %p372, %p373
      %p375 = scmp.ne.s32.totalorder %s363, %s364
      %p376 = scmp.eq.s32.totalorder %s39, 1
      %p377 = por %p375, %p376
      %p379 = scmp.ne.s32.totalorder %s364, %s378
      %p380 = scmp.eq.s32.totalorder %s39, 0
      %p381 = por %p379, %p380
      %s382 = ssub.s32 %s33, %s40
      %p383 = scmp.eq.s32.totalorder %s382, 0
      %s385 = sadd.s32 %s384, 1
      %s386 = scalar_select %p383, %s384, %s385
      %p389 = pneg %p383
      %p390 = scmp.eq.s32.totalorder %s33, 1
      %p391 = por %p389, %p390
      %p392 = scmp.ne.s32.totalorder %s384, %s387
      %p393 = scmp.eq.s32.totalorder %s33, 0
      %p394 = por %p392, %p393
      %p395 = scmp.ne.s32.totalorder %s384, %s387
      %p396 = scmp.eq.s32.totalorder %s38, 1
      %p397 = por %p395, %p396
      %p398 = scmp.ne.s32.totalorder %s387, %s388
      %p399 = scmp.eq.s32.totalorder %s38, 0
      %p400 = por %p398, %p399
      %p401 = scmp.ne.s32.totalorder %s387, %s388
      %p402 = scmp.eq.s32.totalorder %s39, 1
      %p403 = por %p401, %p402
      %p405 = scmp.ne.s32.totalorder %s388, %s404
      %p406 = scmp.eq.s32.totalorder %s39, 0
      %p407 = por %p405, %p406
      %s408 = ssub.s32 %s33, %s40
      %p409 = scmp.eq.s32.totalorder %s408, 0
      %s411 = sadd.s32 %s410, 1
      %s412 = scalar_select %p409, %s410, %s411
      %p415 = pneg %p409
      %p416 = scmp.eq.s32.totalorder %s33, 1
      %p417 = por %p415, %p416
      %p418 = scmp.ne.s32.totalorder %s410, %s413
      %p419 = scmp.eq.s32.totalorder %s33, 0
      %p420 = por %p418, %p419
      %p421 = scmp.ne.s32.totalorder %s410, %s413
      %p422 = scmp.eq.s32.totalorder %s38, 1
      %p423 = por %p421, %p422
      %p424 = scmp.ne.s32.totalorder %s413, %s414
      %p425 = scmp.eq.s32.totalorder %s38, 0
      %p426 = por %p424, %p425
      %p427 = scmp.ne.s32.totalorder %s413, %s414
      %p428 = scmp.eq.s32.totalorder %s39, 1
      %p429 = por %p427, %p428
      %p431 = scmp.ne.s32.totalorder %s414, %s430
      %p432 = scmp.eq.s32.totalorder %s39, 0
      %p433 = por %p431, %p432
      %s434 = ssub.s32 %s33, %s40
      %p435 = scmp.eq.s32.totalorder %s434, 0
      %s437 = sadd.s32 %s436, 1
      %s438 = scalar_select %p435, %s436, %s437
      %p441 = pneg %p435
      %p442 = scmp.eq.s32.totalorder %s33, 1
      %p443 = por %p441, %p442
      %p444 = scmp.ne.s32.totalorder %s436, %s439
      %p445 = scmp.eq.s32.totalorder %s33, 0
      %p446 = por %p444, %p445
      %p447 = scmp.ne.s32.totalorder %s436, %s439
      %p448 = scmp.eq.s32.totalorder %s38, 1
      %p449 = por %p447, %p448
      %p450 = scmp.ne.s32.totalorder %s439, %s440
      %p451 = scmp.eq.s32.totalorder %s38, 0
      %p452 = por %p450, %p451
      %p453 = scmp.ne.s32.totalorder %s439, %s440
      %p454 = scmp.eq.s32.totalorder %s39, 1
      %p455 = por %p453, %p454
      %p457 = scmp.ne.s32.totalorder %s440, %s456
      %p458 = scmp.eq.s32.totalorder %s39, 0
      %p459 = por %p457, %p458
      %p460 = scmp.le.s32.totalorder 1, %s33
      %p461 = scmp.lt.s32.totalorder %s33, 3
      %p462 = pnand %p460, %p461
      %p463 = pneg %p462
      // Predicated region
      $region9: #{tpu_custom_call.1} parent=5 // pred_check
        _
      $region10: #{tpu_custom_call.1} parent=5 // pred_check_branch
        %465 = sbr.rel (%p462) target = $region12
      $region11: #{tpu_custom_call.1} parent=5 // pred_region
        %s466 = ssub.s32 %s33, 1
        // Predicated region
        $region13: #{tpu_custom_call.1} parent=11 // pred_check
          %p467 = pneg %p80
        $region14: #{tpu_custom_call.1} parent=11 // pred_check_branch
          %469 = sbr.rel (%p467) target = $region16
        $region15: #{tpu_custom_call.1} parent=11 // pred_region
          _
        $region16: #{tpu_custom_call.1} parent=11 // pred_fallthru
          _
        // Predicated region
        $region17: #{tpu_custom_call.1} parent=11 // pred_check
          %p470 = pneg %p101
        $region18: #{tpu_custom_call.1} parent=11 // pred_check_branch
          %472 = sbr.rel (%p470) target = $region20
        $region19: #{tpu_custom_call.1} parent=11 // pred_region
          _
        $region20: #{tpu_custom_call.1} parent=11 // pred_fallthru
          _
        // Predicated region
        $region21: #{tpu_custom_call.1} parent=11 // pred_check
          %p473 = pneg %p122
        $region22: #{tpu_custom_call.1} parent=11 // pred_check_branch
          %475 = sbr.rel (%p473) target = $region24
        $region23: #{tpu_custom_call.1} parent=11 // pred_region
          _
        $region24: #{tpu_custom_call.1} parent=11 // pred_fallthru
          _
        // Predicated region
        $region25: #{tpu_custom_call.1} parent=11 // pred_check
          %p476 = pneg %p143
        $region26: #{tpu_custom_call.1} parent=11 // pred_check_branch
          %478 = sbr.rel (%p476) target = $region28
        $region27: #{tpu_custom_call.1} parent=11 // pred_region
          %s480 = ssub.s32 1024, 1024
          %481 = vsyncadd [#allocation4], %s480
          %s482 = sshll.u32 [#allocation3], 4
          %s483 = int_to_ptr.vmem [resolvable:$true] %s482
          %488 = dma.hbm_to_vmem [thread:$0]  %s4, 1024, %s483, [#allocation4], 64, 64, 4
        $region28: #{tpu_custom_call.1} parent=11 // pred_fallthru
          _
        // Predicated region
        $region29: #{tpu_custom_call.1} parent=11 // pred_check
          %p489 = pneg %p164
        $region30: #{tpu_custom_call.1} parent=11 // pred_check_branch
          %491 = sbr.rel (%p489) target = $region32
        $region31: #{tpu_custom_call.1} parent=11 // pred_region
          _
        $region32: #{tpu_custom_call.1} parent=11 // pred_fallthru
          _
        // Predicated region
        $region33: #{tpu_custom_call.1} parent=11 // pred_check
          %p492 = pneg %p185
        $region34: #{tpu_custom_call.1} parent=11 // pred_check_branch
          %494 = sbr.rel (%p492) target = $region36
        $region35: #{tpu_custom_call.1} parent=11 // pred_region
          _
        $region36: #{tpu_custom_call.1} parent=11 // pred_fallthru
          _
        // Predicated region
        $region37: #{tpu_custom_call.1} parent=11 // pred_check
          %p495 = pneg %p206
        $region38: #{tpu_custom_call.1} parent=11 // pred_check_branch
          %497 = sbr.rel (%p495) target = $region40
        $region39: #{tpu_custom_call.1} parent=11 // pred_region
          _
        $region40: #{tpu_custom_call.1} parent=11 // pred_fallthru
          _
        // Predicated region
        $region41: #{tpu_custom_call.1} parent=11 // pred_check
          %p498 = pneg %p227
        $region42: #{tpu_custom_call.1} parent=11 // pred_check_branch
          %500 = sbr.rel (%p498) target = $region44
        $region43: #{tpu_custom_call.1} parent=11 // pred_region
          _
        $region44: #{tpu_custom_call.1} parent=11 // pred_fallthru
          _
        // Predicated region
        $region45: #{tpu_custom_call.1} parent=11 // pred_check
          %p501 = pneg %p248
        $region46: #{tpu_custom_call.1} parent=11 // pred_check_branch
          %503 = sbr.rel (%p501) target = $region48
        $region47: #{tpu_custom_call.1} parent=11 // pred_region
          %s505 = ssub.s32 4096, 4096
          %506 = vsyncadd [#allocation7], %s505
          %s507 = sshll.u32 [#allocation6], 4
          %s508 = int_to_ptr.vmem [resolvable:$true] %s507
          %513 = dma.hbm_to_vmem [thread:$0]  %s9, 4096, %s508, [#allocation7], 64, 64, 4
        $region48: #{tpu_custom_call.1} parent=11 // pred_fallthru
          _
        // Predicated region
        $region49: #{tpu_custom_call.1} parent=11 // pred_check
          %p514 = pneg %p269
        $region50: #{tpu_custom_call.1} parent=11 // pred_check_branch
          %516 = sbr.rel (%p514) target = $region52
        $region51: #{tpu_custom_call.1} parent=11 // pred_region
          _
        $region52: #{tpu_custom_call.1} parent=11 // pred_fallthru
          _
        // Predicated region
        $region53: #{tpu_custom_call.1} parent=11 // pred_check
          %p517 = pneg %p290
        $region54: #{tpu_custom_call.1} parent=11 // pred_check_branch
          %519 = sbr.rel (%p517) target = $region56
        $region55: #{tpu_custom_call.1} parent=11 // pred_region
          _
        $region56: #{tpu_custom_call.1} parent=11 // pred_fallthru
          _
        // Predicated region
        $region57: #{tpu_custom_call.1} parent=11 // pred_check
          %p520 = pneg %p311
        $region58: #{tpu_custom_call.1} parent=11 // pred_check_branch
          %522 = sbr.rel (%p520) target = $region60
        $region59: #{tpu_custom_call.1} parent=11 // pred_region
          _
        $region60: #{tpu_custom_call.1} parent=11 // pred_fallthru
          _
        // Predicated region
        $region61: #{tpu_custom_call.1} parent=11 // pred_check
          %p523 = pneg %p332
        $region62: #{tpu_custom_call.1} parent=11 // pred_check_branch
          %525 = sbr.rel (%p523) target = $region64
        $region63: #{tpu_custom_call.1} parent=11 // pred_region
          %s527 = ssub.s32 8192, 8192
          %528 = vsyncadd [#allocation7], %s527
          %s529 = sshll.u32 [#allocation8], 4
          %s530 = int_to_ptr.vmem [resolvable:$true] %s529
          %535 = dma.hbm_to_vmem [thread:$0]  %s13, 8192, %s530, [#allocation7], 128, 128, 8
        $region64: #{tpu_custom_call.1} parent=11 // pred_fallthru
          _
        // Predicated region
        $region65: #{tpu_custom_call.1} parent=11 // pred_check
          %p536 = pneg %p353
        $region66: #{tpu_custom_call.1} parent=11 // pred_check_branch
          %538 = sbr.rel (%p536) target = $region68
        $region67: #{tpu_custom_call.1} parent=11 // pred_region
          _
        $region68: #{tpu_custom_call.1} parent=11 // pred_fallthru
          _
        // Predicated region
        $region69: #{tpu_custom_call.1} parent=11 // pred_check
          %p539 = pneg %p374
        $region70: #{tpu_custom_call.1} parent=11 // pred_check_branch
          %541 = sbr.rel (%p539) target = $region72
        $region71: #{tpu_custom_call.1} parent=11 // pred_region
          _
        $region72: #{tpu_custom_call.1} parent=11 // pred_fallthru
          _
      $region12: #{tpu_custom_call.1} parent=5 // pred_fallthru
        _
      %p542 = scmp.lt.s32.totalorder %s33, 2
      // Predicated region
      $region73: #{tpu_custom_call.1} parent=5 // pred_check
        %p543 = pneg %p542
      $region74: #{tpu_custom_call.1} parent=5 // pred_check_branch
        %545 = sbr.rel (%p543) target = $region76
      $region75: #{tpu_custom_call.1} parent=5 // pred_region
        // Predicated region
        $region77: #{tpu_custom_call.1} parent=75 // pred_check
          %p546 = pneg %p53
        $region78: #{tpu_custom_call.1} parent=75 // pred_check_branch
          %548 = sbr.rel (%p546) target = $region80
        $region79: #{tpu_custom_call.1} parent=75 // pred_region
          %s549 = smul.u32 2, %s33
          %p550 = scmp.lt.s32.totalorder %s549, 3
          %s551 = scalar_select %p550, %s549, 3
          %s552 = smul.addr %s551, 16
          %s553 = smul.addr %s552, 8
          %s554 = scalar_lea.vmem %s0, %s553
          %s555 = smul.u32 2, %s33
        $region80: #{tpu_custom_call.1} parent=75 // pred_fallthru
          _
      $region76: #{tpu_custom_call.1} parent=5 // pred_fallthru
        _
      %p556 = scmp.le.s32.totalorder 1, %s33
      %p557 = scmp.lt.s32.totalorder %s33, 3
      %p558 = pnand %p556, %p557
      %p559 = pneg %p558
      // Predicated region
      $region81: #{tpu_custom_call.1} parent=5 // pred_check
        _
      $region82: #{tpu_custom_call.1} parent=5 // pred_check_branch
        %561 = sbr.rel (%p558) target = $region84
      $region83: #{tpu_custom_call.1} parent=5 // pred_region
        %s562 = ssub.s32 %s33, 1
        // Predicated region
        $region85: #{tpu_custom_call.1} parent=83 // pred_check
          %p563 = pneg %p143
        $region86: #{tpu_custom_call.1} parent=83 // pred_check_branch
          %565 = sbr.rel (%p563) target = $region88
        $region87: #{tpu_custom_call.1} parent=83 // pred_region
          %566 = dma.done [#allocation4], 1024
        $region88: #{tpu_custom_call.1} parent=83 // pred_fallthru
          _
        // Predicated region
        $region89: #{tpu_custom_call.1} parent=83 // pred_check
          %p567 = pneg %p248
        $region90: #{tpu_custom_call.1} parent=83 // pred_check_branch
          %569 = sbr.rel (%p567) target = $region92
        $region91: #{tpu_custom_call.1} parent=83 // pred_region
          %570 = dma.done [#allocation7], 4096
        $region92: #{tpu_custom_call.1} parent=83 // pred_fallthru
          _
        // Predicated region
        $region93: #{tpu_custom_call.1} parent=83 // pred_check
          %p571 = pneg %p332
        $region94: #{tpu_custom_call.1} parent=83 // pred_check_branch
          %573 = sbr.rel (%p571) target = $region96
        $region95: #{tpu_custom_call.1} parent=83 // pred_region
          %574 = dma.done [#allocation7], 8192
        $region96: #{tpu_custom_call.1} parent=83 // pred_fallthru
          _
        %s575 = smul.u32 2, %s38
        %p576 = scmp.lt.s32.totalorder %s575, 3
        %s577 = scalar_select %p576, %s575, 3
        %s578 = smul.addr %s577, 16
        %s579 = smul.addr %s578, 8
        %s580 = scalar_lea.vmem %s0, %s579
        %p581 = pneg %p59
        %p582 = pneg %p56
        %p583 = pneg %p80
        %p584 = pneg %p77
        %p585 = pneg %p101
        %p586 = pneg %p98
        %p587 = pneg %p122
        %p588 = pneg %p119
        %p589 = pneg %p143
        %p590 = pneg %p140
        %p591 = pneg %p164
        %p592 = pneg %p161
        %p593 = pneg %p185
        %p594 = pneg %p182
        %p595 = pneg %p206
        %p596 = pneg %p203
        %p597 = pneg %p227
        %p598 = pneg %p224
        %p599 = pneg %p248
        %p600 = pneg %p245
        %p601 = pneg %p269
        %p602 = pneg %p266
        %p603 = pneg %p290
        %p604 = pneg %p287
        %p605 = pneg %p311
        %p606 = pneg %p308
        %p607 = pneg %p332
        %p608 = pneg %p329
        %p609 = pneg %p353
        %p610 = pneg %p350
        %p611 = pneg %p374
        %p612 = pneg %p371
        %p613 = pneg %p400
        %p614 = pneg %p397
        %s615 = sand.u32 %s387, 1
        %s616 = scalar_lea.sflag [#allocation5], %s615
        %s617 = sand.u32 %s387, 1
        %s618 = smul.addr %s617, 512
        %s619 = scalar_lea.vmem [#allocation9], %s618
        %p620 = pneg %p426
        %p621 = pneg %p423
        %s622 = sand.u32 %s38, 1
        %s623 = scalar_lea.sflag [#allocation11], %s622
        %s624 = sand.u32 %s413, 1
        %s625 = smul.addr %s624, 4
        %s626 = scalar_lea.vmem [#allocation10], %s625
        %p627 = pneg %p452
        %p628 = pneg %p449
        %s629 = sand.u32 %s38, 1
        %s630 = scalar_lea.sflag [#allocation11], %s629
        %s631 = sand.u32 %s439, 1
        %s632 = smul.addr %s631, 4
        %s633 = scalar_lea.vmem [#allocation12], %s632
        %s634 = smul.u32 2, %s38
        %p635 = scmp.lt.s32.totalorder %s634, 3
        %s636 = scalar_select %p635, %s634, 3
        %s637 = smul.addr %s636, 16
        %s638 = smul.addr %s637, 8
        %s639 = scalar_lea.vmem %s0, %s638
        %s640 = smul.u32 2, %s38
        %s641 = smul.u32 2, %s38
        %s642 = smul.u32 2, %s38
        %s643 = smul.u32 2, %s38
        %v645 = vld [vmem:[%s639] sm:$0xff]
        %v646 = vld [vmem:[%s639 + $0x8] sm:$0xff]
        %v647 = vld [vmem:[%s639 + $0x10] sm:$0xff]
        %v648 = vld [vmem:[%s639 + $0x18] sm:$0xff]
        %v649 = vld [vmem:[%s639 + $0x20] sm:$0xff]
        %v650 = vld [vmem:[%s639 + $0x28] sm:$0xff]
        %v651 = vld [vmem:[%s639 + $0x30] sm:$0xff]
        %v652 = vld [vmem:[%s639 + $0x38] sm:$0xff]
        %v653 = vld [vmem:[%s639 + $0x40] sm:$0xff]
        %v654 = vld [vmem:[%s639 + $0x48] sm:$0xff]
        %v655 = vld [vmem:[%s639 + $0x50] sm:$0xff]
        %v656 = vld [vmem:[%s639 + $0x58] sm:$0xff]
        %v657 = vld [vmem:[%s639 + $0x60] sm:$0xff]
        %v658 = vld [vmem:[%s639 + $0x68] sm:$0xff]
        %v659 = vld [vmem:[%s639 + $0x70] sm:$0xff]
        %v660 = vld [vmem:[%s639 + $0x78] sm:$0xff]
        %v661 = vld [vmem:[%s639 + $0x80] sm:$0xff]
        %v662 = vld [vmem:[%s639 + $0x88] sm:$0xff]
        %v663 = vld [vmem:[%s639 + $0x90] sm:$0xff]
        %v664 = vld [vmem:[%s639 + $0x98] sm:$0xff]
        %v665 = vld [vmem:[%s639 + $0xa0] sm:$0xff]
        %v666 = vld [vmem:[%s639 + $0xa8] sm:$0xff]
        %v667 = vld [vmem:[%s639 + $0xb0] sm:$0xff]
        %v668 = vld [vmem:[%s639 + $0xb8] sm:$0xff]
        %v669 = vld [vmem:[%s639 + $0xc0] sm:$0xff]
        %v670 = vld [vmem:[%s639 + $0xc8] sm:$0xff]
        %v671 = vld [vmem:[%s639 + $0xd0] sm:$0xff]
        %v672 = vld [vmem:[%s639 + $0xd8] sm:$0xff]
        %v673 = vld [vmem:[%s639 + $0xe0] sm:$0xff]
        %v674 = vld [vmem:[%s639 + $0xe8] sm:$0xff]
        %v675 = vld [vmem:[%s639 + $0xf0] sm:$0xff]
        %v676 = vld [vmem:[%s639 + $0xf8] sm:$0xff]
        %v677 = vld [vmem:[%s1] sm:$0x1]
        %679 = vset.pattern.permute.xlu0 0
        %680 = vperm.xlu0 %679, %v645
        %v681 = vpop.permute.xlu0 %680
        %684 = vset.pattern.permute.xlu0 0
        %685 = vperm.xlu0 %684, %v646
        %v686 = vpop.permute.xlu0 %685
        %689 = vset.pattern.permute.xlu0 0
        %690 = vperm.xlu0 %689, %v647
        %v691 = vpop.permute.xlu0 %690
        %694 = vset.pattern.permute.xlu0 0
        %695 = vperm.xlu0 %694, %v648
        %v696 = vpop.permute.xlu0 %695
        %699 = vset.pattern.permute.xlu0 0
        %700 = vperm.xlu0 %699, %v649
        %v701 = vpop.permute.xlu0 %700
        %704 = vset.pattern.permute.xlu0 0
        %705 = vperm.xlu0 %704, %v650
        %v706 = vpop.permute.xlu0 %705
        %709 = vset.pattern.permute.xlu0 0
        %710 = vperm.xlu0 %709, %v651
        %v711 = vpop.permute.xlu0 %710
        %714 = vset.pattern.permute.xlu0 0
        %715 = vperm.xlu0 %714, %v652
        %v716 = vpop.permute.xlu0 %715
        %719 = vset.pattern.permute.xlu0 0
        %720 = vperm.xlu0 %719, %v653
        %v721 = vpop.permute.xlu0 %720
        %724 = vset.pattern.permute.xlu0 0
        %725 = vperm.xlu0 %724, %v654
        %v726 = vpop.permute.xlu0 %725
        %729 = vset.pattern.permute.xlu0 0
        %730 = vperm.xlu0 %729, %v655
        %v731 = vpop.permute.xlu0 %730
        %734 = vset.pattern.permute.xlu0 0
        %735 = vperm.xlu0 %734, %v656
        %v736 = vpop.permute.xlu0 %735
        %739 = vset.pattern.permute.xlu0 0
        %740 = vperm.xlu0 %739, %v657
        %v741 = vpop.permute.xlu0 %740
        %744 = vset.pattern.permute.xlu0 0
        %745 = vperm.xlu0 %744, %v658
        %v746 = vpop.permute.xlu0 %745
        %749 = vset.pattern.permute.xlu0 0
        %750 = vperm.xlu0 %749, %v659
        %v751 = vpop.permute.xlu0 %750
        %754 = vset.pattern.permute.xlu0 0
        %755 = vperm.xlu0 %754, %v660
        %v756 = vpop.permute.xlu0 %755
        %759 = vset.pattern.permute.xlu0 0
        %760 = vperm.xlu0 %759, %v661
        %v761 = vpop.permute.xlu0 %760
        %764 = vset.pattern.permute.xlu0 0
        %765 = vperm.xlu0 %764, %v662
        %v766 = vpop.permute.xlu0 %765
        %769 = vset.pattern.permute.xlu0 0
        %770 = vperm.xlu0 %769, %v663
        %v771 = vpop.permute.xlu0 %770
        %774 = vset.pattern.permute.xlu0 0
        %775 = vperm.xlu0 %774, %v664
        %v776 = vpop.permute.xlu0 %775
        %779 = vset.pattern.permute.xlu0 0
        %780 = vperm.xlu0 %779, %v665
        %v781 = vpop.permute.xlu0 %780
        %784 = vset.pattern.permute.xlu0 0
        %785 = vperm.xlu0 %784, %v666
        %v786 = vpop.permute.xlu0 %785
        %789 = vset.pattern.permute.xlu0 0
        %790 = vperm.xlu0 %789, %v667
        %v791 = vpop.permute.xlu0 %790
        %794 = vset.pattern.permute.xlu0 0
        %795 = vperm.xlu0 %794, %v668
        %v796 = vpop.permute.xlu0 %795
        %799 = vset.pattern.permute.xlu0 0
        %800 = vperm.xlu0 %799, %v669
        %v801 = vpop.permute.xlu0 %800
        %804 = vset.pattern.permute.xlu0 0
        %805 = vperm.xlu0 %804, %v670
        %v806 = vpop.permute.xlu0 %805
        %809 = vset.pattern.permute.xlu0 0
        %810 = vperm.xlu0 %809, %v671
        %v811 = vpop.permute.xlu0 %810
        %814 = vset.pattern.permute.xlu0 0
        %815 = vperm.xlu0 %814, %v672
        %v816 = vpop.permute.xlu0 %815
        %819 = vset.pattern.permute.xlu0 0
        %820 = vperm.xlu0 %819, %v673
        %v821 = vpop.permute.xlu0 %820
        %824 = vset.pattern.permute.xlu0 0
        %825 = vperm.xlu0 %824, %v674
        %v826 = vpop.permute.xlu0 %825
        %829 = vset.pattern.permute.xlu0 0
        %830 = vperm.xlu0 %829, %v675
        %v831 = vpop.permute.xlu0 %830
        %834 = vset.pattern.permute.xlu0 0
        %835 = vperm.xlu0 %834, %v676
        %v836 = vpop.permute.xlu0 %835
        %v838 = vlaneseq
        %v839 = vshrl.u32 %v838, 7
        %v840 = vsub.s32 0, %v839
        %v841 = vrot.slane %v677, %v840
        %v842 = vmul.f32 %v681, %v841
        %v843 = vmul.f32 %v686, %v841
        %v844 = vmul.f32 %v691, %v841
        %v845 = vmul.f32 %v696, %v841
        %v846 = vmul.f32 %v701, %v841
        %v847 = vmul.f32 %v706, %v841
        %v848 = vmul.f32 %v711, %v841
        %v849 = vmul.f32 %v716, %v841
        %v850 = vmul.f32 %v721, %v841
        %v851 = vmul.f32 %v726, %v841
        %v852 = vmul.f32 %v731, %v841
        %v853 = vmul.f32 %v736, %v841
        %v854 = vmul.f32 %v741, %v841
        %v855 = vmul.f32 %v746, %v841
        %v856 = vmul.f32 %v751, %v841
        %v857 = vmul.f32 %v756, %v841
        %v858 = vmul.f32 %v761, %v841
        %v859 = vmul.f32 %v766, %v841
        %v860 = vmul.f32 %v771, %v841
        %v861 = vmul.f32 %v776, %v841
        %v862 = vmul.f32 %v781, %v841
        %v863 = vmul.f32 %v786, %v841
        %v864 = vmul.f32 %v791, %v841
        %v865 = vmul.f32 %v796, %v841
        %v866 = vmul.f32 %v801, %v841
        %v867 = vmul.f32 %v806, %v841
        %v868 = vmul.f32 %v811, %v841
        %v869 = vmul.f32 %v816, %v841
        %v870 = vmul.f32 %v821, %v841
        %v871 = vmul.f32 %v826, %v841
        %v872 = vmul.f32 %v831, %v841
        %v873 = vmul.f32 %v836, %v841
        %v874 = vld [vmem:[%s1 + $0x1] sm:$0x1]
        %875 = vset.pattern.permute.xlu0 1
        %876 = vperm.xlu0 %875, %v645
        %v877 = vpop.permute.xlu0 %876
        %879 = vset.pattern.permute.xlu0 1
        %880 = vperm.xlu0 %879, %v646
        %v881 = vpop.permute.xlu0 %880
        %883 = vset.pattern.permute.xlu0 1
        %884 = vperm.xlu0 %883, %v647
        %v885 = vpop.permute.xlu0 %884
        %887 = vset.pattern.permute.xlu0 1
        %888 = vperm.xlu0 %887, %v648
        %v889 = vpop.permute.xlu0 %888
        %891 = vset.pattern.permute.xlu0 1
        %892 = vperm.xlu0 %891, %v649
        %v893 = vpop.permute.xlu0 %892
        %895 = vset.pattern.permute.xlu0 1
        %896 = vperm.xlu0 %895, %v650
        %v897 = vpop.permute.xlu0 %896
        %899 = vset.pattern.permute.xlu0 1
        %900 = vperm.xlu0 %899, %v651
        %v901 = vpop.permute.xlu0 %900
        %903 = vset.pattern.permute.xlu0 1
        %904 = vperm.xlu0 %903, %v652
        %v905 = vpop.permute.xlu0 %904
        %907 = vset.pattern.permute.xlu0 1
        %908 = vperm.xlu0 %907, %v653
        %v909 = vpop.permute.xlu0 %908
        %911 = vset.pattern.permute.xlu0 1
        %912 = vperm.xlu0 %911, %v654
        %v913 = vpop.permute.xlu0 %912
        %915 = vset.pattern.permute.xlu0 1
        %916 = vperm.xlu0 %915, %v655
        %v917 = vpop.permute.xlu0 %916
        %919 = vset.pattern.permute.xlu0 1
        %920 = vperm.xlu0 %919, %v656
        %v921 = vpop.permute.xlu0 %920
        %923 = vset.pattern.permute.xlu0 1
        %924 = vperm.xlu0 %923, %v657
        %v925 = vpop.permute.xlu0 %924
        %927 = vset.pattern.permute.xlu0 1
        %928 = vperm.xlu0 %927, %v658
        %v929 = vpop.permute.xlu0 %928
        %931 = vset.pattern.permute.xlu0 1
        %932 = vperm.xlu0 %931, %v659
        %v933 = vpop.permute.xlu0 %932
        %935 = vset.pattern.permute.xlu0 1
        %936 = vperm.xlu0 %935, %v660
        %v937 = vpop.permute.xlu0 %936
        %939 = vset.pattern.permute.xlu0 1
        %940 = vperm.xlu0 %939, %v661
        %v941 = vpop.permute.xlu0 %940
        %943 = vset.pattern.permute.xlu0 1
        %944 = vperm.xlu0 %943, %v662
        %v945 = vpop.permute.xlu0 %944
        %947 = vset.pattern.permute.xlu0 1
        %948 = vperm.xlu0 %947, %v663
        %v949 = vpop.permute.xlu0 %948
        %951 = vset.pattern.permute.xlu0 1
        %952 = vperm.xlu0 %951, %v664
        %v953 = vpop.permute.xlu0 %952
        %955 = vset.pattern.permute.xlu0 1
        %956 = vperm.xlu0 %955, %v665
        %v957 = vpop.permute.xlu0 %956
        %959 = vset.pattern.permute.xlu0 1
        %960 = vperm.xlu0 %959, %v666
        %v961 = vpop.permute.xlu0 %960
        %963 = vset.pattern.permute.xlu0 1
        %964 = vperm.xlu0 %963, %v667
        %v965 = vpop.permute.xlu0 %964
        %967 = vset.pattern.permute.xlu0 1
        %968 = vperm.xlu0 %967, %v668
        %v969 = vpop.permute.xlu0 %968
        %971 = vset.pattern.permute.xlu0 1
        %972 = vperm.xlu0 %971, %v669
        %v973 = vpop.permute.xlu0 %972
        %975 = vset.pattern.permute.xlu0 1
        %976 = vperm.xlu0 %975, %v670
        %v977 = vpop.permute.xlu0 %976
        %979 = vset.pattern.permute.xlu0 1
        %980 = vperm.xlu0 %979, %v671
        %v981 = vpop.permute.xlu0 %980
        %983 = vset.pattern.permute.xlu0 1
        %984 = vperm.xlu0 %983, %v672
        %v985 = vpop.permute.xlu0 %984
        %987 = vset.pattern.permute.xlu0 1
        %988 = vperm.xlu0 %987, %v673
        %v989 = vpop.permute.xlu0 %988
        %991 = vset.pattern.permute.xlu0 1
        %992 = vperm.xlu0 %991, %v674
        %v993 = vpop.permute.xlu0 %992
        %995 = vset.pattern.permute.xlu0 1
        %996 = vperm.xlu0 %995, %v675
        %v997 = vpop.permute.xlu0 %996
        %999 = vset.pattern.permute.xlu0 1
        %1000 = vperm.xlu0 %999, %v676
        %v1001 = vpop.permute.xlu0 %1000
        %v1003 = vlaneseq
        %v1004 = vshrl.u32 %v1003, 7
        %v1005 = vsub.s32 0, %v1004
        %v1006 = vrot.slane %v874, %v1005
        %v1007 = vmul.f32 %v877, %v1006
        %v1008 = vmul.f32 %v881, %v1006
        %v1009 = vmul.f32 %v885, %v1006
        %v1010 = vmul.f32 %v889, %v1006
        %v1011 = vmul.f32 %v893, %v1006
        %v1012 = vmul.f32 %v897, %v1006
        %v1013 = vmul.f32 %v901, %v1006
        %v1014 = vmul.f32 %v905, %v1006
        %v1015 = vmul.f32 %v909, %v1006
        %v1016 = vmul.f32 %v913, %v1006
        %v1017 = vmul.f32 %v917, %v1006
        %v1018 = vmul.f32 %v921, %v1006
        %v1019 = vmul.f32 %v925, %v1006
        %v1020 = vmul.f32 %v929, %v1006
        %v1021 = vmul.f32 %v933, %v1006
        %v1022 = vmul.f32 %v937, %v1006
        %v1023 = vmul.f32 %v941, %v1006
        %v1024 = vmul.f32 %v945, %v1006
        %v1025 = vmul.f32 %v949, %v1006
        %v1026 = vmul.f32 %v953, %v1006
        %v1027 = vmul.f32 %v957, %v1006
        %v1028 = vmul.f32 %v961, %v1006
        %v1029 = vmul.f32 %v965, %v1006
        %v1030 = vmul.f32 %v969, %v1006
        %v1031 = vmul.f32 %v973, %v1006
        %v1032 = vmul.f32 %v977, %v1006
        %v1033 = vmul.f32 %v981, %v1006
        %v1034 = vmul.f32 %v985, %v1006
        %v1035 = vmul.f32 %v989, %v1006
        %v1036 = vmul.f32 %v993, %v1006
        %v1037 = vmul.f32 %v997, %v1006
        %v1038 = vmul.f32 %v1001, %v1006
        %v1039 = vadd.f32 %v842, %v1007
        %v1040 = vadd.f32 %v843, %v1008
        %v1041 = vadd.f32 %v844, %v1009
        %v1042 = vadd.f32 %v845, %v1010
        %v1043 = vadd.f32 %v846, %v1011
        %v1044 = vadd.f32 %v847, %v1012
        %v1045 = vadd.f32 %v848, %v1013
        %v1046 = vadd.f32 %v849, %v1014
        %v1047 = vadd.f32 %v850, %v1015
        %v1048 = vadd.f32 %v851, %v1016
        %v1049 = vadd.f32 %v852, %v1017
        %v1050 = vadd.f32 %v853, %v1018
        %v1051 = vadd.f32 %v854, %v1019
        %v1052 = vadd.f32 %v855, %v1020
        %v1053 = vadd.f32 %v856, %v1021
        %v1054 = vadd.f32 %v857, %v1022
        %v1055 = vadd.f32 %v858, %v1023
        %v1056 = vadd.f32 %v859, %v1024
        %v1057 = vadd.f32 %v860, %v1025
        %v1058 = vadd.f32 %v861, %v1026
        %v1059 = vadd.f32 %v862, %v1027
        %v1060 = vadd.f32 %v863, %v1028
        %v1061 = vadd.f32 %v864, %v1029
        %v1062 = vadd.f32 %v865, %v1030
        %v1063 = vadd.f32 %v866, %v1031
        %v1064 = vadd.f32 %v867, %v1032
        %v1065 = vadd.f32 %v868, %v1033
        %v1066 = vadd.f32 %v869, %v1034
        %v1067 = vadd.f32 %v870, %v1035
        %v1068 = vadd.f32 %v871, %v1036
        %v1069 = vadd.f32 %v872, %v1037
        %v1070 = vadd.f32 %v873, %v1038
        %v1071 = vld [vmem:[%s1 + $0x2] sm:$0x1]
        %1072 = vset.pattern.permute.xlu0 2
        %1073 = vperm.xlu0 %1072, %v645
        %v1074 = vpop.permute.xlu0 %1073
        %1076 = vset.pattern.permute.xlu0 2
        %1077 = vperm.xlu0 %1076, %v646
        %v1078 = vpop.permute.xlu0 %1077
        %1080 = vset.pattern.permute.xlu0 2
        %1081 = vperm.xlu0 %1080, %v647
        %v1082 = vpop.permute.xlu0 %1081
        %1084 = vset.pattern.permute.xlu0 2
        %1085 = vperm.xlu0 %1084, %v648
        %v1086 = vpop.permute.xlu0 %1085
        %1088 = vset.pattern.permute.xlu0 2
        %1089 = vperm.xlu0 %1088, %v649
        %v1090 = vpop.permute.xlu0 %1089
        %1092 = vset.pattern.permute.xlu0 2
        %1093 = vperm.xlu0 %1092, %v650
        %v1094 = vpop.permute.xlu0 %1093
        %1096 = vset.pattern.permute.xlu0 2
        %1097 = vperm.xlu0 %1096, %v651
        %v1098 = vpop.permute.xlu0 %1097
        %1100 = vset.pattern.permute.xlu0 2
        %1101 = vperm.xlu0 %1100, %v652
        %v1102 = vpop.permute.xlu0 %1101
        %1104 = vset.pattern.permute.xlu0 2
        %1105 = vperm.xlu0 %1104, %v653
        %v1106 = vpop.permute.xlu0 %1105
        %1108 = vset.pattern.permute.xlu0 2
        %1109 = vperm.xlu0 %1108, %v654
        %v1110 = vpop.permute.xlu0 %1109
        %1112 = vset.pattern.permute.xlu0 2
        %1113 = vperm.xlu0 %1112, %v655
        %v1114 = vpop.permute.xlu0 %1113
        %1116 = vset.pattern.permute.xlu0 2
        %1117 = vperm.xlu0 %1116, %v656
        %v1118 = vpop.permute.xlu0 %1117
        %1120 = vset.pattern.permute.xlu0 2
        %1121 = vperm.xlu0 %1120, %v657
        %v1122 = vpop.permute.xlu0 %1121
        %1124 = vset.pattern.permute.xlu0 2
        %1125 = vperm.xlu0 %1124, %v658
        %v1126 = vpop.permute.xlu0 %1125
        %1128 = vset.pattern.permute.xlu0 2
        %1129 = vperm.xlu0 %1128, %v659
        %v1130 = vpop.permute.xlu0 %1129
        %1132 = vset.pattern.permute.xlu0 2
        %1133 = vperm.xlu0 %1132, %v660
        %v1134 = vpop.permute.xlu0 %1133
        %1136 = vset.pattern.permute.xlu0 2
        %1137 = vperm.xlu0 %1136, %v661
        %v1138 = vpop.permute.xlu0 %1137
        %1140 = vset.pattern.permute.xlu0 2
        %1141 = vperm.xlu0 %1140, %v662
        %v1142 = vpop.permute.xlu0 %1141
        %1144 = vset.pattern.permute.xlu0 2
        %1145 = vperm.xlu0 %1144, %v663
        %v1146 = vpop.permute.xlu0 %1145
        %1148 = vset.pattern.permute.xlu0 2
        %1149 = vperm.xlu0 %1148, %v664
        %v1150 = vpop.permute.xlu0 %1149
        %1152 = vset.pattern.permute.xlu0 2
        %1153 = vperm.xlu0 %1152, %v665
        %v1154 = vpop.permute.xlu0 %1153
        %1156 = vset.pattern.permute.xlu0 2
        %1157 = vperm.xlu0 %1156, %v666
        %v1158 = vpop.permute.xlu0 %1157
        %1160 = vset.pattern.permute.xlu0 2
        %1161 = vperm.xlu0 %1160, %v667
        %v1162 = vpop.permute.xlu0 %1161
        %1164 = vset.pattern.permute.xlu0 2
        %1165 = vperm.xlu0 %1164, %v668
        %v1166 = vpop.permute.xlu0 %1165
        %1168 = vset.pattern.permute.xlu0 2
        %1169 = vperm.xlu0 %1168, %v669
        %v1170 = vpop.permute.xlu0 %1169
        %1172 = vset.pattern.permute.xlu0 2
        %1173 = vperm.xlu0 %1172, %v670
        %v1174 = vpop.permute.xlu0 %1173
        %1176 = vset.pattern.permute.xlu0 2
        %1177 = vperm.xlu0 %1176, %v671
        %v1178 = vpop.permute.xlu0 %1177
        %1180 = vset.pattern.permute.xlu0 2
        %1181 = vperm.xlu0 %1180, %v672
        %v1182 = vpop.permute.xlu0 %1181
        %1184 = vset.pattern.permute.xlu0 2
        %1185 = vperm.xlu0 %1184, %v673
        %v1186 = vpop.permute.xlu0 %1185
        %1188 = vset.pattern.permute.xlu0 2
        %1189 = vperm.xlu0 %1188, %v674
        %v1190 = vpop.permute.xlu0 %1189
        %1192 = vset.pattern.permute.xlu0 2
        %1193 = vperm.xlu0 %1192, %v675
        %v1194 = vpop.permute.xlu0 %1193
        %1196 = vset.pattern.permute.xlu0 2
        %1197 = vperm.xlu0 %1196, %v676
        %v1198 = vpop.permute.xlu0 %1197
        %v1200 = vlaneseq
        %v1201 = vshrl.u32 %v1200, 7
        %v1202 = vsub.s32 0, %v1201
        %v1203 = vrot.slane %v1071, %v1202
        %v1204 = vmul.f32 %v1074, %v1203
        %v1205 = vmul.f32 %v1078, %v1203
        %v1206 = vmul.f32 %v1082, %v1203
        %v1207 = vmul.f32 %v1086, %v1203
        %v1208 = vmul.f32 %v1090, %v1203
        %v1209 = vmul.f32 %v1094, %v1203
        %v1210 = vmul.f32 %v1098, %v1203
        %v1211 = vmul.f32 %v1102, %v1203
        %v1212 = vmul.f32 %v1106, %v1203
        %v1213 = vmul.f32 %v1110, %v1203
        %v1214 = vmul.f32 %v1114, %v1203
        %v1215 = vmul.f32 %v1118, %v1203
        %v1216 = vmul.f32 %v1122, %v1203
        %v1217 = vmul.f32 %v1126, %v1203
        %v1218 = vmul.f32 %v1130, %v1203
        %v1219 = vmul.f32 %v1134, %v1203
        %v1220 = vmul.f32 %v1138, %v1203
        %v1221 = vmul.f32 %v1142, %v1203
        %v1222 = vmul.f32 %v1146, %v1203
        %v1223 = vmul.f32 %v1150, %v1203
        %v1224 = vmul.f32 %v1154, %v1203
        %v1225 = vmul.f32 %v1158, %v1203
        %v1226 = vmul.f32 %v1162, %v1203
        %v1227 = vmul.f32 %v1166, %v1203
        %v1228 = vmul.f32 %v1170, %v1203
        %v1229 = vmul.f32 %v1174, %v1203
        %v1230 = vmul.f32 %v1178, %v1203
        %v1231 = vmul.f32 %v1182, %v1203
        %v1232 = vmul.f32 %v1186, %v1203
        %v1233 = vmul.f32 %v1190, %v1203
        %v1234 = vmul.f32 %v1194, %v1203
        %v1235 = vmul.f32 %v1198, %v1203
        %v1236 = vadd.f32 %v1039, %v1204
        %v1237 = vadd.f32 %v1040, %v1205
        %v1238 = vadd.f32 %v1041, %v1206
        %v1239 = vadd.f32 %v1042, %v1207
        %v1240 = vadd.f32 %v1043, %v1208
        %v1241 = vadd.f32 %v1044, %v1209
        %v1242 = vadd.f32 %v1045, %v1210
        %v1243 = vadd.f32 %v1046, %v1211
        %v1244 = vadd.f32 %v1047, %v1212
        %v1245 = vadd.f32 %v1048, %v1213
        %v1246 = vadd.f32 %v1049, %v1214
        %v1247 = vadd.f32 %v1050, %v1215
        %v1248 = vadd.f32 %v1051, %v1216
        %v1249 = vadd.f32 %v1052, %v1217
        %v1250 = vadd.f32 %v1053, %v1218
        %v1251 = vadd.f32 %v1054, %v1219
        %v1252 = vadd.f32 %v1055, %v1220
        %v1253 = vadd.f32 %v1056, %v1221
        %v1254 = vadd.f32 %v1057, %v1222
        %v1255 = vadd.f32 %v1058, %v1223
        %v1256 = vadd.f32 %v1059, %v1224
        %v1257 = vadd.f32 %v1060, %v1225
        %v1258 = vadd.f32 %v1061, %v1226
        %v1259 = vadd.f32 %v1062, %v1227
        %v1260 = vadd.f32 %v1063, %v1228
        %v1261 = vadd.f32 %v1064, %v1229
        %v1262 = vadd.f32 %v1065, %v1230
        %v1263 = vadd.f32 %v1066, %v1231
        %v1264 = vadd.f32 %v1067, %v1232
        %v1265 = vadd.f32 %v1068, %v1233
        %v1266 = vadd.f32 %v1069, %v1234
        %v1267 = vadd.f32 %v1070, %v1235
        %v1268 = vld [vmem:[%s2] sm:$0x1]
        %v1270 = vlaneseq
        %v1271 = vshrl.u32 %v1270, 7
        %v1272 = vsub.s32 0, %v1271
        %v1273 = vrot.slane %v1268, %v1272
        %v1275 = vmul.f32 %v1236, %v1273
        %v1276 = vmul.f32 %v1237, %v1273
        %v1277 = vmul.f32 %v1238, %v1273
        %v1278 = vmul.f32 %v1239, %v1273
        %v1279 = vmul.f32 %v1240, %v1273
        %v1280 = vmul.f32 %v1241, %v1273
        %v1281 = vmul.f32 %v1242, %v1273
        %v1282 = vmul.f32 %v1243, %v1273
        %v1283 = vmul.f32 %v1244, %v1273
        %v1284 = vmul.f32 %v1245, %v1273
        %v1285 = vmul.f32 %v1246, %v1273
        %v1286 = vmul.f32 %v1247, %v1273
        %v1287 = vmul.f32 %v1248, %v1273
        %v1288 = vmul.f32 %v1249, %v1273
        %v1289 = vmul.f32 %v1250, %v1273
        %v1290 = vmul.f32 %v1251, %v1273
        %v1291 = vmul.f32 %v1252, %v1273
        %v1292 = vmul.f32 %v1253, %v1273
        %v1293 = vmul.f32 %v1254, %v1273
        %v1294 = vmul.f32 %v1255, %v1273
        %v1295 = vmul.f32 %v1256, %v1273
        %v1296 = vmul.f32 %v1257, %v1273
        %v1297 = vmul.f32 %v1258, %v1273
        %v1298 = vmul.f32 %v1259, %v1273
        %v1299 = vmul.f32 %v1260, %v1273
        %v1300 = vmul.f32 %v1261, %v1273
        %v1301 = vmul.f32 %v1262, %v1273
        %v1302 = vmul.f32 %v1263, %v1273
        %v1303 = vmul.f32 %v1264, %v1273
        %v1304 = vmul.f32 %v1265, %v1273
        %v1305 = vmul.f32 %v1266, %v1273
        %v1306 = vmul.f32 %v1267, %v1273
        %v1307 = vld [vmem:[%s3] sm:$0x1]
        %v1309 = vlaneseq
        %v1310 = vshrl.u32 %v1309, 7
        %v1311 = vsub.s32 0, %v1310
        %v1312 = vrot.slane %v1307, %v1311
        %v1314 = vadd.f32 %v1275, %v1312
        %v1315 = vadd.f32 %v1276, %v1312
        %v1316 = vadd.f32 %v1277, %v1312
        %v1317 = vadd.f32 %v1278, %v1312
        %v1318 = vadd.f32 %v1279, %v1312
        %v1319 = vadd.f32 %v1280, %v1312
        %v1320 = vadd.f32 %v1281, %v1312
        %v1321 = vadd.f32 %v1282, %v1312
        %v1322 = vadd.f32 %v1283, %v1312
        %v1323 = vadd.f32 %v1284, %v1312
        %v1324 = vadd.f32 %v1285, %v1312
        %v1325 = vadd.f32 %v1286, %v1312
        %v1326 = vadd.f32 %v1287, %v1312
        %v1327 = vadd.f32 %v1288, %v1312
        %v1328 = vadd.f32 %v1289, %v1312
        %v1329 = vadd.f32 %v1290, %v1312
        %v1330 = vadd.f32 %v1291, %v1312
        %v1331 = vadd.f32 %v1292, %v1312
        %v1332 = vadd.f32 %v1293, %v1312
        %v1333 = vadd.f32 %v1294, %v1312
        %v1334 = vadd.f32 %v1295, %v1312
        %v1335 = vadd.f32 %v1296, %v1312
        %v1336 = vadd.f32 %v1297, %v1312
        %v1337 = vadd.f32 %v1298, %v1312
        %v1338 = vadd.f32 %v1299, %v1312
        %v1339 = vadd.f32 %v1300, %v1312
        %v1340 = vadd.f32 %v1301, %v1312
        %v1341 = vadd.f32 %v1302, %v1312
        %v1342 = vadd.f32 %v1303, %v1312
        %v1343 = vadd.f32 %v1304, %v1312
        %v1344 = vadd.f32 %v1305, %v1312
        %v1345 = vadd.f32 %v1306, %v1312
        %v1346 = vmax.f32 %v1314, 0.0
        %v1347 = vmax.f32 %v1315, 0.0
        %v1348 = vmax.f32 %v1316, 0.0
        %v1349 = vmax.f32 %v1317, 0.0
        %v1350 = vmax.f32 %v1318, 0.0
        %v1351 = vmax.f32 %v1319, 0.0
        %v1352 = vmax.f32 %v1320, 0.0
        %v1353 = vmax.f32 %v1321, 0.0
        %v1354 = vmax.f32 %v1322, 0.0
        %v1355 = vmax.f32 %v1323, 0.0
        %v1356 = vmax.f32 %v1324, 0.0
        %v1357 = vmax.f32 %v1325, 0.0
        %v1358 = vmax.f32 %v1326, 0.0
        %v1359 = vmax.f32 %v1327, 0.0
        %v1360 = vmax.f32 %v1328, 0.0
        %v1361 = vmax.f32 %v1329, 0.0
        %v1362 = vmax.f32 %v1330, 0.0
        %v1363 = vmax.f32 %v1331, 0.0
        %v1364 = vmax.f32 %v1332, 0.0
        %v1365 = vmax.f32 %v1333, 0.0
        %v1366 = vmax.f32 %v1334, 0.0
        %v1367 = vmax.f32 %v1335, 0.0
        %v1368 = vmax.f32 %v1336, 0.0
        %v1369 = vmax.f32 %v1337, 0.0
        %v1370 = vmax.f32 %v1338, 0.0
        %v1371 = vmax.f32 %v1339, 0.0
        %v1372 = vmax.f32 %v1340, 0.0
        %v1373 = vmax.f32 %v1341, 0.0
        %v1374 = vmax.f32 %v1342, 0.0
        %v1375 = vmax.f32 %v1343, 0.0
        %v1376 = vmax.f32 %v1344, 0.0
        %v1377 = vmax.f32 %v1345, 0.0
        %v1378 = vpack.c.bf16 %v1347, %v1346
        %v1379 = vpack.c.bf16 %v1349, %v1348
        %v1380 = vpack.c.bf16 %v1351, %v1350
        %v1381 = vpack.c.bf16 %v1353, %v1352
        %v1382 = vpack.c.bf16 %v1355, %v1354
        %v1383 = vpack.c.bf16 %v1357, %v1356
        %v1384 = vpack.c.bf16 %v1359, %v1358
        %v1385 = vpack.c.bf16 %v1361, %v1360
        %v1386 = vpack.c.bf16 %v1363, %v1362
        %v1387 = vpack.c.bf16 %v1365, %v1364
        %v1388 = vpack.c.bf16 %v1367, %v1366
        %v1389 = vpack.c.bf16 %v1369, %v1368
        %v1390 = vpack.c.bf16 %v1371, %v1370
        %v1391 = vpack.c.bf16 %v1373, %v1372
        %v1392 = vpack.c.bf16 %v1375, %v1374
        %v1393 = vpack.c.bf16 %v1377, %v1376
        %v1394 = vld [vmem:[#allocation3] sm:$0xf]
        %v1395 = vld [vmem:[#allocation3 + $0x4] sm:$0xf]
        %v1396 = vld [vmem:[#allocation3 + $0x8] sm:$0xf]
        %v1397 = vld [vmem:[#allocation3 + $0xc] sm:$0xf]
        %v1398 = vld [vmem:[#allocation3 + $0x10] sm:$0xf]
        %v1399 = vld [vmem:[#allocation3 + $0x14] sm:$0xf]
        %v1400 = vld [vmem:[#allocation3 + $0x18] sm:$0xf]
        %v1401 = vld [vmem:[#allocation3 + $0x1c] sm:$0xf]
        %v1402 = vld [vmem:[#allocation3 + $0x20] sm:$0xf]
        %v1403 = vld [vmem:[#allocation3 + $0x24] sm:$0xf]
        %v1404 = vld [vmem:[#allocation3 + $0x28] sm:$0xf]
        %v1405 = vld [vmem:[#allocation3 + $0x2c] sm:$0xf]
        %v1406 = vld [vmem:[#allocation3 + $0x30] sm:$0xf]
        %v1407 = vld [vmem:[#allocation3 + $0x34] sm:$0xf]
        %v1408 = vld [vmem:[#allocation3 + $0x38] sm:$0xf]
        %v1409 = vld [vmem:[#allocation3 + $0x3c] sm:$0xf]
        %v1426 = vunpack.c.l.b16 %v1394
        %v1427 = vunpack.c.l.b16 %v1395
        %v1428 = vunpack.c.l.b16 %v1396
        %v1429 = vunpack.c.l.b16 %v1397
        %v1430 = vunpack.c.l.b16 %v1398
        %v1431 = vunpack.c.l.b16 %v1399
        %v1432 = vunpack.c.l.b16 %v1400
        %v1433 = vunpack.c.l.b16 %v1401
        %v1434 = vunpack.c.l.b16 %v1402
        %v1435 = vunpack.c.l.b16 %v1403
        %v1436 = vunpack.c.l.b16 %v1404
        %v1437 = vunpack.c.l.b16 %v1405
        %v1438 = vunpack.c.l.b16 %v1406
        %v1439 = vunpack.c.l.b16 %v1407
        %v1440 = vunpack.c.l.b16 %v1408
        %v1441 = vunpack.c.l.b16 %v1409
        %v1442 = vpack.c.b16 %v1427, %v1426
        %v1443 = vpack.c.b16 %v1429, %v1428
        %v1444 = vpack.c.b16 %v1431, %v1430
        %v1445 = vpack.c.b16 %v1433, %v1432
        %v1446 = vpack.c.b16 %v1435, %v1434
        %v1447 = vpack.c.b16 %v1437, %v1436
        %v1448 = vpack.c.b16 %v1439, %v1438
        %v1449 = vpack.c.b16 %v1441, %v1440
        %1458 = vmatprep.subr.bf16.mxu0 0
        %1459 = vmatpush1.bf16.msra.mxu0 %v1442
        %1460 = vmatprep.subr.bf16.mxu0 0
        %1461 = vmatpush1.bf16.msra.mxu0 %v1443
        %1462 = vmatprep.subr.bf16.mxu0 0
        %1463 = vmatpush1.bf16.msra.mxu0 %v1444
        %1464 = vmatprep.subr.bf16.mxu0 0
        %1465 = vmatpush1.bf16.msra.mxu0 %v1445
        %1466 = vmatprep.subr.bf16.mxu0 0
        %1467 = vmatpush1.bf16.msra.mxu0 %v1446
        %1468 = vmatprep.subr.bf16.mxu0 0
        %1469 = vmatpush1.bf16.msra.mxu0 %v1447
        %1470 = vmatprep.subr.bf16.mxu0 0
        %1471 = vmatpush1.bf16.msra.mxu0 %v1448
        %1472 = vmatprep.subr.bf16.mxu0 0
        %1473 = vmatpush1.bf16.msra.mxu0 %v1449
        %1474 = vmatprep.subr.bf16.mxu0 0
        %1475 = vmatpush1.bf16.msra.mxu0 0
        %1476 = vmatprep.subr.bf16.mxu0 0
        %1477 = vmatpush1.bf16.msra.mxu0 0
        %1478 = vmatprep.subr.bf16.mxu0 0
        %1479 = vmatpush1.bf16.msra.mxu0 0
        %1480 = vmatprep.subr.bf16.mxu0 0
        %1481 = vmatpush1.bf16.msra.mxu0 0
        %1482 = vmatprep.subr.bf16.mxu0 0
        %1483 = vmatpush1.bf16.msra.mxu0 0
        %1484 = vmatprep.subr.bf16.mxu0 0
        %1485 = vmatpush1.bf16.msra.mxu0 0
        %1486 = vmatprep.subr.bf16.mxu0 0
        %1487 = vmatpush1.bf16.msra.mxu0 0
        %1488 = vmatprep.subr.bf16.mxu0 0
        %1489 = vmatpush1.bf16.msra.mxu0 0
        %1490 = vmatprep.mubr.bf16.mxu0 0
        %1491 = vmatmul.mubr.bf16.gmra.mrb[0].mxu0 %v1378
        %v1492 = vpop.f32.mrb[0].mxu0
        %v1493 = vadd.f32 0.0, %v1492
        %v1494 = vpop.f32.mrb[0].mxu0
        %v1495 = vpop.f32.mrb[0].mxu0
        %v1496 = vadd.f32 0.0, %v1495
        %v1497 = vpop.f32.mrb[0].mxu0
        %1498 = vmatprep.mubr.bf16.mxu0 0
        %1499 = vmatmul.mubr.bf16.gmra.mrb[0].mxu0 %v1379
        %v1500 = vpop.f32.mrb[0].mxu0
        %v1501 = vadd.f32 0.0, %v1500
        %v1502 = vpop.f32.mrb[0].mxu0
        %v1503 = vpop.f32.mrb[0].mxu0
        %v1504 = vadd.f32 0.0, %v1503
        %v1505 = vpop.f32.mrb[0].mxu0
        %1506 = vmatprep.mubr.bf16.mxu0 0
        %1507 = vmatmul.mubr.bf16.gmra.mrb[0].mxu0 %v1380
        %v1508 = vpop.f32.mrb[0].mxu0
        %v1509 = vadd.f32 0.0, %v1508
        %v1510 = vpop.f32.mrb[0].mxu0
        %v1511 = vpop.f32.mrb[0].mxu0
        %v1512 = vadd.f32 0.0, %v1511
        %v1513 = vpop.f32.mrb[0].mxu0
        %1514 = vmatprep.mubr.bf16.mxu0 0
        %1515 = vmatmul.mubr.bf16.gmra.mrb[0].mxu0 %v1381
        %v1516 = vpop.f32.mrb[0].mxu0
        %v1517 = vadd.f32 0.0, %v1516
        %v1518 = vpop.f32.mrb[0].mxu0
        %v1519 = vpop.f32.mrb[0].mxu0
        %v1520 = vadd.f32 0.0, %v1519
        %v1521 = vpop.f32.mrb[0].mxu0
        %1522 = vmatprep.mubr.bf16.mxu0 0
        %1523 = vmatmul.mubr.bf16.gmra.mrb[0].mxu0 %v1382
        %v1524 = vpop.f32.mrb[0].mxu0
        %v1525 = vadd.f32 0.0, %v1524
        %v1526 = vpop.f32.mrb[0].mxu0
        %v1527 = vpop.f32.mrb[0].mxu0
        %v1528 = vadd.f32 0.0, %v1527
        %v1529 = vpop.f32.mrb[0].mxu0
        %1530 = vmatprep.mubr.bf16.mxu0 0
        %1531 = vmatmul.mubr.bf16.gmra.mrb[0].mxu0 %v1383
        %v1532 = vpop.f32.mrb[0].mxu0
        %v1533 = vadd.f32 0.0, %v1532
        %v1534 = vpop.f32.mrb[0].mxu0
        %v1535 = vpop.f32.mrb[0].mxu0
        %v1536 = vadd.f32 0.0, %v1535
        %v1537 = vpop.f32.mrb[0].mxu0
        %1538 = vmatprep.mubr.bf16.mxu0 0
        %1539 = vmatmul.mubr.bf16.gmra.mrb[0].mxu0 %v1384
        %v1540 = vpop.f32.mrb[0].mxu0
        %v1541 = vadd.f32 0.0, %v1540
        %v1542 = vpop.f32.mrb[0].mxu0
        %v1543 = vpop.f32.mrb[0].mxu0
        %v1544 = vadd.f32 0.0, %v1543
        %v1545 = vpop.f32.mrb[0].mxu0
        %1546 = vmatprep.mubr.bf16.mxu0 0
        %1547 = vmatmul.mubr.bf16.gmra.mrb[0].mxu0 %v1385
        %v1548 = vpop.f32.mrb[0].mxu0
        %v1549 = vadd.f32 0.0, %v1548
        %v1550 = vpop.f32.mrb[0].mxu0
        %v1551 = vpop.f32.mrb[0].mxu0
        %v1552 = vadd.f32 0.0, %v1551
        %v1553 = vpop.f32.mrb[0].mxu0
        %1554 = vmatprep.mubr.bf16.mxu0 0
        %1555 = vmatmul.mubr.bf16.gmra.mrb[0].mxu0 %v1386
        %v1556 = vpop.f32.mrb[0].mxu0
        %v1557 = vadd.f32 0.0, %v1556
        %v1558 = vpop.f32.mrb[0].mxu0
        %v1559 = vpop.f32.mrb[0].mxu0
        %v1560 = vadd.f32 0.0, %v1559
        %v1561 = vpop.f32.mrb[0].mxu0
        %1562 = vmatprep.mubr.bf16.mxu0 0
        %1563 = vmatmul.mubr.bf16.gmra.mrb[0].mxu0 %v1387
        %v1564 = vpop.f32.mrb[0].mxu0
        %v1565 = vadd.f32 0.0, %v1564
        %v1566 = vpop.f32.mrb[0].mxu0
        %v1567 = vpop.f32.mrb[0].mxu0
        %v1568 = vadd.f32 0.0, %v1567
        %v1569 = vpop.f32.mrb[0].mxu0
        %1570 = vmatprep.mubr.bf16.mxu0 0
        %1571 = vmatmul.mubr.bf16.gmra.mrb[0].mxu0 %v1388
        %v1572 = vpop.f32.mrb[0].mxu0
        %v1573 = vadd.f32 0.0, %v1572
        %v1574 = vpop.f32.mrb[0].mxu0
        %v1575 = vpop.f32.mrb[0].mxu0
        %v1576 = vadd.f32 0.0, %v1575
        %v1577 = vpop.f32.mrb[0].mxu0
        %1578 = vmatprep.mubr.bf16.mxu0 0
        %1579 = vmatmul.mubr.bf16.gmra.mrb[0].mxu0 %v1389
        %v1580 = vpop.f32.mrb[0].mxu0
        %v1581 = vadd.f32 0.0, %v1580
        %v1582 = vpop.f32.mrb[0].mxu0
        %v1583 = vpop.f32.mrb[0].mxu0
        %v1584 = vadd.f32 0.0, %v1583
        %v1585 = vpop.f32.mrb[0].mxu0
        %1586 = vmatprep.mubr.bf16.mxu0 0
        %1587 = vmatmul.mubr.bf16.gmra.mrb[0].mxu0 %v1390
        %v1588 = vpop.f32.mrb[0].mxu0
        %v1589 = vadd.f32 0.0, %v1588
        %v1590 = vpop.f32.mrb[0].mxu0
        %v1591 = vpop.f32.mrb[0].mxu0
        %v1592 = vadd.f32 0.0, %v1591
        %v1593 = vpop.f32.mrb[0].mxu0
        %1594 = vmatprep.mubr.bf16.mxu0 0
        %1595 = vmatmul.mubr.bf16.gmra.mrb[0].mxu0 %v1391
        %v1596 = vpop.f32.mrb[0].mxu0
        %v1597 = vadd.f32 0.0, %v1596
        %v1598 = vpop.f32.mrb[0].mxu0
        %v1599 = vpop.f32.mrb[0].mxu0
        %v1600 = vadd.f32 0.0, %v1599
        %v1601 = vpop.f32.mrb[0].mxu0
        %1602 = vmatprep.mubr.bf16.mxu0 0
        %1603 = vmatmul.mubr.bf16.gmra.mrb[0].mxu0 %v1392
        %v1604 = vpop.f32.mrb[0].mxu0
        %v1605 = vadd.f32 0.0, %v1604
        %v1606 = vpop.f32.mrb[0].mxu0
        %v1607 = vpop.f32.mrb[0].mxu0
        %v1608 = vadd.f32 0.0, %v1607
        %v1609 = vpop.f32.mrb[0].mxu0
        %1610 = vmatprep.mubr.bf16.mxu0 0
        %1611 = vmatmul.mubr.bf16.gmra.mrb[0].mxu0 %v1393
        %v1612 = vpop.f32.mrb[0].mxu0
        %v1613 = vadd.f32 0.0, %v1612
        %v1614 = vpop.f32.mrb[0].mxu0
        %v1615 = vpop.f32.mrb[0].mxu0
        %v1616 = vadd.f32 0.0, %v1615
        %v1617 = vpop.f32.mrb[0].mxu0
        %1618 = vdwg.mxu0
        %v1619 = vld [vmem:[%s5] sm:$0x1]
        %v1621 = vlaneseq
        %v1622 = vshrl.u32 %v1621, 7
        %v1623 = vsub.s32 0, %v1622
        %v1624 = vrot.slane %v1619, %v1623
        %v1626 = vmul.f32 %v1493, %v1624
        %v1627 = vmul.f32 %v1496, %v1624
        %v1628 = vmul.f32 %v1501, %v1624
        %v1629 = vmul.f32 %v1504, %v1624
        %v1630 = vmul.f32 %v1509, %v1624
        %v1631 = vmul.f32 %v1512, %v1624
        %v1632 = vmul.f32 %v1517, %v1624
        %v1633 = vmul.f32 %v1520, %v1624
        %v1634 = vmul.f32 %v1525, %v1624
        %v1635 = vmul.f32 %v1528, %v1624
        %v1636 = vmul.f32 %v1533, %v1624
        %v1637 = vmul.f32 %v1536, %v1624
        %v1638 = vmul.f32 %v1541, %v1624
        %v1639 = vmul.f32 %v1544, %v1624
        %v1640 = vmul.f32 %v1549, %v1624
        %v1641 = vmul.f32 %v1552, %v1624
        %v1642 = vmul.f32 %v1557, %v1624
        %v1643 = vmul.f32 %v1560, %v1624
        %v1644 = vmul.f32 %v1565, %v1624
        %v1645 = vmul.f32 %v1568, %v1624
        %v1646 = vmul.f32 %v1573, %v1624
        %v1647 = vmul.f32 %v1576, %v1624
        %v1648 = vmul.f32 %v1581, %v1624
        %v1649 = vmul.f32 %v1584, %v1624
        %v1650 = vmul.f32 %v1589, %v1624
        %v1651 = vmul.f32 %v1592, %v1624
        %v1652 = vmul.f32 %v1597, %v1624
        %v1653 = vmul.f32 %v1600, %v1624
        %v1654 = vmul.f32 %v1605, %v1624
        %v1655 = vmul.f32 %v1608, %v1624
        %v1656 = vmul.f32 %v1613, %v1624
        %v1657 = vmul.f32 %v1616, %v1624
        %v1658 = vld [vmem:[%s6] sm:$0x1]
        %v1660 = vlaneseq
        %v1661 = vshrl.u32 %v1660, 7
        %v1662 = vsub.s32 0, %v1661
        %v1663 = vrot.slane %v1658, %v1662
        %v1665 = vadd.f32 %v1626, %v1663
        %v1666 = vadd.f32 %v1627, %v1663
        %v1667 = vadd.f32 %v1628, %v1663
        %v1668 = vadd.f32 %v1629, %v1663
        %v1669 = vadd.f32 %v1630, %v1663
        %v1670 = vadd.f32 %v1631, %v1663
        %v1671 = vadd.f32 %v1632, %v1663
        %v1672 = vadd.f32 %v1633, %v1663
        %v1673 = vadd.f32 %v1634, %v1663
        %v1674 = vadd.f32 %v1635, %v1663
        %v1675 = vadd.f32 %v1636, %v1663
        %v1676 = vadd.f32 %v1637, %v1663
        %v1677 = vadd.f32 %v1638, %v1663
        %v1678 = vadd.f32 %v1639, %v1663
        %v1679 = vadd.f32 %v1640, %v1663
        %v1680 = vadd.f32 %v1641, %v1663
        %v1681 = vadd.f32 %v1642, %v1663
        %v1682 = vadd.f32 %v1643, %v1663
        %v1683 = vadd.f32 %v1644, %v1663
        %v1684 = vadd.f32 %v1645, %v1663
        %v1685 = vadd.f32 %v1646, %v1663
        %v1686 = vadd.f32 %v1647, %v1663
        %v1687 = vadd.f32 %v1648, %v1663
        %v1688 = vadd.f32 %v1649, %v1663
        %v1689 = vadd.f32 %v1650, %v1663
        %v1690 = vadd.f32 %v1651, %v1663
        %v1691 = vadd.f32 %v1652, %v1663
        %v1692 = vadd.f32 %v1653, %v1663
        %v1693 = vadd.f32 %v1654, %v1663
        %v1694 = vadd.f32 %v1655, %v1663
        %v1695 = vadd.f32 %v1656, %v1663
        %v1696 = vadd.f32 %v1657, %v1663
        %v1697 = vmax.f32 %v1665, 0.0
        %v1698 = vmax.f32 %v1666, 0.0
        %v1699 = vmax.f32 %v1667, 0.0
        %v1700 = vmax.f32 %v1668, 0.0
        %v1701 = vmax.f32 %v1669, 0.0
        %v1702 = vmax.f32 %v1670, 0.0
        %v1703 = vmax.f32 %v1671, 0.0
        %v1704 = vmax.f32 %v1672, 0.0
        %v1705 = vmax.f32 %v1673, 0.0
        %v1706 = vmax.f32 %v1674, 0.0
        %v1707 = vmax.f32 %v1675, 0.0
        %v1708 = vmax.f32 %v1676, 0.0
        %v1709 = vmax.f32 %v1677, 0.0
        %v1710 = vmax.f32 %v1678, 0.0
        %v1711 = vmax.f32 %v1679, 0.0
        %v1712 = vmax.f32 %v1680, 0.0
        %v1713 = vmax.f32 %v1681, 0.0
        %v1714 = vmax.f32 %v1682, 0.0
        %v1715 = vmax.f32 %v1683, 0.0
        %v1716 = vmax.f32 %v1684, 0.0
        %v1717 = vmax.f32 %v1685, 0.0
        %v1718 = vmax.f32 %v1686, 0.0
        %v1719 = vmax.f32 %v1687, 0.0
        %v1720 = vmax.f32 %v1688, 0.0
        %v1721 = vmax.f32 %v1689, 0.0
        %v1722 = vmax.f32 %v1690, 0.0
        %v1723 = vmax.f32 %v1691, 0.0
        %v1724 = vmax.f32 %v1692, 0.0
        %v1725 = vmax.f32 %v1693, 0.0
        %v1726 = vmax.f32 %v1694, 0.0
        %v1727 = vmax.f32 %v1695, 0.0
        %v1728 = vmax.f32 %v1696, 0.0
        %v1729 = vpack.c.bf16 %v1698, %v1697
        %v1730 = vpack.c.bf16 %v1700, %v1699
        %v1731 = vpack.c.bf16 %v1702, %v1701
        %v1732 = vpack.c.bf16 %v1704, %v1703
        %v1733 = vpack.c.bf16 %v1706, %v1705
        %v1734 = vpack.c.bf16 %v1708, %v1707
        %v1735 = vpack.c.bf16 %v1710, %v1709
        %v1736 = vpack.c.bf16 %v1712, %v1711
        %v1737 = vpack.c.bf16 %v1714, %v1713
        %v1738 = vpack.c.bf16 %v1716, %v1715
        %v1739 = vpack.c.bf16 %v1718, %v1717
        %v1740 = vpack.c.bf16 %v1720, %v1719
        %v1741 = vpack.c.bf16 %v1722, %v1721
        %v1742 = vpack.c.bf16 %v1724, %v1723
        %v1743 = vpack.c.bf16 %v1726, %v1725
        %v1744 = vpack.c.bf16 %v1728, %v1727
        %v1745 = vld [vmem:[%s7] sm:$0xff]
        %v1746 = vld [vmem:[%s7 + $0x8] sm:$0xff]
        %v1747 = vld [vmem:[%s7 + $0x10] sm:$0xff]
        %v1748 = vld [vmem:[%s7 + $0x18] sm:$0xff]
        %v1749 = vld [vmem:[%s7 + $0x20] sm:$0xff]
        %v1750 = vld [vmem:[%s7 + $0x28] sm:$0xff]
        %v1751 = vld [vmem:[%s7 + $0x30] sm:$0xff]
        %v1752 = vld [vmem:[%s7 + $0x38] sm:$0xff]
        %v1753 = vld [vmem:[%s7 + $0x40] sm:$0xff]
        %v1754 = vld [vmem:[%s7 + $0x48] sm:$0xff]
        %v1755 = vld [vmem:[%s7 + $0x50] sm:$0xff]
        %v1756 = vld [vmem:[%s7 + $0x58] sm:$0xff]
        %v1757 = vld [vmem:[%s7 + $0x60] sm:$0xff]
        %v1758 = vld [vmem:[%s7 + $0x68] sm:$0xff]
        %v1759 = vld [vmem:[%s7 + $0x70] sm:$0xff]
        %v1760 = vld [vmem:[%s7 + $0x78] sm:$0xff]
        %v1777 = vunpack.c.l.b16 %v1745
        %v1778 = vunpack.c.h.b16 %v1745
        %v1779 = vunpack.c.l.b16 %v1746
        %v1780 = vunpack.c.h.b16 %v1746
        %v1781 = vunpack.c.l.b16 %v1747
        %v1782 = vunpack.c.h.b16 %v1747
        %v1783 = vunpack.c.l.b16 %v1748
        %v1784 = vunpack.c.h.b16 %v1748
        %v1785 = vunpack.c.l.b16 %v1749
        %v1786 = vunpack.c.h.b16 %v1749
        %v1787 = vunpack.c.l.b16 %v1750
        %v1788 = vunpack.c.h.b16 %v1750
        %v1789 = vunpack.c.l.b16 %v1751
        %v1790 = vunpack.c.h.b16 %v1751
        %v1791 = vunpack.c.l.b16 %v1752
        %v1792 = vunpack.c.h.b16 %v1752
        %v1793 = vunpack.c.l.b16 %v1753
        %v1794 = vunpack.c.h.b16 %v1753
        %v1795 = vunpack.c.l.b16 %v1754
        %v1796 = vunpack.c.h.b16 %v1754
        %v1797 = vunpack.c.l.b16 %v1755
        %v1798 = vunpack.c.h.b16 %v1755
        %v1799 = vunpack.c.l.b16 %v1756
        %v1800 = vunpack.c.h.b16 %v1756
        %v1801 = vunpack.c.l.b16 %v1757
        %v1802 = vunpack.c.h.b16 %v1757
        %v1803 = vunpack.c.l.b16 %v1758
        %v1804 = vunpack.c.h.b16 %v1758
        %v1805 = vunpack.c.l.b16 %v1759
        %v1806 = vunpack.c.h.b16 %v1759
        %v1807 = vunpack.c.l.b16 %v1760
        %v1808 = vunpack.c.h.b16 %v1760
        %v1809 = vpack.c.b16 %v1779, %v1777
        %v1810 = vpack.c.b16 %v1780, %v1778
        %v1811 = vpack.c.b16 %v1783, %v1781
        %v1812 = vpack.c.b16 %v1784, %v1782
        %v1813 = vpack.c.b16 %v1787, %v1785
        %v1814 = vpack.c.b16 %v1788, %v1786
        %v1815 = vpack.c.b16 %v1791, %v1789
        %v1816 = vpack.c.b16 %v1792, %v1790
        %v1817 = vpack.c.b16 %v1795, %v1793
        %v1818 = vpack.c.b16 %v1796, %v1794
        %v1819 = vpack.c.b16 %v1799, %v1797
        %v1820 = vpack.c.b16 %v1800, %v1798
        %v1821 = vpack.c.b16 %v1803, %v1801
        %v1822 = vpack.c.b16 %v1804, %v1802
        %v1823 = vpack.c.b16 %v1807, %v1805
        %v1824 = vpack.c.b16 %v1808, %v1806
        %1841 = vmatprep.subr.bf16.mxu0 %v1810
        %1842 = vmatpush1.bf16.msra.mxu0 %v1809
        %1843 = vmatprep.subr.bf16.mxu0 %v1812
        %1844 = vmatpush1.bf16.msra.mxu0 %v1811
        %1845 = vmatprep.subr.bf16.mxu0 %v1814
        %1846 = vmatpush1.bf16.msra.mxu0 %v1813
        %1847 = vmatprep.subr.bf16.mxu0 %v1816
        %1848 = vmatpush1.bf16.msra.mxu0 %v1815
        %1849 = vmatprep.subr.bf16.mxu0 %v1818
        %1850 = vmatpush1.bf16.msra.mxu0 %v1817
        %1851 = vmatprep.subr.bf16.mxu0 %v1820
        %1852 = vmatpush1.bf16.msra.mxu0 %v1819
        %1853 = vmatprep.subr.bf16.mxu0 %v1822
        %1854 = vmatpush1.bf16.msra.mxu0 %v1821
        %1855 = vmatprep.subr.bf16.mxu0 %v1824
        %1856 = vmatpush1.bf16.msra.mxu0 %v1823
        %1857 = vmatprep.subr.bf16.mxu0 0
        %1858 = vmatpush1.bf16.msra.mxu0 0
        %1859 = vmatprep.subr.bf16.mxu0 0
        %1860 = vmatpush1.bf16.msra.mxu0 0
        %1861 = vmatprep.subr.bf16.mxu0 0
        %1862 = vmatpush1.bf16.msra.mxu0 0
        %1863 = vmatprep.subr.bf16.mxu0 0
        %1864 = vmatpush1.bf16.msra.mxu0 0
        %1865 = vmatprep.subr.bf16.mxu0 0
        %1866 = vmatpush1.bf16.msra.mxu0 0
        %1867 = vmatprep.subr.bf16.mxu0 0
        %1868 = vmatpush1.bf16.msra.mxu0 0
        %1869 = vmatprep.subr.bf16.mxu0 0
        %1870 = vmatpush1.bf16.msra.mxu0 0
        %1871 = vmatprep.subr.bf16.mxu0 0
        %1872 = vmatpush1.bf16.msra.mxu0 0
        %1873 = vmatprep.mubr.bf16.mxu0 0
        %1874 = vmatmul.mubr.bf16.gmra.mrb[0].mxu0 %v1729
        %v1875 = vpop.f32.mrb[0].mxu0
        %v1876 = vadd.f32 0.0, %v1875
        %v1877 = vpop.f32.mrb[0].mxu0
        %v1878 = vadd.f32 0.0, %v1877
        %v1879 = vpop.f32.mrb[0].mxu0
        %v1880 = vadd.f32 0.0, %v1879
        %v1881 = vpop.f32.mrb[0].mxu0
        %v1882 = vadd.f32 0.0, %v1881
        %1883 = vmatprep.mubr.bf16.mxu0 0
        %1884 = vmatmul.mubr.bf16.gmra.mrb[0].mxu0 %v1730
        %v1885 = vpop.f32.mrb[0].mxu0
        %v1886 = vadd.f32 0.0, %v1885
        %v1887 = vpop.f32.mrb[0].mxu0
        %v1888 = vadd.f32 0.0, %v1887
        %v1889 = vpop.f32.mrb[0].mxu0
        %v1890 = vadd.f32 0.0, %v1889
        %v1891 = vpop.f32.mrb[0].mxu0
        %v1892 = vadd.f32 0.0, %v1891
        %1893 = vmatprep.mubr.bf16.mxu0 0
        %1894 = vmatmul.mubr.bf16.gmra.mrb[0].mxu0 %v1731
        %v1895 = vpop.f32.mrb[0].mxu0
        %v1896 = vadd.f32 0.0, %v1895
        %v1897 = vpop.f32.mrb[0].mxu0
        %v1898 = vadd.f32 0.0, %v1897
        %v1899 = vpop.f32.mrb[0].mxu0
        %v1900 = vadd.f32 0.0, %v1899
        %v1901 = vpop.f32.mrb[0].mxu0
        %v1902 = vadd.f32 0.0, %v1901
        %1903 = vmatprep.mubr.bf16.mxu0 0
        %1904 = vmatmul.mubr.bf16.gmra.mrb[0].mxu0 %v1732
        %v1905 = vpop.f32.mrb[0].mxu0
        %v1906 = vadd.f32 0.0, %v1905
        %v1907 = vpop.f32.mrb[0].mxu0
        %v1908 = vadd.f32 0.0, %v1907
        %v1909 = vpop.f32.mrb[0].mxu0
        %v1910 = vadd.f32 0.0, %v1909
        %v1911 = vpop.f32.mrb[0].mxu0
        %v1912 = vadd.f32 0.0, %v1911
        %1913 = vmatprep.mubr.bf16.mxu0 0
        %1914 = vmatmul.mubr.bf16.gmra.mrb[0].mxu0 %v1733
        %v1915 = vpop.f32.mrb[0].mxu0
        %v1916 = vadd.f32 0.0, %v1915
        %v1917 = vpop.f32.mrb[0].mxu0
        %v1918 = vadd.f32 0.0, %v1917
        %v1919 = vpop.f32.mrb[0].mxu0
        %v1920 = vadd.f32 0.0, %v1919
        %v1921 = vpop.f32.mrb[0].mxu0
        %v1922 = vadd.f32 0.0, %v1921
        %1923 = vmatprep.mubr.bf16.mxu0 0
        %1924 = vmatmul.mubr.bf16.gmra.mrb[0].mxu0 %v1734
        %v1925 = vpop.f32.mrb[0].mxu0
        %v1926 = vadd.f32 0.0, %v1925
        %v1927 = vpop.f32.mrb[0].mxu0
        %v1928 = vadd.f32 0.0, %v1927
        %v1929 = vpop.f32.mrb[0].mxu0
        %v1930 = vadd.f32 0.0, %v1929
        %v1931 = vpop.f32.mrb[0].mxu0
        %v1932 = vadd.f32 0.0, %v1931
        %1933 = vmatprep.mubr.bf16.mxu0 0
        %1934 = vmatmul.mubr.bf16.gmra.mrb[0].mxu0 %v1735
        %v1935 = vpop.f32.mrb[0].mxu0
        %v1936 = vadd.f32 0.0, %v1935
        %v1937 = vpop.f32.mrb[0].mxu0
        %v1938 = vadd.f32 0.0, %v1937
        %v1939 = vpop.f32.mrb[0].mxu0
        %v1940 = vadd.f32 0.0, %v1939
        %v1941 = vpop.f32.mrb[0].mxu0
        %v1942 = vadd.f32 0.0, %v1941
        %1943 = vmatprep.mubr.bf16.mxu0 0
        %1944 = vmatmul.mubr.bf16.gmra.mrb[0].mxu0 %v1736
        %v1945 = vpop.f32.mrb[0].mxu0
        %v1946 = vadd.f32 0.0, %v1945
        %v1947 = vpop.f32.mrb[0].mxu0
        %v1948 = vadd.f32 0.0, %v1947
        %v1949 = vpop.f32.mrb[0].mxu0
        %v1950 = vadd.f32 0.0, %v1949
        %v1951 = vpop.f32.mrb[0].mxu0
        %v1952 = vadd.f32 0.0, %v1951
        %1953 = vmatprep.mubr.bf16.mxu0 0
        %1954 = vmatmul.mubr.bf16.gmra.mrb[0].mxu0 %v1737
        %v1955 = vpop.f32.mrb[0].mxu0
        %v1956 = vadd.f32 0.0, %v1955
        %v1957 = vpop.f32.mrb[0].mxu0
        %v1958 = vadd.f32 0.0, %v1957
        %v1959 = vpop.f32.mrb[0].mxu0
        %v1960 = vadd.f32 0.0, %v1959
        %v1961 = vpop.f32.mrb[0].mxu0
        %v1962 = vadd.f32 0.0, %v1961
        %1963 = vmatprep.mubr.bf16.mxu0 0
        %1964 = vmatmul.mubr.bf16.gmra.mrb[0].mxu0 %v1738
        %v1965 = vpop.f32.mrb[0].mxu0
        %v1966 = vadd.f32 0.0, %v1965
        %v1967 = vpop.f32.mrb[0].mxu0
        %v1968 = vadd.f32 0.0, %v1967
        %v1969 = vpop.f32.mrb[0].mxu0
        %v1970 = vadd.f32 0.0, %v1969
        %v1971 = vpop.f32.mrb[0].mxu0
        %v1972 = vadd.f32 0.0, %v1971
        %1973 = vmatprep.mubr.bf16.mxu0 0
        %1974 = vmatmul.mubr.bf16.gmra.mrb[0].mxu0 %v1739
        %v1975 = vpop.f32.mrb[0].mxu0
        %v1976 = vadd.f32 0.0, %v1975
        %v1977 = vpop.f32.mrb[0].mxu0
        %v1978 = vadd.f32 0.0, %v1977
        %v1979 = vpop.f32.mrb[0].mxu0
        %v1980 = vadd.f32 0.0, %v1979
        %v1981 = vpop.f32.mrb[0].mxu0
        %v1982 = vadd.f32 0.0, %v1981
        %1983 = vmatprep.mubr.bf16.mxu0 0
        %1984 = vmatmul.mubr.bf16.gmra.mrb[0].mxu0 %v1740
        %v1985 = vpop.f32.mrb[0].mxu0
        %v1986 = vadd.f32 0.0, %v1985
        %v1987 = vpop.f32.mrb[0].mxu0
        %v1988 = vadd.f32 0.0, %v1987
        %v1989 = vpop.f32.mrb[0].mxu0
        %v1990 = vadd.f32 0.0, %v1989
        %v1991 = vpop.f32.mrb[0].mxu0
        %v1992 = vadd.f32 0.0, %v1991
        %1993 = vmatprep.mubr.bf16.mxu0 0
        %1994 = vmatmul.mubr.bf16.gmra.mrb[0].mxu0 %v1741
        %v1995 = vpop.f32.mrb[0].mxu0
        %v1996 = vadd.f32 0.0, %v1995
        %v1997 = vpop.f32.mrb[0].mxu0
        %v1998 = vadd.f32 0.0, %v1997
        %v1999 = vpop.f32.mrb[0].mxu0
        %v2000 = vadd.f32 0.0, %v1999
        %v2001 = vpop.f32.mrb[0].mxu0
        %v2002 = vadd.f32 0.0, %v2001
        %2003 = vmatprep.mubr.bf16.mxu0 0
        %2004 = vmatmul.mubr.bf16.gmra.mrb[0].mxu0 %v1742
        %v2005 = vpop.f32.mrb[0].mxu0
        %v2006 = vadd.f32 0.0, %v2005
        %v2007 = vpop.f32.mrb[0].mxu0
        %v2008 = vadd.f32 0.0, %v2007
        %v2009 = vpop.f32.mrb[0].mxu0
        %v2010 = vadd.f32 0.0, %v2009
        %v2011 = vpop.f32.mrb[0].mxu0
        %v2012 = vadd.f32 0.0, %v2011
        %2013 = vmatprep.mubr.bf16.mxu0 0
        %2014 = vmatmul.mubr.bf16.gmra.mrb[0].mxu0 %v1743
        %v2015 = vpop.f32.mrb[0].mxu0
        %v2016 = vadd.f32 0.0, %v2015
        %v2017 = vpop.f32.mrb[0].mxu0
        %v2018 = vadd.f32 0.0, %v2017
        %v2019 = vpop.f32.mrb[0].mxu0
        %v2020 = vadd.f32 0.0, %v2019
        %v2021 = vpop.f32.mrb[0].mxu0
        %v2022 = vadd.f32 0.0, %v2021
        %2023 = vmatprep.mubr.bf16.mxu0 0
        %2024 = vmatmul.mubr.bf16.gmra.mrb[0].mxu0 %v1744
        %v2025 = vpop.f32.mrb[0].mxu0
        %v2026 = vadd.f32 0.0, %v2025
        %v2027 = vpop.f32.mrb[0].mxu0
        %v2028 = vadd.f32 0.0, %v2027
        %v2029 = vpop.f32.mrb[0].mxu0
        %v2030 = vadd.f32 0.0, %v2029
        %v2031 = vpop.f32.mrb[0].mxu0
        %v2032 = vadd.f32 0.0, %v2031
        %2033 = vdwg.mxu0
        %v2034 = vpack.c.bf16 %v1880, %v1876
        %v2035 = vpack.c.bf16 %v1890, %v1886
        %v2036 = vpack.c.bf16 %v1900, %v1896
        %v2037 = vpack.c.bf16 %v1910, %v1906
        %v2038 = vpack.c.bf16 %v1920, %v1916
        %v2039 = vpack.c.bf16 %v1930, %v1926
        %v2040 = vpack.c.bf16 %v1940, %v1936
        %v2041 = vpack.c.bf16 %v1950, %v1946
        %v2042 = vpack.c.bf16 %v1960, %v1956
        %v2043 = vpack.c.bf16 %v1970, %v1966
        %v2044 = vpack.c.bf16 %v1980, %v1976
        %v2045 = vpack.c.bf16 %v1990, %v1986
        %v2046 = vpack.c.bf16 %v2000, %v1996
        %v2047 = vpack.c.bf16 %v2010, %v2006
        %v2048 = vpack.c.bf16 %v2020, %v2016
        %v2049 = vpack.c.bf16 %v2030, %v2026
        %v2050 = vld [vmem:[%s8] sm:$0x1]
        %v2052 = vlaneseq
        %v2053 = vshrl.u32 %v2052, 7
        %v2054 = vsub.s32 0, %v2053
        %v2055 = vrot.slane %v2050, %v2054
        %v2057 = vadd.f32 %v1878, %v2055
        %v2058 = vadd.f32 %v1882, %v2055
        %v2059 = vadd.f32 %v1888, %v2055
        %v2060 = vadd.f32 %v1892, %v2055
        %v2061 = vadd.f32 %v1898, %v2055
        %v2062 = vadd.f32 %v1902, %v2055
        %v2063 = vadd.f32 %v1908, %v2055
        %v2064 = vadd.f32 %v1912, %v2055
        %v2065 = vadd.f32 %v1918, %v2055
        %v2066 = vadd.f32 %v1922, %v2055
        %v2067 = vadd.f32 %v1928, %v2055
        %v2068 = vadd.f32 %v1932, %v2055
        %v2069 = vadd.f32 %v1938, %v2055
        %v2070 = vadd.f32 %v1942, %v2055
        %v2071 = vadd.f32 %v1948, %v2055
        %v2072 = vadd.f32 %v1952, %v2055
        %v2073 = vadd.f32 %v1958, %v2055
        %v2074 = vadd.f32 %v1962, %v2055
        %v2075 = vadd.f32 %v1968, %v2055
        %v2076 = vadd.f32 %v1972, %v2055
        %v2077 = vadd.f32 %v1978, %v2055
        %v2078 = vadd.f32 %v1982, %v2055
        %v2079 = vadd.f32 %v1988, %v2055
        %v2080 = vadd.f32 %v1992, %v2055
        %v2081 = vadd.f32 %v1998, %v2055
        %v2082 = vadd.f32 %v2002, %v2055
        %v2083 = vadd.f32 %v2008, %v2055
        %v2084 = vadd.f32 %v2012, %v2055
        %v2085 = vadd.f32 %v2018, %v2055
        %v2086 = vadd.f32 %v2022, %v2055
        %v2087 = vadd.f32 %v2028, %v2055
        %v2088 = vadd.f32 %v2032, %v2055
        %v2089 = vpack.c.bf16 %v2058, %v2057
        %v2090 = vpack.c.bf16 %v2060, %v2059
        %v2091 = vpack.c.bf16 %v2062, %v2061
        %v2092 = vpack.c.bf16 %v2064, %v2063
        %v2093 = vpack.c.bf16 %v2066, %v2065
        %v2094 = vpack.c.bf16 %v2068, %v2067
        %v2095 = vpack.c.bf16 %v2070, %v2069
        %v2096 = vpack.c.bf16 %v2072, %v2071
        %v2097 = vpack.c.bf16 %v2074, %v2073
        %v2098 = vpack.c.bf16 %v2076, %v2075
        %v2099 = vpack.c.bf16 %v2078, %v2077
        %v2100 = vpack.c.bf16 %v2080, %v2079
        %v2101 = vpack.c.bf16 %v2082, %v2081
        %v2102 = vpack.c.bf16 %v2084, %v2083
        %v2103 = vpack.c.bf16 %v2086, %v2085
        %v2104 = vpack.c.bf16 %v2088, %v2087
        %2105 = vmatprep.subr.bf16.mxu0 0
        %2106 = vmatpush1.bf16.xpose.msra.mxu0 %v2034
        %2107 = vmatprep.subr.bf16.mxu0 0
        %2108 = vmatpush1.bf16.xpose.msra.mxu0 %v2035
        %2109 = vmatprep.subr.bf16.mxu0 0
        %2110 = vmatpush1.bf16.xpose.msra.mxu0 %v2036
        %2111 = vmatprep.subr.bf16.mxu0 0
        %2112 = vmatpush1.bf16.xpose.msra.mxu0 %v2037
        %2113 = vmatprep.subr.bf16.mxu0 0
        %2114 = vmatpush1.bf16.xpose.msra.mxu0 %v2038
        %2115 = vmatprep.subr.bf16.mxu0 0
        %2116 = vmatpush1.bf16.xpose.msra.mxu0 %v2039
        %2117 = vmatprep.subr.bf16.mxu0 0
        %2118 = vmatpush1.bf16.xpose.msra.mxu0 %v2040
        %2119 = vmatprep.subr.bf16.mxu0 0
        %2120 = vmatpush1.bf16.xpose.msra.mxu0 %v2041
        %2121 = vmatprep.subr.bf16.mxu0 0
        %2122 = vmatpush1.bf16.xpose.msra.mxu0 0
        %2123 = vmatprep.subr.bf16.mxu0 0
        %2124 = vmatpush1.bf16.xpose.msra.mxu0 0
        %2125 = vmatprep.subr.bf16.mxu0 0
        %2126 = vmatpush1.bf16.xpose.msra.mxu0 0
        %2127 = vmatprep.subr.bf16.mxu0 0
        %2128 = vmatpush1.bf16.xpose.msra.mxu0 0
        %2129 = vmatprep.subr.bf16.mxu0 0
        %2130 = vmatpush1.bf16.xpose.msra.mxu0 0
        %2131 = vmatprep.subr.bf16.mxu0 0
        %2132 = vmatpush1.bf16.xpose.msra.mxu0 0
        %2133 = vmatprep.subr.bf16.mxu0 0
        %2134 = vmatpush1.bf16.xpose.msra.mxu0 0
        %2135 = vmatprep.subr.bf16.mxu0 0
        %2136 = vmatpush1.bf16.xpose.msra.mxu0 0
        %2137 = vmatprep.mubr.bf16.mxu0 0
        %2138 = vmatmul.mubr.bf16.gmra.mrb[0].mxu0 %v2034
        %v2139 = vpop.f32.mrb[0].mxu0
        %v2140 = vadd.f32 0.0, %v2139
        %v2141 = vpop.f32.mrb[0].mxu0
        %v2142 = vpop.f32.mrb[0].mxu0
        %v2143 = vadd.f32 0.0, %v2142
        %v2144 = vpop.f32.mrb[0].mxu0
        %2145 = vmatprep.mubr.bf16.mxu0 0
        %2146 = vmatmul.mubr.bf16.gmra.mrb[0].mxu0 %v2035
        %v2147 = vpop.f32.mrb[0].mxu0
        %v2148 = vadd.f32 0.0, %v2147
        %v2149 = vpop.f32.mrb[0].mxu0
        %v2150 = vpop.f32.mrb[0].mxu0
        %v2151 = vadd.f32 0.0, %v2150
        %v2152 = vpop.f32.mrb[0].mxu0
        %2153 = vmatprep.mubr.bf16.mxu0 0
        %2154 = vmatmul.mubr.bf16.gmra.mrb[0].mxu0 %v2036
        %v2155 = vpop.f32.mrb[0].mxu0
        %v2156 = vadd.f32 0.0, %v2155
        %v2157 = vpop.f32.mrb[0].mxu0
        %v2158 = vpop.f32.mrb[0].mxu0
        %v2159 = vadd.f32 0.0, %v2158
        %v2160 = vpop.f32.mrb[0].mxu0
        %2161 = vmatprep.mubr.bf16.mxu0 0
        %2162 = vmatmul.mubr.bf16.gmra.mrb[0].mxu0 %v2037
        %v2163 = vpop.f32.mrb[0].mxu0
        %v2164 = vadd.f32 0.0, %v2163
        %v2165 = vpop.f32.mrb[0].mxu0
        %v2166 = vpop.f32.mrb[0].mxu0
        %v2167 = vadd.f32 0.0, %v2166
        %v2168 = vpop.f32.mrb[0].mxu0
        %2169 = vmatprep.mubr.bf16.mxu0 0
        %2170 = vmatmul.mubr.bf16.gmra.mrb[0].mxu0 %v2038
        %v2171 = vpop.f32.mrb[0].mxu0
        %v2172 = vadd.f32 0.0, %v2171
        %v2173 = vpop.f32.mrb[0].mxu0
        %v2174 = vpop.f32.mrb[0].mxu0
        %v2175 = vadd.f32 0.0, %v2174
        %v2176 = vpop.f32.mrb[0].mxu0
        %2177 = vmatprep.mubr.bf16.mxu0 0
        %2178 = vmatmul.mubr.bf16.gmra.mrb[0].mxu0 %v2039
        %v2179 = vpop.f32.mrb[0].mxu0
        %v2180 = vadd.f32 0.0, %v2179
        %v2181 = vpop.f32.mrb[0].mxu0
        %v2182 = vpop.f32.mrb[0].mxu0
        %v2183 = vadd.f32 0.0, %v2182
        %v2184 = vpop.f32.mrb[0].mxu0
        %2185 = vmatprep.mubr.bf16.mxu0 0
        %2186 = vmatmul.mubr.bf16.gmra.mrb[0].mxu0 %v2040
        %v2187 = vpop.f32.mrb[0].mxu0
        %v2188 = vadd.f32 0.0, %v2187
        %v2189 = vpop.f32.mrb[0].mxu0
        %v2190 = vpop.f32.mrb[0].mxu0
        %v2191 = vadd.f32 0.0, %v2190
        %v2192 = vpop.f32.mrb[0].mxu0
        %2193 = vmatprep.mubr.bf16.mxu0 0
        %2194 = vmatmul.mubr.bf16.gmra.mrb[0].mxu0 %v2041
        %v2195 = vpop.f32.mrb[0].mxu0
        %v2196 = vadd.f32 0.0, %v2195
        %v2197 = vpop.f32.mrb[0].mxu0
        %v2198 = vpop.f32.mrb[0].mxu0
        %v2199 = vadd.f32 0.0, %v2198
        %v2200 = vpop.f32.mrb[0].mxu0
        %2201 = vdwg.mxu0
        %v2202 = vmax.f32 %v2140, %v2156
        %v2203 = vmax.f32 %v2143, %v2159
        %v2204 = vmax.f32 %v2148, %v2164
        %v2205 = vmax.f32 %v2151, %v2167
        %v2206 = vmax.f32 %v2202, %v2172
        %v2207 = vmax.f32 %v2203, %v2175
        %v2208 = vmax.f32 %v2204, %v2180
        %v2209 = vmax.f32 %v2205, %v2183
        %v2210 = vmax.f32 %v2206, %v2188
        %v2211 = vmax.f32 %v2207, %v2191
        %v2212 = vmax.f32 %v2208, %v2196
        %v2213 = vmax.f32 %v2209, %v2199
        %v2214 = vmax.f32 %v2210, %v2211
        %v2215 = vmax.f32 %v2212, %v2213
        %v2216 = vmax.f32 %v2214, %v2215
        %v2217 = vrot.slane %v2216, 4
        %v2218 = vmax.f32 %v2216, %v2217
        %v2219 = vrot.slane %v2218, 2
        %v2220 = vmax.f32 %v2218, %v2219
        %v2221 = vrot.slane %v2220, 1
        %v2222 = vmax.f32 %v2220, %v2221
        %v2223 = vsub.f32 %v2140, %v2222
        %v2224 = vsub.f32 %v2143, %v2222
        %v2225 = vsub.f32 %v2148, %v2222
        %v2226 = vsub.f32 %v2151, %v2222
        %v2227 = vsub.f32 %v2156, %v2222
        %v2228 = vsub.f32 %v2159, %v2222
        %v2229 = vsub.f32 %v2164, %v2222
        %v2230 = vsub.f32 %v2167, %v2222
        %v2231 = vsub.f32 %v2172, %v2222
        %v2232 = vsub.f32 %v2175, %v2222
        %v2233 = vsub.f32 %v2180, %v2222
        %v2234 = vsub.f32 %v2183, %v2222
        %v2235 = vsub.f32 %v2188, %v2222
        %v2236 = vsub.f32 %v2191, %v2222
        %v2237 = vsub.f32 %v2196, %v2222
        %v2238 = vsub.f32 %v2199, %v2222
        %v2239 = vmul.f32 %v2223, 1.442695
        %v2240 = vpow.pop %v2239
        %v2241 = vmul.f32 %v2224, 1.442695
        %v2242 = vpow.pop %v2241
        %v2243 = vmul.f32 %v2225, 1.442695
        %v2244 = vpow.pop %v2243
        %v2245 = vmul.f32 %v2226, 1.442695
        %v2246 = vpow.pop %v2245
        %v2247 = vmul.f32 %v2227, 1.442695
        %v2248 = vpow.pop %v2247
        %v2249 = vmul.f32 %v2228, 1.442695
        %v2250 = vpow.pop %v2249
        %v2251 = vmul.f32 %v2229, 1.442695
        %v2252 = vpow.pop %v2251
        %v2253 = vmul.f32 %v2230, 1.442695
        %v2254 = vpow.pop %v2253
        %v2255 = vmul.f32 %v2231, 1.442695
        %v2256 = vpow.pop %v2255
        %v2257 = vmul.f32 %v2232, 1.442695
        %v2258 = vpow.pop %v2257
        %v2259 = vmul.f32 %v2233, 1.442695
        %v2260 = vpow.pop %v2259
        %v2261 = vmul.f32 %v2234, 1.442695
        %v2262 = vpow.pop %v2261
        %v2263 = vmul.f32 %v2235, 1.442695
        %v2264 = vpow.pop %v2263
        %v2265 = vmul.f32 %v2236, 1.442695
        %v2266 = vpow.pop %v2265
        %v2267 = vmul.f32 %v2237, 1.442695
        %v2268 = vpow.pop %v2267
        %v2269 = vmul.f32 %v2238, 1.442695
        %v2270 = vpow.pop %v2269
        %v2271 = vadd.f32 %v2240, %v2242
        %v2272 = vadd.f32 %v2271, %v2244
        %v2273 = vadd.f32 %v2272, %v2246
        %v2274 = vadd.f32 %v2273, %v2248
        %v2275 = vadd.f32 %v2274, %v2250
        %v2276 = vadd.f32 %v2275, %v2252
        %v2277 = vadd.f32 %v2276, %v2254
        %v2278 = vadd.f32 %v2277, %v2256
        %v2279 = vadd.f32 %v2278, %v2258
        %v2280 = vadd.f32 %v2279, %v2260
        %v2281 = vadd.f32 %v2280, %v2262
        %v2282 = vadd.f32 %v2281, %v2264
        %v2283 = vadd.f32 %v2282, %v2266
        %v2284 = vadd.f32 %v2283, %v2268
        %v2285 = vadd.f32 %v2284, %v2270
        %v2286 = vrot.slane %v2285, 4
        %v2287 = vadd.f32 %v2285, %v2286
        %v2288 = vrot.slane %v2287, 2
        %v2289 = vadd.f32 %v2287, %v2288
        %v2290 = vrot.slane %v2289, 1
        %v2291 = vadd.f32 %v2289, %v2290
        %v2292 = vrcp.pop %v2291
        %v2293 = vmul.f32 %v2240, %v2292
        %v2294 = vmul.f32 %v2242, %v2292
        %v2295 = vmul.f32 %v2244, %v2292
        %v2296 = vmul.f32 %v2246, %v2292
        %v2297 = vmul.f32 %v2248, %v2292
        %v2298 = vmul.f32 %v2250, %v2292
        %v2299 = vmul.f32 %v2252, %v2292
        %v2300 = vmul.f32 %v2254, %v2292
        %v2301 = vmul.f32 %v2256, %v2292
        %v2302 = vmul.f32 %v2258, %v2292
        %v2303 = vmul.f32 %v2260, %v2292
        %v2304 = vmul.f32 %v2262, %v2292
        %v2305 = vmul.f32 %v2264, %v2292
        %v2306 = vmul.f32 %v2266, %v2292
        %v2307 = vmul.f32 %v2268, %v2292
        %v2308 = vmul.f32 %v2270, %v2292
        %v2309 = vpack.c.bf16 %v2294, %v2293
        %v2310 = vpack.c.bf16 %v2296, %v2295
        %v2311 = vpack.c.bf16 %v2298, %v2297
        %v2312 = vpack.c.bf16 %v2300, %v2299
        %v2313 = vpack.c.bf16 %v2302, %v2301
        %v2314 = vpack.c.bf16 %v2304, %v2303
        %v2315 = vpack.c.bf16 %v2306, %v2305
        %v2316 = vpack.c.bf16 %v2308, %v2307
        %2317 = vmatprep.subr.bf16.mxu0 0
        %2318 = vmatpush1.bf16.msra.mxu0 %v2089
        %2319 = vmatprep.subr.bf16.mxu0 0
        %2320 = vmatpush1.bf16.msra.mxu0 %v2090
        %2321 = vmatprep.subr.bf16.mxu0 0
        %2322 = vmatpush1.bf16.msra.mxu0 %v2091
        %2323 = vmatprep.subr.bf16.mxu0 0
        %2324 = vmatpush1.bf16.msra.mxu0 %v2092
        %2325 = vmatprep.subr.bf16.mxu0 0
        %2326 = vmatpush1.bf16.msra.mxu0 %v2093
        %2327 = vmatprep.subr.bf16.mxu0 0
        %2328 = vmatpush1.bf16.msra.mxu0 %v2094
        %2329 = vmatprep.subr.bf16.mxu0 0
        %2330 = vmatpush1.bf16.msra.mxu0 %v2095
        %2331 = vmatprep.subr.bf16.mxu0 0
        %2332 = vmatpush1.bf16.msra.mxu0 %v2096
        %2333 = vmatprep.subr.bf16.mxu0 0
        %2334 = vmatpush1.bf16.msra.mxu0 0
        %2335 = vmatprep.subr.bf16.mxu0 0
        %2336 = vmatpush1.bf16.msra.mxu0 0
        %2337 = vmatprep.subr.bf16.mxu0 0
        %2338 = vmatpush1.bf16.msra.mxu0 0
        %2339 = vmatprep.subr.bf16.mxu0 0
        %2340 = vmatpush1.bf16.msra.mxu0 0
        %2341 = vmatprep.subr.bf16.mxu0 0
        %2342 = vmatpush1.bf16.msra.mxu0 0
        %2343 = vmatprep.subr.bf16.mxu0 0
        %2344 = vmatpush1.bf16.msra.mxu0 0
        %2345 = vmatprep.subr.bf16.mxu0 0
        %2346 = vmatpush1.bf16.msra.mxu0 0
        %2347 = vmatprep.subr.bf16.mxu0 0
        %2348 = vmatpush1.bf16.msra.mxu0 0
        %2349 = vmatprep.mubr.bf16.mxu0 0
        %2350 = vmatmul.mubr.bf16.gmra.mrb[0].mxu0 %v2309
        %v2351 = vpop.f32.mrb[0].mxu0
        %v2352 = vadd.f32 0.0, %v2351
        %v2353 = vpop.f32.mrb[0].mxu0
        %v2354 = vpop.f32.mrb[0].mxu0
        %v2355 = vadd.f32 0.0, %v2354
        %v2356 = vpop.f32.mrb[0].mxu0
        %2357 = vmatprep.mubr.bf16.mxu0 0
        %2358 = vmatmul.mubr.bf16.gmra.mrb[0].mxu0 %v2310
        %v2359 = vpop.f32.mrb[0].mxu0
        %v2360 = vadd.f32 0.0, %v2359
        %v2361 = vpop.f32.mrb[0].mxu0
        %v2362 = vpop.f32.mrb[0].mxu0
        %v2363 = vadd.f32 0.0, %v2362
        %v2364 = vpop.f32.mrb[0].mxu0
        %2365 = vmatprep.mubr.bf16.mxu0 0
        %2366 = vmatmul.mubr.bf16.gmra.mrb[0].mxu0 %v2311
        %v2367 = vpop.f32.mrb[0].mxu0
        %v2368 = vadd.f32 0.0, %v2367
        %v2369 = vpop.f32.mrb[0].mxu0
        %v2370 = vpop.f32.mrb[0].mxu0
        %v2371 = vadd.f32 0.0, %v2370
        %v2372 = vpop.f32.mrb[0].mxu0
        %2373 = vmatprep.mubr.bf16.mxu0 0
        %2374 = vmatmul.mubr.bf16.gmra.mrb[0].mxu0 %v2312
        %v2375 = vpop.f32.mrb[0].mxu0
        %v2376 = vadd.f32 0.0, %v2375
        %v2377 = vpop.f32.mrb[0].mxu0
        %v2378 = vpop.f32.mrb[0].mxu0
        %v2379 = vadd.f32 0.0, %v2378
        %v2380 = vpop.f32.mrb[0].mxu0
        %2381 = vmatprep.mubr.bf16.mxu0 0
        %2382 = vmatmul.mubr.bf16.gmra.mrb[0].mxu0 %v2313
        %v2383 = vpop.f32.mrb[0].mxu0
        %v2384 = vadd.f32 0.0, %v2383
        %v2385 = vpop.f32.mrb[0].mxu0
        %v2386 = vpop.f32.mrb[0].mxu0
        %v2387 = vadd.f32 0.0, %v2386
        %v2388 = vpop.f32.mrb[0].mxu0
        %2389 = vmatprep.mubr.bf16.mxu0 0
        %2390 = vmatmul.mubr.bf16.gmra.mrb[0].mxu0 %v2314
        %v2391 = vpop.f32.mrb[0].mxu0
        %v2392 = vadd.f32 0.0, %v2391
        %v2393 = vpop.f32.mrb[0].mxu0
        %v2394 = vpop.f32.mrb[0].mxu0
        %v2395 = vadd.f32 0.0, %v2394
        %v2396 = vpop.f32.mrb[0].mxu0
        %2397 = vmatprep.mubr.bf16.mxu0 0
        %2398 = vmatmul.mubr.bf16.gmra.mrb[0].mxu0 %v2315
        %v2399 = vpop.f32.mrb[0].mxu0
        %v2400 = vadd.f32 0.0, %v2399
        %v2401 = vpop.f32.mrb[0].mxu0
        %v2402 = vpop.f32.mrb[0].mxu0
        %v2403 = vadd.f32 0.0, %v2402
        %v2404 = vpop.f32.mrb[0].mxu0
        %2405 = vmatprep.mubr.bf16.mxu0 0
        %2406 = vmatmul.mubr.bf16.gmra.mrb[0].mxu0 %v2316
        %v2407 = vpop.f32.mrb[0].mxu0
        %v2408 = vadd.f32 0.0, %v2407
        %v2409 = vpop.f32.mrb[0].mxu0
        %v2410 = vpop.f32.mrb[0].mxu0
        %v2411 = vadd.f32 0.0, %v2410
        %v2412 = vpop.f32.mrb[0].mxu0
        %2413 = vdwg.mxu0
        %2414 = vmatprep.subr.bf16.mxu0 0
        %2415 = vmatpush1.bf16.xpose.msra.mxu0 %v2042
        %2416 = vmatprep.subr.bf16.mxu0 0
        %2417 = vmatpush1.bf16.xpose.msra.mxu0 %v2043
        %2418 = vmatprep.subr.bf16.mxu0 0
        %2419 = vmatpush1.bf16.xpose.msra.mxu0 %v2044
        %2420 = vmatprep.subr.bf16.mxu0 0
        %2421 = vmatpush1.bf16.xpose.msra.mxu0 %v2045
        %2422 = vmatprep.subr.bf16.mxu0 0
        %2423 = vmatpush1.bf16.xpose.msra.mxu0 %v2046
        %2424 = vmatprep.subr.bf16.mxu0 0
        %2425 = vmatpush1.bf16.xpose.msra.mxu0 %v2047
        %2426 = vmatprep.subr.bf16.mxu0 0
        %2427 = vmatpush1.bf16.xpose.msra.mxu0 %v2048
        %2428 = vmatprep.subr.bf16.mxu0 0
        %2429 = vmatpush1.bf16.xpose.msra.mxu0 %v2049
        %2430 = vmatprep.subr.bf16.mxu0 0
        %2431 = vmatpush1.bf16.xpose.msra.mxu0 0
        %2432 = vmatprep.subr.bf16.mxu0 0
        %2433 = vmatpush1.bf16.xpose.msra.mxu0 0
        %2434 = vmatprep.subr.bf16.mxu0 0
        %2435 = vmatpush1.bf16.xpose.msra.mxu0 0
        %2436 = vmatprep.subr.bf16.mxu0 0
        %2437 = vmatpush1.bf16.xpose.msra.mxu0 0
        %2438 = vmatprep.subr.bf16.mxu0 0
        %2439 = vmatpush1.bf16.xpose.msra.mxu0 0
        %2440 = vmatprep.subr.bf16.mxu0 0
        %2441 = vmatpush1.bf16.xpose.msra.mxu0 0
        %2442 = vmatprep.subr.bf16.mxu0 0
        %2443 = vmatpush1.bf16.xpose.msra.mxu0 0
        %2444 = vmatprep.subr.bf16.mxu0 0
        %2445 = vmatpush1.bf16.xpose.msra.mxu0 0
        %2446 = vmatprep.mubr.bf16.mxu0 0
        %2447 = vmatmul.mubr.bf16.gmra.mrb[0].mxu0 %v2042
        %v2448 = vpop.f32.mrb[0].mxu0
        %v2449 = vadd.f32 0.0, %v2448
        %v2450 = vpop.f32.mrb[0].mxu0
        %v2451 = vpop.f32.mrb[0].mxu0
        %v2452 = vadd.f32 0.0, %v2451
        %v2453 = vpop.f32.mrb[0].mxu0
        %2454 = vmatprep.mubr.bf16.mxu0 0
        %2455 = vmatmul.mubr.bf16.gmra.mrb[0].mxu0 %v2043
        %v2456 = vpop.f32.mrb[0].mxu0
        %v2457 = vadd.f32 0.0, %v2456
        %v2458 = vpop.f32.mrb[0].mxu0
        %v2459 = vpop.f32.mrb[0].mxu0
        %v2460 = vadd.f32 0.0, %v2459
        %v2461 = vpop.f32.mrb[0].mxu0
        %2462 = vmatprep.mubr.bf16.mxu0 0
        %2463 = vmatmul.mubr.bf16.gmra.mrb[0].mxu0 %v2044
        %v2464 = vpop.f32.mrb[0].mxu0
        %v2465 = vadd.f32 0.0, %v2464
        %v2466 = vpop.f32.mrb[0].mxu0
        %v2467 = vpop.f32.mrb[0].mxu0
        %v2468 = vadd.f32 0.0, %v2467
        %v2469 = vpop.f32.mrb[0].mxu0
        %2470 = vmatprep.mubr.bf16.mxu0 0
        %2471 = vmatmul.mubr.bf16.gmra.mrb[0].mxu0 %v2045
        %v2472 = vpop.f32.mrb[0].mxu0
        %v2473 = vadd.f32 0.0, %v2472
        %v2474 = vpop.f32.mrb[0].mxu0
        %v2475 = vpop.f32.mrb[0].mxu0
        %v2476 = vadd.f32 0.0, %v2475
        %v2477 = vpop.f32.mrb[0].mxu0
        %2478 = vmatprep.mubr.bf16.mxu0 0
        %2479 = vmatmul.mubr.bf16.gmra.mrb[0].mxu0 %v2046
        %v2480 = vpop.f32.mrb[0].mxu0
        %v2481 = vadd.f32 0.0, %v2480
        %v2482 = vpop.f32.mrb[0].mxu0
        %v2483 = vpop.f32.mrb[0].mxu0
        %v2484 = vadd.f32 0.0, %v2483
        %v2485 = vpop.f32.mrb[0].mxu0
        %2486 = vmatprep.mubr.bf16.mxu0 0
        %2487 = vmatmul.mubr.bf16.gmra.mrb[0].mxu0 %v2047
        %v2488 = vpop.f32.mrb[0].mxu0
        %v2489 = vadd.f32 0.0, %v2488
        %v2490 = vpop.f32.mrb[0].mxu0
        %v2491 = vpop.f32.mrb[0].mxu0
        %v2492 = vadd.f32 0.0, %v2491
        %v2493 = vpop.f32.mrb[0].mxu0
        %2494 = vmatprep.mubr.bf16.mxu0 0
        %2495 = vmatmul.mubr.bf16.gmra.mrb[0].mxu0 %v2048
        %v2496 = vpop.f32.mrb[0].mxu0
        %v2497 = vadd.f32 0.0, %v2496
        %v2498 = vpop.f32.mrb[0].mxu0
        %v2499 = vpop.f32.mrb[0].mxu0
        %v2500 = vadd.f32 0.0, %v2499
        %v2501 = vpop.f32.mrb[0].mxu0
        %2502 = vmatprep.mubr.bf16.mxu0 0
        %2503 = vmatmul.mubr.bf16.gmra.mrb[0].mxu0 %v2049
        %v2504 = vpop.f32.mrb[0].mxu0
        %v2505 = vadd.f32 0.0, %v2504
        %v2506 = vpop.f32.mrb[0].mxu0
        %v2507 = vpop.f32.mrb[0].mxu0
        %v2508 = vadd.f32 0.0, %v2507
        %v2509 = vpop.f32.mrb[0].mxu0
        %2510 = vdwg.mxu0
        %v2511 = vmax.f32 %v2449, %v2465
        %v2512 = vmax.f32 %v2452, %v2468
        %v2513 = vmax.f32 %v2457, %v2473
        %v2514 = vmax.f32 %v2460, %v2476
        %v2515 = vmax.f32 %v2511, %v2481
        %v2516 = vmax.f32 %v2512, %v2484
        %v2517 = vmax.f32 %v2513, %v2489
        %v2518 = vmax.f32 %v2514, %v2492
        %v2519 = vmax.f32 %v2515, %v2497
        %v2520 = vmax.f32 %v2516, %v2500
        %v2521 = vmax.f32 %v2517, %v2505
        %v2522 = vmax.f32 %v2518, %v2508
        %v2523 = vmax.f32 %v2519, %v2520
        %v2524 = vmax.f32 %v2521, %v2522
        %v2525 = vmax.f32 %v2523, %v2524
        %v2526 = vrot.slane %v2525, 4
        %v2527 = vmax.f32 %v2525, %v2526
        %v2528 = vrot.slane %v2527, 2
        %v2529 = vmax.f32 %v2527, %v2528
        %v2530 = vrot.slane %v2529, 1
        %v2531 = vmax.f32 %v2529, %v2530
        %v2532 = vsub.f32 %v2449, %v2531
        %v2533 = vsub.f32 %v2452, %v2531
        %v2534 = vsub.f32 %v2457, %v2531
        %v2535 = vsub.f32 %v2460, %v2531
        %v2536 = vsub.f32 %v2465, %v2531
        %v2537 = vsub.f32 %v2468, %v2531
        %v2538 = vsub.f32 %v2473, %v2531
        %v2539 = vsub.f32 %v2476, %v2531
        %v2540 = vsub.f32 %v2481, %v2531
        %v2541 = vsub.f32 %v2484, %v2531
        %v2542 = vsub.f32 %v2489, %v2531
        %v2543 = vsub.f32 %v2492, %v2531
        %v2544 = vsub.f32 %v2497, %v2531
        %v2545 = vsub.f32 %v2500, %v2531
        %v2546 = vsub.f32 %v2505, %v2531
        %v2547 = vsub.f32 %v2508, %v2531
        %v2548 = vmul.f32 %v2532, 1.442695
        %v2549 = vpow.pop %v2548
        %v2550 = vmul.f32 %v2533, 1.442695
        %v2551 = vpow.pop %v2550
        %v2552 = vmul.f32 %v2534, 1.442695
        %v2553 = vpow.pop %v2552
        %v2554 = vmul.f32 %v2535, 1.442695
        %v2555 = vpow.pop %v2554
        %v2556 = vmul.f32 %v2536, 1.442695
        %v2557 = vpow.pop %v2556
        %v2558 = vmul.f32 %v2537, 1.442695
        %v2559 = vpow.pop %v2558
        %v2560 = vmul.f32 %v2538, 1.442695
        %v2561 = vpow.pop %v2560
        %v2562 = vmul.f32 %v2539, 1.442695
        %v2563 = vpow.pop %v2562
        %v2564 = vmul.f32 %v2540, 1.442695
        %v2565 = vpow.pop %v2564
        %v2566 = vmul.f32 %v2541, 1.442695
        %v2567 = vpow.pop %v2566
        %v2568 = vmul.f32 %v2542, 1.442695
        %v2569 = vpow.pop %v2568
        %v2570 = vmul.f32 %v2543, 1.442695
        %v2571 = vpow.pop %v2570
        %v2572 = vmul.f32 %v2544, 1.442695
        %v2573 = vpow.pop %v2572
        %v2574 = vmul.f32 %v2545, 1.442695
        %v2575 = vpow.pop %v2574
        %v2576 = vmul.f32 %v2546, 1.442695
        %v2577 = vpow.pop %v2576
        %v2578 = vmul.f32 %v2547, 1.442695
        %v2579 = vpow.pop %v2578
        %v2580 = vadd.f32 %v2549, %v2551
        %v2581 = vadd.f32 %v2580, %v2553
        %v2582 = vadd.f32 %v2581, %v2555
        %v2583 = vadd.f32 %v2582, %v2557
        %v2584 = vadd.f32 %v2583, %v2559
        %v2585 = vadd.f32 %v2584, %v2561
        %v2586 = vadd.f32 %v2585, %v2563
        %v2587 = vadd.f32 %v2586, %v2565
        %v2588 = vadd.f32 %v2587, %v2567
        %v2589 = vadd.f32 %v2588, %v2569
        %v2590 = vadd.f32 %v2589, %v2571
        %v2591 = vadd.f32 %v2590, %v2573
        %v2592 = vadd.f32 %v2591, %v2575
        %v2593 = vadd.f32 %v2592, %v2577
        %v2594 = vadd.f32 %v2593, %v2579
        %v2595 = vrot.slane %v2594, 4
        %v2596 = vadd.f32 %v2594, %v2595
        %v2597 = vrot.slane %v2596, 2
        %v2598 = vadd.f32 %v2596, %v2597
        %v2599 = vrot.slane %v2598, 1
        %v2600 = vadd.f32 %v2598, %v2599
        %v2601 = vrcp.pop %v2600
        %v2602 = vmul.f32 %v2549, %v2601
        %v2603 = vmul.f32 %v2551, %v2601
        %v2604 = vmul.f32 %v2553, %v2601
        %v2605 = vmul.f32 %v2555, %v2601
        %v2606 = vmul.f32 %v2557, %v2601
        %v2607 = vmul.f32 %v2559, %v2601
        %v2608 = vmul.f32 %v2561, %v2601
        %v2609 = vmul.f32 %v2563, %v2601
        %v2610 = vmul.f32 %v2565, %v2601
        %v2611 = vmul.f32 %v2567, %v2601
        %v2612 = vmul.f32 %v2569, %v2601
        %v2613 = vmul.f32 %v2571, %v2601
        %v2614 = vmul.f32 %v2573, %v2601
        %v2615 = vmul.f32 %v2575, %v2601
        %v2616 = vmul.f32 %v2577, %v2601
        %v2617 = vmul.f32 %v2579, %v2601
        %v2618 = vpack.c.bf16 %v2603, %v2602
        %v2619 = vpack.c.bf16 %v2605, %v2604
        %v2620 = vpack.c.bf16 %v2607, %v2606
        %v2621 = vpack.c.bf16 %v2609, %v2608
        %v2622 = vpack.c.bf16 %v2611, %v2610
        %v2623 = vpack.c.bf16 %v2613, %v2612
        %v2624 = vpack.c.bf16 %v2615, %v2614
        %v2625 = vpack.c.bf16 %v2617, %v2616
        %2626 = vmatprep.subr.bf16.mxu0 0
        %2627 = vmatpush1.bf16.msra.mxu0 %v2097
        %2628 = vmatprep.subr.bf16.mxu0 0
        %2629 = vmatpush1.bf16.msra.mxu0 %v2098
        %2630 = vmatprep.subr.bf16.mxu0 0
        %2631 = vmatpush1.bf16.msra.mxu0 %v2099
        %2632 = vmatprep.subr.bf16.mxu0 0
        %2633 = vmatpush1.bf16.msra.mxu0 %v2100
        %2634 = vmatprep.subr.bf16.mxu0 0
        %2635 = vmatpush1.bf16.msra.mxu0 %v2101
        %2636 = vmatprep.subr.bf16.mxu0 0
        %2637 = vmatpush1.bf16.msra.mxu0 %v2102
        %2638 = vmatprep.subr.bf16.mxu0 0
        %2639 = vmatpush1.bf16.msra.mxu0 %v2103
        %2640 = vmatprep.subr.bf16.mxu0 0
        %2641 = vmatpush1.bf16.msra.mxu0 %v2104
        %2642 = vmatprep.subr.bf16.mxu0 0
        %2643 = vmatpush1.bf16.msra.mxu0 0
        %2644 = vmatprep.subr.bf16.mxu0 0
        %2645 = vmatpush1.bf16.msra.mxu0 0
        %2646 = vmatprep.subr.bf16.mxu0 0
        %2647 = vmatpush1.bf16.msra.mxu0 0
        %2648 = vmatprep.subr.bf16.mxu0 0
        %2649 = vmatpush1.bf16.msra.mxu0 0
        %2650 = vmatprep.subr.bf16.mxu0 0
        %2651 = vmatpush1.bf16.msra.mxu0 0
        %2652 = vmatprep.subr.bf16.mxu0 0
        %2653 = vmatpush1.bf16.msra.mxu0 0
        %2654 = vmatprep.subr.bf16.mxu0 0
        %2655 = vmatpush1.bf16.msra.mxu0 0
        %2656 = vmatprep.subr.bf16.mxu0 0
        %2657 = vmatpush1.bf16.msra.mxu0 0
        %2658 = vmatprep.mubr.bf16.mxu0 0
        %2659 = vmatmul.mubr.bf16.gmra.mrb[0].mxu0 %v2618
        %v2660 = vpop.f32.mrb[0].mxu0
        %v2661 = vadd.f32 0.0, %v2660
        %v2662 = vpop.f32.mrb[0].mxu0
        %v2663 = vpop.f32.mrb[0].mxu0
        %v2664 = vadd.f32 0.0, %v2663
        %v2665 = vpop.f32.mrb[0].mxu0
        %2666 = vmatprep.mubr.bf16.mxu0 0
        %2667 = vmatmul.mubr.bf16.gmra.mrb[0].mxu0 %v2619
        %v2668 = vpop.f32.mrb[0].mxu0
        %v2669 = vadd.f32 0.0, %v2668
        %v2670 = vpop.f32.mrb[0].mxu0
        %v2671 = vpop.f32.mrb[0].mxu0
        %v2672 = vadd.f32 0.0, %v2671
        %v2673 = vpop.f32.mrb[0].mxu0
        %2674 = vmatprep.mubr.bf16.mxu0 0
        %2675 = vmatmul.mubr.bf16.gmra.mrb[0].mxu0 %v2620
        %v2676 = vpop.f32.mrb[0].mxu0
        %v2677 = vadd.f32 0.0, %v2676
        %v2678 = vpop.f32.mrb[0].mxu0
        %v2679 = vpop.f32.mrb[0].mxu0
        %v2680 = vadd.f32 0.0, %v2679
        %v2681 = vpop.f32.mrb[0].mxu0
        %2682 = vmatprep.mubr.bf16.mxu0 0
        %2683 = vmatmul.mubr.bf16.gmra.mrb[0].mxu0 %v2621
        %v2684 = vpop.f32.mrb[0].mxu0
        %v2685 = vadd.f32 0.0, %v2684
        %v2686 = vpop.f32.mrb[0].mxu0
        %v2687 = vpop.f32.mrb[0].mxu0
        %v2688 = vadd.f32 0.0, %v2687
        %v2689 = vpop.f32.mrb[0].mxu0
        %2690 = vmatprep.mubr.bf16.mxu0 0
        %2691 = vmatmul.mubr.bf16.gmra.mrb[0].mxu0 %v2622
        %v2692 = vpop.f32.mrb[0].mxu0
        %v2693 = vadd.f32 0.0, %v2692
        %v2694 = vpop.f32.mrb[0].mxu0
        %v2695 = vpop.f32.mrb[0].mxu0
        %v2696 = vadd.f32 0.0, %v2695
        %v2697 = vpop.f32.mrb[0].mxu0
        %2698 = vmatprep.mubr.bf16.mxu0 0
        %2699 = vmatmul.mubr.bf16.gmra.mrb[0].mxu0 %v2623
        %v2700 = vpop.f32.mrb[0].mxu0
        %v2701 = vadd.f32 0.0, %v2700
        %v2702 = vpop.f32.mrb[0].mxu0
        %v2703 = vpop.f32.mrb[0].mxu0
        %v2704 = vadd.f32 0.0, %v2703
        %v2705 = vpop.f32.mrb[0].mxu0
        %2706 = vmatprep.mubr.bf16.mxu0 0
        %2707 = vmatmul.mubr.bf16.gmra.mrb[0].mxu0 %v2624
        %v2708 = vpop.f32.mrb[0].mxu0
        %v2709 = vadd.f32 0.0, %v2708
        %v2710 = vpop.f32.mrb[0].mxu0
        %v2711 = vpop.f32.mrb[0].mxu0
        %v2712 = vadd.f32 0.0, %v2711
        %v2713 = vpop.f32.mrb[0].mxu0
        %2714 = vmatprep.mubr.bf16.mxu0 0
        %2715 = vmatmul.mubr.bf16.gmra.mrb[0].mxu0 %v2625
        %v2716 = vpop.f32.mrb[0].mxu0
        %v2717 = vadd.f32 0.0, %v2716
        %v2718 = vpop.f32.mrb[0].mxu0
        %v2719 = vpop.f32.mrb[0].mxu0
        %v2720 = vadd.f32 0.0, %v2719
        %v2721 = vpop.f32.mrb[0].mxu0
        %2722 = vdwg.mxu0
        %v2723 = vpack.c.bf16 %v2355, %v2352
        %v2724 = vpack.c.bf16 %v2363, %v2360
        %v2725 = vpack.c.bf16 %v2371, %v2368
        %v2726 = vpack.c.bf16 %v2379, %v2376
        %v2727 = vpack.c.bf16 %v2387, %v2384
        %v2728 = vpack.c.bf16 %v2395, %v2392
        %v2729 = vpack.c.bf16 %v2403, %v2400
        %v2730 = vpack.c.bf16 %v2411, %v2408
        %v2731 = vpack.c.bf16 %v2664, %v2661
        %v2732 = vpack.c.bf16 %v2672, %v2669
        %v2733 = vpack.c.bf16 %v2680, %v2677
        %v2734 = vpack.c.bf16 %v2688, %v2685
        %v2735 = vpack.c.bf16 %v2696, %v2693
        %v2736 = vpack.c.bf16 %v2704, %v2701
        %v2737 = vpack.c.bf16 %v2712, %v2709
        %v2738 = vpack.c.bf16 %v2720, %v2717
        %v2739 = vld [vmem:[#allocation6] sm:$0xf]
        %v2740 = vld [vmem:[#allocation6 + $0x4] sm:$0xf]
        %v2741 = vld [vmem:[#allocation6 + $0x8] sm:$0xf]
        %v2742 = vld [vmem:[#allocation6 + $0xc] sm:$0xf]
        %v2743 = vld [vmem:[#allocation6 + $0x10] sm:$0xf]
        %v2744 = vld [vmem:[#allocation6 + $0x14] sm:$0xf]
        %v2745 = vld [vmem:[#allocation6 + $0x18] sm:$0xf]
        %v2746 = vld [vmem:[#allocation6 + $0x1c] sm:$0xf]
        %v2747 = vld [vmem:[#allocation6 + $0x20] sm:$0xf]
        %v2748 = vld [vmem:[#allocation6 + $0x24] sm:$0xf]
        %v2749 = vld [vmem:[#allocation6 + $0x28] sm:$0xf]
        %v2750 = vld [vmem:[#allocation6 + $0x2c] sm:$0xf]
        %v2751 = vld [vmem:[#allocation6 + $0x30] sm:$0xf]
        %v2752 = vld [vmem:[#allocation6 + $0x34] sm:$0xf]
        %v2753 = vld [vmem:[#allocation6 + $0x38] sm:$0xf]
        %v2754 = vld [vmem:[#allocation6 + $0x3c] sm:$0xf]
        %v2755 = vld [vmem:[%s10] sm:$0x1]
        %v2757 = vlaneseq
        %v2758 = vshrl.u32 %v2757, 7
        %v2759 = vsub.s32 0, %v2758
        %v2760 = vrot.slane %v2755, %v2759
        %v2778 = vunpack.c.l.b16 %v2739
        %v2779 = vunpack.c.l.b16 %v2740
        %v2780 = vunpack.c.l.b16 %v2741
        %v2781 = vunpack.c.l.b16 %v2742
        %v2782 = vunpack.c.l.b16 %v2743
        %v2783 = vunpack.c.l.b16 %v2744
        %v2784 = vunpack.c.l.b16 %v2745
        %v2785 = vunpack.c.l.b16 %v2746
        %v2786 = vunpack.c.l.b16 %v2747
        %v2787 = vunpack.c.l.b16 %v2748
        %v2788 = vunpack.c.l.b16 %v2749
        %v2789 = vunpack.c.l.b16 %v2750
        %v2790 = vunpack.c.l.b16 %v2751
        %v2791 = vunpack.c.l.b16 %v2752
        %v2792 = vunpack.c.l.b16 %v2753
        %v2793 = vunpack.c.l.b16 %v2754
        %v2794 = vpack.c.b16 %v2779, %v2778
        %v2795 = vpack.c.b16 %v2781, %v2780
        %v2796 = vpack.c.b16 %v2783, %v2782
        %v2797 = vpack.c.b16 %v2785, %v2784
        %v2798 = vpack.c.b16 %v2787, %v2786
        %v2799 = vpack.c.b16 %v2789, %v2788
        %v2800 = vpack.c.b16 %v2791, %v2790
        %v2801 = vpack.c.b16 %v2793, %v2792
        %2810 = vmatprep.subr.bf16.mxu0 0
        %2811 = vmatpush1.bf16.msra.mxu0 %v2794
        %2812 = vmatprep.subr.bf16.mxu0 0
        %2813 = vmatpush1.bf16.msra.mxu0 %v2795
        %2814 = vmatprep.subr.bf16.mxu0 0
        %2815 = vmatpush1.bf16.msra.mxu0 %v2796
        %2816 = vmatprep.subr.bf16.mxu0 0
        %2817 = vmatpush1.bf16.msra.mxu0 %v2797
        %2818 = vmatprep.subr.bf16.mxu0 0
        %2819 = vmatpush1.bf16.msra.mxu0 %v2798
        %2820 = vmatprep.subr.bf16.mxu0 0
        %2821 = vmatpush1.bf16.msra.mxu0 %v2799
        %2822 = vmatprep.subr.bf16.mxu0 0
        %2823 = vmatpush1.bf16.msra.mxu0 %v2800
        %2824 = vmatprep.subr.bf16.mxu0 0
        %2825 = vmatpush1.bf16.msra.mxu0 %v2801
        %2826 = vmatprep.subr.bf16.mxu0 0
        %2827 = vmatpush1.bf16.msra.mxu0 0
        %2828 = vmatprep.subr.bf16.mxu0 0
        %2829 = vmatpush1.bf16.msra.mxu0 0
        %2830 = vmatprep.subr.bf16.mxu0 0
        %2831 = vmatpush1.bf16.msra.mxu0 0
        %2832 = vmatprep.subr.bf16.mxu0 0
        %2833 = vmatpush1.bf16.msra.mxu0 0
        %2834 = vmatprep.subr.bf16.mxu0 0
        %2835 = vmatpush1.bf16.msra.mxu0 0
        %2836 = vmatprep.subr.bf16.mxu0 0
        %2837 = vmatpush1.bf16.msra.mxu0 0
        %2838 = vmatprep.subr.bf16.mxu0 0
        %2839 = vmatpush1.bf16.msra.mxu0 0
        %2840 = vmatprep.subr.bf16.mxu0 0
        %2841 = vmatpush1.bf16.msra.mxu0 0
        %2842 = vmatprep.mubr.bf16.mxu0 0
        %2843 = vmatmul.mubr.bf16.gmra.mrb[0].mxu0 %v2723
        %v2844 = vpop.f32.mrb[0].mxu0
        %v2845 = vadd.f32 %v2760, %v2844
        %v2846 = vpop.f32.mrb[0].mxu0
        %v2847 = vpop.f32.mrb[0].mxu0
        %v2848 = vadd.f32 %v2760, %v2847
        %v2849 = vpop.f32.mrb[0].mxu0
        %2850 = vmatprep.mubr.bf16.mxu0 0
        %2851 = vmatmul.mubr.bf16.gmra.mrb[0].mxu0 %v2724
        %v2852 = vpop.f32.mrb[0].mxu0
        %v2853 = vadd.f32 %v2760, %v2852
        %v2854 = vpop.f32.mrb[0].mxu0
        %v2855 = vpop.f32.mrb[0].mxu0
        %v2856 = vadd.f32 %v2760, %v2855
        %v2857 = vpop.f32.mrb[0].mxu0
        %2858 = vmatprep.mubr.bf16.mxu0 0
        %2859 = vmatmul.mubr.bf16.gmra.mrb[0].mxu0 %v2725
        %v2860 = vpop.f32.mrb[0].mxu0
        %v2861 = vadd.f32 %v2760, %v2860
        %v2862 = vpop.f32.mrb[0].mxu0
        %v2863 = vpop.f32.mrb[0].mxu0
        %v2864 = vadd.f32 %v2760, %v2863
        %v2865 = vpop.f32.mrb[0].mxu0
        %2866 = vmatprep.mubr.bf16.mxu0 0
        %2867 = vmatmul.mubr.bf16.gmra.mrb[0].mxu0 %v2726
        %v2868 = vpop.f32.mrb[0].mxu0
        %v2869 = vadd.f32 %v2760, %v2868
        %v2870 = vpop.f32.mrb[0].mxu0
        %v2871 = vpop.f32.mrb[0].mxu0
        %v2872 = vadd.f32 %v2760, %v2871
        %v2873 = vpop.f32.mrb[0].mxu0
        %2874 = vmatprep.mubr.bf16.mxu0 0
        %2875 = vmatmul.mubr.bf16.gmra.mrb[0].mxu0 %v2727
        %v2876 = vpop.f32.mrb[0].mxu0
        %v2877 = vadd.f32 %v2760, %v2876
        %v2878 = vpop.f32.mrb[0].mxu0
        %v2879 = vpop.f32.mrb[0].mxu0
        %v2880 = vadd.f32 %v2760, %v2879
        %v2881 = vpop.f32.mrb[0].mxu0
        %2882 = vmatprep.mubr.bf16.mxu0 0
        %2883 = vmatmul.mubr.bf16.gmra.mrb[0].mxu0 %v2728
        %v2884 = vpop.f32.mrb[0].mxu0
        %v2885 = vadd.f32 %v2760, %v2884
        %v2886 = vpop.f32.mrb[0].mxu0
        %v2887 = vpop.f32.mrb[0].mxu0
        %v2888 = vadd.f32 %v2760, %v2887
        %v2889 = vpop.f32.mrb[0].mxu0
        %2890 = vmatprep.mubr.bf16.mxu0 0
        %2891 = vmatmul.mubr.bf16.gmra.mrb[0].mxu0 %v2729
        %v2892 = vpop.f32.mrb[0].mxu0
        %v2893 = vadd.f32 %v2760, %v2892
        %v2894 = vpop.f32.mrb[0].mxu0
        %v2895 = vpop.f32.mrb[0].mxu0
        %v2896 = vadd.f32 %v2760, %v2895
        %v2897 = vpop.f32.mrb[0].mxu0
        %2898 = vmatprep.mubr.bf16.mxu0 0
        %2899 = vmatmul.mubr.bf16.gmra.mrb[0].mxu0 %v2730
        %v2900 = vpop.f32.mrb[0].mxu0
        %v2901 = vadd.f32 %v2760, %v2900
        %v2902 = vpop.f32.mrb[0].mxu0
        %v2903 = vpop.f32.mrb[0].mxu0
        %v2904 = vadd.f32 %v2760, %v2903
        %v2905 = vpop.f32.mrb[0].mxu0
        %2906 = vmatprep.mubr.bf16.mxu0 0
        %2907 = vmatmul.mubr.bf16.gmra.mrb[0].mxu0 %v2731
        %v2908 = vpop.f32.mrb[0].mxu0
        %v2909 = vadd.f32 %v2760, %v2908
        %v2910 = vpop.f32.mrb[0].mxu0
        %v2911 = vpop.f32.mrb[0].mxu0
        %v2912 = vadd.f32 %v2760, %v2911
        %v2913 = vpop.f32.mrb[0].mxu0
        %2914 = vmatprep.mubr.bf16.mxu0 0
        %2915 = vmatmul.mubr.bf16.gmra.mrb[0].mxu0 %v2732
        %v2916 = vpop.f32.mrb[0].mxu0
        %v2917 = vadd.f32 %v2760, %v2916
        %v2918 = vpop.f32.mrb[0].mxu0
        %v2919 = vpop.f32.mrb[0].mxu0
        %v2920 = vadd.f32 %v2760, %v2919
        %v2921 = vpop.f32.mrb[0].mxu0
        %2922 = vmatprep.mubr.bf16.mxu0 0
        %2923 = vmatmul.mubr.bf16.gmra.mrb[0].mxu0 %v2733
        %v2924 = vpop.f32.mrb[0].mxu0
        %v2925 = vadd.f32 %v2760, %v2924
        %v2926 = vpop.f32.mrb[0].mxu0
        %v2927 = vpop.f32.mrb[0].mxu0
        %v2928 = vadd.f32 %v2760, %v2927
        %v2929 = vpop.f32.mrb[0].mxu0
        %2930 = vmatprep.mubr.bf16.mxu0 0
        %2931 = vmatmul.mubr.bf16.gmra.mrb[0].mxu0 %v2734
        %v2932 = vpop.f32.mrb[0].mxu0
        %v2933 = vadd.f32 %v2760, %v2932
        %v2934 = vpop.f32.mrb[0].mxu0
        %v2935 = vpop.f32.mrb[0].mxu0
        %v2936 = vadd.f32 %v2760, %v2935
        %v2937 = vpop.f32.mrb[0].mxu0
        %2938 = vmatprep.mubr.bf16.mxu0 0
        %2939 = vmatmul.mubr.bf16.gmra.mrb[0].mxu0 %v2735
        %v2940 = vpop.f32.mrb[0].mxu0
        %v2941 = vadd.f32 %v2760, %v2940
        %v2942 = vpop.f32.mrb[0].mxu0
        %v2943 = vpop.f32.mrb[0].mxu0
        %v2944 = vadd.f32 %v2760, %v2943
        %v2945 = vpop.f32.mrb[0].mxu0
        %2946 = vmatprep.mubr.bf16.mxu0 0
        %2947 = vmatmul.mubr.bf16.gmra.mrb[0].mxu0 %v2736
        %v2948 = vpop.f32.mrb[0].mxu0
        %v2949 = vadd.f32 %v2760, %v2948
        %v2950 = vpop.f32.mrb[0].mxu0
        %v2951 = vpop.f32.mrb[0].mxu0
        %v2952 = vadd.f32 %v2760, %v2951
        %v2953 = vpop.f32.mrb[0].mxu0
        %2954 = vmatprep.mubr.bf16.mxu0 0
        %2955 = vmatmul.mubr.bf16.gmra.mrb[0].mxu0 %v2737
        %v2956 = vpop.f32.mrb[0].mxu0
        %v2957 = vadd.f32 %v2760, %v2956
        %v2958 = vpop.f32.mrb[0].mxu0
        %v2959 = vpop.f32.mrb[0].mxu0
        %v2960 = vadd.f32 %v2760, %v2959
        %v2961 = vpop.f32.mrb[0].mxu0
        %2962 = vmatprep.mubr.bf16.mxu0 0
        %2963 = vmatmul.mubr.bf16.gmra.mrb[0].mxu0 %v2738
        %v2964 = vpop.f32.mrb[0].mxu0
        %v2965 = vadd.f32 %v2760, %v2964
        %v2966 = vpop.f32.mrb[0].mxu0
        %v2967 = vpop.f32.mrb[0].mxu0
        %v2968 = vadd.f32 %v2760, %v2967
        %v2969 = vpop.f32.mrb[0].mxu0
        %2970 = vdwg.mxu0
        %v2971 = vld [vmem:[%s11] sm:$0x1]
        %v2973 = vlaneseq
        %v2974 = vshrl.u32 %v2973, 7
        %v2975 = vsub.s32 0, %v2974
        %v2976 = vrot.slane %v2971, %v2975
        %v2978 = vmul.f32 %v2845, %v2976
        %v2979 = vmul.f32 %v2848, %v2976
        %v2980 = vmul.f32 %v2853, %v2976
        %v2981 = vmul.f32 %v2856, %v2976
        %v2982 = vmul.f32 %v2861, %v2976
        %v2983 = vmul.f32 %v2864, %v2976
        %v2984 = vmul.f32 %v2869, %v2976
        %v2985 = vmul.f32 %v2872, %v2976
        %v2986 = vmul.f32 %v2877, %v2976
        %v2987 = vmul.f32 %v2880, %v2976
        %v2988 = vmul.f32 %v2885, %v2976
        %v2989 = vmul.f32 %v2888, %v2976
        %v2990 = vmul.f32 %v2893, %v2976
        %v2991 = vmul.f32 %v2896, %v2976
        %v2992 = vmul.f32 %v2901, %v2976
        %v2993 = vmul.f32 %v2904, %v2976
        %v2994 = vmul.f32 %v2909, %v2976
        %v2995 = vmul.f32 %v2912, %v2976
        %v2996 = vmul.f32 %v2917, %v2976
        %v2997 = vmul.f32 %v2920, %v2976
        %v2998 = vmul.f32 %v2925, %v2976
        %v2999 = vmul.f32 %v2928, %v2976
        %v3000 = vmul.f32 %v2933, %v2976
        %v3001 = vmul.f32 %v2936, %v2976
        %v3002 = vmul.f32 %v2941, %v2976
        %v3003 = vmul.f32 %v2944, %v2976
        %v3004 = vmul.f32 %v2949, %v2976
        %v3005 = vmul.f32 %v2952, %v2976
        %v3006 = vmul.f32 %v2957, %v2976
        %v3007 = vmul.f32 %v2960, %v2976
        %v3008 = vmul.f32 %v2965, %v2976
        %v3009 = vmul.f32 %v2968, %v2976
        %v3010 = vld [vmem:[%s12] sm:$0x1]
        %v3012 = vlaneseq
        %v3013 = vshrl.u32 %v3012, 7
        %v3014 = vsub.s32 0, %v3013
        %v3015 = vrot.slane %v3010, %v3014
        %v3017 = vadd.f32 %v2978, %v3015
        %v3018 = vadd.f32 %v2979, %v3015
        %v3019 = vadd.f32 %v2980, %v3015
        %v3020 = vadd.f32 %v2981, %v3015
        %v3021 = vadd.f32 %v2982, %v3015
        %v3022 = vadd.f32 %v2983, %v3015
        %v3023 = vadd.f32 %v2984, %v3015
        %v3024 = vadd.f32 %v2985, %v3015
        %v3025 = vadd.f32 %v2986, %v3015
        %v3026 = vadd.f32 %v2987, %v3015
        %v3027 = vadd.f32 %v2988, %v3015
        %v3028 = vadd.f32 %v2989, %v3015
        %v3029 = vadd.f32 %v2990, %v3015
        %v3030 = vadd.f32 %v2991, %v3015
        %v3031 = vadd.f32 %v2992, %v3015
        %v3032 = vadd.f32 %v2993, %v3015
        %v3033 = vadd.f32 %v2994, %v3015
        %v3034 = vadd.f32 %v2995, %v3015
        %v3035 = vadd.f32 %v2996, %v3015
        %v3036 = vadd.f32 %v2997, %v3015
        %v3037 = vadd.f32 %v2998, %v3015
        %v3038 = vadd.f32 %v2999, %v3015
        %v3039 = vadd.f32 %v3000, %v3015
        %v3040 = vadd.f32 %v3001, %v3015
        %v3041 = vadd.f32 %v3002, %v3015
        %v3042 = vadd.f32 %v3003, %v3015
        %v3043 = vadd.f32 %v3004, %v3015
        %v3044 = vadd.f32 %v3005, %v3015
        %v3045 = vadd.f32 %v3006, %v3015
        %v3046 = vadd.f32 %v3007, %v3015
        %v3047 = vadd.f32 %v3008, %v3015
        %v3048 = vadd.f32 %v3009, %v3015
        %v3049 = vmax.f32 %v3017, 0.0
        %v3050 = vmax.f32 %v3018, 0.0
        %v3051 = vmax.f32 %v3019, 0.0
        %v3052 = vmax.f32 %v3020, 0.0
        %v3053 = vmax.f32 %v3021, 0.0
        %v3054 = vmax.f32 %v3022, 0.0
        %v3055 = vmax.f32 %v3023, 0.0
        %v3056 = vmax.f32 %v3024, 0.0
        %v3057 = vmax.f32 %v3025, 0.0
        %v3058 = vmax.f32 %v3026, 0.0
        %v3059 = vmax.f32 %v3027, 0.0
        %v3060 = vmax.f32 %v3028, 0.0
        %v3061 = vmax.f32 %v3029, 0.0
        %v3062 = vmax.f32 %v3030, 0.0
        %v3063 = vmax.f32 %v3031, 0.0
        %v3064 = vmax.f32 %v3032, 0.0
        %v3065 = vmax.f32 %v3033, 0.0
        %v3066 = vmax.f32 %v3034, 0.0
        %v3067 = vmax.f32 %v3035, 0.0
        %v3068 = vmax.f32 %v3036, 0.0
        %v3069 = vmax.f32 %v3037, 0.0
        %v3070 = vmax.f32 %v3038, 0.0
        %v3071 = vmax.f32 %v3039, 0.0
        %v3072 = vmax.f32 %v3040, 0.0
        %v3073 = vmax.f32 %v3041, 0.0
        %v3074 = vmax.f32 %v3042, 0.0
        %v3075 = vmax.f32 %v3043, 0.0
        %v3076 = vmax.f32 %v3044, 0.0
        %v3077 = vmax.f32 %v3045, 0.0
        %v3078 = vmax.f32 %v3046, 0.0
        %v3079 = vmax.f32 %v3047, 0.0
        %v3080 = vmax.f32 %v3048, 0.0
        %v3081 = vadd.f32 %v1697, %v3049
        %v3082 = vadd.f32 %v1698, %v3050
        %v3083 = vadd.f32 %v1699, %v3051
        %v3084 = vadd.f32 %v1700, %v3052
        %v3085 = vadd.f32 %v1701, %v3053
        %v3086 = vadd.f32 %v1702, %v3054
        %v3087 = vadd.f32 %v1703, %v3055
        %v3088 = vadd.f32 %v1704, %v3056
        %v3089 = vadd.f32 %v1705, %v3057
        %v3090 = vadd.f32 %v1706, %v3058
        %v3091 = vadd.f32 %v1707, %v3059
        %v3092 = vadd.f32 %v1708, %v3060
        %v3093 = vadd.f32 %v1709, %v3061
        %v3094 = vadd.f32 %v1710, %v3062
        %v3095 = vadd.f32 %v1711, %v3063
        %v3096 = vadd.f32 %v1712, %v3064
        %v3097 = vadd.f32 %v1713, %v3065
        %v3098 = vadd.f32 %v1714, %v3066
        %v3099 = vadd.f32 %v1715, %v3067
        %v3100 = vadd.f32 %v1716, %v3068
        %v3101 = vadd.f32 %v1717, %v3069
        %v3102 = vadd.f32 %v1718, %v3070
        %v3103 = vadd.f32 %v1719, %v3071
        %v3104 = vadd.f32 %v1720, %v3072
        %v3105 = vadd.f32 %v1721, %v3073
        %v3106 = vadd.f32 %v1722, %v3074
        %v3107 = vadd.f32 %v1723, %v3075
        %v3108 = vadd.f32 %v1724, %v3076
        %v3109 = vadd.f32 %v1725, %v3077
        %v3110 = vadd.f32 %v1726, %v3078
        %v3111 = vadd.f32 %v1727, %v3079
        %v3112 = vadd.f32 %v1728, %v3080
        %v3113 = vpack.c.bf16 %v3082, %v3081
        %v3114 = vpack.c.bf16 %v3084, %v3083
        %v3115 = vpack.c.bf16 %v3086, %v3085
        %v3116 = vpack.c.bf16 %v3088, %v3087
        %v3117 = vpack.c.bf16 %v3090, %v3089
        %v3118 = vpack.c.bf16 %v3092, %v3091
        %v3119 = vpack.c.bf16 %v3094, %v3093
        %v3120 = vpack.c.bf16 %v3096, %v3095
        %v3121 = vpack.c.bf16 %v3098, %v3097
        %v3122 = vpack.c.bf16 %v3100, %v3099
        %v3123 = vpack.c.bf16 %v3102, %v3101
        %v3124 = vpack.c.bf16 %v3104, %v3103
        %v3125 = vpack.c.bf16 %v3106, %v3105
        %v3126 = vpack.c.bf16 %v3108, %v3107
        %v3127 = vpack.c.bf16 %v3110, %v3109
        %v3128 = vpack.c.bf16 %v3112, %v3111
        %3129 = vst [vmem:[#allocation2] sm:$0xff] %v3113
        %3130 = vst [vmem:[#allocation2 + $0x20] sm:$0xff] %v3114
        %3131 = vst [vmem:[#allocation2 + $0x40] sm:$0xff] %v3115
        %3132 = vst [vmem:[#allocation2 + $0x60] sm:$0xff] %v3116
        %3133 = vst [vmem:[#allocation2 + $0x80] sm:$0xff] %v3117
        %3134 = vst [vmem:[#allocation2 + $0xa0] sm:$0xff] %v3118
        %3135 = vst [vmem:[#allocation2 + $0xc0] sm:$0xff] %v3119
        %3136 = vst [vmem:[#allocation2 + $0xe0] sm:$0xff] %v3120
        %3137 = vst [vmem:[#allocation2 + $0x100] sm:$0xff] %v3121
        %3138 = vst [vmem:[#allocation2 + $0x120] sm:$0xff] %v3122
        %3139 = vst [vmem:[#allocation2 + $0x140] sm:$0xff] %v3123
        %3140 = vst [vmem:[#allocation2 + $0x160] sm:$0xff] %v3124
        %3141 = vst [vmem:[#allocation2 + $0x180] sm:$0xff] %v3125
        %3142 = vst [vmem:[#allocation2 + $0x1a0] sm:$0xff] %v3126
        %3143 = vst [vmem:[#allocation2 + $0x1c0] sm:$0xff] %v3127
        %3144 = vst [vmem:[#allocation2 + $0x1e0] sm:$0xff] %v3128
        %s3145 = scalar_lea.vmem %s7, 128
        %v3146 = vld [vmem:[%s3145] sm:$0xff]
        %v3147 = vld [vmem:[%s3145 + $0x8] sm:$0xff]
        %v3148 = vld [vmem:[%s3145 + $0x10] sm:$0xff]
        %v3149 = vld [vmem:[%s3145 + $0x18] sm:$0xff]
        %v3150 = vld [vmem:[%s3145 + $0x20] sm:$0xff]
        %v3151 = vld [vmem:[%s3145 + $0x28] sm:$0xff]
        %v3152 = vld [vmem:[%s3145 + $0x30] sm:$0xff]
        %v3153 = vld [vmem:[%s3145 + $0x38] sm:$0xff]
        %v3154 = vld [vmem:[%s3145 + $0x40] sm:$0xff]
        %v3155 = vld [vmem:[%s3145 + $0x48] sm:$0xff]
        %v3156 = vld [vmem:[%s3145 + $0x50] sm:$0xff]
        %v3157 = vld [vmem:[%s3145 + $0x58] sm:$0xff]
        %v3158 = vld [vmem:[%s3145 + $0x60] sm:$0xff]
        %v3159 = vld [vmem:[%s3145 + $0x68] sm:$0xff]
        %v3160 = vld [vmem:[%s3145 + $0x70] sm:$0xff]
        %v3161 = vld [vmem:[%s3145 + $0x78] sm:$0xff]
        %v3178 = vunpack.c.l.b16 %v3146
        %v3179 = vunpack.c.h.b16 %v3146
        %v3180 = vunpack.c.l.b16 %v3147
        %v3181 = vunpack.c.h.b16 %v3147
        %v3182 = vunpack.c.l.b16 %v3148
        %v3183 = vunpack.c.h.b16 %v3148
        %v3184 = vunpack.c.l.b16 %v3149
        %v3185 = vunpack.c.h.b16 %v3149
        %v3186 = vunpack.c.l.b16 %v3150
        %v3187 = vunpack.c.h.b16 %v3150
        %v3188 = vunpack.c.l.b16 %v3151
        %v3189 = vunpack.c.h.b16 %v3151
        %v3190 = vunpack.c.l.b16 %v3152
        %v3191 = vunpack.c.h.b16 %v3152
        %v3192 = vunpack.c.l.b16 %v3153
        %v3193 = vunpack.c.h.b16 %v3153
        %v3194 = vunpack.c.l.b16 %v3154
        %v3195 = vunpack.c.h.b16 %v3154
        %v3196 = vunpack.c.l.b16 %v3155
        %v3197 = vunpack.c.h.b16 %v3155
        %v3198 = vunpack.c.l.b16 %v3156
        %v3199 = vunpack.c.h.b16 %v3156
        %v3200 = vunpack.c.l.b16 %v3157
        %v3201 = vunpack.c.h.b16 %v3157
        %v3202 = vunpack.c.l.b16 %v3158
        %v3203 = vunpack.c.h.b16 %v3158
        %v3204 = vunpack.c.l.b16 %v3159
        %v3205 = vunpack.c.h.b16 %v3159
        %v3206 = vunpack.c.l.b16 %v3160
        %v3207 = vunpack.c.h.b16 %v3160
        %v3208 = vunpack.c.l.b16 %v3161
        %v3209 = vunpack.c.h.b16 %v3161
        %v3210 = vpack.c.b16 %v3180, %v3178
        %v3211 = vpack.c.b16 %v3181, %v3179
        %v3212 = vpack.c.b16 %v3184, %v3182
        %v3213 = vpack.c.b16 %v3185, %v3183
        %v3214 = vpack.c.b16 %v3188, %v3186
        %v3215 = vpack.c.b16 %v3189, %v3187
        %v3216 = vpack.c.b16 %v3192, %v3190
        %v3217 = vpack.c.b16 %v3193, %v3191
        %v3218 = vpack.c.b16 %v3196, %v3194
        %v3219 = vpack.c.b16 %v3197, %v3195
        %v3220 = vpack.c.b16 %v3200, %v3198
        %v3221 = vpack.c.b16 %v3201, %v3199
        %v3222 = vpack.c.b16 %v3204, %v3202
        %v3223 = vpack.c.b16 %v3205, %v3203
        %v3224 = vpack.c.b16 %v3208, %v3206
        %v3225 = vpack.c.b16 %v3209, %v3207
        %3242 = vmatprep.subr.bf16.mxu0 %v3211
        %3243 = vmatpush1.bf16.msra.mxu0 %v3210
        %3244 = vmatprep.subr.bf16.mxu0 %v3213
        %3245 = vmatpush1.bf16.msra.mxu0 %v3212
        %3246 = vmatprep.subr.bf16.mxu0 %v3215
        %3247 = vmatpush1.bf16.msra.mxu0 %v3214
        %3248 = vmatprep.subr.bf16.mxu0 %v3217
        %3249 = vmatpush1.bf16.msra.mxu0 %v3216
        %3250 = vmatprep.subr.bf16.mxu0 %v3219
        %3251 = vmatpush1.bf16.msra.mxu0 %v3218
        %3252 = vmatprep.subr.bf16.mxu0 %v3221
        %3253 = vmatpush1.bf16.msra.mxu0 %v3220
        %3254 = vmatprep.subr.bf16.mxu0 %v3223
        %3255 = vmatpush1.bf16.msra.mxu0 %v3222
        %3256 = vmatprep.subr.bf16.mxu0 %v3225
        %3257 = vmatpush1.bf16.msra.mxu0 %v3224
        %3258 = vmatprep.subr.bf16.mxu0 0
        %3259 = vmatpush1.bf16.msra.mxu0 0
        %3260 = vmatprep.subr.bf16.mxu0 0
        %3261 = vmatpush1.bf16.msra.mxu0 0
        %3262 = vmatprep.subr.bf16.mxu0 0
        %3263 = vmatpush1.bf16.msra.mxu0 0
        %3264 = vmatprep.subr.bf16.mxu0 0
        %3265 = vmatpush1.bf16.msra.mxu0 0
        %3266 = vmatprep.subr.bf16.mxu0 0
        %3267 = vmatpush1.bf16.msra.mxu0 0
        %3268 = vmatprep.subr.bf16.mxu0 0
        %3269 = vmatpush1.bf16.msra.mxu0 0
        %3270 = vmatprep.subr.bf16.mxu0 0
        %3271 = vmatpush1.bf16.msra.mxu0 0
        %3272 = vmatprep.subr.bf16.mxu0 0
        %3273 = vmatpush1.bf16.msra.mxu0 0
        %3274 = vmatprep.mubr.bf16.mxu0 0
        %3275 = vmatmul.mubr.bf16.gmra.mrb[0].mxu0 %v3113
        %v3276 = vpop.f32.mrb[0].mxu0
        %v3277 = vadd.f32 0.0, %v3276
        %v3278 = vpop.f32.mrb[0].mxu0
        %v3279 = vadd.f32 0.0, %v3278
        %v3280 = vpop.f32.mrb[0].mxu0
        %v3281 = vadd.f32 0.0, %v3280
        %v3282 = vpop.f32.mrb[0].mxu0
        %v3283 = vadd.f32 0.0, %v3282
        %3284 = vmatprep.mubr.bf16.mxu0 0
        %3285 = vmatmul.mubr.bf16.gmra.mrb[0].mxu0 %v3114
        %v3286 = vpop.f32.mrb[0].mxu0
        %v3287 = vadd.f32 0.0, %v3286
        %v3288 = vpop.f32.mrb[0].mxu0
        %v3289 = vadd.f32 0.0, %v3288
        %v3290 = vpop.f32.mrb[0].mxu0
        %v3291 = vadd.f32 0.0, %v3290
        %v3292 = vpop.f32.mrb[0].mxu0
        %v3293 = vadd.f32 0.0, %v3292
        %3294 = vmatprep.mubr.bf16.mxu0 0
        %3295 = vmatmul.mubr.bf16.gmra.mrb[0].mxu0 %v3115
        %v3296 = vpop.f32.mrb[0].mxu0
        %v3297 = vadd.f32 0.0, %v3296
        %v3298 = vpop.f32.mrb[0].mxu0
        %v3299 = vadd.f32 0.0, %v3298
        %v3300 = vpop.f32.mrb[0].mxu0
        %v3301 = vadd.f32 0.0, %v3300
        %v3302 = vpop.f32.mrb[0].mxu0
        %v3303 = vadd.f32 0.0, %v3302
        %3304 = vmatprep.mubr.bf16.mxu0 0
        %3305 = vmatmul.mubr.bf16.gmra.mrb[0].mxu0 %v3116
        %v3306 = vpop.f32.mrb[0].mxu0
        %v3307 = vadd.f32 0.0, %v3306
        %v3308 = vpop.f32.mrb[0].mxu0
        %v3309 = vadd.f32 0.0, %v3308
        %v3310 = vpop.f32.mrb[0].mxu0
        %v3311 = vadd.f32 0.0, %v3310
        %v3312 = vpop.f32.mrb[0].mxu0
        %v3313 = vadd.f32 0.0, %v3312
        %3314 = vmatprep.mubr.bf16.mxu0 0
        %3315 = vmatmul.mubr.bf16.gmra.mrb[0].mxu0 %v3117
        %v3316 = vpop.f32.mrb[0].mxu0
        %v3317 = vadd.f32 0.0, %v3316
        %v3318 = vpop.f32.mrb[0].mxu0
        %v3319 = vadd.f32 0.0, %v3318
        %v3320 = vpop.f32.mrb[0].mxu0
        %v3321 = vadd.f32 0.0, %v3320
        %v3322 = vpop.f32.mrb[0].mxu0
        %v3323 = vadd.f32 0.0, %v3322
        %3324 = vmatprep.mubr.bf16.mxu0 0
        %3325 = vmatmul.mubr.bf16.gmra.mrb[0].mxu0 %v3118
        %v3326 = vpop.f32.mrb[0].mxu0
        %v3327 = vadd.f32 0.0, %v3326
        %v3328 = vpop.f32.mrb[0].mxu0
        %v3329 = vadd.f32 0.0, %v3328
        %v3330 = vpop.f32.mrb[0].mxu0
        %v3331 = vadd.f32 0.0, %v3330
        %v3332 = vpop.f32.mrb[0].mxu0
        %v3333 = vadd.f32 0.0, %v3332
        %3334 = vmatprep.mubr.bf16.mxu0 0
        %3335 = vmatmul.mubr.bf16.gmra.mrb[0].mxu0 %v3119
        %v3336 = vpop.f32.mrb[0].mxu0
        %v3337 = vadd.f32 0.0, %v3336
        %v3338 = vpop.f32.mrb[0].mxu0
        %v3339 = vadd.f32 0.0, %v3338
        %v3340 = vpop.f32.mrb[0].mxu0
        %v3341 = vadd.f32 0.0, %v3340
        %v3342 = vpop.f32.mrb[0].mxu0
        %v3343 = vadd.f32 0.0, %v3342
        %3344 = vmatprep.mubr.bf16.mxu0 0
        %3345 = vmatmul.mubr.bf16.gmra.mrb[0].mxu0 %v3120
        %v3346 = vpop.f32.mrb[0].mxu0
        %v3347 = vadd.f32 0.0, %v3346
        %v3348 = vpop.f32.mrb[0].mxu0
        %v3349 = vadd.f32 0.0, %v3348
        %v3350 = vpop.f32.mrb[0].mxu0
        %v3351 = vadd.f32 0.0, %v3350
        %v3352 = vpop.f32.mrb[0].mxu0
        %v3353 = vadd.f32 0.0, %v3352
        %3354 = vmatprep.mubr.bf16.mxu0 0
        %3355 = vmatmul.mubr.bf16.gmra.mrb[0].mxu0 %v3121
        %v3356 = vpop.f32.mrb[0].mxu0
        %v3357 = vadd.f32 0.0, %v3356
        %v3358 = vpop.f32.mrb[0].mxu0
        %v3359 = vadd.f32 0.0, %v3358
        %v3360 = vpop.f32.mrb[0].mxu0
        %v3361 = vadd.f32 0.0, %v3360
        %v3362 = vpop.f32.mrb[0].mxu0
        %v3363 = vadd.f32 0.0, %v3362
        %3364 = vmatprep.mubr.bf16.mxu0 0
        %3365 = vmatmul.mubr.bf16.gmra.mrb[0].mxu0 %v3122
        %v3366 = vpop.f32.mrb[0].mxu0
        %v3367 = vadd.f32 0.0, %v3366
        %v3368 = vpop.f32.mrb[0].mxu0
        %v3369 = vadd.f32 0.0, %v3368
        %v3370 = vpop.f32.mrb[0].mxu0
        %v3371 = vadd.f32 0.0, %v3370
        %v3372 = vpop.f32.mrb[0].mxu0
        %v3373 = vadd.f32 0.0, %v3372
        %3374 = vmatprep.mubr.bf16.mxu0 0
        %3375 = vmatmul.mubr.bf16.gmra.mrb[0].mxu0 %v3123
        %v3376 = vpop.f32.mrb[0].mxu0
        %v3377 = vadd.f32 0.0, %v3376
        %v3378 = vpop.f32.mrb[0].mxu0
        %v3379 = vadd.f32 0.0, %v3378
        %v3380 = vpop.f32.mrb[0].mxu0
        %v3381 = vadd.f32 0.0, %v3380
        %v3382 = vpop.f32.mrb[0].mxu0
        %v3383 = vadd.f32 0.0, %v3382
        %3384 = vmatprep.mubr.bf16.mxu0 0
        %3385 = vmatmul.mubr.bf16.gmra.mrb[0].mxu0 %v3124
        %v3386 = vpop.f32.mrb[0].mxu0
        %v3387 = vadd.f32 0.0, %v3386
        %v3388 = vpop.f32.mrb[0].mxu0
        %v3389 = vadd.f32 0.0, %v3388
        %v3390 = vpop.f32.mrb[0].mxu0
        %v3391 = vadd.f32 0.0, %v3390
        %v3392 = vpop.f32.mrb[0].mxu0
        %v3393 = vadd.f32 0.0, %v3392
        %3394 = vmatprep.mubr.bf16.mxu0 0
        %3395 = vmatmul.mubr.bf16.gmra.mrb[0].mxu0 %v3125
        %v3396 = vpop.f32.mrb[0].mxu0
        %v3397 = vadd.f32 0.0, %v3396
        %v3398 = vpop.f32.mrb[0].mxu0
        %v3399 = vadd.f32 0.0, %v3398
        %v3400 = vpop.f32.mrb[0].mxu0
        %v3401 = vadd.f32 0.0, %v3400
        %v3402 = vpop.f32.mrb[0].mxu0
        %v3403 = vadd.f32 0.0, %v3402
        %3404 = vmatprep.mubr.bf16.mxu0 0
        %3405 = vmatmul.mubr.bf16.gmra.mrb[0].mxu0 %v3126
        %v3406 = vpop.f32.mrb[0].mxu0
        %v3407 = vadd.f32 0.0, %v3406
        %v3408 = vpop.f32.mrb[0].mxu0
        %v3409 = vadd.f32 0.0, %v3408
        %v3410 = vpop.f32.mrb[0].mxu0
        %v3411 = vadd.f32 0.0, %v3410
        %v3412 = vpop.f32.mrb[0].mxu0
        %v3413 = vadd.f32 0.0, %v3412
        %3414 = vmatprep.mubr.bf16.mxu0 0
        %3415 = vmatmul.mubr.bf16.gmra.mrb[0].mxu0 %v3127
        %v3416 = vpop.f32.mrb[0].mxu0
        %v3417 = vadd.f32 0.0, %v3416
        %v3418 = vpop.f32.mrb[0].mxu0
        %v3419 = vadd.f32 0.0, %v3418
        %v3420 = vpop.f32.mrb[0].mxu0
        %v3421 = vadd.f32 0.0, %v3420
        %v3422 = vpop.f32.mrb[0].mxu0
        %v3423 = vadd.f32 0.0, %v3422
        %3424 = vmatprep.mubr.bf16.mxu0 0
        %3425 = vmatmul.mubr.bf16.gmra.mrb[0].mxu0 %v3128
        %v3426 = vpop.f32.mrb[0].mxu0
        %v3427 = vadd.f32 0.0, %v3426
        %v3428 = vpop.f32.mrb[0].mxu0
        %v3429 = vadd.f32 0.0, %v3428
        %v3430 = vpop.f32.mrb[0].mxu0
        %v3431 = vadd.f32 0.0, %v3430
        %v3432 = vpop.f32.mrb[0].mxu0
        %v3433 = vadd.f32 0.0, %v3432
        %3434 = vdwg.mxu0
        %v3435 = vpack.c.bf16 %v3281, %v3277
        %v3436 = vpack.c.bf16 %v3291, %v3287
        %v3437 = vpack.c.bf16 %v3301, %v3297
        %v3438 = vpack.c.bf16 %v3311, %v3307
        %v3439 = vpack.c.bf16 %v3321, %v3317
        %v3440 = vpack.c.bf16 %v3331, %v3327
        %v3441 = vpack.c.bf16 %v3341, %v3337
        %v3442 = vpack.c.bf16 %v3351, %v3347
        %v3443 = vpack.c.bf16 %v3361, %v3357
        %v3444 = vpack.c.bf16 %v3371, %v3367
        %v3445 = vpack.c.bf16 %v3381, %v3377
        %v3446 = vpack.c.bf16 %v3391, %v3387
        %v3447 = vpack.c.bf16 %v3401, %v3397
        %v3448 = vpack.c.bf16 %v3411, %v3407
        %v3449 = vpack.c.bf16 %v3421, %v3417
        %v3450 = vpack.c.bf16 %v3431, %v3427
        %s3451 = scalar_lea.vmem %s8, 1
        %v3452 = vld [vmem:[%s3451] sm:$0x1]
        %v3454 = vlaneseq
        %v3455 = vshrl.u32 %v3454, 7
        %v3456 = vsub.s32 0, %v3455
        %v3457 = vrot.slane %v3452, %v3456
        %v3459 = vadd.f32 %v3279, %v3457
        %v3460 = vadd.f32 %v3283, %v3457
        %v3461 = vadd.f32 %v3289, %v3457
        %v3462 = vadd.f32 %v3293, %v3457
        %v3463 = vadd.f32 %v3299, %v3457
        %v3464 = vadd.f32 %v3303, %v3457
        %v3465 = vadd.f32 %v3309, %v3457
        %v3466 = vadd.f32 %v3313, %v3457
        %v3467 = vadd.f32 %v3319, %v3457
        %v3468 = vadd.f32 %v3323, %v3457
        %v3469 = vadd.f32 %v3329, %v3457
        %v3470 = vadd.f32 %v3333, %v3457
        %v3471 = vadd.f32 %v3339, %v3457
        %v3472 = vadd.f32 %v3343, %v3457
        %v3473 = vadd.f32 %v3349, %v3457
        %v3474 = vadd.f32 %v3353, %v3457
        %v3475 = vadd.f32 %v3359, %v3457
        %v3476 = vadd.f32 %v3363, %v3457
        %v3477 = vadd.f32 %v3369, %v3457
        %v3478 = vadd.f32 %v3373, %v3457
        %v3479 = vadd.f32 %v3379, %v3457
        %v3480 = vadd.f32 %v3383, %v3457
        %v3481 = vadd.f32 %v3389, %v3457
        %v3482 = vadd.f32 %v3393, %v3457
        %v3483 = vadd.f32 %v3399, %v3457
        %v3484 = vadd.f32 %v3403, %v3457
        %v3485 = vadd.f32 %v3409, %v3457
        %v3486 = vadd.f32 %v3413, %v3457
        %v3487 = vadd.f32 %v3419, %v3457
        %v3488 = vadd.f32 %v3423, %v3457
        %v3489 = vadd.f32 %v3429, %v3457
        %v3490 = vadd.f32 %v3433, %v3457
        %v3491 = vpack.c.bf16 %v3460, %v3459
        %v3492 = vpack.c.bf16 %v3462, %v3461
        %v3493 = vpack.c.bf16 %v3464, %v3463
        %v3494 = vpack.c.bf16 %v3466, %v3465
        %v3495 = vpack.c.bf16 %v3468, %v3467
        %v3496 = vpack.c.bf16 %v3470, %v3469
        %v3497 = vpack.c.bf16 %v3472, %v3471
        %v3498 = vpack.c.bf16 %v3474, %v3473
        %v3499 = vpack.c.bf16 %v3476, %v3475
        %v3500 = vpack.c.bf16 %v3478, %v3477
        %v3501 = vpack.c.bf16 %v3480, %v3479
        %v3502 = vpack.c.bf16 %v3482, %v3481
        %v3503 = vpack.c.bf16 %v3484, %v3483
        %v3504 = vpack.c.bf16 %v3486, %v3485
        %v3505 = vpack.c.bf16 %v3488, %v3487
        %v3506 = vpack.c.bf16 %v3490, %v3489
        %3507 = vmatprep.subr.bf16.mxu0 0
        %3508 = vmatpush1.bf16.xpose.msra.mxu0 %v3435
        %3509 = vmatprep.subr.bf16.mxu0 0
        %3510 = vmatpush1.bf16.xpose.msra.mxu0 %v3436
        %3511 = vmatprep.subr.bf16.mxu0 0
        %3512 = vmatpush1.bf16.xpose.msra.mxu0 %v3437
        %3513 = vmatprep.subr.bf16.mxu0 0
        %3514 = vmatpush1.bf16.xpose.msra.mxu0 %v3438
        %3515 = vmatprep.subr.bf16.mxu0 0
        %3516 = vmatpush1.bf16.xpose.msra.mxu0 %v3439
        %3517 = vmatprep.subr.bf16.mxu0 0
        %3518 = vmatpush1.bf16.xpose.msra.mxu0 %v3440
        %3519 = vmatprep.subr.bf16.mxu0 0
        %3520 = vmatpush1.bf16.xpose.msra.mxu0 %v3441
        %3521 = vmatprep.subr.bf16.mxu0 0
        %3522 = vmatpush1.bf16.xpose.msra.mxu0 %v3442
        %3523 = vmatprep.subr.bf16.mxu0 0
        %3524 = vmatpush1.bf16.xpose.msra.mxu0 0
        %3525 = vmatprep.subr.bf16.mxu0 0
        %3526 = vmatpush1.bf16.xpose.msra.mxu0 0
        %3527 = vmatprep.subr.bf16.mxu0 0
        %3528 = vmatpush1.bf16.xpose.msra.mxu0 0
        %3529 = vmatprep.subr.bf16.mxu0 0
        %3530 = vmatpush1.bf16.xpose.msra.mxu0 0
        %3531 = vmatprep.subr.bf16.mxu0 0
        %3532 = vmatpush1.bf16.xpose.msra.mxu0 0
        %3533 = vmatprep.subr.bf16.mxu0 0
        %3534 = vmatpush1.bf16.xpose.msra.mxu0 0
        %3535 = vmatprep.subr.bf16.mxu0 0
        %3536 = vmatpush1.bf16.xpose.msra.mxu0 0
        %3537 = vmatprep.subr.bf16.mxu0 0
        %3538 = vmatpush1.bf16.xpose.msra.mxu0 0
        %3539 = vmatprep.mubr.bf16.mxu0 0
        %3540 = vmatmul.mubr.bf16.gmra.mrb[0].mxu0 %v3435
        %v3541 = vpop.f32.mrb[0].mxu0
        %v3542 = vadd.f32 0.0, %v3541
        %v3543 = vpop.f32.mrb[0].mxu0
        %v3544 = vpop.f32.mrb[0].mxu0
        %v3545 = vadd.f32 0.0, %v3544
        %v3546 = vpop.f32.mrb[0].mxu0
        %3547 = vmatprep.mubr.bf16.mxu0 0
        %3548 = vmatmul.mubr.bf16.gmra.mrb[0].mxu0 %v3436
        %v3549 = vpop.f32.mrb[0].mxu0
        %v3550 = vadd.f32 0.0, %v3549
        %v3551 = vpop.f32.mrb[0].mxu0
        %v3552 = vpop.f32.mrb[0].mxu0
        %v3553 = vadd.f32 0.0, %v3552
        %v3554 = vpop.f32.mrb[0].mxu0
        %3555 = vmatprep.mubr.bf16.mxu0 0
        %3556 = vmatmul.mubr.bf16.gmra.mrb[0].mxu0 %v3437
        %v3557 = vpop.f32.mrb[0].mxu0
        %v3558 = vadd.f32 0.0, %v3557
        %v3559 = vpop.f32.mrb[0].mxu0
        %v3560 = vpop.f32.mrb[0].mxu0
        %v3561 = vadd.f32 0.0, %v3560
        %v3562 = vpop.f32.mrb[0].mxu0
        %3563 = vmatprep.mubr.bf16.mxu0 0
        %3564 = vmatmul.mubr.bf16.gmra.mrb[0].mxu0 %v3438
        %v3565 = vpop.f32.mrb[0].mxu0
        %v3566 = vadd.f32 0.0, %v3565
        %v3567 = vpop.f32.mrb[0].mxu0
        %v3568 = vpop.f32.mrb[0].mxu0
        %v3569 = vadd.f32 0.0, %v3568
        %v3570 = vpop.f32.mrb[0].mxu0
        %3571 = vmatprep.mubr.bf16.mxu0 0
        %3572 = vmatmul.mubr.bf16.gmra.mrb[0].mxu0 %v3439
        %v3573 = vpop.f32.mrb[0].mxu0
        %v3574 = vadd.f32 0.0, %v3573
        %v3575 = vpop.f32.mrb[0].mxu0
        %v3576 = vpop.f32.mrb[0].mxu0
        %v3577 = vadd.f32 0.0, %v3576
        %v3578 = vpop.f32.mrb[0].mxu0
        %3579 = vmatprep.mubr.bf16.mxu0 0
        %3580 = vmatmul.mubr.bf16.gmra.mrb[0].mxu0 %v3440
        %v3581 = vpop.f32.mrb[0].mxu0
        %v3582 = vadd.f32 0.0, %v3581
        %v3583 = vpop.f32.mrb[0].mxu0
        %v3584 = vpop.f32.mrb[0].mxu0
        %v3585 = vadd.f32 0.0, %v3584
        %v3586 = vpop.f32.mrb[0].mxu0
        %3587 = vmatprep.mubr.bf16.mxu0 0
        %3588 = vmatmul.mubr.bf16.gmra.mrb[0].mxu0 %v3441
        %v3589 = vpop.f32.mrb[0].mxu0
        %v3590 = vadd.f32 0.0, %v3589
        %v3591 = vpop.f32.mrb[0].mxu0
        %v3592 = vpop.f32.mrb[0].mxu0
        %v3593 = vadd.f32 0.0, %v3592
        %v3594 = vpop.f32.mrb[0].mxu0
        %3595 = vmatprep.mubr.bf16.mxu0 0
        %3596 = vmatmul.mubr.bf16.gmra.mrb[0].mxu0 %v3442
        %v3597 = vpop.f32.mrb[0].mxu0
        %v3598 = vadd.f32 0.0, %v3597
        %v3599 = vpop.f32.mrb[0].mxu0
        %v3600 = vpop.f32.mrb[0].mxu0
        %v3601 = vadd.f32 0.0, %v3600
        %v3602 = vpop.f32.mrb[0].mxu0
        %3603 = vdwg.mxu0
        %v3604 = vmax.f32 %v3542, %v3558
        %v3605 = vmax.f32 %v3545, %v3561
        %v3606 = vmax.f32 %v3550, %v3566
        %v3607 = vmax.f32 %v3553, %v3569
        %v3608 = vmax.f32 %v3604, %v3574
        %v3609 = vmax.f32 %v3605, %v3577
        %v3610 = vmax.f32 %v3606, %v3582
        %v3611 = vmax.f32 %v3607, %v3585
        %v3612 = vmax.f32 %v3608, %v3590
        %v3613 = vmax.f32 %v3609, %v3593
        %v3614 = vmax.f32 %v3610, %v3598
        %v3615 = vmax.f32 %v3611, %v3601
        %v3616 = vmax.f32 %v3612, %v3613
        %v3617 = vmax.f32 %v3614, %v3615
        %v3618 = vmax.f32 %v3616, %v3617
        %v3619 = vrot.slane %v3618, 4
        %v3620 = vmax.f32 %v3618, %v3619
        %v3621 = vrot.slane %v3620, 2
        %v3622 = vmax.f32 %v3620, %v3621
        %v3623 = vrot.slane %v3622, 1
        %v3624 = vmax.f32 %v3622, %v3623
        %v3625 = vsub.f32 %v3542, %v3624
        %v3626 = vsub.f32 %v3545, %v3624
        %v3627 = vsub.f32 %v3550, %v3624
        %v3628 = vsub.f32 %v3553, %v3624
        %v3629 = vsub.f32 %v3558, %v3624
        %v3630 = vsub.f32 %v3561, %v3624
        %v3631 = vsub.f32 %v3566, %v3624
        %v3632 = vsub.f32 %v3569, %v3624
        %v3633 = vsub.f32 %v3574, %v3624
        %v3634 = vsub.f32 %v3577, %v3624
        %v3635 = vsub.f32 %v3582, %v3624
        %v3636 = vsub.f32 %v3585, %v3624
        %v3637 = vsub.f32 %v3590, %v3624
        %v3638 = vsub.f32 %v3593, %v3624
        %v3639 = vsub.f32 %v3598, %v3624
        %v3640 = vsub.f32 %v3601, %v3624
        %v3641 = vmul.f32 %v3625, 1.442695
        %v3642 = vpow.pop %v3641
        %v3643 = vmul.f32 %v3626, 1.442695
        %v3644 = vpow.pop %v3643
        %v3645 = vmul.f32 %v3627, 1.442695
        %v3646 = vpow.pop %v3645
        %v3647 = vmul.f32 %v3628, 1.442695
        %v3648 = vpow.pop %v3647
        %v3649 = vmul.f32 %v3629, 1.442695
        %v3650 = vpow.pop %v3649
        %v3651 = vmul.f32 %v3630, 1.442695
        %v3652 = vpow.pop %v3651
        %v3653 = vmul.f32 %v3631, 1.442695
        %v3654 = vpow.pop %v3653
        %v3655 = vmul.f32 %v3632, 1.442695
        %v3656 = vpow.pop %v3655
        %v3657 = vmul.f32 %v3633, 1.442695
        %v3658 = vpow.pop %v3657
        %v3659 = vmul.f32 %v3634, 1.442695
        %v3660 = vpow.pop %v3659
        %v3661 = vmul.f32 %v3635, 1.442695
        %v3662 = vpow.pop %v3661
        %v3663 = vmul.f32 %v3636, 1.442695
        %v3664 = vpow.pop %v3663
        %v3665 = vmul.f32 %v3637, 1.442695
        %v3666 = vpow.pop %v3665
        %v3667 = vmul.f32 %v3638, 1.442695
        %v3668 = vpow.pop %v3667
        %v3669 = vmul.f32 %v3639, 1.442695
        %v3670 = vpow.pop %v3669
        %v3671 = vmul.f32 %v3640, 1.442695
        %v3672 = vpow.pop %v3671
        %v3673 = vadd.f32 %v3642, %v3644
        %v3674 = vadd.f32 %v3673, %v3646
        %v3675 = vadd.f32 %v3674, %v3648
        %v3676 = vadd.f32 %v3675, %v3650
        %v3677 = vadd.f32 %v3676, %v3652
        %v3678 = vadd.f32 %v3677, %v3654
        %v3679 = vadd.f32 %v3678, %v3656
        %v3680 = vadd.f32 %v3679, %v3658
        %v3681 = vadd.f32 %v3680, %v3660
        %v3682 = vadd.f32 %v3681, %v3662
        %v3683 = vadd.f32 %v3682, %v3664
        %v3684 = vadd.f32 %v3683, %v3666
        %v3685 = vadd.f32 %v3684, %v3668
        %v3686 = vadd.f32 %v3685, %v3670
        %v3687 = vadd.f32 %v3686, %v3672
        %v3688 = vrot.slane %v3687, 4
        %v3689 = vadd.f32 %v3687, %v3688
        %v3690 = vrot.slane %v3689, 2
        %v3691 = vadd.f32 %v3689, %v3690
        %v3692 = vrot.slane %v3691, 1
        %v3693 = vadd.f32 %v3691, %v3692
        %v3694 = vrcp.pop %v3693
        %v3695 = vmul.f32 %v3642, %v3694
        %v3696 = vmul.f32 %v3644, %v3694
        %v3697 = vmul.f32 %v3646, %v3694
        %v3698 = vmul.f32 %v3648, %v3694
        %v3699 = vmul.f32 %v3650, %v3694
        %v3700 = vmul.f32 %v3652, %v3694
        %v3701 = vmul.f32 %v3654, %v3694
        %v3702 = vmul.f32 %v3656, %v3694
        %v3703 = vmul.f32 %v3658, %v3694
        %v3704 = vmul.f32 %v3660, %v3694
        %v3705 = vmul.f32 %v3662, %v3694
        %v3706 = vmul.f32 %v3664, %v3694
        %v3707 = vmul.f32 %v3666, %v3694
        %v3708 = vmul.f32 %v3668, %v3694
        %v3709 = vmul.f32 %v3670, %v3694
        %v3710 = vmul.f32 %v3672, %v3694
        %v3711 = vpack.c.bf16 %v3696, %v3695
        %v3712 = vpack.c.bf16 %v3698, %v3697
        %v3713 = vpack.c.bf16 %v3700, %v3699
        %v3714 = vpack.c.bf16 %v3702, %v3701
        %v3715 = vpack.c.bf16 %v3704, %v3703
        %v3716 = vpack.c.bf16 %v3706, %v3705
        %v3717 = vpack.c.bf16 %v3708, %v3707
        %v3718 = vpack.c.bf16 %v3710, %v3709
        %3719 = vmatprep.subr.bf16.mxu0 0
        %3720 = vmatpush1.bf16.msra.mxu0 %v3491
        %3721 = vmatprep.subr.bf16.mxu0 0
        %3722 = vmatpush1.bf16.msra.mxu0 %v3492
        %3723 = vmatprep.subr.bf16.mxu0 0
        %3724 = vmatpush1.bf16.msra.mxu0 %v3493
        %3725 = vmatprep.subr.bf16.mxu0 0
        %3726 = vmatpush1.bf16.msra.mxu0 %v3494
        %3727 = vmatprep.subr.bf16.mxu0 0
        %3728 = vmatpush1.bf16.msra.mxu0 %v3495
        %3729 = vmatprep.subr.bf16.mxu0 0
        %3730 = vmatpush1.bf16.msra.mxu0 %v3496
        %3731 = vmatprep.subr.bf16.mxu0 0
        %3732 = vmatpush1.bf16.msra.mxu0 %v3497
        %3733 = vmatprep.subr.bf16.mxu0 0
        %3734 = vmatpush1.bf16.msra.mxu0 %v3498
        %3735 = vmatprep.subr.bf16.mxu0 0
        %3736 = vmatpush1.bf16.msra.mxu0 0
        %3737 = vmatprep.subr.bf16.mxu0 0
        %3738 = vmatpush1.bf16.msra.mxu0 0
        %3739 = vmatprep.subr.bf16.mxu0 0
        %3740 = vmatpush1.bf16.msra.mxu0 0
        %3741 = vmatprep.subr.bf16.mxu0 0
        %3742 = vmatpush1.bf16.msra.mxu0 0
        %3743 = vmatprep.subr.bf16.mxu0 0
        %3744 = vmatpush1.bf16.msra.mxu0 0
        %3745 = vmatprep.subr.bf16.mxu0 0
        %3746 = vmatpush1.bf16.msra.mxu0 0
        %3747 = vmatprep.subr.bf16.mxu0 0
        %3748 = vmatpush1.bf16.msra.mxu0 0
        %3749 = vmatprep.subr.bf16.mxu0 0
        %3750 = vmatpush1.bf16.msra.mxu0 0
        %3751 = vmatprep.mubr.bf16.mxu0 0
        %3752 = vmatmul.mubr.bf16.gmra.mrb[0].mxu0 %v3711
        %v3753 = vpop.f32.mrb[0].mxu0
        %v3754 = vadd.f32 0.0, %v3753
        %v3755 = vpop.f32.mrb[0].mxu0
        %v3756 = vpop.f32.mrb[0].mxu0
        %v3757 = vadd.f32 0.0, %v3756
        %v3758 = vpop.f32.mrb[0].mxu0
        %3759 = vmatprep.mubr.bf16.mxu0 0
        %3760 = vmatmul.mubr.bf16.gmra.mrb[0].mxu0 %v3712
        %v3761 = vpop.f32.mrb[0].mxu0
        %v3762 = vadd.f32 0.0, %v3761
        %v3763 = vpop.f32.mrb[0].mxu0
        %v3764 = vpop.f32.mrb[0].mxu0
        %v3765 = vadd.f32 0.0, %v3764
        %v3766 = vpop.f32.mrb[0].mxu0
        %3767 = vmatprep.mubr.bf16.mxu0 0
        %3768 = vmatmul.mubr.bf16.gmra.mrb[0].mxu0 %v3713
        %v3769 = vpop.f32.mrb[0].mxu0
        %v3770 = vadd.f32 0.0, %v3769
        %v3771 = vpop.f32.mrb[0].mxu0
        %v3772 = vpop.f32.mrb[0].mxu0
        %v3773 = vadd.f32 0.0, %v3772
        %v3774 = vpop.f32.mrb[0].mxu0
        %3775 = vmatprep.mubr.bf16.mxu0 0
        %3776 = vmatmul.mubr.bf16.gmra.mrb[0].mxu0 %v3714
        %v3777 = vpop.f32.mrb[0].mxu0
        %v3778 = vadd.f32 0.0, %v3777
        %v3779 = vpop.f32.mrb[0].mxu0
        %v3780 = vpop.f32.mrb[0].mxu0
        %v3781 = vadd.f32 0.0, %v3780
        %v3782 = vpop.f32.mrb[0].mxu0
        %3783 = vmatprep.mubr.bf16.mxu0 0
        %3784 = vmatmul.mubr.bf16.gmra.mrb[0].mxu0 %v3715
        %v3785 = vpop.f32.mrb[0].mxu0
        %v3786 = vadd.f32 0.0, %v3785
        %v3787 = vpop.f32.mrb[0].mxu0
        %v3788 = vpop.f32.mrb[0].mxu0
        %v3789 = vadd.f32 0.0, %v3788
        %v3790 = vpop.f32.mrb[0].mxu0
        %3791 = vmatprep.mubr.bf16.mxu0 0
        %3792 = vmatmul.mubr.bf16.gmra.mrb[0].mxu0 %v3716
        %v3793 = vpop.f32.mrb[0].mxu0
        %v3794 = vadd.f32 0.0, %v3793
        %v3795 = vpop.f32.mrb[0].mxu0
        %v3796 = vpop.f32.mrb[0].mxu0
        %v3797 = vadd.f32 0.0, %v3796
        %v3798 = vpop.f32.mrb[0].mxu0
        %3799 = vmatprep.mubr.bf16.mxu0 0
        %3800 = vmatmul.mubr.bf16.gmra.mrb[0].mxu0 %v3717
        %v3801 = vpop.f32.mrb[0].mxu0
        %v3802 = vadd.f32 0.0, %v3801
        %v3803 = vpop.f32.mrb[0].mxu0
        %v3804 = vpop.f32.mrb[0].mxu0
        %v3805 = vadd.f32 0.0, %v3804
        %v3806 = vpop.f32.mrb[0].mxu0
        %3807 = vmatprep.mubr.bf16.mxu0 0
        %3808 = vmatmul.mubr.bf16.gmra.mrb[0].mxu0 %v3718
        %v3809 = vpop.f32.mrb[0].mxu0
        %v3810 = vadd.f32 0.0, %v3809
        %v3811 = vpop.f32.mrb[0].mxu0
        %v3812 = vpop.f32.mrb[0].mxu0
        %v3813 = vadd.f32 0.0, %v3812
        %v3814 = vpop.f32.mrb[0].mxu0
        %3815 = vdwg.mxu0
        %3816 = vmatprep.subr.bf16.mxu0 0
        %3817 = vmatpush1.bf16.xpose.msra.mxu0 %v3443
        %3818 = vmatprep.subr.bf16.mxu0 0
        %3819 = vmatpush1.bf16.xpose.msra.mxu0 %v3444
        %3820 = vmatprep.subr.bf16.mxu0 0
        %3821 = vmatpush1.bf16.xpose.msra.mxu0 %v3445
        %3822 = vmatprep.subr.bf16.mxu0 0
        %3823 = vmatpush1.bf16.xpose.msra.mxu0 %v3446
        %3824 = vmatprep.subr.bf16.mxu0 0
        %3825 = vmatpush1.bf16.xpose.msra.mxu0 %v3447
        %3826 = vmatprep.subr.bf16.mxu0 0
        %3827 = vmatpush1.bf16.xpose.msra.mxu0 %v3448
        %3828 = vmatprep.subr.bf16.mxu0 0
        %3829 = vmatpush1.bf16.xpose.msra.mxu0 %v3449
        %3830 = vmatprep.subr.bf16.mxu0 0
        %3831 = vmatpush1.bf16.xpose.msra.mxu0 %v3450
        %3832 = vmatprep.subr.bf16.mxu0 0
        %3833 = vmatpush1.bf16.xpose.msra.mxu0 0
        %3834 = vmatprep.subr.bf16.mxu0 0
        %3835 = vmatpush1.bf16.xpose.msra.mxu0 0
        %3836 = vmatprep.subr.bf16.mxu0 0
        %3837 = vmatpush1.bf16.xpose.msra.mxu0 0
        %3838 = vmatprep.subr.bf16.mxu0 0
        %3839 = vmatpush1.bf16.xpose.msra.mxu0 0
        %3840 = vmatprep.subr.bf16.mxu0 0
        %3841 = vmatpush1.bf16.xpose.msra.mxu0 0
        %3842 = vmatprep.subr.bf16.mxu0 0
        %3843 = vmatpush1.bf16.xpose.msra.mxu0 0
        %3844 = vmatprep.subr.bf16.mxu0 0
        %3845 = vmatpush1.bf16.xpose.msra.mxu0 0
        %3846 = vmatprep.subr.bf16.mxu0 0
        %3847 = vmatpush1.bf16.xpose.msra.mxu0 0
        %3848 = vmatprep.mubr.bf16.mxu0 0
        %3849 = vmatmul.mubr.bf16.gmra.mrb[0].mxu0 %v3443
        %v3850 = vpop.f32.mrb[0].mxu0
        %v3851 = vadd.f32 0.0, %v3850
        %v3852 = vpop.f32.mrb[0].mxu0
        %v3853 = vpop.f32.mrb[0].mxu0
        %v3854 = vadd.f32 0.0, %v3853
        %v3855 = vpop.f32.mrb[0].mxu0
        %3856 = vmatprep.mubr.bf16.mxu0 0
        %3857 = vmatmul.mubr.bf16.gmra.mrb[0].mxu0 %v3444
        %v3858 = vpop.f32.mrb[0].mxu0
        %v3859 = vadd.f32 0.0, %v3858
        %v3860 = vpop.f32.mrb[0].mxu0
        %v3861 = vpop.f32.mrb[0].mxu0
        %v3862 = vadd.f32 0.0, %v3861
        %v3863 = vpop.f32.mrb[0].mxu0
        %3864 = vmatprep.mubr.bf16.mxu0 0
        %3865 = vmatmul.mubr.bf16.gmra.mrb[0].mxu0 %v3445
        %v3866 = vpop.f32.mrb[0].mxu0
        %v3867 = vadd.f32 0.0, %v3866
        %v3868 = vpop.f32.mrb[0].mxu0
        %v3869 = vpop.f32.mrb[0].mxu0
        %v3870 = vadd.f32 0.0, %v3869
        %v3871 = vpop.f32.mrb[0].mxu0
        %3872 = vmatprep.mubr.bf16.mxu0 0
        %3873 = vmatmul.mubr.bf16.gmra.mrb[0].mxu0 %v3446
        %v3874 = vpop.f32.mrb[0].mxu0
        %v3875 = vadd.f32 0.0, %v3874
        %v3876 = vpop.f32.mrb[0].mxu0
        %v3877 = vpop.f32.mrb[0].mxu0
        %v3878 = vadd.f32 0.0, %v3877
        %v3879 = vpop.f32.mrb[0].mxu0
        %3880 = vmatprep.mubr.bf16.mxu0 0
        %3881 = vmatmul.mubr.bf16.gmra.mrb[0].mxu0 %v3447
        %v3882 = vpop.f32.mrb[0].mxu0
        %v3883 = vadd.f32 0.0, %v3882
        %v3884 = vpop.f32.mrb[0].mxu0
        %v3885 = vpop.f32.mrb[0].mxu0
        %v3886 = vadd.f32 0.0, %v3885
        %v3887 = vpop.f32.mrb[0].mxu0
        %3888 = vmatprep.mubr.bf16.mxu0 0
        %3889 = vmatmul.mubr.bf16.gmra.mrb[0].mxu0 %v3448
        %v3890 = vpop.f32.mrb[0].mxu0
        %v3891 = vadd.f32 0.0, %v3890
        %v3892 = vpop.f32.mrb[0].mxu0
        %v3893 = vpop.f32.mrb[0].mxu0
        %v3894 = vadd.f32 0.0, %v3893
        %v3895 = vpop.f32.mrb[0].mxu0
        %3896 = vmatprep.mubr.bf16.mxu0 0
        %3897 = vmatmul.mubr.bf16.gmra.mrb[0].mxu0 %v3449
        %v3898 = vpop.f32.mrb[0].mxu0
        %v3899 = vadd.f32 0.0, %v3898
        %v3900 = vpop.f32.mrb[0].mxu0
        %v3901 = vpop.f32.mrb[0].mxu0
        %v3902 = vadd.f32 0.0, %v3901
        %v3903 = vpop.f32.mrb[0].mxu0
        %3904 = vmatprep.mubr.bf16.mxu0 0
        %3905 = vmatmul.mubr.bf16.gmra.mrb[0].mxu0 %v3450
        %v3906 = vpop.f32.mrb[0].mxu0
        %v3907 = vadd.f32 0.0, %v3906
        %v3908 = vpop.f32.mrb[0].mxu0
        %v3909 = vpop.f32.mrb[0].mxu0
        %v3910 = vadd.f32 0.0, %v3909
        %v3911 = vpop.f32.mrb[0].mxu0
        %3912 = vdwg.mxu0
        %v3913 = vmax.f32 %v3851, %v3867
        %v3914 = vmax.f32 %v3854, %v3870
        %v3915 = vmax.f32 %v3859, %v3875
        %v3916 = vmax.f32 %v3862, %v3878
        %v3917 = vmax.f32 %v3913, %v3883
        %v3918 = vmax.f32 %v3914, %v3886
        %v3919 = vmax.f32 %v3915, %v3891
        %v3920 = vmax.f32 %v3916, %v3894
        %v3921 = vmax.f32 %v3917, %v3899
        %v3922 = vmax.f32 %v3918, %v3902
        %v3923 = vmax.f32 %v3919, %v3907
        %v3924 = vmax.f32 %v3920, %v3910
        %v3925 = vmax.f32 %v3921, %v3922
        %v3926 = vmax.f32 %v3923, %v3924
        %v3927 = vmax.f32 %v3925, %v3926
        %v3928 = vrot.slane %v3927, 4
        %v3929 = vmax.f32 %v3927, %v3928
        %v3930 = vrot.slane %v3929, 2
        %v3931 = vmax.f32 %v3929, %v3930
        %v3932 = vrot.slane %v3931, 1
        %v3933 = vmax.f32 %v3931, %v3932
        %v3934 = vsub.f32 %v3851, %v3933
        %v3935 = vsub.f32 %v3854, %v3933
        %v3936 = vsub.f32 %v3859, %v3933
        %v3937 = vsub.f32 %v3862, %v3933
        %v3938 = vsub.f32 %v3867, %v3933
        %v3939 = vsub.f32 %v3870, %v3933
        %v3940 = vsub.f32 %v3875, %v3933
        %v3941 = vsub.f32 %v3878, %v3933
        %v3942 = vsub.f32 %v3883, %v3933
        %v3943 = vsub.f32 %v3886, %v3933
        %v3944 = vsub.f32 %v3891, %v3933
        %v3945 = vsub.f32 %v3894, %v3933
        %v3946 = vsub.f32 %v3899, %v3933
        %v3947 = vsub.f32 %v3902, %v3933
        %v3948 = vsub.f32 %v3907, %v3933
        %v3949 = vsub.f32 %v3910, %v3933
        %v3950 = vmul.f32 %v3934, 1.442695
        %v3951 = vpow.pop %v3950
        %v3952 = vmul.f32 %v3935, 1.442695
        %v3953 = vpow.pop %v3952
        %v3954 = vmul.f32 %v3936, 1.442695
        %v3955 = vpow.pop %v3954
        %v3956 = vmul.f32 %v3937, 1.442695
        %v3957 = vpow.pop %v3956
        %v3958 = vmul.f32 %v3938, 1.442695
        %v3959 = vpow.pop %v3958
        %v3960 = vmul.f32 %v3939, 1.442695
        %v3961 = vpow.pop %v3960
        %v3962 = vmul.f32 %v3940, 1.442695
        %v3963 = vpow.pop %v3962
        %v3964 = vmul.f32 %v3941, 1.442695
        %v3965 = vpow.pop %v3964
        %v3966 = vmul.f32 %v3942, 1.442695
        %v3967 = vpow.pop %v3966
        %v3968 = vmul.f32 %v3943, 1.442695
        %v3969 = vpow.pop %v3968
        %v3970 = vmul.f32 %v3944, 1.442695
        %v3971 = vpow.pop %v3970
        %v3972 = vmul.f32 %v3945, 1.442695
        %v3973 = vpow.pop %v3972
        %v3974 = vmul.f32 %v3946, 1.442695
        %v3975 = vpow.pop %v3974
        %v3976 = vmul.f32 %v3947, 1.442695
        %v3977 = vpow.pop %v3976
        %v3978 = vmul.f32 %v3948, 1.442695
        %v3979 = vpow.pop %v3978
        %v3980 = vmul.f32 %v3949, 1.442695
        %v3981 = vpow.pop %v3980
        %v3982 = vadd.f32 %v3951, %v3953
        %v3983 = vadd.f32 %v3982, %v3955
        %v3984 = vadd.f32 %v3983, %v3957
        %v3985 = vadd.f32 %v3984, %v3959
        %v3986 = vadd.f32 %v3985, %v3961
        %v3987 = vadd.f32 %v3986, %v3963
        %v3988 = vadd.f32 %v3987, %v3965
        %v3989 = vadd.f32 %v3988, %v3967
        %v3990 = vadd.f32 %v3989, %v3969
        %v3991 = vadd.f32 %v3990, %v3971
        %v3992 = vadd.f32 %v3991, %v3973
        %v3993 = vadd.f32 %v3992, %v3975
        %v3994 = vadd.f32 %v3993, %v3977
        %v3995 = vadd.f32 %v3994, %v3979
        %v3996 = vadd.f32 %v3995, %v3981
        %v3997 = vrot.slane %v3996, 4
        %v3998 = vadd.f32 %v3996, %v3997
        %v3999 = vrot.slane %v3998, 2
        %v4000 = vadd.f32 %v3998, %v3999
        %v4001 = vrot.slane %v4000, 1
        %v4002 = vadd.f32 %v4000, %v4001
        %v4003 = vrcp.pop %v4002
        %v4004 = vmul.f32 %v3951, %v4003
        %v4005 = vmul.f32 %v3953, %v4003
        %v4006 = vmul.f32 %v3955, %v4003
        %v4007 = vmul.f32 %v3957, %v4003
        %v4008 = vmul.f32 %v3959, %v4003
        %v4009 = vmul.f32 %v3961, %v4003
        %v4010 = vmul.f32 %v3963, %v4003
        %v4011 = vmul.f32 %v3965, %v4003
        %v4012 = vmul.f32 %v3967, %v4003
        %v4013 = vmul.f32 %v3969, %v4003
        %v4014 = vmul.f32 %v3971, %v4003
        %v4015 = vmul.f32 %v3973, %v4003
        %v4016 = vmul.f32 %v3975, %v4003
        %v4017 = vmul.f32 %v3977, %v4003
        %v4018 = vmul.f32 %v3979, %v4003
        %v4019 = vmul.f32 %v3981, %v4003
        %v4020 = vpack.c.bf16 %v4005, %v4004
        %v4021 = vpack.c.bf16 %v4007, %v4006
        %v4022 = vpack.c.bf16 %v4009, %v4008
        %v4023 = vpack.c.bf16 %v4011, %v4010
        %v4024 = vpack.c.bf16 %v4013, %v4012
        %v4025 = vpack.c.bf16 %v4015, %v4014
        %v4026 = vpack.c.bf16 %v4017, %v4016
        %v4027 = vpack.c.bf16 %v4019, %v4018
        %4028 = vmatprep.subr.bf16.mxu0 0
        %4029 = vmatpush1.bf16.msra.mxu0 %v3499
        %4030 = vmatprep.subr.bf16.mxu0 0
        %4031 = vmatpush1.bf16.msra.mxu0 %v3500
        %4032 = vmatprep.subr.bf16.mxu0 0
        %4033 = vmatpush1.bf16.msra.mxu0 %v3501
        %4034 = vmatprep.subr.bf16.mxu0 0
        %4035 = vmatpush1.bf16.msra.mxu0 %v3502
        %4036 = vmatprep.subr.bf16.mxu0 0
        %4037 = vmatpush1.bf16.msra.mxu0 %v3503
        %4038 = vmatprep.subr.bf16.mxu0 0
        %4039 = vmatpush1.bf16.msra.mxu0 %v3504
        %4040 = vmatprep.subr.bf16.mxu0 0
        %4041 = vmatpush1.bf16.msra.mxu0 %v3505
        %4042 = vmatprep.subr.bf16.mxu0 0
        %4043 = vmatpush1.bf16.msra.mxu0 %v3506
        %4044 = vmatprep.subr.bf16.mxu0 0
        %4045 = vmatpush1.bf16.msra.mxu0 0
        %4046 = vmatprep.subr.bf16.mxu0 0
        %4047 = vmatpush1.bf16.msra.mxu0 0
        %4048 = vmatprep.subr.bf16.mxu0 0
        %4049 = vmatpush1.bf16.msra.mxu0 0
        %4050 = vmatprep.subr.bf16.mxu0 0
        %4051 = vmatpush1.bf16.msra.mxu0 0
        %4052 = vmatprep.subr.bf16.mxu0 0
        %4053 = vmatpush1.bf16.msra.mxu0 0
        %4054 = vmatprep.subr.bf16.mxu0 0
        %4055 = vmatpush1.bf16.msra.mxu0 0
        %4056 = vmatprep.subr.bf16.mxu0 0
        %4057 = vmatpush1.bf16.msra.mxu0 0
        %4058 = vmatprep.subr.bf16.mxu0 0
        %4059 = vmatpush1.bf16.msra.mxu0 0
        %4060 = vmatprep.mubr.bf16.mxu0 0
        %4061 = vmatmul.mubr.bf16.gmra.mrb[0].mxu0 %v4020
        %v4062 = vpop.f32.mrb[0].mxu0
        %v4063 = vadd.f32 0.0, %v4062
        %v4064 = vpop.f32.mrb[0].mxu0
        %v4065 = vpop.f32.mrb[0].mxu0
        %v4066 = vadd.f32 0.0, %v4065
        %v4067 = vpop.f32.mrb[0].mxu0
        %4068 = vmatprep.mubr.bf16.mxu0 0
        %4069 = vmatmul.mubr.bf16.gmra.mrb[0].mxu0 %v4021
        %v4070 = vpop.f32.mrb[0].mxu0
        %v4071 = vadd.f32 0.0, %v4070
        %v4072 = vpop.f32.mrb[0].mxu0
        %v4073 = vpop.f32.mrb[0].mxu0
        %v4074 = vadd.f32 0.0, %v4073
        %v4075 = vpop.f32.mrb[0].mxu0
        %4076 = vmatprep.mubr.bf16.mxu0 0
        %4077 = vmatmul.mubr.bf16.gmra.mrb[0].mxu0 %v4022
        %v4078 = vpop.f32.mrb[0].mxu0
        %v4079 = vadd.f32 0.0, %v4078
        %v4080 = vpop.f32.mrb[0].mxu0
        %v4081 = vpop.f32.mrb[0].mxu0
        %v4082 = vadd.f32 0.0, %v4081
        %v4083 = vpop.f32.mrb[0].mxu0
        %4084 = vmatprep.mubr.bf16.mxu0 0
        %4085 = vmatmul.mubr.bf16.gmra.mrb[0].mxu0 %v4023
        %v4086 = vpop.f32.mrb[0].mxu0
        %v4087 = vadd.f32 0.0, %v4086
        %v4088 = vpop.f32.mrb[0].mxu0
        %v4089 = vpop.f32.mrb[0].mxu0
        %v4090 = vadd.f32 0.0, %v4089
        %v4091 = vpop.f32.mrb[0].mxu0
        %4092 = vmatprep.mubr.bf16.mxu0 0
        %4093 = vmatmul.mubr.bf16.gmra.mrb[0].mxu0 %v4024
        %v4094 = vpop.f32.mrb[0].mxu0
        %v4095 = vadd.f32 0.0, %v4094
        %v4096 = vpop.f32.mrb[0].mxu0
        %v4097 = vpop.f32.mrb[0].mxu0
        %v4098 = vadd.f32 0.0, %v4097
        %v4099 = vpop.f32.mrb[0].mxu0
        %4100 = vmatprep.mubr.bf16.mxu0 0
        %4101 = vmatmul.mubr.bf16.gmra.mrb[0].mxu0 %v4025
        %v4102 = vpop.f32.mrb[0].mxu0
        %v4103 = vadd.f32 0.0, %v4102
        %v4104 = vpop.f32.mrb[0].mxu0
        %v4105 = vpop.f32.mrb[0].mxu0
        %v4106 = vadd.f32 0.0, %v4105
        %v4107 = vpop.f32.mrb[0].mxu0
        %4108 = vmatprep.mubr.bf16.mxu0 0
        %4109 = vmatmul.mubr.bf16.gmra.mrb[0].mxu0 %v4026
        %v4110 = vpop.f32.mrb[0].mxu0
        %v4111 = vadd.f32 0.0, %v4110
        %v4112 = vpop.f32.mrb[0].mxu0
        %v4113 = vpop.f32.mrb[0].mxu0
        %v4114 = vadd.f32 0.0, %v4113
        %v4115 = vpop.f32.mrb[0].mxu0
        %4116 = vmatprep.mubr.bf16.mxu0 0
        %4117 = vmatmul.mubr.bf16.gmra.mrb[0].mxu0 %v4027
        %v4118 = vpop.f32.mrb[0].mxu0
        %v4119 = vadd.f32 0.0, %v4118
        %v4120 = vpop.f32.mrb[0].mxu0
        %v4121 = vpop.f32.mrb[0].mxu0
        %v4122 = vadd.f32 0.0, %v4121
        %v4123 = vpop.f32.mrb[0].mxu0
        %4124 = vdwg.mxu0
        %v4125 = vpack.c.bf16 %v3757, %v3754
        %v4126 = vpack.c.bf16 %v3765, %v3762
        %v4127 = vpack.c.bf16 %v3773, %v3770
        %v4128 = vpack.c.bf16 %v3781, %v3778
        %v4129 = vpack.c.bf16 %v3789, %v3786
        %v4130 = vpack.c.bf16 %v3797, %v3794
        %v4131 = vpack.c.bf16 %v3805, %v3802
        %v4132 = vpack.c.bf16 %v3813, %v3810
        %v4133 = vpack.c.bf16 %v4066, %v4063
        %v4134 = vpack.c.bf16 %v4074, %v4071
        %v4135 = vpack.c.bf16 %v4082, %v4079
        %v4136 = vpack.c.bf16 %v4090, %v4087
        %v4137 = vpack.c.bf16 %v4098, %v4095
        %v4138 = vpack.c.bf16 %v4106, %v4103
        %v4139 = vpack.c.bf16 %v4114, %v4111
        %v4140 = vpack.c.bf16 %v4122, %v4119
        %s4141 = scalar_lea.vmem [#allocation6], 64
        %v4142 = vld [vmem:[%s4141] sm:$0xf]
        %v4143 = vld [vmem:[%s4141 + $0x4] sm:$0xf]
        %v4144 = vld [vmem:[%s4141 + $0x8] sm:$0xf]
        %v4145 = vld [vmem:[%s4141 + $0xc] sm:$0xf]
        %v4146 = vld [vmem:[%s4141 + $0x10] sm:$0xf]
        %v4147 = vld [vmem:[%s4141 + $0x14] sm:$0xf]
        %v4148 = vld [vmem:[%s4141 + $0x18] sm:$0xf]
        %v4149 = vld [vmem:[%s4141 + $0x1c] sm:$0xf]
        %v4150 = vld [vmem:[%s4141 + $0x20] sm:$0xf]
        %v4151 = vld [vmem:[%s4141 + $0x24] sm:$0xf]
        %v4152 = vld [vmem:[%s4141 + $0x28] sm:$0xf]
        %v4153 = vld [vmem:[%s4141 + $0x2c] sm:$0xf]
        %v4154 = vld [vmem:[%s4141 + $0x30] sm:$0xf]
        %v4155 = vld [vmem:[%s4141 + $0x34] sm:$0xf]
        %v4156 = vld [vmem:[%s4141 + $0x38] sm:$0xf]
        %v4157 = vld [vmem:[%s4141 + $0x3c] sm:$0xf]
        %s4158 = scalar_lea.vmem %s10, 1
        %v4159 = vld [vmem:[%s4158] sm:$0x1]
        %v4161 = vlaneseq
        %v4162 = vshrl.u32 %v4161, 7
        %v4163 = vsub.s32 0, %v4162
        %v4164 = vrot.slane %v4159, %v4163
        %v4182 = vunpack.c.l.b16 %v4142
        %v4183 = vunpack.c.l.b16 %v4143
        %v4184 = vunpack.c.l.b16 %v4144
        %v4185 = vunpack.c.l.b16 %v4145
        %v4186 = vunpack.c.l.b16 %v4146
        %v4187 = vunpack.c.l.b16 %v4147
        %v4188 = vunpack.c.l.b16 %v4148
        %v4189 = vunpack.c.l.b16 %v4149
        %v4190 = vunpack.c.l.b16 %v4150
        %v4191 = vunpack.c.l.b16 %v4151
        %v4192 = vunpack.c.l.b16 %v4152
        %v4193 = vunpack.c.l.b16 %v4153
        %v4194 = vunpack.c.l.b16 %v4154
        %v4195 = vunpack.c.l.b16 %v4155
        %v4196 = vunpack.c.l.b16 %v4156
        %v4197 = vunpack.c.l.b16 %v4157
        %v4198 = vpack.c.b16 %v4183, %v4182
        %v4199 = vpack.c.b16 %v4185, %v4184
        %v4200 = vpack.c.b16 %v4187, %v4186
        %v4201 = vpack.c.b16 %v4189, %v4188
        %v4202 = vpack.c.b16 %v4191, %v4190
        %v4203 = vpack.c.b16 %v4193, %v4192
        %v4204 = vpack.c.b16 %v4195, %v4194
        %v4205 = vpack.c.b16 %v4197, %v4196
        %4214 = vmatprep.subr.bf16.mxu0 0
        %4215 = vmatpush1.bf16.msra.mxu0 %v4198
        %4216 = vmatprep.subr.bf16.mxu0 0
        %4217 = vmatpush1.bf16.msra.mxu0 %v4199
        %4218 = vmatprep.subr.bf16.mxu0 0
        %4219 = vmatpush1.bf16.msra.mxu0 %v4200
        %4220 = vmatprep.subr.bf16.mxu0 0
        %4221 = vmatpush1.bf16.msra.mxu0 %v4201
        %4222 = vmatprep.subr.bf16.mxu0 0
        %4223 = vmatpush1.bf16.msra.mxu0 %v4202
        %4224 = vmatprep.subr.bf16.mxu0 0
        %4225 = vmatpush1.bf16.msra.mxu0 %v4203
        %4226 = vmatprep.subr.bf16.mxu0 0
        %4227 = vmatpush1.bf16.msra.mxu0 %v4204
        %4228 = vmatprep.subr.bf16.mxu0 0
        %4229 = vmatpush1.bf16.msra.mxu0 %v4205
        %4230 = vmatprep.subr.bf16.mxu0 0
        %4231 = vmatpush1.bf16.msra.mxu0 0
        %4232 = vmatprep.subr.bf16.mxu0 0
        %4233 = vmatpush1.bf16.msra.mxu0 0
        %4234 = vmatprep.subr.bf16.mxu0 0
        %4235 = vmatpush1.bf16.msra.mxu0 0
        %4236 = vmatprep.subr.bf16.mxu0 0
        %4237 = vmatpush1.bf16.msra.mxu0 0
        %4238 = vmatprep.subr.bf16.mxu0 0
        %4239 = vmatpush1.bf16.msra.mxu0 0
        %4240 = vmatprep.subr.bf16.mxu0 0
        %4241 = vmatpush1.bf16.msra.mxu0 0
        %4242 = vmatprep.subr.bf16.mxu0 0
        %4243 = vmatpush1.bf16.msra.mxu0 0
        %4244 = vmatprep.subr.bf16.mxu0 0
        %4245 = vmatpush1.bf16.msra.mxu0 0
        %4246 = vmatprep.mubr.bf16.mxu0 0
        %4247 = vmatmul.mubr.bf16.gmra.mrb[0].mxu0 %v4125
        %v4248 = vpop.f32.mrb[0].mxu0
        %v4249 = vadd.f32 %v4164, %v4248
        %v4250 = vpop.f32.mrb[0].mxu0
        %v4251 = vpop.f32.mrb[0].mxu0
        %v4252 = vadd.f32 %v4164, %v4251
        %v4253 = vpop.f32.mrb[0].mxu0
        %4254 = vmatprep.mubr.bf16.mxu0 0
        %4255 = vmatmul.mubr.bf16.gmra.mrb[0].mxu0 %v4126
        %v4256 = vpop.f32.mrb[0].mxu0
        %v4257 = vadd.f32 %v4164, %v4256
        %v4258 = vpop.f32.mrb[0].mxu0
        %v4259 = vpop.f32.mrb[0].mxu0
        %v4260 = vadd.f32 %v4164, %v4259
        %v4261 = vpop.f32.mrb[0].mxu0
        %4262 = vmatprep.mubr.bf16.mxu0 0
        %4263 = vmatmul.mubr.bf16.gmra.mrb[0].mxu0 %v4127
        %v4264 = vpop.f32.mrb[0].mxu0
        %v4265 = vadd.f32 %v4164, %v4264
        %v4266 = vpop.f32.mrb[0].mxu0
        %v4267 = vpop.f32.mrb[0].mxu0
        %v4268 = vadd.f32 %v4164, %v4267
        %v4269 = vpop.f32.mrb[0].mxu0
        %4270 = vmatprep.mubr.bf16.mxu0 0
        %4271 = vmatmul.mubr.bf16.gmra.mrb[0].mxu0 %v4128
        %v4272 = vpop.f32.mrb[0].mxu0
        %v4273 = vadd.f32 %v4164, %v4272
        %v4274 = vpop.f32.mrb[0].mxu0
        %v4275 = vpop.f32.mrb[0].mxu0
        %v4276 = vadd.f32 %v4164, %v4275
        %v4277 = vpop.f32.mrb[0].mxu0
        %4278 = vmatprep.mubr.bf16.mxu0 0
        %4279 = vmatmul.mubr.bf16.gmra.mrb[0].mxu0 %v4129
        %v4280 = vpop.f32.mrb[0].mxu0
        %v4281 = vadd.f32 %v4164, %v4280
        %v4282 = vpop.f32.mrb[0].mxu0
        %v4283 = vpop.f32.mrb[0].mxu0
        %v4284 = vadd.f32 %v4164, %v4283
        %v4285 = vpop.f32.mrb[0].mxu0
        %4286 = vmatprep.mubr.bf16.mxu0 0
        %4287 = vmatmul.mubr.bf16.gmra.mrb[0].mxu0 %v4130
        %v4288 = vpop.f32.mrb[0].mxu0
        %v4289 = vadd.f32 %v4164, %v4288
        %v4290 = vpop.f32.mrb[0].mxu0
        %v4291 = vpop.f32.mrb[0].mxu0
        %v4292 = vadd.f32 %v4164, %v4291
        %v4293 = vpop.f32.mrb[0].mxu0
        %4294 = vmatprep.mubr.bf16.mxu0 0
        %4295 = vmatmul.mubr.bf16.gmra.mrb[0].mxu0 %v4131
        %v4296 = vpop.f32.mrb[0].mxu0
        %v4297 = vadd.f32 %v4164, %v4296
        %v4298 = vpop.f32.mrb[0].mxu0
        %v4299 = vpop.f32.mrb[0].mxu0
        %v4300 = vadd.f32 %v4164, %v4299
        %v4301 = vpop.f32.mrb[0].mxu0
        %4302 = vmatprep.mubr.bf16.mxu0 0
        %4303 = vmatmul.mubr.bf16.gmra.mrb[0].mxu0 %v4132
        %v4304 = vpop.f32.mrb[0].mxu0
        %v4305 = vadd.f32 %v4164, %v4304
        %v4306 = vpop.f32.mrb[0].mxu0
        %v4307 = vpop.f32.mrb[0].mxu0
        %v4308 = vadd.f32 %v4164, %v4307
        %v4309 = vpop.f32.mrb[0].mxu0
        %4310 = vmatprep.mubr.bf16.mxu0 0
        %4311 = vmatmul.mubr.bf16.gmra.mrb[0].mxu0 %v4133
        %v4312 = vpop.f32.mrb[0].mxu0
        %v4313 = vadd.f32 %v4164, %v4312
        %v4314 = vpop.f32.mrb[0].mxu0
        %v4315 = vpop.f32.mrb[0].mxu0
        %v4316 = vadd.f32 %v4164, %v4315
        %v4317 = vpop.f32.mrb[0].mxu0
        %4318 = vmatprep.mubr.bf16.mxu0 0
        %4319 = vmatmul.mubr.bf16.gmra.mrb[0].mxu0 %v4134
        %v4320 = vpop.f32.mrb[0].mxu0
        %v4321 = vadd.f32 %v4164, %v4320
        %v4322 = vpop.f32.mrb[0].mxu0
        %v4323 = vpop.f32.mrb[0].mxu0
        %v4324 = vadd.f32 %v4164, %v4323
        %v4325 = vpop.f32.mrb[0].mxu0
        %4326 = vmatprep.mubr.bf16.mxu0 0
        %4327 = vmatmul.mubr.bf16.gmra.mrb[0].mxu0 %v4135
        %v4328 = vpop.f32.mrb[0].mxu0
        %v4329 = vadd.f32 %v4164, %v4328
        %v4330 = vpop.f32.mrb[0].mxu0
        %v4331 = vpop.f32.mrb[0].mxu0
        %v4332 = vadd.f32 %v4164, %v4331
        %v4333 = vpop.f32.mrb[0].mxu0
        %4334 = vmatprep.mubr.bf16.mxu0 0
        %4335 = vmatmul.mubr.bf16.gmra.mrb[0].mxu0 %v4136
        %v4336 = vpop.f32.mrb[0].mxu0
        %v4337 = vadd.f32 %v4164, %v4336
        %v4338 = vpop.f32.mrb[0].mxu0
        %v4339 = vpop.f32.mrb[0].mxu0
        %v4340 = vadd.f32 %v4164, %v4339
        %v4341 = vpop.f32.mrb[0].mxu0
        %4342 = vmatprep.mubr.bf16.mxu0 0
        %4343 = vmatmul.mubr.bf16.gmra.mrb[0].mxu0 %v4137
        %v4344 = vpop.f32.mrb[0].mxu0
        %v4345 = vadd.f32 %v4164, %v4344
        %v4346 = vpop.f32.mrb[0].mxu0
        %v4347 = vpop.f32.mrb[0].mxu0
        %v4348 = vadd.f32 %v4164, %v4347
        %v4349 = vpop.f32.mrb[0].mxu0
        %4350 = vmatprep.mubr.bf16.mxu0 0
        %4351 = vmatmul.mubr.bf16.gmra.mrb[0].mxu0 %v4138
        %v4352 = vpop.f32.mrb[0].mxu0
        %v4353 = vadd.f32 %v4164, %v4352
        %v4354 = vpop.f32.mrb[0].mxu0
        %v4355 = vpop.f32.mrb[0].mxu0
        %v4356 = vadd.f32 %v4164, %v4355
        %v4357 = vpop.f32.mrb[0].mxu0
        %4358 = vmatprep.mubr.bf16.mxu0 0
        %4359 = vmatmul.mubr.bf16.gmra.mrb[0].mxu0 %v4139
        %v4360 = vpop.f32.mrb[0].mxu0
        %v4361 = vadd.f32 %v4164, %v4360
        %v4362 = vpop.f32.mrb[0].mxu0
        %v4363 = vpop.f32.mrb[0].mxu0
        %v4364 = vadd.f32 %v4164, %v4363
        %v4365 = vpop.f32.mrb[0].mxu0
        %4366 = vmatprep.mubr.bf16.mxu0 0
        %4367 = vmatmul.mubr.bf16.gmra.mrb[0].mxu0 %v4140
        %v4368 = vpop.f32.mrb[0].mxu0
        %v4369 = vadd.f32 %v4164, %v4368
        %v4370 = vpop.f32.mrb[0].mxu0
        %v4371 = vpop.f32.mrb[0].mxu0
        %v4372 = vadd.f32 %v4164, %v4371
        %v4373 = vpop.f32.mrb[0].mxu0
        %4374 = vdwg.mxu0
        %s4375 = scalar_lea.vmem %s11, 1
        %v4376 = vld [vmem:[%s4375] sm:$0x1]
        %v4378 = vlaneseq
        %v4379 = vshrl.u32 %v4378, 7
        %v4380 = vsub.s32 0, %v4379
        %v4381 = vrot.slane %v4376, %v4380
        %v4383 = vmul.f32 %v4249, %v4381
        %v4384 = vmul.f32 %v4252, %v4381
        %v4385 = vmul.f32 %v4257, %v4381
        %v4386 = vmul.f32 %v4260, %v4381
        %v4387 = vmul.f32 %v4265, %v4381
        %v4388 = vmul.f32 %v4268, %v4381
        %v4389 = vmul.f32 %v4273, %v4381
        %v4390 = vmul.f32 %v4276, %v4381
        %v4391 = vmul.f32 %v4281, %v4381
        %v4392 = vmul.f32 %v4284, %v4381
        %v4393 = vmul.f32 %v4289, %v4381
        %v4394 = vmul.f32 %v4292, %v4381
        %v4395 = vmul.f32 %v4297, %v4381
        %v4396 = vmul.f32 %v4300, %v4381
        %v4397 = vmul.f32 %v4305, %v4381
        %v4398 = vmul.f32 %v4308, %v4381
        %v4399 = vmul.f32 %v4313, %v4381
        %v4400 = vmul.f32 %v4316, %v4381
        %v4401 = vmul.f32 %v4321, %v4381
        %v4402 = vmul.f32 %v4324, %v4381
        %v4403 = vmul.f32 %v4329, %v4381
        %v4404 = vmul.f32 %v4332, %v4381
        %v4405 = vmul.f32 %v4337, %v4381
        %v4406 = vmul.f32 %v4340, %v4381
        %v4407 = vmul.f32 %v4345, %v4381
        %v4408 = vmul.f32 %v4348, %v4381
        %v4409 = vmul.f32 %v4353, %v4381
        %v4410 = vmul.f32 %v4356, %v4381
        %v4411 = vmul.f32 %v4361, %v4381
        %v4412 = vmul.f32 %v4364, %v4381
        %v4413 = vmul.f32 %v4369, %v4381
        %v4414 = vmul.f32 %v4372, %v4381
        %s4415 = scalar_lea.vmem %s12, 1
        %v4416 = vld [vmem:[%s4415] sm:$0x1]
        %v4418 = vlaneseq
        %v4419 = vshrl.u32 %v4418, 7
        %v4420 = vsub.s32 0, %v4419
        %v4421 = vrot.slane %v4416, %v4420
        %v4423 = vadd.f32 %v4383, %v4421
        %v4424 = vadd.f32 %v4384, %v4421
        %v4425 = vadd.f32 %v4385, %v4421
        %v4426 = vadd.f32 %v4386, %v4421
        %v4427 = vadd.f32 %v4387, %v4421
        %v4428 = vadd.f32 %v4388, %v4421
        %v4429 = vadd.f32 %v4389, %v4421
        %v4430 = vadd.f32 %v4390, %v4421
        %v4431 = vadd.f32 %v4391, %v4421
        %v4432 = vadd.f32 %v4392, %v4421
        %v4433 = vadd.f32 %v4393, %v4421
        %v4434 = vadd.f32 %v4394, %v4421
        %v4435 = vadd.f32 %v4395, %v4421
        %v4436 = vadd.f32 %v4396, %v4421
        %v4437 = vadd.f32 %v4397, %v4421
        %v4438 = vadd.f32 %v4398, %v4421
        %v4439 = vadd.f32 %v4399, %v4421
        %v4440 = vadd.f32 %v4400, %v4421
        %v4441 = vadd.f32 %v4401, %v4421
        %v4442 = vadd.f32 %v4402, %v4421
        %v4443 = vadd.f32 %v4403, %v4421
        %v4444 = vadd.f32 %v4404, %v4421
        %v4445 = vadd.f32 %v4405, %v4421
        %v4446 = vadd.f32 %v4406, %v4421
        %v4447 = vadd.f32 %v4407, %v4421
        %v4448 = vadd.f32 %v4408, %v4421
        %v4449 = vadd.f32 %v4409, %v4421
        %v4450 = vadd.f32 %v4410, %v4421
        %v4451 = vadd.f32 %v4411, %v4421
        %v4452 = vadd.f32 %v4412, %v4421
        %v4453 = vadd.f32 %v4413, %v4421
        %v4454 = vadd.f32 %v4414, %v4421
        %v4455 = vmax.f32 %v4423, 0.0
        %v4456 = vmax.f32 %v4424, 0.0
        %v4457 = vmax.f32 %v4425, 0.0
        %v4458 = vmax.f32 %v4426, 0.0
        %v4459 = vmax.f32 %v4427, 0.0
        %v4460 = vmax.f32 %v4428, 0.0
        %v4461 = vmax.f32 %v4429, 0.0
        %v4462 = vmax.f32 %v4430, 0.0
        %v4463 = vmax.f32 %v4431, 0.0
        %v4464 = vmax.f32 %v4432, 0.0
        %v4465 = vmax.f32 %v4433, 0.0
        %v4466 = vmax.f32 %v4434, 0.0
        %v4467 = vmax.f32 %v4435, 0.0
        %v4468 = vmax.f32 %v4436, 0.0
        %v4469 = vmax.f32 %v4437, 0.0
        %v4470 = vmax.f32 %v4438, 0.0
        %v4471 = vmax.f32 %v4439, 0.0
        %v4472 = vmax.f32 %v4440, 0.0
        %v4473 = vmax.f32 %v4441, 0.0
        %v4474 = vmax.f32 %v4442, 0.0
        %v4475 = vmax.f32 %v4443, 0.0
        %v4476 = vmax.f32 %v4444, 0.0
        %v4477 = vmax.f32 %v4445, 0.0
        %v4478 = vmax.f32 %v4446, 0.0
        %v4479 = vmax.f32 %v4447, 0.0
        %v4480 = vmax.f32 %v4448, 0.0
        %v4481 = vmax.f32 %v4449, 0.0
        %v4482 = vmax.f32 %v4450, 0.0
        %v4483 = vmax.f32 %v4451, 0.0
        %v4484 = vmax.f32 %v4452, 0.0
        %v4485 = vmax.f32 %v4453, 0.0
        %v4486 = vmax.f32 %v4454, 0.0
        %v4487 = vadd.f32 %v3081, %v4455
        %v4488 = vadd.f32 %v3082, %v4456
        %v4489 = vadd.f32 %v3083, %v4457
        %v4490 = vadd.f32 %v3084, %v4458
        %v4491 = vadd.f32 %v3085, %v4459
        %v4492 = vadd.f32 %v3086, %v4460
        %v4493 = vadd.f32 %v3087, %v4461
        %v4494 = vadd.f32 %v3088, %v4462
        %v4495 = vadd.f32 %v3089, %v4463
        %v4496 = vadd.f32 %v3090, %v4464
        %v4497 = vadd.f32 %v3091, %v4465
        %v4498 = vadd.f32 %v3092, %v4466
        %v4499 = vadd.f32 %v3093, %v4467
        %v4500 = vadd.f32 %v3094, %v4468
        %v4501 = vadd.f32 %v3095, %v4469
        %v4502 = vadd.f32 %v3096, %v4470
        %v4503 = vadd.f32 %v3097, %v4471
        %v4504 = vadd.f32 %v3098, %v4472
        %v4505 = vadd.f32 %v3099, %v4473
        %v4506 = vadd.f32 %v3100, %v4474
        %v4507 = vadd.f32 %v3101, %v4475
        %v4508 = vadd.f32 %v3102, %v4476
        %v4509 = vadd.f32 %v3103, %v4477
        %v4510 = vadd.f32 %v3104, %v4478
        %v4511 = vadd.f32 %v3105, %v4479
        %v4512 = vadd.f32 %v3106, %v4480
        %v4513 = vadd.f32 %v3107, %v4481
        %v4514 = vadd.f32 %v3108, %v4482
        %v4515 = vadd.f32 %v3109, %v4483
        %v4516 = vadd.f32 %v3110, %v4484
        %v4517 = vadd.f32 %v3111, %v4485
        %v4518 = vadd.f32 %v3112, %v4486
        %v4519 = vpack.c.bf16 %v4488, %v4487
        %v4520 = vpack.c.bf16 %v4490, %v4489
        %v4521 = vpack.c.bf16 %v4492, %v4491
        %v4522 = vpack.c.bf16 %v4494, %v4493
        %v4523 = vpack.c.bf16 %v4496, %v4495
        %v4524 = vpack.c.bf16 %v4498, %v4497
        %v4525 = vpack.c.bf16 %v4500, %v4499
        %v4526 = vpack.c.bf16 %v4502, %v4501
        %v4527 = vpack.c.bf16 %v4504, %v4503
        %v4528 = vpack.c.bf16 %v4506, %v4505
        %v4529 = vpack.c.bf16 %v4508, %v4507
        %v4530 = vpack.c.bf16 %v4510, %v4509
        %v4531 = vpack.c.bf16 %v4512, %v4511
        %v4532 = vpack.c.bf16 %v4514, %v4513
        %v4533 = vpack.c.bf16 %v4516, %v4515
        %v4534 = vpack.c.bf16 %v4518, %v4517
        %4535 = vst [vmem:[#allocation2 + $0x8] sm:$0xff] %v4519
        %4536 = vst [vmem:[#allocation2 + $0x28] sm:$0xff] %v4520
        %4537 = vst [vmem:[#allocation2 + $0x48] sm:$0xff] %v4521
        %4538 = vst [vmem:[#allocation2 + $0x68] sm:$0xff] %v4522
        %4539 = vst [vmem:[#allocation2 + $0x88] sm:$0xff] %v4523
        %4540 = vst [vmem:[#allocation2 + $0xa8] sm:$0xff] %v4524
        %4541 = vst [vmem:[#allocation2 + $0xc8] sm:$0xff] %v4525
        %4542 = vst [vmem:[#allocation2 + $0xe8] sm:$0xff] %v4526
        %4543 = vst [vmem:[#allocation2 + $0x108] sm:$0xff] %v4527
        %4544 = vst [vmem:[#allocation2 + $0x128] sm:$0xff] %v4528
        %4545 = vst [vmem:[#allocation2 + $0x148] sm:$0xff] %v4529
        %4546 = vst [vmem:[#allocation2 + $0x168] sm:$0xff] %v4530
        %4547 = vst [vmem:[#allocation2 + $0x188] sm:$0xff] %v4531
        %4548 = vst [vmem:[#allocation2 + $0x1a8] sm:$0xff] %v4532
        %4549 = vst [vmem:[#allocation2 + $0x1c8] sm:$0xff] %v4533
        %4550 = vst [vmem:[#allocation2 + $0x1e8] sm:$0xff] %v4534
        %s4551 = scalar_lea.vmem %s7, 256
        %v4552 = vld [vmem:[%s4551] sm:$0xff]
        %v4553 = vld [vmem:[%s4551 + $0x8] sm:$0xff]
        %v4554 = vld [vmem:[%s4551 + $0x10] sm:$0xff]
        %v4555 = vld [vmem:[%s4551 + $0x18] sm:$0xff]
        %v4556 = vld [vmem:[%s4551 + $0x20] sm:$0xff]
        %v4557 = vld [vmem:[%s4551 + $0x28] sm:$0xff]
        %v4558 = vld [vmem:[%s4551 + $0x30] sm:$0xff]
        %v4559 = vld [vmem:[%s4551 + $0x38] sm:$0xff]
        %v4560 = vld [vmem:[%s4551 + $0x40] sm:$0xff]
        %v4561 = vld [vmem:[%s4551 + $0x48] sm:$0xff]
        %v4562 = vld [vmem:[%s4551 + $0x50] sm:$0xff]
        %v4563 = vld [vmem:[%s4551 + $0x58] sm:$0xff]
        %v4564 = vld [vmem:[%s4551 + $0x60] sm:$0xff]
        %v4565 = vld [vmem:[%s4551 + $0x68] sm:$0xff]
        %v4566 = vld [vmem:[%s4551 + $0x70] sm:$0xff]
        %v4567 = vld [vmem:[%s4551 + $0x78] sm:$0xff]
        %v4584 = vunpack.c.l.b16 %v4552
        %v4585 = vunpack.c.h.b16 %v4552
        %v4586 = vunpack.c.l.b16 %v4553
        %v4587 = vunpack.c.h.b16 %v4553
        %v4588 = vunpack.c.l.b16 %v4554
        %v4589 = vunpack.c.h.b16 %v4554
        %v4590 = vunpack.c.l.b16 %v4555
        %v4591 = vunpack.c.h.b16 %v4555
        %v4592 = vunpack.c.l.b16 %v4556
        %v4593 = vunpack.c.h.b16 %v4556
        %v4594 = vunpack.c.l.b16 %v4557
        %v4595 = vunpack.c.h.b16 %v4557
        %v4596 = vunpack.c.l.b16 %v4558
        %v4597 = vunpack.c.h.b16 %v4558
        %v4598 = vunpack.c.l.b16 %v4559
        %v4599 = vunpack.c.h.b16 %v4559
        %v4600 = vunpack.c.l.b16 %v4560
        %v4601 = vunpack.c.h.b16 %v4560
        %v4602 = vunpack.c.l.b16 %v4561
        %v4603 = vunpack.c.h.b16 %v4561
        %v4604 = vunpack.c.l.b16 %v4562
        %v4605 = vunpack.c.h.b16 %v4562
        %v4606 = vunpack.c.l.b16 %v4563
        %v4607 = vunpack.c.h.b16 %v4563
        %v4608 = vunpack.c.l.b16 %v4564
        %v4609 = vunpack.c.h.b16 %v4564
        %v4610 = vunpack.c.l.b16 %v4565
        %v4611 = vunpack.c.h.b16 %v4565
        %v4612 = vunpack.c.l.b16 %v4566
        %v4613 = vunpack.c.h.b16 %v4566
        %v4614 = vunpack.c.l.b16 %v4567
        %v4615 = vunpack.c.h.b16 %v4567
        %v4616 = vpack.c.b16 %v4586, %v4584
        %v4617 = vpack.c.b16 %v4587, %v4585
        %v4618 = vpack.c.b16 %v4590, %v4588
        %v4619 = vpack.c.b16 %v4591, %v4589
        %v4620 = vpack.c.b16 %v4594, %v4592
        %v4621 = vpack.c.b16 %v4595, %v4593
        %v4622 = vpack.c.b16 %v4598, %v4596
        %v4623 = vpack.c.b16 %v4599, %v4597
        %v4624 = vpack.c.b16 %v4602, %v4600
        %v4625 = vpack.c.b16 %v4603, %v4601
        %v4626 = vpack.c.b16 %v4606, %v4604
        %v4627 = vpack.c.b16 %v4607, %v4605
        %v4628 = vpack.c.b16 %v4610, %v4608
        %v4629 = vpack.c.b16 %v4611, %v4609
        %v4630 = vpack.c.b16 %v4614, %v4612
        %v4631 = vpack.c.b16 %v4615, %v4613
        %4648 = vmatprep.subr.bf16.mxu0 %v4617
        %4649 = vmatpush1.bf16.msra.mxu0 %v4616
        %4650 = vmatprep.subr.bf16.mxu0 %v4619
        %4651 = vmatpush1.bf16.msra.mxu0 %v4618
        %4652 = vmatprep.subr.bf16.mxu0 %v4621
        %4653 = vmatpush1.bf16.msra.mxu0 %v4620
        %4654 = vmatprep.subr.bf16.mxu0 %v4623
        %4655 = vmatpush1.bf16.msra.mxu0 %v4622
        %4656 = vmatprep.subr.bf16.mxu0 %v4625
        %4657 = vmatpush1.bf16.msra.mxu0 %v4624
        %4658 = vmatprep.subr.bf16.mxu0 %v4627
        %4659 = vmatpush1.bf16.msra.mxu0 %v4626
        %4660 = vmatprep.subr.bf16.mxu0 %v4629
        %4661 = vmatpush1.bf16.msra.mxu0 %v4628
        %4662 = vmatprep.subr.bf16.mxu0 %v4631
        %4663 = vmatpush1.bf16.msra.mxu0 %v4630
        %4664 = vmatprep.subr.bf16.mxu0 0
        %4665 = vmatpush1.bf16.msra.mxu0 0
        %4666 = vmatprep.subr.bf16.mxu0 0
        %4667 = vmatpush1.bf16.msra.mxu0 0
        %4668 = vmatprep.subr.bf16.mxu0 0
        %4669 = vmatpush1.bf16.msra.mxu0 0
        %4670 = vmatprep.subr.bf16.mxu0 0
        %4671 = vmatpush1.bf16.msra.mxu0 0
        %4672 = vmatprep.subr.bf16.mxu0 0
        %4673 = vmatpush1.bf16.msra.mxu0 0
        %4674 = vmatprep.subr.bf16.mxu0 0
        %4675 = vmatpush1.bf16.msra.mxu0 0
        %4676 = vmatprep.subr.bf16.mxu0 0
        %4677 = vmatpush1.bf16.msra.mxu0 0
        %4678 = vmatprep.subr.bf16.mxu0 0
        %4679 = vmatpush1.bf16.msra.mxu0 0
        %4680 = vmatprep.mubr.bf16.mxu0 0
        %4681 = vmatmul.mubr.bf16.gmra.mrb[0].mxu0 %v4519
        %v4682 = vpop.f32.mrb[0].mxu0
        %v4683 = vadd.f32 0.0, %v4682
        %v4684 = vpop.f32.mrb[0].mxu0
        %v4685 = vadd.f32 0.0, %v4684
        %v4686 = vpop.f32.mrb[0].mxu0
        %v4687 = vadd.f32 0.0, %v4686
        %v4688 = vpop.f32.mrb[0].mxu0
        %v4689 = vadd.f32 0.0, %v4688
        %4690 = vmatprep.mubr.bf16.mxu0 0
        %4691 = vmatmul.mubr.bf16.gmra.mrb[0].mxu0 %v4520
        %v4692 = vpop.f32.mrb[0].mxu0
        %v4693 = vadd.f32 0.0, %v4692
        %v4694 = vpop.f32.mrb[0].mxu0
        %v4695 = vadd.f32 0.0, %v4694
        %v4696 = vpop.f32.mrb[0].mxu0
        %v4697 = vadd.f32 0.0, %v4696
        %v4698 = vpop.f32.mrb[0].mxu0
        %v4699 = vadd.f32 0.0, %v4698
        %4700 = vmatprep.mubr.bf16.mxu0 0
        %4701 = vmatmul.mubr.bf16.gmra.mrb[0].mxu0 %v4521
        %v4702 = vpop.f32.mrb[0].mxu0
        %v4703 = vadd.f32 0.0, %v4702
        %v4704 = vpop.f32.mrb[0].mxu0
        %v4705 = vadd.f32 0.0, %v4704
        %v4706 = vpop.f32.mrb[0].mxu0
        %v4707 = vadd.f32 0.0, %v4706
        %v4708 = vpop.f32.mrb[0].mxu0
        %v4709 = vadd.f32 0.0, %v4708
        %4710 = vmatprep.mubr.bf16.mxu0 0
        %4711 = vmatmul.mubr.bf16.gmra.mrb[0].mxu0 %v4522
        %v4712 = vpop.f32.mrb[0].mxu0
        %v4713 = vadd.f32 0.0, %v4712
        %v4714 = vpop.f32.mrb[0].mxu0
        %v4715 = vadd.f32 0.0, %v4714
        %v4716 = vpop.f32.mrb[0].mxu0
        %v4717 = vadd.f32 0.0, %v4716
        %v4718 = vpop.f32.mrb[0].mxu0
        %v4719 = vadd.f32 0.0, %v4718
        %4720 = vmatprep.mubr.bf16.mxu0 0
        %4721 = vmatmul.mubr.bf16.gmra.mrb[0].mxu0 %v4523
        %v4722 = vpop.f32.mrb[0].mxu0
        %v4723 = vadd.f32 0.0, %v4722
        %v4724 = vpop.f32.mrb[0].mxu0
        %v4725 = vadd.f32 0.0, %v4724
        %v4726 = vpop.f32.mrb[0].mxu0
        %v4727 = vadd.f32 0.0, %v4726
        %v4728 = vpop.f32.mrb[0].mxu0
        %v4729 = vadd.f32 0.0, %v4728
        %4730 = vmatprep.mubr.bf16.mxu0 0
        %4731 = vmatmul.mubr.bf16.gmra.mrb[0].mxu0 %v4524
        %v4732 = vpop.f32.mrb[0].mxu0
        %v4733 = vadd.f32 0.0, %v4732
        %v4734 = vpop.f32.mrb[0].mxu0
        %v4735 = vadd.f32 0.0, %v4734
        %v4736 = vpop.f32.mrb[0].mxu0
        %v4737 = vadd.f32 0.0, %v4736
        %v4738 = vpop.f32.mrb[0].mxu0
        %v4739 = vadd.f32 0.0, %v4738
        %4740 = vmatprep.mubr.bf16.mxu0 0
        %4741 = vmatmul.mubr.bf16.gmra.mrb[0].mxu0 %v4525
        %v4742 = vpop.f32.mrb[0].mxu0
        %v4743 = vadd.f32 0.0, %v4742
        %v4744 = vpop.f32.mrb[0].mxu0
        %v4745 = vadd.f32 0.0, %v4744
        %v4746 = vpop.f32.mrb[0].mxu0
        %v4747 = vadd.f32 0.0, %v4746
        %v4748 = vpop.f32.mrb[0].mxu0
        %v4749 = vadd.f32 0.0, %v4748
        %4750 = vmatprep.mubr.bf16.mxu0 0
        %4751 = vmatmul.mubr.bf16.gmra.mrb[0].mxu0 %v4526
        %v4752 = vpop.f32.mrb[0].mxu0
        %v4753 = vadd.f32 0.0, %v4752
        %v4754 = vpop.f32.mrb[0].mxu0
        %v4755 = vadd.f32 0.0, %v4754
        %v4756 = vpop.f32.mrb[0].mxu0
        %v4757 = vadd.f32 0.0, %v4756
        %v4758 = vpop.f32.mrb[0].mxu0
        %v4759 = vadd.f32 0.0, %v4758
        %4760 = vmatprep.mubr.bf16.mxu0 0
        %4761 = vmatmul.mubr.bf16.gmra.mrb[0].mxu0 %v4527
        %v4762 = vpop.f32.mrb[0].mxu0
        %v4763 = vadd.f32 0.0, %v4762
        %v4764 = vpop.f32.mrb[0].mxu0
        %v4765 = vadd.f32 0.0, %v4764
        %v4766 = vpop.f32.mrb[0].mxu0
        %v4767 = vadd.f32 0.0, %v4766
        %v4768 = vpop.f32.mrb[0].mxu0
        %v4769 = vadd.f32 0.0, %v4768
        %4770 = vmatprep.mubr.bf16.mxu0 0
        %4771 = vmatmul.mubr.bf16.gmra.mrb[0].mxu0 %v4528
        %v4772 = vpop.f32.mrb[0].mxu0
        %v4773 = vadd.f32 0.0, %v4772
        %v4774 = vpop.f32.mrb[0].mxu0
        %v4775 = vadd.f32 0.0, %v4774
        %v4776 = vpop.f32.mrb[0].mxu0
        %v4777 = vadd.f32 0.0, %v4776
        %v4778 = vpop.f32.mrb[0].mxu0
        %v4779 = vadd.f32 0.0, %v4778
        %4780 = vmatprep.mubr.bf16.mxu0 0
        %4781 = vmatmul.mubr.bf16.gmra.mrb[0].mxu0 %v4529
        %v4782 = vpop.f32.mrb[0].mxu0
        %v4783 = vadd.f32 0.0, %v4782
        %v4784 = vpop.f32.mrb[0].mxu0
        %v4785 = vadd.f32 0.0, %v4784
        %v4786 = vpop.f32.mrb[0].mxu0
        %v4787 = vadd.f32 0.0, %v4786
        %v4788 = vpop.f32.mrb[0].mxu0
        %v4789 = vadd.f32 0.0, %v4788
        %4790 = vmatprep.mubr.bf16.mxu0 0
        %4791 = vmatmul.mubr.bf16.gmra.mrb[0].mxu0 %v4530
        %v4792 = vpop.f32.mrb[0].mxu0
        %v4793 = vadd.f32 0.0, %v4792
        %v4794 = vpop.f32.mrb[0].mxu0
        %v4795 = vadd.f32 0.0, %v4794
        %v4796 = vpop.f32.mrb[0].mxu0
        %v4797 = vadd.f32 0.0, %v4796
        %v4798 = vpop.f32.mrb[0].mxu0
        %v4799 = vadd.f32 0.0, %v4798
        %4800 = vmatprep.mubr.bf16.mxu0 0
        %4801 = vmatmul.mubr.bf16.gmra.mrb[0].mxu0 %v4531
        %v4802 = vpop.f32.mrb[0].mxu0
        %v4803 = vadd.f32 0.0, %v4802
        %v4804 = vpop.f32.mrb[0].mxu0
        %v4805 = vadd.f32 0.0, %v4804
        %v4806 = vpop.f32.mrb[0].mxu0
        %v4807 = vadd.f32 0.0, %v4806
        %v4808 = vpop.f32.mrb[0].mxu0
        %v4809 = vadd.f32 0.0, %v4808
        %4810 = vmatprep.mubr.bf16.mxu0 0
        %4811 = vmatmul.mubr.bf16.gmra.mrb[0].mxu0 %v4532
        %v4812 = vpop.f32.mrb[0].mxu0
        %v4813 = vadd.f32 0.0, %v4812
        %v4814 = vpop.f32.mrb[0].mxu0
        %v4815 = vadd.f32 0.0, %v4814
        %v4816 = vpop.f32.mrb[0].mxu0
        %v4817 = vadd.f32 0.0, %v4816
        %v4818 = vpop.f32.mrb[0].mxu0
        %v4819 = vadd.f32 0.0, %v4818
        %4820 = vmatprep.mubr.bf16.mxu0 0
        %4821 = vmatmul.mubr.bf16.gmra.mrb[0].mxu0 %v4533
        %v4822 = vpop.f32.mrb[0].mxu0
        %v4823 = vadd.f32 0.0, %v4822
        %v4824 = vpop.f32.mrb[0].mxu0
        %v4825 = vadd.f32 0.0, %v4824
        %v4826 = vpop.f32.mrb[0].mxu0
        %v4827 = vadd.f32 0.0, %v4826
        %v4828 = vpop.f32.mrb[0].mxu0
        %v4829 = vadd.f32 0.0, %v4828
        %4830 = vmatprep.mubr.bf16.mxu0 0
        %4831 = vmatmul.mubr.bf16.gmra.mrb[0].mxu0 %v4534
        %v4832 = vpop.f32.mrb[0].mxu0
        %v4833 = vadd.f32 0.0, %v4832
        %v4834 = vpop.f32.mrb[0].mxu0
        %v4835 = vadd.f32 0.0, %v4834
        %v4836 = vpop.f32.mrb[0].mxu0
        %v4837 = vadd.f32 0.0, %v4836
        %v4838 = vpop.f32.mrb[0].mxu0
        %v4839 = vadd.f32 0.0, %v4838
        %4840 = vdwg.mxu0
        %v4841 = vpack.c.bf16 %v4687, %v4683
        %v4842 = vpack.c.bf16 %v4697, %v4693
        %v4843 = vpack.c.bf16 %v4707, %v4703
        %v4844 = vpack.c.bf16 %v4717, %v4713
        %v4845 = vpack.c.bf16 %v4727, %v4723
        %v4846 = vpack.c.bf16 %v4737, %v4733
        %v4847 = vpack.c.bf16 %v4747, %v4743
        %v4848 = vpack.c.bf16 %v4757, %v4753
        %v4849 = vpack.c.bf16 %v4767, %v4763
        %v4850 = vpack.c.bf16 %v4777, %v4773
        %v4851 = vpack.c.bf16 %v4787, %v4783
        %v4852 = vpack.c.bf16 %v4797, %v4793
        %v4853 = vpack.c.bf16 %v4807, %v4803
        %v4854 = vpack.c.bf16 %v4817, %v4813
        %v4855 = vpack.c.bf16 %v4827, %v4823
        %v4856 = vpack.c.bf16 %v4837, %v4833
        %s4857 = scalar_lea.vmem %s8, 2
        %v4858 = vld [vmem:[%s4857] sm:$0x1]
        %v4860 = vlaneseq
        %v4861 = vshrl.u32 %v4860, 7
        %v4862 = vsub.s32 0, %v4861
        %v4863 = vrot.slane %v4858, %v4862
        %v4865 = vadd.f32 %v4685, %v4863
        %v4866 = vadd.f32 %v4689, %v4863
        %v4867 = vadd.f32 %v4695, %v4863
        %v4868 = vadd.f32 %v4699, %v4863
        %v4869 = vadd.f32 %v4705, %v4863
        %v4870 = vadd.f32 %v4709, %v4863
        %v4871 = vadd.f32 %v4715, %v4863
        %v4872 = vadd.f32 %v4719, %v4863
        %v4873 = vadd.f32 %v4725, %v4863
        %v4874 = vadd.f32 %v4729, %v4863
        %v4875 = vadd.f32 %v4735, %v4863
        %v4876 = vadd.f32 %v4739, %v4863
        %v4877 = vadd.f32 %v4745, %v4863
        %v4878 = vadd.f32 %v4749, %v4863
        %v4879 = vadd.f32 %v4755, %v4863
        %v4880 = vadd.f32 %v4759, %v4863
        %v4881 = vadd.f32 %v4765, %v4863
        %v4882 = vadd.f32 %v4769, %v4863
        %v4883 = vadd.f32 %v4775, %v4863
        %v4884 = vadd.f32 %v4779, %v4863
        %v4885 = vadd.f32 %v4785, %v4863
        %v4886 = vadd.f32 %v4789, %v4863
        %v4887 = vadd.f32 %v4795, %v4863
        %v4888 = vadd.f32 %v4799, %v4863
        %v4889 = vadd.f32 %v4805, %v4863
        %v4890 = vadd.f32 %v4809, %v4863
        %v4891 = vadd.f32 %v4815, %v4863
        %v4892 = vadd.f32 %v4819, %v4863
        %v4893 = vadd.f32 %v4825, %v4863
        %v4894 = vadd.f32 %v4829, %v4863
        %v4895 = vadd.f32 %v4835, %v4863
        %v4896 = vadd.f32 %v4839, %v4863
        %v4897 = vpack.c.bf16 %v4866, %v4865
        %v4898 = vpack.c.bf16 %v4868, %v4867
        %v4899 = vpack.c.bf16 %v4870, %v4869
        %v4900 = vpack.c.bf16 %v4872, %v4871
        %v4901 = vpack.c.bf16 %v4874, %v4873
        %v4902 = vpack.c.bf16 %v4876, %v4875
        %v4903 = vpack.c.bf16 %v4878, %v4877
        %v4904 = vpack.c.bf16 %v4880, %v4879
        %v4905 = vpack.c.bf16 %v4882, %v4881
        %v4906 = vpack.c.bf16 %v4884, %v4883
        %v4907 = vpack.c.bf16 %v4886, %v4885
        %v4908 = vpack.c.bf16 %v4888, %v4887
        %v4909 = vpack.c.bf16 %v4890, %v4889
        %v4910 = vpack.c.bf16 %v4892, %v4891
        %v4911 = vpack.c.bf16 %v4894, %v4893
        %v4912 = vpack.c.bf16 %v4896, %v4895
        %4913 = vmatprep.subr.bf16.mxu0 0
        %4914 = vmatpush1.bf16.xpose.msra.mxu0 %v4841
        %4915 = vmatprep.subr.bf16.mxu0 0
        %4916 = vmatpush1.bf16.xpose.msra.mxu0 %v4842
        %4917 = vmatprep.subr.bf16.mxu0 0
        %4918 = vmatpush1.bf16.xpose.msra.mxu0 %v4843
        %4919 = vmatprep.subr.bf16.mxu0 0
        %4920 = vmatpush1.bf16.xpose.msra.mxu0 %v4844
        %4921 = vmatprep.subr.bf16.mxu0 0
        %4922 = vmatpush1.bf16.xpose.msra.mxu0 %v4845
        %4923 = vmatprep.subr.bf16.mxu0 0
        %4924 = vmatpush1.bf16.xpose.msra.mxu0 %v4846
        %4925 = vmatprep.subr.bf16.mxu0 0
        %4926 = vmatpush1.bf16.xpose.msra.mxu0 %v4847
        %4927 = vmatprep.subr.bf16.mxu0 0
        %4928 = vmatpush1.bf16.xpose.msra.mxu0 %v4848
        %4929 = vmatprep.subr.bf16.mxu0 0
        %4930 = vmatpush1.bf16.xpose.msra.mxu0 0
        %4931 = vmatprep.subr.bf16.mxu0 0
        %4932 = vmatpush1.bf16.xpose.msra.mxu0 0
        %4933 = vmatprep.subr.bf16.mxu0 0
        %4934 = vmatpush1.bf16.xpose.msra.mxu0 0
        %4935 = vmatprep.subr.bf16.mxu0 0
        %4936 = vmatpush1.bf16.xpose.msra.mxu0 0
        %4937 = vmatprep.subr.bf16.mxu0 0
        %4938 = vmatpush1.bf16.xpose.msra.mxu0 0
        %4939 = vmatprep.subr.bf16.mxu0 0
        %4940 = vmatpush1.bf16.xpose.msra.mxu0 0
        %4941 = vmatprep.subr.bf16.mxu0 0
        %4942 = vmatpush1.bf16.xpose.msra.mxu0 0
        %4943 = vmatprep.subr.bf16.mxu0 0
        %4944 = vmatpush1.bf16.xpose.msra.mxu0 0
        %4945 = vmatprep.mubr.bf16.mxu0 0
        %4946 = vmatmul.mubr.bf16.gmra.mrb[0].mxu0 %v4841
        %v4947 = vpop.f32.mrb[0].mxu0
        %v4948 = vadd.f32 0.0, %v4947
        %v4949 = vpop.f32.mrb[0].mxu0
        %v4950 = vpop.f32.mrb[0].mxu0
        %v4951 = vadd.f32 0.0, %v4950
        %v4952 = vpop.f32.mrb[0].mxu0
        %4953 = vmatprep.mubr.bf16.mxu0 0
        %4954 = vmatmul.mubr.bf16.gmra.mrb[0].mxu0 %v4842
        %v4955 = vpop.f32.mrb[0].mxu0
        %v4956 = vadd.f32 0.0, %v4955
        %v4957 = vpop.f32.mrb[0].mxu0
        %v4958 = vpop.f32.mrb[0].mxu0
        %v4959 = vadd.f32 0.0, %v4958
        %v4960 = vpop.f32.mrb[0].mxu0
        %4961 = vmatprep.mubr.bf16.mxu0 0
        %4962 = vmatmul.mubr.bf16.gmra.mrb[0].mxu0 %v4843
        %v4963 = vpop.f32.mrb[0].mxu0
        %v4964 = vadd.f32 0.0, %v4963
        %v4965 = vpop.f32.mrb[0].mxu0
        %v4966 = vpop.f32.mrb[0].mxu0
        %v4967 = vadd.f32 0.0, %v4966
        %v4968 = vpop.f32.mrb[0].mxu0
        %4969 = vmatprep.mubr.bf16.mxu0 0
        %4970 = vmatmul.mubr.bf16.gmra.mrb[0].mxu0 %v4844
        %v4971 = vpop.f32.mrb[0].mxu0
        %v4972 = vadd.f32 0.0, %v4971
        %v4973 = vpop.f32.mrb[0].mxu0
        %v4974 = vpop.f32.mrb[0].mxu0
        %v4975 = vadd.f32 0.0, %v4974
        %v4976 = vpop.f32.mrb[0].mxu0
        %4977 = vmatprep.mubr.bf16.mxu0 0
        %4978 = vmatmul.mubr.bf16.gmra.mrb[0].mxu0 %v4845
        %v4979 = vpop.f32.mrb[0].mxu0
        %v4980 = vadd.f32 0.0, %v4979
        %v4981 = vpop.f32.mrb[0].mxu0
        %v4982 = vpop.f32.mrb[0].mxu0
        %v4983 = vadd.f32 0.0, %v4982
        %v4984 = vpop.f32.mrb[0].mxu0
        %4985 = vmatprep.mubr.bf16.mxu0 0
        %4986 = vmatmul.mubr.bf16.gmra.mrb[0].mxu0 %v4846
        %v4987 = vpop.f32.mrb[0].mxu0
        %v4988 = vadd.f32 0.0, %v4987
        %v4989 = vpop.f32.mrb[0].mxu0
        %v4990 = vpop.f32.mrb[0].mxu0
        %v4991 = vadd.f32 0.0, %v4990
        %v4992 = vpop.f32.mrb[0].mxu0
        %4993 = vmatprep.mubr.bf16.mxu0 0
        %4994 = vmatmul.mubr.bf16.gmra.mrb[0].mxu0 %v4847
        %v4995 = vpop.f32.mrb[0].mxu0
        %v4996 = vadd.f32 0.0, %v4995
        %v4997 = vpop.f32.mrb[0].mxu0
        %v4998 = vpop.f32.mrb[0].mxu0
        %v4999 = vadd.f32 0.0, %v4998
        %v5000 = vpop.f32.mrb[0].mxu0
        %5001 = vmatprep.mubr.bf16.mxu0 0
        %5002 = vmatmul.mubr.bf16.gmra.mrb[0].mxu0 %v4848
        %v5003 = vpop.f32.mrb[0].mxu0
        %v5004 = vadd.f32 0.0, %v5003
        %v5005 = vpop.f32.mrb[0].mxu0
        %v5006 = vpop.f32.mrb[0].mxu0
        %v5007 = vadd.f32 0.0, %v5006
        %v5008 = vpop.f32.mrb[0].mxu0
        %5009 = vdwg.mxu0
        %v5010 = vmax.f32 %v4948, %v4964
        %v5011 = vmax.f32 %v4951, %v4967
        %v5012 = vmax.f32 %v4956, %v4972
        %v5013 = vmax.f32 %v4959, %v4975
        %v5014 = vmax.f32 %v5010, %v4980
        %v5015 = vmax.f32 %v5011, %v4983
        %v5016 = vmax.f32 %v5012, %v4988
        %v5017 = vmax.f32 %v5013, %v4991
        %v5018 = vmax.f32 %v5014, %v4996
        %v5019 = vmax.f32 %v5015, %v4999
        %v5020 = vmax.f32 %v5016, %v5004
        %v5021 = vmax.f32 %v5017, %v5007
        %v5022 = vmax.f32 %v5018, %v5019
        %v5023 = vmax.f32 %v5020, %v5021
        %v5024 = vmax.f32 %v5022, %v5023
        %v5025 = vrot.slane %v5024, 4
        %v5026 = vmax.f32 %v5024, %v5025
        %v5027 = vrot.slane %v5026, 2
        %v5028 = vmax.f32 %v5026, %v5027
        %v5029 = vrot.slane %v5028, 1
        %v5030 = vmax.f32 %v5028, %v5029
        %v5031 = vsub.f32 %v4948, %v5030
        %v5032 = vsub.f32 %v4951, %v5030
        %v5033 = vsub.f32 %v4956, %v5030
        %v5034 = vsub.f32 %v4959, %v5030
        %v5035 = vsub.f32 %v4964, %v5030
        %v5036 = vsub.f32 %v4967, %v5030
        %v5037 = vsub.f32 %v4972, %v5030
        %v5038 = vsub.f32 %v4975, %v5030
        %v5039 = vsub.f32 %v4980, %v5030
        %v5040 = vsub.f32 %v4983, %v5030
        %v5041 = vsub.f32 %v4988, %v5030
        %v5042 = vsub.f32 %v4991, %v5030
        %v5043 = vsub.f32 %v4996, %v5030
        %v5044 = vsub.f32 %v4999, %v5030
        %v5045 = vsub.f32 %v5004, %v5030
        %v5046 = vsub.f32 %v5007, %v5030
        %v5047 = vmul.f32 %v5031, 1.442695
        %v5048 = vpow.pop %v5047
        %v5049 = vmul.f32 %v5032, 1.442695
        %v5050 = vpow.pop %v5049
        %v5051 = vmul.f32 %v5033, 1.442695
        %v5052 = vpow.pop %v5051
        %v5053 = vmul.f32 %v5034, 1.442695
        %v5054 = vpow.pop %v5053
        %v5055 = vmul.f32 %v5035, 1.442695
        %v5056 = vpow.pop %v5055
        %v5057 = vmul.f32 %v5036, 1.442695
        %v5058 = vpow.pop %v5057
        %v5059 = vmul.f32 %v5037, 1.442695
        %v5060 = vpow.pop %v5059
        %v5061 = vmul.f32 %v5038, 1.442695
        %v5062 = vpow.pop %v5061
        %v5063 = vmul.f32 %v5039, 1.442695
        %v5064 = vpow.pop %v5063
        %v5065 = vmul.f32 %v5040, 1.442695
        %v5066 = vpow.pop %v5065
        %v5067 = vmul.f32 %v5041, 1.442695
        %v5068 = vpow.pop %v5067
        %v5069 = vmul.f32 %v5042, 1.442695
        %v5070 = vpow.pop %v5069
        %v5071 = vmul.f32 %v5043, 1.442695
        %v5072 = vpow.pop %v5071
        %v5073 = vmul.f32 %v5044, 1.442695
        %v5074 = vpow.pop %v5073
        %v5075 = vmul.f32 %v5045, 1.442695
        %v5076 = vpow.pop %v5075
        %v5077 = vmul.f32 %v5046, 1.442695
        %v5078 = vpow.pop %v5077
        %v5079 = vadd.f32 %v5048, %v5050
        %v5080 = vadd.f32 %v5079, %v5052
        %v5081 = vadd.f32 %v5080, %v5054
        %v5082 = vadd.f32 %v5081, %v5056
        %v5083 = vadd.f32 %v5082, %v5058
        %v5084 = vadd.f32 %v5083, %v5060
        %v5085 = vadd.f32 %v5084, %v5062
        %v5086 = vadd.f32 %v5085, %v5064
        %v5087 = vadd.f32 %v5086, %v5066
        %v5088 = vadd.f32 %v5087, %v5068
        %v5089 = vadd.f32 %v5088, %v5070
        %v5090 = vadd.f32 %v5089, %v5072
        %v5091 = vadd.f32 %v5090, %v5074
        %v5092 = vadd.f32 %v5091, %v5076
        %v5093 = vadd.f32 %v5092, %v5078
        %v5094 = vrot.slane %v5093, 4
        %v5095 = vadd.f32 %v5093, %v5094
        %v5096 = vrot.slane %v5095, 2
        %v5097 = vadd.f32 %v5095, %v5096
        %v5098 = vrot.slane %v5097, 1
        %v5099 = vadd.f32 %v5097, %v5098
        %v5100 = vrcp.pop %v5099
        %v5101 = vmul.f32 %v5048, %v5100
        %v5102 = vmul.f32 %v5050, %v5100
        %v5103 = vmul.f32 %v5052, %v5100
        %v5104 = vmul.f32 %v5054, %v5100
        %v5105 = vmul.f32 %v5056, %v5100
        %v5106 = vmul.f32 %v5058, %v5100
        %v5107 = vmul.f32 %v5060, %v5100
        %v5108 = vmul.f32 %v5062, %v5100
        %v5109 = vmul.f32 %v5064, %v5100
        %v5110 = vmul.f32 %v5066, %v5100
        %v5111 = vmul.f32 %v5068, %v5100
        %v5112 = vmul.f32 %v5070, %v5100
        %v5113 = vmul.f32 %v5072, %v5100
        %v5114 = vmul.f32 %v5074, %v5100
        %v5115 = vmul.f32 %v5076, %v5100
        %v5116 = vmul.f32 %v5078, %v5100
        %v5117 = vpack.c.bf16 %v5102, %v5101
        %v5118 = vpack.c.bf16 %v5104, %v5103
        %v5119 = vpack.c.bf16 %v5106, %v5105
        %v5120 = vpack.c.bf16 %v5108, %v5107
        %v5121 = vpack.c.bf16 %v5110, %v5109
        %v5122 = vpack.c.bf16 %v5112, %v5111
        %v5123 = vpack.c.bf16 %v5114, %v5113
        %v5124 = vpack.c.bf16 %v5116, %v5115
        %5125 = vmatprep.subr.bf16.mxu0 0
        %5126 = vmatpush1.bf16.msra.mxu0 %v4897
        %5127 = vmatprep.subr.bf16.mxu0 0
        %5128 = vmatpush1.bf16.msra.mxu0 %v4898
        %5129 = vmatprep.subr.bf16.mxu0 0
        %5130 = vmatpush1.bf16.msra.mxu0 %v4899
        %5131 = vmatprep.subr.bf16.mxu0 0
        %5132 = vmatpush1.bf16.msra.mxu0 %v4900
        %5133 = vmatprep.subr.bf16.mxu0 0
        %5134 = vmatpush1.bf16.msra.mxu0 %v4901
        %5135 = vmatprep.subr.bf16.mxu0 0
        %5136 = vmatpush1.bf16.msra.mxu0 %v4902
        %5137 = vmatprep.subr.bf16.mxu0 0
        %5138 = vmatpush1.bf16.msra.mxu0 %v4903
        %5139 = vmatprep.subr.bf16.mxu0 0
        %5140 = vmatpush1.bf16.msra.mxu0 %v4904
        %5141 = vmatprep.subr.bf16.mxu0 0
        %5142 = vmatpush1.bf16.msra.mxu0 0
        %5143 = vmatprep.subr.bf16.mxu0 0
        %5144 = vmatpush1.bf16.msra.mxu0 0
        %5145 = vmatprep.subr.bf16.mxu0 0
        %5146 = vmatpush1.bf16.msra.mxu0 0
        %5147 = vmatprep.subr.bf16.mxu0 0
        %5148 = vmatpush1.bf16.msra.mxu0 0
        %5149 = vmatprep.subr.bf16.mxu0 0
        %5150 = vmatpush1.bf16.msra.mxu0 0
        %5151 = vmatprep.subr.bf16.mxu0 0
        %5152 = vmatpush1.bf16.msra.mxu0 0
        %5153 = vmatprep.subr.bf16.mxu0 0
        %5154 = vmatpush1.bf16.msra.mxu0 0
        %5155 = vmatprep.subr.bf16.mxu0 0
        %5156 = vmatpush1.bf16.msra.mxu0 0
        %5157 = vmatprep.mubr.bf16.mxu0 0
        %5158 = vmatmul.mubr.bf16.gmra.mrb[0].mxu0 %v5117
        %v5159 = vpop.f32.mrb[0].mxu0
        %v5160 = vadd.f32 0.0, %v5159
        %v5161 = vpop.f32.mrb[0].mxu0
        %v5162 = vpop.f32.mrb[0].mxu0
        %v5163 = vadd.f32 0.0, %v5162
        %v5164 = vpop.f32.mrb[0].mxu0
        %5165 = vmatprep.mubr.bf16.mxu0 0
        %5166 = vmatmul.mubr.bf16.gmra.mrb[0].mxu0 %v5118
        %v5167 = vpop.f32.mrb[0].mxu0
        %v5168 = vadd.f32 0.0, %v5167
        %v5169 = vpop.f32.mrb[0].mxu0
        %v5170 = vpop.f32.mrb[0].mxu0
        %v5171 = vadd.f32 0.0, %v5170
        %v5172 = vpop.f32.mrb[0].mxu0
        %5173 = vmatprep.mubr.bf16.mxu0 0
        %5174 = vmatmul.mubr.bf16.gmra.mrb[0].mxu0 %v5119
        %v5175 = vpop.f32.mrb[0].mxu0
        %v5176 = vadd.f32 0.0, %v5175
        %v5177 = vpop.f32.mrb[0].mxu0
        %v5178 = vpop.f32.mrb[0].mxu0
        %v5179 = vadd.f32 0.0, %v5178
        %v5180 = vpop.f32.mrb[0].mxu0
        %5181 = vmatprep.mubr.bf16.mxu0 0
        %5182 = vmatmul.mubr.bf16.gmra.mrb[0].mxu0 %v5120
        %v5183 = vpop.f32.mrb[0].mxu0
        %v5184 = vadd.f32 0.0, %v5183
        %v5185 = vpop.f32.mrb[0].mxu0
        %v5186 = vpop.f32.mrb[0].mxu0
        %v5187 = vadd.f32 0.0, %v5186
        %v5188 = vpop.f32.mrb[0].mxu0
        %5189 = vmatprep.mubr.bf16.mxu0 0
        %5190 = vmatmul.mubr.bf16.gmra.mrb[0].mxu0 %v5121
        %v5191 = vpop.f32.mrb[0].mxu0
        %v5192 = vadd.f32 0.0, %v5191
        %v5193 = vpop.f32.mrb[0].mxu0
        %v5194 = vpop.f32.mrb[0].mxu0
        %v5195 = vadd.f32 0.0, %v5194
        %v5196 = vpop.f32.mrb[0].mxu0
        %5197 = vmatprep.mubr.bf16.mxu0 0
        %5198 = vmatmul.mubr.bf16.gmra.mrb[0].mxu0 %v5122
        %v5199 = vpop.f32.mrb[0].mxu0
        %v5200 = vadd.f32 0.0, %v5199
        %v5201 = vpop.f32.mrb[0].mxu0
        %v5202 = vpop.f32.mrb[0].mxu0
        %v5203 = vadd.f32 0.0, %v5202
        %v5204 = vpop.f32.mrb[0].mxu0
        %5205 = vmatprep.mubr.bf16.mxu0 0
        %5206 = vmatmul.mubr.bf16.gmra.mrb[0].mxu0 %v5123
        %v5207 = vpop.f32.mrb[0].mxu0
        %v5208 = vadd.f32 0.0, %v5207
        %v5209 = vpop.f32.mrb[0].mxu0
        %v5210 = vpop.f32.mrb[0].mxu0
        %v5211 = vadd.f32 0.0, %v5210
        %v5212 = vpop.f32.mrb[0].mxu0
        %5213 = vmatprep.mubr.bf16.mxu0 0
        %5214 = vmatmul.mubr.bf16.gmra.mrb[0].mxu0 %v5124
        %v5215 = vpop.f32.mrb[0].mxu0
        %v5216 = vadd.f32 0.0, %v5215
        %v5217 = vpop.f32.mrb[0].mxu0
        %v5218 = vpop.f32.mrb[0].mxu0
        %v5219 = vadd.f32 0.0, %v5218
        %v5220 = vpop.f32.mrb[0].mxu0
        %5221 = vdwg.mxu0
        %5222 = vmatprep.subr.bf16.mxu0 0
        %5223 = vmatpush1.bf16.xpose.msra.mxu0 %v4849
        %5224 = vmatprep.subr.bf16.mxu0 0
        %5225 = vmatpush1.bf16.xpose.msra.mxu0 %v4850
        %5226 = vmatprep.subr.bf16.mxu0 0
        %5227 = vmatpush1.bf16.xpose.msra.mxu0 %v4851
        %5228 = vmatprep.subr.bf16.mxu0 0
        %5229 = vmatpush1.bf16.xpose.msra.mxu0 %v4852
        %5230 = vmatprep.subr.bf16.mxu0 0
        %5231 = vmatpush1.bf16.xpose.msra.mxu0 %v4853
        %5232 = vmatprep.subr.bf16.mxu0 0
        %5233 = vmatpush1.bf16.xpose.msra.mxu0 %v4854
        %5234 = vmatprep.subr.bf16.mxu0 0
        %5235 = vmatpush1.bf16.xpose.msra.mxu0 %v4855
        %5236 = vmatprep.subr.bf16.mxu0 0
        %5237 = vmatpush1.bf16.xpose.msra.mxu0 %v4856
        %5238 = vmatprep.subr.bf16.mxu0 0
        %5239 = vmatpush1.bf16.xpose.msra.mxu0 0
        %5240 = vmatprep.subr.bf16.mxu0 0
        %5241 = vmatpush1.bf16.xpose.msra.mxu0 0
        %5242 = vmatprep.subr.bf16.mxu0 0
        %5243 = vmatpush1.bf16.xpose.msra.mxu0 0
        %5244 = vmatprep.subr.bf16.mxu0 0
        %5245 = vmatpush1.bf16.xpose.msra.mxu0 0
        %5246 = vmatprep.subr.bf16.mxu0 0
        %5247 = vmatpush1.bf16.xpose.msra.mxu0 0
        %5248 = vmatprep.subr.bf16.mxu0 0
        %5249 = vmatpush1.bf16.xpose.msra.mxu0 0
        %5250 = vmatprep.subr.bf16.mxu0 0
        %5251 = vmatpush1.bf16.xpose.msra.mxu0 0
        %5252 = vmatprep.subr.bf16.mxu0 0
        %5253 = vmatpush1.bf16.xpose.msra.mxu0 0
        %5254 = vmatprep.mubr.bf16.mxu0 0
        %5255 = vmatmul.mubr.bf16.gmra.mrb[0].mxu0 %v4849
        %v5256 = vpop.f32.mrb[0].mxu0
        %v5257 = vadd.f32 0.0, %v5256
        %v5258 = vpop.f32.mrb[0].mxu0
        %v5259 = vpop.f32.mrb[0].mxu0
        %v5260 = vadd.f32 0.0, %v5259
        %v5261 = vpop.f32.mrb[0].mxu0
        %5262 = vmatprep.mubr.bf16.mxu0 0
        %5263 = vmatmul.mubr.bf16.gmra.mrb[0].mxu0 %v4850
        %v5264 = vpop.f32.mrb[0].mxu0
        %v5265 = vadd.f32 0.0, %v5264
        %v5266 = vpop.f32.mrb[0].mxu0
        %v5267 = vpop.f32.mrb[0].mxu0
        %v5268 = vadd.f32 0.0, %v5267
        %v5269 = vpop.f32.mrb[0].mxu0
        %5270 = vmatprep.mubr.bf16.mxu0 0
        %5271 = vmatmul.mubr.bf16.gmra.mrb[0].mxu0 %v4851
        %v5272 = vpop.f32.mrb[0].mxu0
        %v5273 = vadd.f32 0.0, %v5272
        %v5274 = vpop.f32.mrb[0].mxu0
        %v5275 = vpop.f32.mrb[0].mxu0
        %v5276 = vadd.f32 0.0, %v5275
        %v5277 = vpop.f32.mrb[0].mxu0
        %5278 = vmatprep.mubr.bf16.mxu0 0
        %5279 = vmatmul.mubr.bf16.gmra.mrb[0].mxu0 %v4852
        %v5280 = vpop.f32.mrb[0].mxu0
        %v5281 = vadd.f32 0.0, %v5280
        %v5282 = vpop.f32.mrb[0].mxu0
        %v5283 = vpop.f32.mrb[0].mxu0
        %v5284 = vadd.f32 0.0, %v5283
        %v5285 = vpop.f32.mrb[0].mxu0
        %5286 = vmatprep.mubr.bf16.mxu0 0
        %5287 = vmatmul.mubr.bf16.gmra.mrb[0].mxu0 %v4853
        %v5288 = vpop.f32.mrb[0].mxu0
        %v5289 = vadd.f32 0.0, %v5288
        %v5290 = vpop.f32.mrb[0].mxu0
        %v5291 = vpop.f32.mrb[0].mxu0
        %v5292 = vadd.f32 0.0, %v5291
        %v5293 = vpop.f32.mrb[0].mxu0
        %5294 = vmatprep.mubr.bf16.mxu0 0
        %5295 = vmatmul.mubr.bf16.gmra.mrb[0].mxu0 %v4854
        %v5296 = vpop.f32.mrb[0].mxu0
        %v5297 = vadd.f32 0.0, %v5296
        %v5298 = vpop.f32.mrb[0].mxu0
        %v5299 = vpop.f32.mrb[0].mxu0
        %v5300 = vadd.f32 0.0, %v5299
        %v5301 = vpop.f32.mrb[0].mxu0
        %5302 = vmatprep.mubr.bf16.mxu0 0
        %5303 = vmatmul.mubr.bf16.gmra.mrb[0].mxu0 %v4855
        %v5304 = vpop.f32.mrb[0].mxu0
        %v5305 = vadd.f32 0.0, %v5304
        %v5306 = vpop.f32.mrb[0].mxu0
        %v5307 = vpop.f32.mrb[0].mxu0
        %v5308 = vadd.f32 0.0, %v5307
        %v5309 = vpop.f32.mrb[0].mxu0
        %5310 = vmatprep.mubr.bf16.mxu0 0
        %5311 = vmatmul.mubr.bf16.gmra.mrb[0].mxu0 %v4856
        %v5312 = vpop.f32.mrb[0].mxu0
        %v5313 = vadd.f32 0.0, %v5312
        %v5314 = vpop.f32.mrb[0].mxu0
        %v5315 = vpop.f32.mrb[0].mxu0
        %v5316 = vadd.f32 0.0, %v5315
        %v5317 = vpop.f32.mrb[0].mxu0
        %5318 = vdwg.mxu0
        %v5319 = vmax.f32 %v5257, %v5273
        %v5320 = vmax.f32 %v5260, %v5276
        %v5321 = vmax.f32 %v5265, %v5281
        %v5322 = vmax.f32 %v5268, %v5284
        %v5323 = vmax.f32 %v5319, %v5289
        %v5324 = vmax.f32 %v5320, %v5292
        %v5325 = vmax.f32 %v5321, %v5297
        %v5326 = vmax.f32 %v5322, %v5300
        %v5327 = vmax.f32 %v5323, %v5305
        %v5328 = vmax.f32 %v5324, %v5308
        %v5329 = vmax.f32 %v5325, %v5313
        %v5330 = vmax.f32 %v5326, %v5316
        %v5331 = vmax.f32 %v5327, %v5328
        %v5332 = vmax.f32 %v5329, %v5330
        %v5333 = vmax.f32 %v5331, %v5332
        %v5334 = vrot.slane %v5333, 4
        %v5335 = vmax.f32 %v5333, %v5334
        %v5336 = vrot.slane %v5335, 2
        %v5337 = vmax.f32 %v5335, %v5336
        %v5338 = vrot.slane %v5337, 1
        %v5339 = vmax.f32 %v5337, %v5338
        %v5340 = vsub.f32 %v5257, %v5339
        %v5341 = vsub.f32 %v5260, %v5339
        %v5342 = vsub.f32 %v5265, %v5339
        %v5343 = vsub.f32 %v5268, %v5339
        %v5344 = vsub.f32 %v5273, %v5339
        %v5345 = vsub.f32 %v5276, %v5339
        %v5346 = vsub.f32 %v5281, %v5339
        %v5347 = vsub.f32 %v5284, %v5339
        %v5348 = vsub.f32 %v5289, %v5339
        %v5349 = vsub.f32 %v5292, %v5339
        %v5350 = vsub.f32 %v5297, %v5339
        %v5351 = vsub.f32 %v5300, %v5339
        %v5352 = vsub.f32 %v5305, %v5339
        %v5353 = vsub.f32 %v5308, %v5339
        %v5354 = vsub.f32 %v5313, %v5339
        %v5355 = vsub.f32 %v5316, %v5339
        %v5356 = vmul.f32 %v5340, 1.442695
        %v5357 = vpow.pop %v5356
        %v5358 = vmul.f32 %v5341, 1.442695
        %v5359 = vpow.pop %v5358
        %v5360 = vmul.f32 %v5342, 1.442695
        %v5361 = vpow.pop %v5360
        %v5362 = vmul.f32 %v5343, 1.442695
        %v5363 = vpow.pop %v5362
        %v5364 = vmul.f32 %v5344, 1.442695
        %v5365 = vpow.pop %v5364
        %v5366 = vmul.f32 %v5345, 1.442695
        %v5367 = vpow.pop %v5366
        %v5368 = vmul.f32 %v5346, 1.442695
        %v5369 = vpow.pop %v5368
        %v5370 = vmul.f32 %v5347, 1.442695
        %v5371 = vpow.pop %v5370
        %v5372 = vmul.f32 %v5348, 1.442695
        %v5373 = vpow.pop %v5372
        %v5374 = vmul.f32 %v5349, 1.442695
        %v5375 = vpow.pop %v5374
        %v5376 = vmul.f32 %v5350, 1.442695
        %v5377 = vpow.pop %v5376
        %v5378 = vmul.f32 %v5351, 1.442695
        %v5379 = vpow.pop %v5378
        %v5380 = vmul.f32 %v5352, 1.442695
        %v5381 = vpow.pop %v5380
        %v5382 = vmul.f32 %v5353, 1.442695
        %v5383 = vpow.pop %v5382
        %v5384 = vmul.f32 %v5354, 1.442695
        %v5385 = vpow.pop %v5384
        %v5386 = vmul.f32 %v5355, 1.442695
        %v5387 = vpow.pop %v5386
        %v5388 = vadd.f32 %v5357, %v5359
        %v5389 = vadd.f32 %v5388, %v5361
        %v5390 = vadd.f32 %v5389, %v5363
        %v5391 = vadd.f32 %v5390, %v5365
        %v5392 = vadd.f32 %v5391, %v5367
        %v5393 = vadd.f32 %v5392, %v5369
        %v5394 = vadd.f32 %v5393, %v5371
        %v5395 = vadd.f32 %v5394, %v5373
        %v5396 = vadd.f32 %v5395, %v5375
        %v5397 = vadd.f32 %v5396, %v5377
        %v5398 = vadd.f32 %v5397, %v5379
        %v5399 = vadd.f32 %v5398, %v5381
        %v5400 = vadd.f32 %v5399, %v5383
        %v5401 = vadd.f32 %v5400, %v5385
        %v5402 = vadd.f32 %v5401, %v5387
        %v5403 = vrot.slane %v5402, 4
        %v5404 = vadd.f32 %v5402, %v5403
        %v5405 = vrot.slane %v5404, 2
        %v5406 = vadd.f32 %v5404, %v5405
        %v5407 = vrot.slane %v5406, 1
        %v5408 = vadd.f32 %v5406, %v5407
        %v5409 = vrcp.pop %v5408
        %v5410 = vmul.f32 %v5357, %v5409
        %v5411 = vmul.f32 %v5359, %v5409
        %v5412 = vmul.f32 %v5361, %v5409
        %v5413 = vmul.f32 %v5363, %v5409
        %v5414 = vmul.f32 %v5365, %v5409
        %v5415 = vmul.f32 %v5367, %v5409
        %v5416 = vmul.f32 %v5369, %v5409
        %v5417 = vmul.f32 %v5371, %v5409
        %v5418 = vmul.f32 %v5373, %v5409
        %v5419 = vmul.f32 %v5375, %v5409
        %v5420 = vmul.f32 %v5377, %v5409
        %v5421 = vmul.f32 %v5379, %v5409
        %v5422 = vmul.f32 %v5381, %v5409
        %v5423 = vmul.f32 %v5383, %v5409
        %v5424 = vmul.f32 %v5385, %v5409
        %v5425 = vmul.f32 %v5387, %v5409
        %v5426 = vpack.c.bf16 %v5411, %v5410
        %v5427 = vpack.c.bf16 %v5413, %v5412
        %v5428 = vpack.c.bf16 %v5415, %v5414
        %v5429 = vpack.c.bf16 %v5417, %v5416
        %v5430 = vpack.c.bf16 %v5419, %v5418
        %v5431 = vpack.c.bf16 %v5421, %v5420
        %v5432 = vpack.c.bf16 %v5423, %v5422
        %v5433 = vpack.c.bf16 %v5425, %v5424
        %5434 = vmatprep.subr.bf16.mxu0 0
        %5435 = vmatpush1.bf16.msra.mxu0 %v4905
        %5436 = vmatprep.subr.bf16.mxu0 0
        %5437 = vmatpush1.bf16.msra.mxu0 %v4906
        %5438 = vmatprep.subr.bf16.mxu0 0
        %5439 = vmatpush1.bf16.msra.mxu0 %v4907
        %5440 = vmatprep.subr.bf16.mxu0 0
        %5441 = vmatpush1.bf16.msra.mxu0 %v4908
        %5442 = vmatprep.subr.bf16.mxu0 0
        %5443 = vmatpush1.bf16.msra.mxu0 %v4909
        %5444 = vmatprep.subr.bf16.mxu0 0
        %5445 = vmatpush1.bf16.msra.mxu0 %v4910
        %5446 = vmatprep.subr.bf16.mxu0 0
        %5447 = vmatpush1.bf16.msra.mxu0 %v4911
        %5448 = vmatprep.subr.bf16.mxu0 0
        %5449 = vmatpush1.bf16.msra.mxu0 %v4912
        %5450 = vmatprep.subr.bf16.mxu0 0
        %5451 = vmatpush1.bf16.msra.mxu0 0
        %5452 = vmatprep.subr.bf16.mxu0 0
        %5453 = vmatpush1.bf16.msra.mxu0 0
        %5454 = vmatprep.subr.bf16.mxu0 0
        %5455 = vmatpush1.bf16.msra.mxu0 0
        %5456 = vmatprep.subr.bf16.mxu0 0
        %5457 = vmatpush1.bf16.msra.mxu0 0
        %5458 = vmatprep.subr.bf16.mxu0 0
        %5459 = vmatpush1.bf16.msra.mxu0 0
        %5460 = vmatprep.subr.bf16.mxu0 0
        %5461 = vmatpush1.bf16.msra.mxu0 0
        %5462 = vmatprep.subr.bf16.mxu0 0
        %5463 = vmatpush1.bf16.msra.mxu0 0
        %5464 = vmatprep.subr.bf16.mxu0 0
        %5465 = vmatpush1.bf16.msra.mxu0 0
        %5466 = vmatprep.mubr.bf16.mxu0 0
        %5467 = vmatmul.mubr.bf16.gmra.mrb[0].mxu0 %v5426
        %v5468 = vpop.f32.mrb[0].mxu0
        %v5469 = vadd.f32 0.0, %v5468
        %v5470 = vpop.f32.mrb[0].mxu0
        %v5471 = vpop.f32.mrb[0].mxu0
        %v5472 = vadd.f32 0.0, %v5471
        %v5473 = vpop.f32.mrb[0].mxu0
        %5474 = vmatprep.mubr.bf16.mxu0 0
        %5475 = vmatmul.mubr.bf16.gmra.mrb[0].mxu0 %v5427
        %v5476 = vpop.f32.mrb[0].mxu0
        %v5477 = vadd.f32 0.0, %v5476
        %v5478 = vpop.f32.mrb[0].mxu0
        %v5479 = vpop.f32.mrb[0].mxu0
        %v5480 = vadd.f32 0.0, %v5479
        %v5481 = vpop.f32.mrb[0].mxu0
        %5482 = vmatprep.mubr.bf16.mxu0 0
        %5483 = vmatmul.mubr.bf16.gmra.mrb[0].mxu0 %v5428
        %v5484 = vpop.f32.mrb[0].mxu0
        %v5485 = vadd.f32 0.0, %v5484
        %v5486 = vpop.f32.mrb[0].mxu0
        %v5487 = vpop.f32.mrb[0].mxu0
        %v5488 = vadd.f32 0.0, %v5487
        %v5489 = vpop.f32.mrb[0].mxu0
        %5490 = vmatprep.mubr.bf16.mxu0 0
        %5491 = vmatmul.mubr.bf16.gmra.mrb[0].mxu0 %v5429
        %v5492 = vpop.f32.mrb[0].mxu0
        %v5493 = vadd.f32 0.0, %v5492
        %v5494 = vpop.f32.mrb[0].mxu0
        %v5495 = vpop.f32.mrb[0].mxu0
        %v5496 = vadd.f32 0.0, %v5495
        %v5497 = vpop.f32.mrb[0].mxu0
        %5498 = vmatprep.mubr.bf16.mxu0 0
        %5499 = vmatmul.mubr.bf16.gmra.mrb[0].mxu0 %v5430
        %v5500 = vpop.f32.mrb[0].mxu0
        %v5501 = vadd.f32 0.0, %v5500
        %v5502 = vpop.f32.mrb[0].mxu0
        %v5503 = vpop.f32.mrb[0].mxu0
        %v5504 = vadd.f32 0.0, %v5503
        %v5505 = vpop.f32.mrb[0].mxu0
        %5506 = vmatprep.mubr.bf16.mxu0 0
        %5507 = vmatmul.mubr.bf16.gmra.mrb[0].mxu0 %v5431
        %v5508 = vpop.f32.mrb[0].mxu0
        %v5509 = vadd.f32 0.0, %v5508
        %v5510 = vpop.f32.mrb[0].mxu0
        %v5511 = vpop.f32.mrb[0].mxu0
        %v5512 = vadd.f32 0.0, %v5511
        %v5513 = vpop.f32.mrb[0].mxu0
        %5514 = vmatprep.mubr.bf16.mxu0 0
        %5515 = vmatmul.mubr.bf16.gmra.mrb[0].mxu0 %v5432
        %v5516 = vpop.f32.mrb[0].mxu0
        %v5517 = vadd.f32 0.0, %v5516
        %v5518 = vpop.f32.mrb[0].mxu0
        %v5519 = vpop.f32.mrb[0].mxu0
        %v5520 = vadd.f32 0.0, %v5519
        %v5521 = vpop.f32.mrb[0].mxu0
        %5522 = vmatprep.mubr.bf16.mxu0 0
        %5523 = vmatmul.mubr.bf16.gmra.mrb[0].mxu0 %v5433
        %v5524 = vpop.f32.mrb[0].mxu0
        %v5525 = vadd.f32 0.0, %v5524
        %v5526 = vpop.f32.mrb[0].mxu0
        %v5527 = vpop.f32.mrb[0].mxu0
        %v5528 = vadd.f32 0.0, %v5527
        %v5529 = vpop.f32.mrb[0].mxu0
        %5530 = vdwg.mxu0
        %v5531 = vpack.c.bf16 %v5163, %v5160
        %v5532 = vpack.c.bf16 %v5171, %v5168
        %v5533 = vpack.c.bf16 %v5179, %v5176
        %v5534 = vpack.c.bf16 %v5187, %v5184
        %v5535 = vpack.c.bf16 %v5195, %v5192
        %v5536 = vpack.c.bf16 %v5203, %v5200
        %v5537 = vpack.c.bf16 %v5211, %v5208
        %v5538 = vpack.c.bf16 %v5219, %v5216
        %v5539 = vpack.c.bf16 %v5472, %v5469
        %v5540 = vpack.c.bf16 %v5480, %v5477
        %v5541 = vpack.c.bf16 %v5488, %v5485
        %v5542 = vpack.c.bf16 %v5496, %v5493
        %v5543 = vpack.c.bf16 %v5504, %v5501
        %v5544 = vpack.c.bf16 %v5512, %v5509
        %v5545 = vpack.c.bf16 %v5520, %v5517
        %v5546 = vpack.c.bf16 %v5528, %v5525
        %s5547 = scalar_lea.vmem [#allocation6], 128
        %v5548 = vld [vmem:[%s5547] sm:$0xf]
        %v5549 = vld [vmem:[%s5547 + $0x4] sm:$0xf]
        %v5550 = vld [vmem:[%s5547 + $0x8] sm:$0xf]
        %v5551 = vld [vmem:[%s5547 + $0xc] sm:$0xf]
        %v5552 = vld [vmem:[%s5547 + $0x10] sm:$0xf]
        %v5553 = vld [vmem:[%s5547 + $0x14] sm:$0xf]
        %v5554 = vld [vmem:[%s5547 + $0x18] sm:$0xf]
        %v5555 = vld [vmem:[%s5547 + $0x1c] sm:$0xf]
        %v5556 = vld [vmem:[%s5547 + $0x20] sm:$0xf]
        %v5557 = vld [vmem:[%s5547 + $0x24] sm:$0xf]
        %v5558 = vld [vmem:[%s5547 + $0x28] sm:$0xf]
        %v5559 = vld [vmem:[%s5547 + $0x2c] sm:$0xf]
        %v5560 = vld [vmem:[%s5547 + $0x30] sm:$0xf]
        %v5561 = vld [vmem:[%s5547 + $0x34] sm:$0xf]
        %v5562 = vld [vmem:[%s5547 + $0x38] sm:$0xf]
        %v5563 = vld [vmem:[%s5547 + $0x3c] sm:$0xf]
        %s5564 = scalar_lea.vmem %s10, 2
        %v5565 = vld [vmem:[%s5564] sm:$0x1]
        %v5567 = vlaneseq
        %v5568 = vshrl.u32 %v5567, 7
        %v5569 = vsub.s32 0, %v5568
        %v5570 = vrot.slane %v5565, %v5569
        %v5588 = vunpack.c.l.b16 %v5548
        %v5589 = vunpack.c.l.b16 %v5549
        %v5590 = vunpack.c.l.b16 %v5550
        %v5591 = vunpack.c.l.b16 %v5551
        %v5592 = vunpack.c.l.b16 %v5552
        %v5593 = vunpack.c.l.b16 %v5553
        %v5594 = vunpack.c.l.b16 %v5554
        %v5595 = vunpack.c.l.b16 %v5555
        %v5596 = vunpack.c.l.b16 %v5556
        %v5597 = vunpack.c.l.b16 %v5557
        %v5598 = vunpack.c.l.b16 %v5558
        %v5599 = vunpack.c.l.b16 %v5559
        %v5600 = vunpack.c.l.b16 %v5560
        %v5601 = vunpack.c.l.b16 %v5561
        %v5602 = vunpack.c.l.b16 %v5562
        %v5603 = vunpack.c.l.b16 %v5563
        %v5604 = vpack.c.b16 %v5589, %v5588
        %v5605 = vpack.c.b16 %v5591, %v5590
        %v5606 = vpack.c.b16 %v5593, %v5592
        %v5607 = vpack.c.b16 %v5595, %v5594
        %v5608 = vpack.c.b16 %v5597, %v5596
        %v5609 = vpack.c.b16 %v5599, %v5598
        %v5610 = vpack.c.b16 %v5601, %v5600
        %v5611 = vpack.c.b16 %v5603, %v5602
        %5620 = vmatprep.subr.bf16.mxu0 0
        %5621 = vmatpush1.bf16.msra.mxu0 %v5604
        %5622 = vmatprep.subr.bf16.mxu0 0
        %5623 = vmatpush1.bf16.msra.mxu0 %v5605
        %5624 = vmatprep.subr.bf16.mxu0 0
        %5625 = vmatpush1.bf16.msra.mxu0 %v5606
        %5626 = vmatprep.subr.bf16.mxu0 0
        %5627 = vmatpush1.bf16.msra.mxu0 %v5607
        %5628 = vmatprep.subr.bf16.mxu0 0
        %5629 = vmatpush1.bf16.msra.mxu0 %v5608
        %5630 = vmatprep.subr.bf16.mxu0 0
        %5631 = vmatpush1.bf16.msra.mxu0 %v5609
        %5632 = vmatprep.subr.bf16.mxu0 0
        %5633 = vmatpush1.bf16.msra.mxu0 %v5610
        %5634 = vmatprep.subr.bf16.mxu0 0
        %5635 = vmatpush1.bf16.msra.mxu0 %v5611
        %5636 = vmatprep.subr.bf16.mxu0 0
        %5637 = vmatpush1.bf16.msra.mxu0 0
        %5638 = vmatprep.subr.bf16.mxu0 0
        %5639 = vmatpush1.bf16.msra.mxu0 0
        %5640 = vmatprep.subr.bf16.mxu0 0
        %5641 = vmatpush1.bf16.msra.mxu0 0
        %5642 = vmatprep.subr.bf16.mxu0 0
        %5643 = vmatpush1.bf16.msra.mxu0 0
        %5644 = vmatprep.subr.bf16.mxu0 0
        %5645 = vmatpush1.bf16.msra.mxu0 0
        %5646 = vmatprep.subr.bf16.mxu0 0
        %5647 = vmatpush1.bf16.msra.mxu0 0
        %5648 = vmatprep.subr.bf16.mxu0 0
        %5649 = vmatpush1.bf16.msra.mxu0 0
        %5650 = vmatprep.subr.bf16.mxu0 0
        %5651 = vmatpush1.bf16.msra.mxu0 0
        %5652 = vmatprep.mubr.bf16.mxu0 0
        %5653 = vmatmul.mubr.bf16.gmra.mrb[0].mxu0 %v5531
        %v5654 = vpop.f32.mrb[0].mxu0
        %v5655 = vadd.f32 %v5570, %v5654
        %v5656 = vpop.f32.mrb[0].mxu0
        %v5657 = vpop.f32.mrb[0].mxu0
        %v5658 = vadd.f32 %v5570, %v5657
        %v5659 = vpop.f32.mrb[0].mxu0
        %5660 = vmatprep.mubr.bf16.mxu0 0
        %5661 = vmatmul.mubr.bf16.gmra.mrb[0].mxu0 %v5532
        %v5662 = vpop.f32.mrb[0].mxu0
        %v5663 = vadd.f32 %v5570, %v5662
        %v5664 = vpop.f32.mrb[0].mxu0
        %v5665 = vpop.f32.mrb[0].mxu0
        %v5666 = vadd.f32 %v5570, %v5665
        %v5667 = vpop.f32.mrb[0].mxu0
        %5668 = vmatprep.mubr.bf16.mxu0 0
        %5669 = vmatmul.mubr.bf16.gmra.mrb[0].mxu0 %v5533
        %v5670 = vpop.f32.mrb[0].mxu0
        %v5671 = vadd.f32 %v5570, %v5670
        %v5672 = vpop.f32.mrb[0].mxu0
        %v5673 = vpop.f32.mrb[0].mxu0
        %v5674 = vadd.f32 %v5570, %v5673
        %v5675 = vpop.f32.mrb[0].mxu0
        %5676 = vmatprep.mubr.bf16.mxu0 0
        %5677 = vmatmul.mubr.bf16.gmra.mrb[0].mxu0 %v5534
        %v5678 = vpop.f32.mrb[0].mxu0
        %v5679 = vadd.f32 %v5570, %v5678
        %v5680 = vpop.f32.mrb[0].mxu0
        %v5681 = vpop.f32.mrb[0].mxu0
        %v5682 = vadd.f32 %v5570, %v5681
        %v5683 = vpop.f32.mrb[0].mxu0
        %5684 = vmatprep.mubr.bf16.mxu0 0
        %5685 = vmatmul.mubr.bf16.gmra.mrb[0].mxu0 %v5535
        %v5686 = vpop.f32.mrb[0].mxu0
        %v5687 = vadd.f32 %v5570, %v5686
        %v5688 = vpop.f32.mrb[0].mxu0
        %v5689 = vpop.f32.mrb[0].mxu0
        %v5690 = vadd.f32 %v5570, %v5689
        %v5691 = vpop.f32.mrb[0].mxu0
        %5692 = vmatprep.mubr.bf16.mxu0 0
        %5693 = vmatmul.mubr.bf16.gmra.mrb[0].mxu0 %v5536
        %v5694 = vpop.f32.mrb[0].mxu0
        %v5695 = vadd.f32 %v5570, %v5694
        %v5696 = vpop.f32.mrb[0].mxu0
        %v5697 = vpop.f32.mrb[0].mxu0
        %v5698 = vadd.f32 %v5570, %v5697
        %v5699 = vpop.f32.mrb[0].mxu0
        %5700 = vmatprep.mubr.bf16.mxu0 0
        %5701 = vmatmul.mubr.bf16.gmra.mrb[0].mxu0 %v5537
        %v5702 = vpop.f32.mrb[0].mxu0
        %v5703 = vadd.f32 %v5570, %v5702
        %v5704 = vpop.f32.mrb[0].mxu0
        %v5705 = vpop.f32.mrb[0].mxu0
        %v5706 = vadd.f32 %v5570, %v5705
        %v5707 = vpop.f32.mrb[0].mxu0
        %5708 = vmatprep.mubr.bf16.mxu0 0
        %5709 = vmatmul.mubr.bf16.gmra.mrb[0].mxu0 %v5538
        %v5710 = vpop.f32.mrb[0].mxu0
        %v5711 = vadd.f32 %v5570, %v5710
        %v5712 = vpop.f32.mrb[0].mxu0
        %v5713 = vpop.f32.mrb[0].mxu0
        %v5714 = vadd.f32 %v5570, %v5713
        %v5715 = vpop.f32.mrb[0].mxu0
        %5716 = vmatprep.mubr.bf16.mxu0 0
        %5717 = vmatmul.mubr.bf16.gmra.mrb[0].mxu0 %v5539
        %v5718 = vpop.f32.mrb[0].mxu0
        %v5719 = vadd.f32 %v5570, %v5718
        %v5720 = vpop.f32.mrb[0].mxu0
        %v5721 = vpop.f32.mrb[0].mxu0
        %v5722 = vadd.f32 %v5570, %v5721
        %v5723 = vpop.f32.mrb[0].mxu0
        %5724 = vmatprep.mubr.bf16.mxu0 0
        %5725 = vmatmul.mubr.bf16.gmra.mrb[0].mxu0 %v5540
        %v5726 = vpop.f32.mrb[0].mxu0
        %v5727 = vadd.f32 %v5570, %v5726
        %v5728 = vpop.f32.mrb[0].mxu0
        %v5729 = vpop.f32.mrb[0].mxu0
        %v5730 = vadd.f32 %v5570, %v5729
        %v5731 = vpop.f32.mrb[0].mxu0
        %5732 = vmatprep.mubr.bf16.mxu0 0
        %5733 = vmatmul.mubr.bf16.gmra.mrb[0].mxu0 %v5541
        %v5734 = vpop.f32.mrb[0].mxu0
        %v5735 = vadd.f32 %v5570, %v5734
        %v5736 = vpop.f32.mrb[0].mxu0
        %v5737 = vpop.f32.mrb[0].mxu0
        %v5738 = vadd.f32 %v5570, %v5737
        %v5739 = vpop.f32.mrb[0].mxu0
        %5740 = vmatprep.mubr.bf16.mxu0 0
        %5741 = vmatmul.mubr.bf16.gmra.mrb[0].mxu0 %v5542
        %v5742 = vpop.f32.mrb[0].mxu0
        %v5743 = vadd.f32 %v5570, %v5742
        %v5744 = vpop.f32.mrb[0].mxu0
        %v5745 = vpop.f32.mrb[0].mxu0
        %v5746 = vadd.f32 %v5570, %v5745
        %v5747 = vpop.f32.mrb[0].mxu0
        %5748 = vmatprep.mubr.bf16.mxu0 0
        %5749 = vmatmul.mubr.bf16.gmra.mrb[0].mxu0 %v5543
        %v5750 = vpop.f32.mrb[0].mxu0
        %v5751 = vadd.f32 %v5570, %v5750
        %v5752 = vpop.f32.mrb[0].mxu0
        %v5753 = vpop.f32.mrb[0].mxu0
        %v5754 = vadd.f32 %v5570, %v5753
        %v5755 = vpop.f32.mrb[0].mxu0
        %5756 = vmatprep.mubr.bf16.mxu0 0
        %5757 = vmatmul.mubr.bf16.gmra.mrb[0].mxu0 %v5544
        %v5758 = vpop.f32.mrb[0].mxu0
        %v5759 = vadd.f32 %v5570, %v5758
        %v5760 = vpop.f32.mrb[0].mxu0
        %v5761 = vpop.f32.mrb[0].mxu0
        %v5762 = vadd.f32 %v5570, %v5761
        %v5763 = vpop.f32.mrb[0].mxu0
        %5764 = vmatprep.mubr.bf16.mxu0 0
        %5765 = vmatmul.mubr.bf16.gmra.mrb[0].mxu0 %v5545
        %v5766 = vpop.f32.mrb[0].mxu0
        %v5767 = vadd.f32 %v5570, %v5766
        %v5768 = vpop.f32.mrb[0].mxu0
        %v5769 = vpop.f32.mrb[0].mxu0
        %v5770 = vadd.f32 %v5570, %v5769
        %v5771 = vpop.f32.mrb[0].mxu0
        %5772 = vmatprep.mubr.bf16.mxu0 0
        %5773 = vmatmul.mubr.bf16.gmra.mrb[0].mxu0 %v5546
        %v5774 = vpop.f32.mrb[0].mxu0
        %v5775 = vadd.f32 %v5570, %v5774
        %v5776 = vpop.f32.mrb[0].mxu0
        %v5777 = vpop.f32.mrb[0].mxu0
        %v5778 = vadd.f32 %v5570, %v5777
        %v5779 = vpop.f32.mrb[0].mxu0
        %5780 = vdwg.mxu0
        %s5781 = scalar_lea.vmem %s11, 2
        %v5782 = vld [vmem:[%s5781] sm:$0x1]
        %v5784 = vlaneseq
        %v5785 = vshrl.u32 %v5784, 7
        %v5786 = vsub.s32 0, %v5785
        %v5787 = vrot.slane %v5782, %v5786
        %v5789 = vmul.f32 %v5655, %v5787
        %v5790 = vmul.f32 %v5658, %v5787
        %v5791 = vmul.f32 %v5663, %v5787
        %v5792 = vmul.f32 %v5666, %v5787
        %v5793 = vmul.f32 %v5671, %v5787
        %v5794 = vmul.f32 %v5674, %v5787
        %v5795 = vmul.f32 %v5679, %v5787
        %v5796 = vmul.f32 %v5682, %v5787
        %v5797 = vmul.f32 %v5687, %v5787
        %v5798 = vmul.f32 %v5690, %v5787
        %v5799 = vmul.f32 %v5695, %v5787
        %v5800 = vmul.f32 %v5698, %v5787
        %v5801 = vmul.f32 %v5703, %v5787
        %v5802 = vmul.f32 %v5706, %v5787
        %v5803 = vmul.f32 %v5711, %v5787
        %v5804 = vmul.f32 %v5714, %v5787
        %v5805 = vmul.f32 %v5719, %v5787
        %v5806 = vmul.f32 %v5722, %v5787
        %v5807 = vmul.f32 %v5727, %v5787
        %v5808 = vmul.f32 %v5730, %v5787
        %v5809 = vmul.f32 %v5735, %v5787
        %v5810 = vmul.f32 %v5738, %v5787
        %v5811 = vmul.f32 %v5743, %v5787
        %v5812 = vmul.f32 %v5746, %v5787
        %v5813 = vmul.f32 %v5751, %v5787
        %v5814 = vmul.f32 %v5754, %v5787
        %v5815 = vmul.f32 %v5759, %v5787
        %v5816 = vmul.f32 %v5762, %v5787
        %v5817 = vmul.f32 %v5767, %v5787
        %v5818 = vmul.f32 %v5770, %v5787
        %v5819 = vmul.f32 %v5775, %v5787
        %v5820 = vmul.f32 %v5778, %v5787
        %s5821 = scalar_lea.vmem %s12, 2
        %v5822 = vld [vmem:[%s5821] sm:$0x1]
        %v5824 = vlaneseq
        %v5825 = vshrl.u32 %v5824, 7
        %v5826 = vsub.s32 0, %v5825
        %v5827 = vrot.slane %v5822, %v5826
        %v5829 = vadd.f32 %v5789, %v5827
        %v5830 = vadd.f32 %v5790, %v5827
        %v5831 = vadd.f32 %v5791, %v5827
        %v5832 = vadd.f32 %v5792, %v5827
        %v5833 = vadd.f32 %v5793, %v5827
        %v5834 = vadd.f32 %v5794, %v5827
        %v5835 = vadd.f32 %v5795, %v5827
        %v5836 = vadd.f32 %v5796, %v5827
        %v5837 = vadd.f32 %v5797, %v5827
        %v5838 = vadd.f32 %v5798, %v5827
        %v5839 = vadd.f32 %v5799, %v5827
        %v5840 = vadd.f32 %v5800, %v5827
        %v5841 = vadd.f32 %v5801, %v5827
        %v5842 = vadd.f32 %v5802, %v5827
        %v5843 = vadd.f32 %v5803, %v5827
        %v5844 = vadd.f32 %v5804, %v5827
        %v5845 = vadd.f32 %v5805, %v5827
        %v5846 = vadd.f32 %v5806, %v5827
        %v5847 = vadd.f32 %v5807, %v5827
        %v5848 = vadd.f32 %v5808, %v5827
        %v5849 = vadd.f32 %v5809, %v5827
        %v5850 = vadd.f32 %v5810, %v5827
        %v5851 = vadd.f32 %v5811, %v5827
        %v5852 = vadd.f32 %v5812, %v5827
        %v5853 = vadd.f32 %v5813, %v5827
        %v5854 = vadd.f32 %v5814, %v5827
        %v5855 = vadd.f32 %v5815, %v5827
        %v5856 = vadd.f32 %v5816, %v5827
        %v5857 = vadd.f32 %v5817, %v5827
        %v5858 = vadd.f32 %v5818, %v5827
        %v5859 = vadd.f32 %v5819, %v5827
        %v5860 = vadd.f32 %v5820, %v5827
        %v5861 = vmax.f32 %v5829, 0.0
        %v5862 = vmax.f32 %v5830, 0.0
        %v5863 = vmax.f32 %v5831, 0.0
        %v5864 = vmax.f32 %v5832, 0.0
        %v5865 = vmax.f32 %v5833, 0.0
        %v5866 = vmax.f32 %v5834, 0.0
        %v5867 = vmax.f32 %v5835, 0.0
        %v5868 = vmax.f32 %v5836, 0.0
        %v5869 = vmax.f32 %v5837, 0.0
        %v5870 = vmax.f32 %v5838, 0.0
        %v5871 = vmax.f32 %v5839, 0.0
        %v5872 = vmax.f32 %v5840, 0.0
        %v5873 = vmax.f32 %v5841, 0.0
        %v5874 = vmax.f32 %v5842, 0.0
        %v5875 = vmax.f32 %v5843, 0.0
        %v5876 = vmax.f32 %v5844, 0.0
        %v5877 = vmax.f32 %v5845, 0.0
        %v5878 = vmax.f32 %v5846, 0.0
        %v5879 = vmax.f32 %v5847, 0.0
        %v5880 = vmax.f32 %v5848, 0.0
        %v5881 = vmax.f32 %v5849, 0.0
        %v5882 = vmax.f32 %v5850, 0.0
        %v5883 = vmax.f32 %v5851, 0.0
        %v5884 = vmax.f32 %v5852, 0.0
        %v5885 = vmax.f32 %v5853, 0.0
        %v5886 = vmax.f32 %v5854, 0.0
        %v5887 = vmax.f32 %v5855, 0.0
        %v5888 = vmax.f32 %v5856, 0.0
        %v5889 = vmax.f32 %v5857, 0.0
        %v5890 = vmax.f32 %v5858, 0.0
        %v5891 = vmax.f32 %v5859, 0.0
        %v5892 = vmax.f32 %v5860, 0.0
        %v5893 = vadd.f32 %v4487, %v5861
        %v5894 = vadd.f32 %v4488, %v5862
        %v5895 = vadd.f32 %v4489, %v5863
        %v5896 = vadd.f32 %v4490, %v5864
        %v5897 = vadd.f32 %v4491, %v5865
        %v5898 = vadd.f32 %v4492, %v5866
        %v5899 = vadd.f32 %v4493, %v5867
        %v5900 = vadd.f32 %v4494, %v5868
        %v5901 = vadd.f32 %v4495, %v5869
        %v5902 = vadd.f32 %v4496, %v5870
        %v5903 = vadd.f32 %v4497, %v5871
        %v5904 = vadd.f32 %v4498, %v5872
        %v5905 = vadd.f32 %v4499, %v5873
        %v5906 = vadd.f32 %v4500, %v5874
        %v5907 = vadd.f32 %v4501, %v5875
        %v5908 = vadd.f32 %v4502, %v5876
        %v5909 = vadd.f32 %v4503, %v5877
        %v5910 = vadd.f32 %v4504, %v5878
        %v5911 = vadd.f32 %v4505, %v5879
        %v5912 = vadd.f32 %v4506, %v5880
        %v5913 = vadd.f32 %v4507, %v5881
        %v5914 = vadd.f32 %v4508, %v5882
        %v5915 = vadd.f32 %v4509, %v5883
        %v5916 = vadd.f32 %v4510, %v5884
        %v5917 = vadd.f32 %v4511, %v5885
        %v5918 = vadd.f32 %v4512, %v5886
        %v5919 = vadd.f32 %v4513, %v5887
        %v5920 = vadd.f32 %v4514, %v5888
        %v5921 = vadd.f32 %v4515, %v5889
        %v5922 = vadd.f32 %v4516, %v5890
        %v5923 = vadd.f32 %v4517, %v5891
        %v5924 = vadd.f32 %v4518, %v5892
        %v5925 = vpack.c.bf16 %v5894, %v5893
        %v5926 = vpack.c.bf16 %v5896, %v5895
        %v5927 = vpack.c.bf16 %v5898, %v5897
        %v5928 = vpack.c.bf16 %v5900, %v5899
        %v5929 = vpack.c.bf16 %v5902, %v5901
        %v5930 = vpack.c.bf16 %v5904, %v5903
        %v5931 = vpack.c.bf16 %v5906, %v5905
        %v5932 = vpack.c.bf16 %v5908, %v5907
        %v5933 = vpack.c.bf16 %v5910, %v5909
        %v5934 = vpack.c.bf16 %v5912, %v5911
        %v5935 = vpack.c.bf16 %v5914, %v5913
        %v5936 = vpack.c.bf16 %v5916, %v5915
        %v5937 = vpack.c.bf16 %v5918, %v5917
        %v5938 = vpack.c.bf16 %v5920, %v5919
        %v5939 = vpack.c.bf16 %v5922, %v5921
        %v5940 = vpack.c.bf16 %v5924, %v5923
        %5941 = vst [vmem:[#allocation2 + $0x10] sm:$0xff] %v5925
        %5942 = vst [vmem:[#allocation2 + $0x30] sm:$0xff] %v5926
        %5943 = vst [vmem:[#allocation2 + $0x50] sm:$0xff] %v5927
        %5944 = vst [vmem:[#allocation2 + $0x70] sm:$0xff] %v5928
        %5945 = vst [vmem:[#allocation2 + $0x90] sm:$0xff] %v5929
        %5946 = vst [vmem:[#allocation2 + $0xb0] sm:$0xff] %v5930
        %5947 = vst [vmem:[#allocation2 + $0xd0] sm:$0xff] %v5931
        %5948 = vst [vmem:[#allocation2 + $0xf0] sm:$0xff] %v5932
        %5949 = vst [vmem:[#allocation2 + $0x110] sm:$0xff] %v5933
        %5950 = vst [vmem:[#allocation2 + $0x130] sm:$0xff] %v5934
        %5951 = vst [vmem:[#allocation2 + $0x150] sm:$0xff] %v5935
        %5952 = vst [vmem:[#allocation2 + $0x170] sm:$0xff] %v5936
        %5953 = vst [vmem:[#allocation2 + $0x190] sm:$0xff] %v5937
        %5954 = vst [vmem:[#allocation2 + $0x1b0] sm:$0xff] %v5938
        %5955 = vst [vmem:[#allocation2 + $0x1d0] sm:$0xff] %v5939
        %5956 = vst [vmem:[#allocation2 + $0x1f0] sm:$0xff] %v5940
        %s5957 = scalar_lea.vmem %s7, 384
        %v5958 = vld [vmem:[%s5957] sm:$0xff]
        %v5959 = vld [vmem:[%s5957 + $0x8] sm:$0xff]
        %v5960 = vld [vmem:[%s5957 + $0x10] sm:$0xff]
        %v5961 = vld [vmem:[%s5957 + $0x18] sm:$0xff]
        %v5962 = vld [vmem:[%s5957 + $0x20] sm:$0xff]
        %v5963 = vld [vmem:[%s5957 + $0x28] sm:$0xff]
        %v5964 = vld [vmem:[%s5957 + $0x30] sm:$0xff]
        %v5965 = vld [vmem:[%s5957 + $0x38] sm:$0xff]
        %v5966 = vld [vmem:[%s5957 + $0x40] sm:$0xff]
        %v5967 = vld [vmem:[%s5957 + $0x48] sm:$0xff]
        %v5968 = vld [vmem:[%s5957 + $0x50] sm:$0xff]
        %v5969 = vld [vmem:[%s5957 + $0x58] sm:$0xff]
        %v5970 = vld [vmem:[%s5957 + $0x60] sm:$0xff]
        %v5971 = vld [vmem:[%s5957 + $0x68] sm:$0xff]
        %v5972 = vld [vmem:[%s5957 + $0x70] sm:$0xff]
        %v5973 = vld [vmem:[%s5957 + $0x78] sm:$0xff]
        %v5990 = vunpack.c.l.b16 %v5958
        %v5991 = vunpack.c.h.b16 %v5958
        %v5992 = vunpack.c.l.b16 %v5959
        %v5993 = vunpack.c.h.b16 %v5959
        %v5994 = vunpack.c.l.b16 %v5960
        %v5995 = vunpack.c.h.b16 %v5960
        %v5996 = vunpack.c.l.b16 %v5961
        %v5997 = vunpack.c.h.b16 %v5961
        %v5998 = vunpack.c.l.b16 %v5962
        %v5999 = vunpack.c.h.b16 %v5962
        %v6000 = vunpack.c.l.b16 %v5963
        %v6001 = vunpack.c.h.b16 %v5963
        %v6002 = vunpack.c.l.b16 %v5964
        %v6003 = vunpack.c.h.b16 %v5964
        %v6004 = vunpack.c.l.b16 %v5965
        %v6005 = vunpack.c.h.b16 %v5965
        %v6006 = vunpack.c.l.b16 %v5966
        %v6007 = vunpack.c.h.b16 %v5966
        %v6008 = vunpack.c.l.b16 %v5967
        %v6009 = vunpack.c.h.b16 %v5967
        %v6010 = vunpack.c.l.b16 %v5968
        %v6011 = vunpack.c.h.b16 %v5968
        %v6012 = vunpack.c.l.b16 %v5969
        %v6013 = vunpack.c.h.b16 %v5969
        %v6014 = vunpack.c.l.b16 %v5970
        %v6015 = vunpack.c.h.b16 %v5970
        %v6016 = vunpack.c.l.b16 %v5971
        %v6017 = vunpack.c.h.b16 %v5971
        %v6018 = vunpack.c.l.b16 %v5972
        %v6019 = vunpack.c.h.b16 %v5972
        %v6020 = vunpack.c.l.b16 %v5973
        %v6021 = vunpack.c.h.b16 %v5973
        %v6022 = vpack.c.b16 %v5992, %v5990
        %v6023 = vpack.c.b16 %v5993, %v5991
        %v6024 = vpack.c.b16 %v5996, %v5994
        %v6025 = vpack.c.b16 %v5997, %v5995
        %v6026 = vpack.c.b16 %v6000, %v5998
        %v6027 = vpack.c.b16 %v6001, %v5999
        %v6028 = vpack.c.b16 %v6004, %v6002
        %v6029 = vpack.c.b16 %v6005, %v6003
        %v6030 = vpack.c.b16 %v6008, %v6006
        %v6031 = vpack.c.b16 %v6009, %v6007
        %v6032 = vpack.c.b16 %v6012, %v6010
        %v6033 = vpack.c.b16 %v6013, %v6011
        %v6034 = vpack.c.b16 %v6016, %v6014
        %v6035 = vpack.c.b16 %v6017, %v6015
        %v6036 = vpack.c.b16 %v6020, %v6018
        %v6037 = vpack.c.b16 %v6021, %v6019
        %6054 = vmatprep.subr.bf16.mxu0 %v6023
        %6055 = vmatpush1.bf16.msra.mxu0 %v6022
        %6056 = vmatprep.subr.bf16.mxu0 %v6025
        %6057 = vmatpush1.bf16.msra.mxu0 %v6024
        %6058 = vmatprep.subr.bf16.mxu0 %v6027
        %6059 = vmatpush1.bf16.msra.mxu0 %v6026
        %6060 = vmatprep.subr.bf16.mxu0 %v6029
        %6061 = vmatpush1.bf16.msra.mxu0 %v6028
        %6062 = vmatprep.subr.bf16.mxu0 %v6031
        %6063 = vmatpush1.bf16.msra.mxu0 %v6030
        %6064 = vmatprep.subr.bf16.mxu0 %v6033
        %6065 = vmatpush1.bf16.msra.mxu0 %v6032
        %6066 = vmatprep.subr.bf16.mxu0 %v6035
        %6067 = vmatpush1.bf16.msra.mxu0 %v6034
        %6068 = vmatprep.subr.bf16.mxu0 %v6037
        %6069 = vmatpush1.bf16.msra.mxu0 %v6036
        %6070 = vmatprep.subr.bf16.mxu0 0
        %6071 = vmatpush1.bf16.msra.mxu0 0
        %6072 = vmatprep.subr.bf16.mxu0 0
        %6073 = vmatpush1.bf16.msra.mxu0 0
        %6074 = vmatprep.subr.bf16.mxu0 0
        %6075 = vmatpush1.bf16.msra.mxu0 0
        %6076 = vmatprep.subr.bf16.mxu0 0
        %6077 = vmatpush1.bf16.msra.mxu0 0
        %6078 = vmatprep.subr.bf16.mxu0 0
        %6079 = vmatpush1.bf16.msra.mxu0 0
        %6080 = vmatprep.subr.bf16.mxu0 0
        %6081 = vmatpush1.bf16.msra.mxu0 0
        %6082 = vmatprep.subr.bf16.mxu0 0
        %6083 = vmatpush1.bf16.msra.mxu0 0
        %6084 = vmatprep.subr.bf16.mxu0 0
        %6085 = vmatpush1.bf16.msra.mxu0 0
        %6086 = vmatprep.mubr.bf16.mxu0 0
        %6087 = vmatmul.mubr.bf16.gmra.mrb[0].mxu0 %v5925
        %v6088 = vpop.f32.mrb[0].mxu0
        %v6089 = vadd.f32 0.0, %v6088
        %v6090 = vpop.f32.mrb[0].mxu0
        %v6091 = vadd.f32 0.0, %v6090
        %v6092 = vpop.f32.mrb[0].mxu0
        %v6093 = vadd.f32 0.0, %v6092
        %v6094 = vpop.f32.mrb[0].mxu0
        %v6095 = vadd.f32 0.0, %v6094
        %6096 = vmatprep.mubr.bf16.mxu0 0
        %6097 = vmatmul.mubr.bf16.gmra.mrb[0].mxu0 %v5926
        %v6098 = vpop.f32.mrb[0].mxu0
        %v6099 = vadd.f32 0.0, %v6098
        %v6100 = vpop.f32.mrb[0].mxu0
        %v6101 = vadd.f32 0.0, %v6100
        %v6102 = vpop.f32.mrb[0].mxu0
        %v6103 = vadd.f32 0.0, %v6102
        %v6104 = vpop.f32.mrb[0].mxu0
        %v6105 = vadd.f32 0.0, %v6104
        %6106 = vmatprep.mubr.bf16.mxu0 0
        %6107 = vmatmul.mubr.bf16.gmra.mrb[0].mxu0 %v5927
        %v6108 = vpop.f32.mrb[0].mxu0
        %v6109 = vadd.f32 0.0, %v6108
        %v6110 = vpop.f32.mrb[0].mxu0
        %v6111 = vadd.f32 0.0, %v6110
        %v6112 = vpop.f32.mrb[0].mxu0
        %v6113 = vadd.f32 0.0, %v6112
        %v6114 = vpop.f32.mrb[0].mxu0
        %v6115 = vadd.f32 0.0, %v6114
        %6116 = vmatprep.mubr.bf16.mxu0 0
        %6117 = vmatmul.mubr.bf16.gmra.mrb[0].mxu0 %v5928
        %v6118 = vpop.f32.mrb[0].mxu0
        %v6119 = vadd.f32 0.0, %v6118
        %v6120 = vpop.f32.mrb[0].mxu0
        %v6121 = vadd.f32 0.0, %v6120
        %v6122 = vpop.f32.mrb[0].mxu0
        %v6123 = vadd.f32 0.0, %v6122
        %v6124 = vpop.f32.mrb[0].mxu0
        %v6125 = vadd.f32 0.0, %v6124
        %6126 = vmatprep.mubr.bf16.mxu0 0
        %6127 = vmatmul.mubr.bf16.gmra.mrb[0].mxu0 %v5929
        %v6128 = vpop.f32.mrb[0].mxu0
        %v6129 = vadd.f32 0.0, %v6128
        %v6130 = vpop.f32.mrb[0].mxu0
        %v6131 = vadd.f32 0.0, %v6130
        %v6132 = vpop.f32.mrb[0].mxu0
        %v6133 = vadd.f32 0.0, %v6132
        %v6134 = vpop.f32.mrb[0].mxu0
        %v6135 = vadd.f32 0.0, %v6134
        %6136 = vmatprep.mubr.bf16.mxu0 0
        %6137 = vmatmul.mubr.bf16.gmra.mrb[0].mxu0 %v5930
        %v6138 = vpop.f32.mrb[0].mxu0
        %v6139 = vadd.f32 0.0, %v6138
        %v6140 = vpop.f32.mrb[0].mxu0
        %v6141 = vadd.f32 0.0, %v6140
        %v6142 = vpop.f32.mrb[0].mxu0
        %v6143 = vadd.f32 0.0, %v6142
        %v6144 = vpop.f32.mrb[0].mxu0
        %v6145 = vadd.f32 0.0, %v6144
        %6146 = vmatprep.mubr.bf16.mxu0 0
        %6147 = vmatmul.mubr.bf16.gmra.mrb[0].mxu0 %v5931
        %v6148 = vpop.f32.mrb[0].mxu0
        %v6149 = vadd.f32 0.0, %v6148
        %v6150 = vpop.f32.mrb[0].mxu0
        %v6151 = vadd.f32 0.0, %v6150
        %v6152 = vpop.f32.mrb[0].mxu0
        %v6153 = vadd.f32 0.0, %v6152
        %v6154 = vpop.f32.mrb[0].mxu0
        %v6155 = vadd.f32 0.0, %v6154
        %6156 = vmatprep.mubr.bf16.mxu0 0
        %6157 = vmatmul.mubr.bf16.gmra.mrb[0].mxu0 %v5932
        %v6158 = vpop.f32.mrb[0].mxu0
        %v6159 = vadd.f32 0.0, %v6158
        %v6160 = vpop.f32.mrb[0].mxu0
        %v6161 = vadd.f32 0.0, %v6160
        %v6162 = vpop.f32.mrb[0].mxu0
        %v6163 = vadd.f32 0.0, %v6162
        %v6164 = vpop.f32.mrb[0].mxu0
        %v6165 = vadd.f32 0.0, %v6164
        %6166 = vmatprep.mubr.bf16.mxu0 0
        %6167 = vmatmul.mubr.bf16.gmra.mrb[0].mxu0 %v5933
        %v6168 = vpop.f32.mrb[0].mxu0
        %v6169 = vadd.f32 0.0, %v6168
        %v6170 = vpop.f32.mrb[0].mxu0
        %v6171 = vadd.f32 0.0, %v6170
        %v6172 = vpop.f32.mrb[0].mxu0
        %v6173 = vadd.f32 0.0, %v6172
        %v6174 = vpop.f32.mrb[0].mxu0
        %v6175 = vadd.f32 0.0, %v6174
        %6176 = vmatprep.mubr.bf16.mxu0 0
        %6177 = vmatmul.mubr.bf16.gmra.mrb[0].mxu0 %v5934
        %v6178 = vpop.f32.mrb[0].mxu0
        %v6179 = vadd.f32 0.0, %v6178
        %v6180 = vpop.f32.mrb[0].mxu0
        %v6181 = vadd.f32 0.0, %v6180
        %v6182 = vpop.f32.mrb[0].mxu0
        %v6183 = vadd.f32 0.0, %v6182
        %v6184 = vpop.f32.mrb[0].mxu0
        %v6185 = vadd.f32 0.0, %v6184
        %6186 = vmatprep.mubr.bf16.mxu0 0
        %6187 = vmatmul.mubr.bf16.gmra.mrb[0].mxu0 %v5935
        %v6188 = vpop.f32.mrb[0].mxu0
        %v6189 = vadd.f32 0.0, %v6188
        %v6190 = vpop.f32.mrb[0].mxu0
        %v6191 = vadd.f32 0.0, %v6190
        %v6192 = vpop.f32.mrb[0].mxu0
        %v6193 = vadd.f32 0.0, %v6192
        %v6194 = vpop.f32.mrb[0].mxu0
        %v6195 = vadd.f32 0.0, %v6194
        %6196 = vmatprep.mubr.bf16.mxu0 0
        %6197 = vmatmul.mubr.bf16.gmra.mrb[0].mxu0 %v5936
        %v6198 = vpop.f32.mrb[0].mxu0
        %v6199 = vadd.f32 0.0, %v6198
        %v6200 = vpop.f32.mrb[0].mxu0
        %v6201 = vadd.f32 0.0, %v6200
        %v6202 = vpop.f32.mrb[0].mxu0
        %v6203 = vadd.f32 0.0, %v6202
        %v6204 = vpop.f32.mrb[0].mxu0
        %v6205 = vadd.f32 0.0, %v6204
        %6206 = vmatprep.mubr.bf16.mxu0 0
        %6207 = vmatmul.mubr.bf16.gmra.mrb[0].mxu0 %v5937
        %v6208 = vpop.f32.mrb[0].mxu0
        %v6209 = vadd.f32 0.0, %v6208
        %v6210 = vpop.f32.mrb[0].mxu0
        %v6211 = vadd.f32 0.0, %v6210
        %v6212 = vpop.f32.mrb[0].mxu0
        %v6213 = vadd.f32 0.0, %v6212
        %v6214 = vpop.f32.mrb[0].mxu0
        %v6215 = vadd.f32 0.0, %v6214
        %6216 = vmatprep.mubr.bf16.mxu0 0
        %6217 = vmatmul.mubr.bf16.gmra.mrb[0].mxu0 %v5938
        %v6218 = vpop.f32.mrb[0].mxu0
        %v6219 = vadd.f32 0.0, %v6218
        %v6220 = vpop.f32.mrb[0].mxu0
        %v6221 = vadd.f32 0.0, %v6220
        %v6222 = vpop.f32.mrb[0].mxu0
        %v6223 = vadd.f32 0.0, %v6222
        %v6224 = vpop.f32.mrb[0].mxu0
        %v6225 = vadd.f32 0.0, %v6224
        %6226 = vmatprep.mubr.bf16.mxu0 0
        %6227 = vmatmul.mubr.bf16.gmra.mrb[0].mxu0 %v5939
        %v6228 = vpop.f32.mrb[0].mxu0
        %v6229 = vadd.f32 0.0, %v6228
        %v6230 = vpop.f32.mrb[0].mxu0
        %v6231 = vadd.f32 0.0, %v6230
        %v6232 = vpop.f32.mrb[0].mxu0
        %v6233 = vadd.f32 0.0, %v6232
        %v6234 = vpop.f32.mrb[0].mxu0
        %v6235 = vadd.f32 0.0, %v6234
        %6236 = vmatprep.mubr.bf16.mxu0 0
        %6237 = vmatmul.mubr.bf16.gmra.mrb[0].mxu0 %v5940
        %v6238 = vpop.f32.mrb[0].mxu0
        %v6239 = vadd.f32 0.0, %v6238
        %v6240 = vpop.f32.mrb[0].mxu0
        %v6241 = vadd.f32 0.0, %v6240
        %v6242 = vpop.f32.mrb[0].mxu0
        %v6243 = vadd.f32 0.0, %v6242
        %v6244 = vpop.f32.mrb[0].mxu0
        %v6245 = vadd.f32 0.0, %v6244
        %6246 = vdwg.mxu0
        %v6247 = vpack.c.bf16 %v6093, %v6089
        %v6248 = vpack.c.bf16 %v6103, %v6099
        %v6249 = vpack.c.bf16 %v6113, %v6109
        %v6250 = vpack.c.bf16 %v6123, %v6119
        %v6251 = vpack.c.bf16 %v6133, %v6129
        %v6252 = vpack.c.bf16 %v6143, %v6139
        %v6253 = vpack.c.bf16 %v6153, %v6149
        %v6254 = vpack.c.bf16 %v6163, %v6159
        %v6255 = vpack.c.bf16 %v6173, %v6169
        %v6256 = vpack.c.bf16 %v6183, %v6179
        %v6257 = vpack.c.bf16 %v6193, %v6189
        %v6258 = vpack.c.bf16 %v6203, %v6199
        %v6259 = vpack.c.bf16 %v6213, %v6209
        %v6260 = vpack.c.bf16 %v6223, %v6219
        %v6261 = vpack.c.bf16 %v6233, %v6229
        %v6262 = vpack.c.bf16 %v6243, %v6239
        %s6263 = scalar_lea.vmem %s8, 3
        %v6264 = vld [vmem:[%s6263] sm:$0x1]
        %v6266 = vlaneseq
        %v6267 = vshrl.u32 %v6266, 7
        %v6268 = vsub.s32 0, %v6267
        %v6269 = vrot.slane %v6264, %v6268
        %v6271 = vadd.f32 %v6091, %v6269
        %v6272 = vadd.f32 %v6095, %v6269
        %v6273 = vadd.f32 %v6101, %v6269
        %v6274 = vadd.f32 %v6105, %v6269
        %v6275 = vadd.f32 %v6111, %v6269
        %v6276 = vadd.f32 %v6115, %v6269
        %v6277 = vadd.f32 %v6121, %v6269
        %v6278 = vadd.f32 %v6125, %v6269
        %v6279 = vadd.f32 %v6131, %v6269
        %v6280 = vadd.f32 %v6135, %v6269
        %v6281 = vadd.f32 %v6141, %v6269
        %v6282 = vadd.f32 %v6145, %v6269
        %v6283 = vadd.f32 %v6151, %v6269
        %v6284 = vadd.f32 %v6155, %v6269
        %v6285 = vadd.f32 %v6161, %v6269
        %v6286 = vadd.f32 %v6165, %v6269
        %v6287 = vadd.f32 %v6171, %v6269
        %v6288 = vadd.f32 %v6175, %v6269
        %v6289 = vadd.f32 %v6181, %v6269
        %v6290 = vadd.f32 %v6185, %v6269
        %v6291 = vadd.f32 %v6191, %v6269
        %v6292 = vadd.f32 %v6195, %v6269
        %v6293 = vadd.f32 %v6201, %v6269
        %v6294 = vadd.f32 %v6205, %v6269
        %v6295 = vadd.f32 %v6211, %v6269
        %v6296 = vadd.f32 %v6215, %v6269
        %v6297 = vadd.f32 %v6221, %v6269
        %v6298 = vadd.f32 %v6225, %v6269
        %v6299 = vadd.f32 %v6231, %v6269
        %v6300 = vadd.f32 %v6235, %v6269
        %v6301 = vadd.f32 %v6241, %v6269
        %v6302 = vadd.f32 %v6245, %v6269
        %v6303 = vpack.c.bf16 %v6272, %v6271
        %v6304 = vpack.c.bf16 %v6274, %v6273
        %v6305 = vpack.c.bf16 %v6276, %v6275
        %v6306 = vpack.c.bf16 %v6278, %v6277
        %v6307 = vpack.c.bf16 %v6280, %v6279
        %v6308 = vpack.c.bf16 %v6282, %v6281
        %v6309 = vpack.c.bf16 %v6284, %v6283
        %v6310 = vpack.c.bf16 %v6286, %v6285
        %v6311 = vpack.c.bf16 %v6288, %v6287
        %v6312 = vpack.c.bf16 %v6290, %v6289
        %v6313 = vpack.c.bf16 %v6292, %v6291
        %v6314 = vpack.c.bf16 %v6294, %v6293
        %v6315 = vpack.c.bf16 %v6296, %v6295
        %v6316 = vpack.c.bf16 %v6298, %v6297
        %v6317 = vpack.c.bf16 %v6300, %v6299
        %v6318 = vpack.c.bf16 %v6302, %v6301
        %6319 = vmatprep.subr.bf16.mxu0 0
        %6320 = vmatpush1.bf16.xpose.msra.mxu0 %v6247
        %6321 = vmatprep.subr.bf16.mxu0 0
        %6322 = vmatpush1.bf16.xpose.msra.mxu0 %v6248
        %6323 = vmatprep.subr.bf16.mxu0 0
        %6324 = vmatpush1.bf16.xpose.msra.mxu0 %v6249
        %6325 = vmatprep.subr.bf16.mxu0 0
        %6326 = vmatpush1.bf16.xpose.msra.mxu0 %v6250
        %6327 = vmatprep.subr.bf16.mxu0 0
        %6328 = vmatpush1.bf16.xpose.msra.mxu0 %v6251
        %6329 = vmatprep.subr.bf16.mxu0 0
        %6330 = vmatpush1.bf16.xpose.msra.mxu0 %v6252
        %6331 = vmatprep.subr.bf16.mxu0 0
        %6332 = vmatpush1.bf16.xpose.msra.mxu0 %v6253
        %6333 = vmatprep.subr.bf16.mxu0 0
        %6334 = vmatpush1.bf16.xpose.msra.mxu0 %v6254
        %6335 = vmatprep.subr.bf16.mxu0 0
        %6336 = vmatpush1.bf16.xpose.msra.mxu0 0
        %6337 = vmatprep.subr.bf16.mxu0 0
        %6338 = vmatpush1.bf16.xpose.msra.mxu0 0
        %6339 = vmatprep.subr.bf16.mxu0 0
        %6340 = vmatpush1.bf16.xpose.msra.mxu0 0
        %6341 = vmatprep.subr.bf16.mxu0 0
        %6342 = vmatpush1.bf16.xpose.msra.mxu0 0
        %6343 = vmatprep.subr.bf16.mxu0 0
        %6344 = vmatpush1.bf16.xpose.msra.mxu0 0
        %6345 = vmatprep.subr.bf16.mxu0 0
        %6346 = vmatpush1.bf16.xpose.msra.mxu0 0
        %6347 = vmatprep.subr.bf16.mxu0 0
        %6348 = vmatpush1.bf16.xpose.msra.mxu0 0
        %6349 = vmatprep.subr.bf16.mxu0 0
        %6350 = vmatpush1.bf16.xpose.msra.mxu0 0
        %6351 = vmatprep.mubr.bf16.mxu0 0
        %6352 = vmatmul.mubr.bf16.gmra.mrb[0].mxu0 %v6247
        %v6353 = vpop.f32.mrb[0].mxu0
        %v6354 = vadd.f32 0.0, %v6353
        %v6355 = vpop.f32.mrb[0].mxu0
        %v6356 = vpop.f32.mrb[0].mxu0
        %v6357 = vadd.f32 0.0, %v6356
        %v6358 = vpop.f32.mrb[0].mxu0
        %6359 = vmatprep.mubr.bf16.mxu0 0
        %6360 = vmatmul.mubr.bf16.gmra.mrb[0].mxu0 %v6248
        %v6361 = vpop.f32.mrb[0].mxu0
        %v6362 = vadd.f32 0.0, %v6361
        %v6363 = vpop.f32.mrb[0].mxu0
        %v6364 = vpop.f32.mrb[0].mxu0
        %v6365 = vadd.f32 0.0, %v6364
        %v6366 = vpop.f32.mrb[0].mxu0
        %6367 = vmatprep.mubr.bf16.mxu0 0
        %6368 = vmatmul.mubr.bf16.gmra.mrb[0].mxu0 %v6249
        %v6369 = vpop.f32.mrb[0].mxu0
        %v6370 = vadd.f32 0.0, %v6369
        %v6371 = vpop.f32.mrb[0].mxu0
        %v6372 = vpop.f32.mrb[0].mxu0
        %v6373 = vadd.f32 0.0, %v6372
        %v6374 = vpop.f32.mrb[0].mxu0
        %6375 = vmatprep.mubr.bf16.mxu0 0
        %6376 = vmatmul.mubr.bf16.gmra.mrb[0].mxu0 %v6250
        %v6377 = vpop.f32.mrb[0].mxu0
        %v6378 = vadd.f32 0.0, %v6377
        %v6379 = vpop.f32.mrb[0].mxu0
        %v6380 = vpop.f32.mrb[0].mxu0
        %v6381 = vadd.f32 0.0, %v6380
        %v6382 = vpop.f32.mrb[0].mxu0
        %6383 = vmatprep.mubr.bf16.mxu0 0
        %6384 = vmatmul.mubr.bf16.gmra.mrb[0].mxu0 %v6251
        %v6385 = vpop.f32.mrb[0].mxu0
        %v6386 = vadd.f32 0.0, %v6385
        %v6387 = vpop.f32.mrb[0].mxu0
        %v6388 = vpop.f32.mrb[0].mxu0
        %v6389 = vadd.f32 0.0, %v6388
        %v6390 = vpop.f32.mrb[0].mxu0
        %6391 = vmatprep.mubr.bf16.mxu0 0
        %6392 = vmatmul.mubr.bf16.gmra.mrb[0].mxu0 %v6252
        %v6393 = vpop.f32.mrb[0].mxu0
        %v6394 = vadd.f32 0.0, %v6393
        %v6395 = vpop.f32.mrb[0].mxu0
        %v6396 = vpop.f32.mrb[0].mxu0
        %v6397 = vadd.f32 0.0, %v6396
        %v6398 = vpop.f32.mrb[0].mxu0
        %6399 = vmatprep.mubr.bf16.mxu0 0
        %6400 = vmatmul.mubr.bf16.gmra.mrb[0].mxu0 %v6253
        %v6401 = vpop.f32.mrb[0].mxu0
        %v6402 = vadd.f32 0.0, %v6401
        %v6403 = vpop.f32.mrb[0].mxu0
        %v6404 = vpop.f32.mrb[0].mxu0
        %v6405 = vadd.f32 0.0, %v6404
        %v6406 = vpop.f32.mrb[0].mxu0
        %6407 = vmatprep.mubr.bf16.mxu0 0
        %6408 = vmatmul.mubr.bf16.gmra.mrb[0].mxu0 %v6254
        %v6409 = vpop.f32.mrb[0].mxu0
        %v6410 = vadd.f32 0.0, %v6409
        %v6411 = vpop.f32.mrb[0].mxu0
        %v6412 = vpop.f32.mrb[0].mxu0
        %v6413 = vadd.f32 0.0, %v6412
        %v6414 = vpop.f32.mrb[0].mxu0
        %6415 = vdwg.mxu0
        %v6416 = vmax.f32 %v6354, %v6370
        %v6417 = vmax.f32 %v6357, %v6373
        %v6418 = vmax.f32 %v6362, %v6378
        %v6419 = vmax.f32 %v6365, %v6381
        %v6420 = vmax.f32 %v6416, %v6386
        %v6421 = vmax.f32 %v6417, %v6389
        %v6422 = vmax.f32 %v6418, %v6394
        %v6423 = vmax.f32 %v6419, %v6397
        %v6424 = vmax.f32 %v6420, %v6402
        %v6425 = vmax.f32 %v6421, %v6405
        %v6426 = vmax.f32 %v6422, %v6410
        %v6427 = vmax.f32 %v6423, %v6413
        %v6428 = vmax.f32 %v6424, %v6425
        %v6429 = vmax.f32 %v6426, %v6427
        %v6430 = vmax.f32 %v6428, %v6429
        %v6431 = vrot.slane %v6430, 4
        %v6432 = vmax.f32 %v6430, %v6431
        %v6433 = vrot.slane %v6432, 2
        %v6434 = vmax.f32 %v6432, %v6433
        %v6435 = vrot.slane %v6434, 1
        %v6436 = vmax.f32 %v6434, %v6435
        %v6437 = vsub.f32 %v6354, %v6436
        %v6438 = vsub.f32 %v6357, %v6436
        %v6439 = vsub.f32 %v6362, %v6436
        %v6440 = vsub.f32 %v6365, %v6436
        %v6441 = vsub.f32 %v6370, %v6436
        %v6442 = vsub.f32 %v6373, %v6436
        %v6443 = vsub.f32 %v6378, %v6436
        %v6444 = vsub.f32 %v6381, %v6436
        %v6445 = vsub.f32 %v6386, %v6436
        %v6446 = vsub.f32 %v6389, %v6436
        %v6447 = vsub.f32 %v6394, %v6436
        %v6448 = vsub.f32 %v6397, %v6436
        %v6449 = vsub.f32 %v6402, %v6436
        %v6450 = vsub.f32 %v6405, %v6436
        %v6451 = vsub.f32 %v6410, %v6436
        %v6452 = vsub.f32 %v6413, %v6436
        %v6453 = vmul.f32 %v6437, 1.442695
        %v6454 = vpow.pop %v6453
        %v6455 = vmul.f32 %v6438, 1.442695
        %v6456 = vpow.pop %v6455
        %v6457 = vmul.f32 %v6439, 1.442695
        %v6458 = vpow.pop %v6457
        %v6459 = vmul.f32 %v6440, 1.442695
        %v6460 = vpow.pop %v6459
        %v6461 = vmul.f32 %v6441, 1.442695
        %v6462 = vpow.pop %v6461
        %v6463 = vmul.f32 %v6442, 1.442695
        %v6464 = vpow.pop %v6463
        %v6465 = vmul.f32 %v6443, 1.442695
        %v6466 = vpow.pop %v6465
        %v6467 = vmul.f32 %v6444, 1.442695
        %v6468 = vpow.pop %v6467
        %v6469 = vmul.f32 %v6445, 1.442695
        %v6470 = vpow.pop %v6469
        %v6471 = vmul.f32 %v6446, 1.442695
        %v6472 = vpow.pop %v6471
        %v6473 = vmul.f32 %v6447, 1.442695
        %v6474 = vpow.pop %v6473
        %v6475 = vmul.f32 %v6448, 1.442695
        %v6476 = vpow.pop %v6475
        %v6477 = vmul.f32 %v6449, 1.442695
        %v6478 = vpow.pop %v6477
        %v6479 = vmul.f32 %v6450, 1.442695
        %v6480 = vpow.pop %v6479
        %v6481 = vmul.f32 %v6451, 1.442695
        %v6482 = vpow.pop %v6481
        %v6483 = vmul.f32 %v6452, 1.442695
        %v6484 = vpow.pop %v6483
        %v6485 = vadd.f32 %v6454, %v6456
        %v6486 = vadd.f32 %v6485, %v6458
        %v6487 = vadd.f32 %v6486, %v6460
        %v6488 = vadd.f32 %v6487, %v6462
        %v6489 = vadd.f32 %v6488, %v6464
        %v6490 = vadd.f32 %v6489, %v6466
        %v6491 = vadd.f32 %v6490, %v6468
        %v6492 = vadd.f32 %v6491, %v6470
        %v6493 = vadd.f32 %v6492, %v6472
        %v6494 = vadd.f32 %v6493, %v6474
        %v6495 = vadd.f32 %v6494, %v6476
        %v6496 = vadd.f32 %v6495, %v6478
        %v6497 = vadd.f32 %v6496, %v6480
        %v6498 = vadd.f32 %v6497, %v6482
        %v6499 = vadd.f32 %v6498, %v6484
        %v6500 = vrot.slane %v6499, 4
        %v6501 = vadd.f32 %v6499, %v6500
        %v6502 = vrot.slane %v6501, 2
        %v6503 = vadd.f32 %v6501, %v6502
        %v6504 = vrot.slane %v6503, 1
        %v6505 = vadd.f32 %v6503, %v6504
        %v6506 = vrcp.pop %v6505
        %v6507 = vmul.f32 %v6454, %v6506
        %v6508 = vmul.f32 %v6456, %v6506
        %v6509 = vmul.f32 %v6458, %v6506
        %v6510 = vmul.f32 %v6460, %v6506
        %v6511 = vmul.f32 %v6462, %v6506
        %v6512 = vmul.f32 %v6464, %v6506
        %v6513 = vmul.f32 %v6466, %v6506
        %v6514 = vmul.f32 %v6468, %v6506
        %v6515 = vmul.f32 %v6470, %v6506
        %v6516 = vmul.f32 %v6472, %v6506
        %v6517 = vmul.f32 %v6474, %v6506
        %v6518 = vmul.f32 %v6476, %v6506
        %v6519 = vmul.f32 %v6478, %v6506
        %v6520 = vmul.f32 %v6480, %v6506
        %v6521 = vmul.f32 %v6482, %v6506
        %v6522 = vmul.f32 %v6484, %v6506
        %v6523 = vpack.c.bf16 %v6508, %v6507
        %v6524 = vpack.c.bf16 %v6510, %v6509
        %v6525 = vpack.c.bf16 %v6512, %v6511
        %v6526 = vpack.c.bf16 %v6514, %v6513
        %v6527 = vpack.c.bf16 %v6516, %v6515
        %v6528 = vpack.c.bf16 %v6518, %v6517
        %v6529 = vpack.c.bf16 %v6520, %v6519
        %v6530 = vpack.c.bf16 %v6522, %v6521
        %6531 = vmatprep.subr.bf16.mxu0 0
        %6532 = vmatpush1.bf16.msra.mxu0 %v6303
        %6533 = vmatprep.subr.bf16.mxu0 0
        %6534 = vmatpush1.bf16.msra.mxu0 %v6304
        %6535 = vmatprep.subr.bf16.mxu0 0
        %6536 = vmatpush1.bf16.msra.mxu0 %v6305
        %6537 = vmatprep.subr.bf16.mxu0 0
        %6538 = vmatpush1.bf16.msra.mxu0 %v6306
        %6539 = vmatprep.subr.bf16.mxu0 0
        %6540 = vmatpush1.bf16.msra.mxu0 %v6307
        %6541 = vmatprep.subr.bf16.mxu0 0
        %6542 = vmatpush1.bf16.msra.mxu0 %v6308
        %6543 = vmatprep.subr.bf16.mxu0 0
        %6544 = vmatpush1.bf16.msra.mxu0 %v6309
        %6545 = vmatprep.subr.bf16.mxu0 0
        %6546 = vmatpush1.bf16.msra.mxu0 %v6310
        %6547 = vmatprep.subr.bf16.mxu0 0
        %6548 = vmatpush1.bf16.msra.mxu0 0
        %6549 = vmatprep.subr.bf16.mxu0 0
        %6550 = vmatpush1.bf16.msra.mxu0 0
        %6551 = vmatprep.subr.bf16.mxu0 0
        %6552 = vmatpush1.bf16.msra.mxu0 0
        %6553 = vmatprep.subr.bf16.mxu0 0
        %6554 = vmatpush1.bf16.msra.mxu0 0
        %6555 = vmatprep.subr.bf16.mxu0 0
        %6556 = vmatpush1.bf16.msra.mxu0 0
        %6557 = vmatprep.subr.bf16.mxu0 0
        %6558 = vmatpush1.bf16.msra.mxu0 0
        %6559 = vmatprep.subr.bf16.mxu0 0
        %6560 = vmatpush1.bf16.msra.mxu0 0
        %6561 = vmatprep.subr.bf16.mxu0 0
        %6562 = vmatpush1.bf16.msra.mxu0 0
        %6563 = vmatprep.mubr.bf16.mxu0 0
        %6564 = vmatmul.mubr.bf16.gmra.mrb[0].mxu0 %v6523
        %v6565 = vpop.f32.mrb[0].mxu0
        %v6566 = vadd.f32 0.0, %v6565
        %v6567 = vpop.f32.mrb[0].mxu0
        %v6568 = vpop.f32.mrb[0].mxu0
        %v6569 = vadd.f32 0.0, %v6568
        %v6570 = vpop.f32.mrb[0].mxu0
        %6571 = vmatprep.mubr.bf16.mxu0 0
        %6572 = vmatmul.mubr.bf16.gmra.mrb[0].mxu0 %v6524
        %v6573 = vpop.f32.mrb[0].mxu0
        %v6574 = vadd.f32 0.0, %v6573
        %v6575 = vpop.f32.mrb[0].mxu0
        %v6576 = vpop.f32.mrb[0].mxu0
        %v6577 = vadd.f32 0.0, %v6576
        %v6578 = vpop.f32.mrb[0].mxu0
        %6579 = vmatprep.mubr.bf16.mxu0 0
        %6580 = vmatmul.mubr.bf16.gmra.mrb[0].mxu0 %v6525
        %v6581 = vpop.f32.mrb[0].mxu0
        %v6582 = vadd.f32 0.0, %v6581
        %v6583 = vpop.f32.mrb[0].mxu0
        %v6584 = vpop.f32.mrb[0].mxu0
        %v6585 = vadd.f32 0.0, %v6584
        %v6586 = vpop.f32.mrb[0].mxu0
        %6587 = vmatprep.mubr.bf16.mxu0 0
        %6588 = vmatmul.mubr.bf16.gmra.mrb[0].mxu0 %v6526
        %v6589 = vpop.f32.mrb[0].mxu0
        %v6590 = vadd.f32 0.0, %v6589
        %v6591 = vpop.f32.mrb[0].mxu0
        %v6592 = vpop.f32.mrb[0].mxu0
        %v6593 = vadd.f32 0.0, %v6592
        %v6594 = vpop.f32.mrb[0].mxu0
        %6595 = vmatprep.mubr.bf16.mxu0 0
        %6596 = vmatmul.mubr.bf16.gmra.mrb[0].mxu0 %v6527
        %v6597 = vpop.f32.mrb[0].mxu0
        %v6598 = vadd.f32 0.0, %v6597
        %v6599 = vpop.f32.mrb[0].mxu0
        %v6600 = vpop.f32.mrb[0].mxu0
        %v6601 = vadd.f32 0.0, %v6600
        %v6602 = vpop.f32.mrb[0].mxu0
        %6603 = vmatprep.mubr.bf16.mxu0 0
        %6604 = vmatmul.mubr.bf16.gmra.mrb[0].mxu0 %v6528
        %v6605 = vpop.f32.mrb[0].mxu0
        %v6606 = vadd.f32 0.0, %v6605
        %v6607 = vpop.f32.mrb[0].mxu0
        %v6608 = vpop.f32.mrb[0].mxu0
        %v6609 = vadd.f32 0.0, %v6608
        %v6610 = vpop.f32.mrb[0].mxu0
        %6611 = vmatprep.mubr.bf16.mxu0 0
        %6612 = vmatmul.mubr.bf16.gmra.mrb[0].mxu0 %v6529
        %v6613 = vpop.f32.mrb[0].mxu0
        %v6614 = vadd.f32 0.0, %v6613
        %v6615 = vpop.f32.mrb[0].mxu0
        %v6616 = vpop.f32.mrb[0].mxu0
        %v6617 = vadd.f32 0.0, %v6616
        %v6618 = vpop.f32.mrb[0].mxu0
        %6619 = vmatprep.mubr.bf16.mxu0 0
        %6620 = vmatmul.mubr.bf16.gmra.mrb[0].mxu0 %v6530
        %v6621 = vpop.f32.mrb[0].mxu0
        %v6622 = vadd.f32 0.0, %v6621
        %v6623 = vpop.f32.mrb[0].mxu0
        %v6624 = vpop.f32.mrb[0].mxu0
        %v6625 = vadd.f32 0.0, %v6624
        %v6626 = vpop.f32.mrb[0].mxu0
        %6627 = vdwg.mxu0
        %6628 = vmatprep.subr.bf16.mxu0 0
        %6629 = vmatpush1.bf16.xpose.msra.mxu0 %v6255
        %6630 = vmatprep.subr.bf16.mxu0 0
        %6631 = vmatpush1.bf16.xpose.msra.mxu0 %v6256
        %6632 = vmatprep.subr.bf16.mxu0 0
        %6633 = vmatpush1.bf16.xpose.msra.mxu0 %v6257
        %6634 = vmatprep.subr.bf16.mxu0 0
        %6635 = vmatpush1.bf16.xpose.msra.mxu0 %v6258
        %6636 = vmatprep.subr.bf16.mxu0 0
        %6637 = vmatpush1.bf16.xpose.msra.mxu0 %v6259
        %6638 = vmatprep.subr.bf16.mxu0 0
        %6639 = vmatpush1.bf16.xpose.msra.mxu0 %v6260
        %6640 = vmatprep.subr.bf16.mxu0 0
        %6641 = vmatpush1.bf16.xpose.msra.mxu0 %v6261
        %6642 = vmatprep.subr.bf16.mxu0 0
        %6643 = vmatpush1.bf16.xpose.msra.mxu0 %v6262
        %6644 = vmatprep.subr.bf16.mxu0 0
        %6645 = vmatpush1.bf16.xpose.msra.mxu0 0
        %6646 = vmatprep.subr.bf16.mxu0 0
        %6647 = vmatpush1.bf16.xpose.msra.mxu0 0
        %6648 = vmatprep.subr.bf16.mxu0 0
        %6649 = vmatpush1.bf16.xpose.msra.mxu0 0
        %6650 = vmatprep.subr.bf16.mxu0 0
        %6651 = vmatpush1.bf16.xpose.msra.mxu0 0
        %6652 = vmatprep.subr.bf16.mxu0 0
        %6653 = vmatpush1.bf16.xpose.msra.mxu0 0
        %6654 = vmatprep.subr.bf16.mxu0 0
        %6655 = vmatpush1.bf16.xpose.msra.mxu0 0
        %6656 = vmatprep.subr.bf16.mxu0 0
        %6657 = vmatpush1.bf16.xpose.msra.mxu0 0
        %6658 = vmatprep.subr.bf16.mxu0 0
        %6659 = vmatpush1.bf16.xpose.msra.mxu0 0
        %6660 = vmatprep.mubr.bf16.mxu0 0
        %6661 = vmatmul.mubr.bf16.gmra.mrb[0].mxu0 %v6255
        %v6662 = vpop.f32.mrb[0].mxu0
        %v6663 = vadd.f32 0.0, %v6662
        %v6664 = vpop.f32.mrb[0].mxu0
        %v6665 = vpop.f32.mrb[0].mxu0
        %v6666 = vadd.f32 0.0, %v6665
        %v6667 = vpop.f32.mrb[0].mxu0
        %6668 = vmatprep.mubr.bf16.mxu0 0
        %6669 = vmatmul.mubr.bf16.gmra.mrb[0].mxu0 %v6256
        %v6670 = vpop.f32.mrb[0].mxu0
        %v6671 = vadd.f32 0.0, %v6670
        %v6672 = vpop.f32.mrb[0].mxu0
        %v6673 = vpop.f32.mrb[0].mxu0
        %v6674 = vadd.f32 0.0, %v6673
        %v6675 = vpop.f32.mrb[0].mxu0
        %6676 = vmatprep.mubr.bf16.mxu0 0
        %6677 = vmatmul.mubr.bf16.gmra.mrb[0].mxu0 %v6257
        %v6678 = vpop.f32.mrb[0].mxu0
        %v6679 = vadd.f32 0.0, %v6678
        %v6680 = vpop.f32.mrb[0].mxu0
        %v6681 = vpop.f32.mrb[0].mxu0
        %v6682 = vadd.f32 0.0, %v6681
        %v6683 = vpop.f32.mrb[0].mxu0
        %6684 = vmatprep.mubr.bf16.mxu0 0
        %6685 = vmatmul.mubr.bf16.gmra.mrb[0].mxu0 %v6258
        %v6686 = vpop.f32.mrb[0].mxu0
        %v6687 = vadd.f32 0.0, %v6686
        %v6688 = vpop.f32.mrb[0].mxu0
        %v6689 = vpop.f32.mrb[0].mxu0
        %v6690 = vadd.f32 0.0, %v6689
        %v6691 = vpop.f32.mrb[0].mxu0
        %6692 = vmatprep.mubr.bf16.mxu0 0
        %6693 = vmatmul.mubr.bf16.gmra.mrb[0].mxu0 %v6259
        %v6694 = vpop.f32.mrb[0].mxu0
        %v6695 = vadd.f32 0.0, %v6694
        %v6696 = vpop.f32.mrb[0].mxu0
        %v6697 = vpop.f32.mrb[0].mxu0
        %v6698 = vadd.f32 0.0, %v6697
        %v6699 = vpop.f32.mrb[0].mxu0
        %6700 = vmatprep.mubr.bf16.mxu0 0
        %6701 = vmatmul.mubr.bf16.gmra.mrb[0].mxu0 %v6260
        %v6702 = vpop.f32.mrb[0].mxu0
        %v6703 = vadd.f32 0.0, %v6702
        %v6704 = vpop.f32.mrb[0].mxu0
        %v6705 = vpop.f32.mrb[0].mxu0
        %v6706 = vadd.f32 0.0, %v6705
        %v6707 = vpop.f32.mrb[0].mxu0
        %6708 = vmatprep.mubr.bf16.mxu0 0
        %6709 = vmatmul.mubr.bf16.gmra.mrb[0].mxu0 %v6261
        %v6710 = vpop.f32.mrb[0].mxu0
        %v6711 = vadd.f32 0.0, %v6710
        %v6712 = vpop.f32.mrb[0].mxu0
        %v6713 = vpop.f32.mrb[0].mxu0
        %v6714 = vadd.f32 0.0, %v6713
        %v6715 = vpop.f32.mrb[0].mxu0
        %6716 = vmatprep.mubr.bf16.mxu0 0
        %6717 = vmatmul.mubr.bf16.gmra.mrb[0].mxu0 %v6262
        %v6718 = vpop.f32.mrb[0].mxu0
        %v6719 = vadd.f32 0.0, %v6718
        %v6720 = vpop.f32.mrb[0].mxu0
        %v6721 = vpop.f32.mrb[0].mxu0
        %v6722 = vadd.f32 0.0, %v6721
        %v6723 = vpop.f32.mrb[0].mxu0
        %6724 = vdwg.mxu0
        %v6725 = vmax.f32 %v6663, %v6679
        %v6726 = vmax.f32 %v6666, %v6682
        %v6727 = vmax.f32 %v6671, %v6687
        %v6728 = vmax.f32 %v6674, %v6690
        %v6729 = vmax.f32 %v6725, %v6695
        %v6730 = vmax.f32 %v6726, %v6698
        %v6731 = vmax.f32 %v6727, %v6703
        %v6732 = vmax.f32 %v6728, %v6706
        %v6733 = vmax.f32 %v6729, %v6711
        %v6734 = vmax.f32 %v6730, %v6714
        %v6735 = vmax.f32 %v6731, %v6719
        %v6736 = vmax.f32 %v6732, %v6722
        %v6737 = vmax.f32 %v6733, %v6734
        %v6738 = vmax.f32 %v6735, %v6736
        %v6739 = vmax.f32 %v6737, %v6738
        %v6740 = vrot.slane %v6739, 4
        %v6741 = vmax.f32 %v6739, %v6740
        %v6742 = vrot.slane %v6741, 2
        %v6743 = vmax.f32 %v6741, %v6742
        %v6744 = vrot.slane %v6743, 1
        %v6745 = vmax.f32 %v6743, %v6744
        %v6746 = vsub.f32 %v6663, %v6745
        %v6747 = vsub.f32 %v6666, %v6745
        %v6748 = vsub.f32 %v6671, %v6745
        %v6749 = vsub.f32 %v6674, %v6745
        %v6750 = vsub.f32 %v6679, %v6745
        %v6751 = vsub.f32 %v6682, %v6745
        %v6752 = vsub.f32 %v6687, %v6745
        %v6753 = vsub.f32 %v6690, %v6745
        %v6754 = vsub.f32 %v6695, %v6745
        %v6755 = vsub.f32 %v6698, %v6745
        %v6756 = vsub.f32 %v6703, %v6745
        %v6757 = vsub.f32 %v6706, %v6745
        %v6758 = vsub.f32 %v6711, %v6745
        %v6759 = vsub.f32 %v6714, %v6745
        %v6760 = vsub.f32 %v6719, %v6745
        %v6761 = vsub.f32 %v6722, %v6745
        %v6762 = vmul.f32 %v6746, 1.442695
        %v6763 = vpow.pop %v6762
        %v6764 = vmul.f32 %v6747, 1.442695
        %v6765 = vpow.pop %v6764
        %v6766 = vmul.f32 %v6748, 1.442695
        %v6767 = vpow.pop %v6766
        %v6768 = vmul.f32 %v6749, 1.442695
        %v6769 = vpow.pop %v6768
        %v6770 = vmul.f32 %v6750, 1.442695
        %v6771 = vpow.pop %v6770
        %v6772 = vmul.f32 %v6751, 1.442695
        %v6773 = vpow.pop %v6772
        %v6774 = vmul.f32 %v6752, 1.442695
        %v6775 = vpow.pop %v6774
        %v6776 = vmul.f32 %v6753, 1.442695
        %v6777 = vpow.pop %v6776
        %v6778 = vmul.f32 %v6754, 1.442695
        %v6779 = vpow.pop %v6778
        %v6780 = vmul.f32 %v6755, 1.442695
        %v6781 = vpow.pop %v6780
        %v6782 = vmul.f32 %v6756, 1.442695
        %v6783 = vpow.pop %v6782
        %v6784 = vmul.f32 %v6757, 1.442695
        %v6785 = vpow.pop %v6784
        %v6786 = vmul.f32 %v6758, 1.442695
        %v6787 = vpow.pop %v6786
        %v6788 = vmul.f32 %v6759, 1.442695
        %v6789 = vpow.pop %v6788
        %v6790 = vmul.f32 %v6760, 1.442695
        %v6791 = vpow.pop %v6790
        %v6792 = vmul.f32 %v6761, 1.442695
        %v6793 = vpow.pop %v6792
        %v6794 = vadd.f32 %v6763, %v6765
        %v6795 = vadd.f32 %v6794, %v6767
        %v6796 = vadd.f32 %v6795, %v6769
        %v6797 = vadd.f32 %v6796, %v6771
        %v6798 = vadd.f32 %v6797, %v6773
        %v6799 = vadd.f32 %v6798, %v6775
        %v6800 = vadd.f32 %v6799, %v6777
        %v6801 = vadd.f32 %v6800, %v6779
        %v6802 = vadd.f32 %v6801, %v6781
        %v6803 = vadd.f32 %v6802, %v6783
        %v6804 = vadd.f32 %v6803, %v6785
        %v6805 = vadd.f32 %v6804, %v6787
        %v6806 = vadd.f32 %v6805, %v6789
        %v6807 = vadd.f32 %v6806, %v6791
        %v6808 = vadd.f32 %v6807, %v6793
        %v6809 = vrot.slane %v6808, 4
        %v6810 = vadd.f32 %v6808, %v6809
        %v6811 = vrot.slane %v6810, 2
        %v6812 = vadd.f32 %v6810, %v6811
        %v6813 = vrot.slane %v6812, 1
        %v6814 = vadd.f32 %v6812, %v6813
        %v6815 = vrcp.pop %v6814
        %v6816 = vmul.f32 %v6763, %v6815
        %v6817 = vmul.f32 %v6765, %v6815
        %v6818 = vmul.f32 %v6767, %v6815
        %v6819 = vmul.f32 %v6769, %v6815
        %v6820 = vmul.f32 %v6771, %v6815
        %v6821 = vmul.f32 %v6773, %v6815
        %v6822 = vmul.f32 %v6775, %v6815
        %v6823 = vmul.f32 %v6777, %v6815
        %v6824 = vmul.f32 %v6779, %v6815
        %v6825 = vmul.f32 %v6781, %v6815
        %v6826 = vmul.f32 %v6783, %v6815
        %v6827 = vmul.f32 %v6785, %v6815
        %v6828 = vmul.f32 %v6787, %v6815
        %v6829 = vmul.f32 %v6789, %v6815
        %v6830 = vmul.f32 %v6791, %v6815
        %v6831 = vmul.f32 %v6793, %v6815
        %v6832 = vpack.c.bf16 %v6817, %v6816
        %v6833 = vpack.c.bf16 %v6819, %v6818
        %v6834 = vpack.c.bf16 %v6821, %v6820
        %v6835 = vpack.c.bf16 %v6823, %v6822
        %v6836 = vpack.c.bf16 %v6825, %v6824
        %v6837 = vpack.c.bf16 %v6827, %v6826
        %v6838 = vpack.c.bf16 %v6829, %v6828
        %v6839 = vpack.c.bf16 %v6831, %v6830
        %6840 = vmatprep.subr.bf16.mxu0 0
        %6841 = vmatpush1.bf16.msra.mxu0 %v6311
        %6842 = vmatprep.subr.bf16.mxu0 0
        %6843 = vmatpush1.bf16.msra.mxu0 %v6312
        %6844 = vmatprep.subr.bf16.mxu0 0
        %6845 = vmatpush1.bf16.msra.mxu0 %v6313
        %6846 = vmatprep.subr.bf16.mxu0 0
        %6847 = vmatpush1.bf16.msra.mxu0 %v6314
        %6848 = vmatprep.subr.bf16.mxu0 0
        %6849 = vmatpush1.bf16.msra.mxu0 %v6315
        %6850 = vmatprep.subr.bf16.mxu0 0
        %6851 = vmatpush1.bf16.msra.mxu0 %v6316
        %6852 = vmatprep.subr.bf16.mxu0 0
        %6853 = vmatpush1.bf16.msra.mxu0 %v6317
        %6854 = vmatprep.subr.bf16.mxu0 0
        %6855 = vmatpush1.bf16.msra.mxu0 %v6318
        %6856 = vmatprep.subr.bf16.mxu0 0
        %6857 = vmatpush1.bf16.msra.mxu0 0
        %6858 = vmatprep.subr.bf16.mxu0 0
        %6859 = vmatpush1.bf16.msra.mxu0 0
        %6860 = vmatprep.subr.bf16.mxu0 0
        %6861 = vmatpush1.bf16.msra.mxu0 0
        %6862 = vmatprep.subr.bf16.mxu0 0
        %6863 = vmatpush1.bf16.msra.mxu0 0
        %6864 = vmatprep.subr.bf16.mxu0 0
        %6865 = vmatpush1.bf16.msra.mxu0 0
        %6866 = vmatprep.subr.bf16.mxu0 0
        %6867 = vmatpush1.bf16.msra.mxu0 0
        %6868 = vmatprep.subr.bf16.mxu0 0
        %6869 = vmatpush1.bf16.msra.mxu0 0
        %6870 = vmatprep.subr.bf16.mxu0 0
        %6871 = vmatpush1.bf16.msra.mxu0 0
        %6872 = vmatprep.mubr.bf16.mxu0 0
        %6873 = vmatmul.mubr.bf16.gmra.mrb[0].mxu0 %v6832
        %v6874 = vpop.f32.mrb[0].mxu0
        %v6875 = vadd.f32 0.0, %v6874
        %v6876 = vpop.f32.mrb[0].mxu0
        %v6877 = vpop.f32.mrb[0].mxu0
        %v6878 = vadd.f32 0.0, %v6877
        %v6879 = vpop.f32.mrb[0].mxu0
        %6880 = vmatprep.mubr.bf16.mxu0 0
        %6881 = vmatmul.mubr.bf16.gmra.mrb[0].mxu0 %v6833
        %v6882 = vpop.f32.mrb[0].mxu0
        %v6883 = vadd.f32 0.0, %v6882
        %v6884 = vpop.f32.mrb[0].mxu0
        %v6885 = vpop.f32.mrb[0].mxu0
        %v6886 = vadd.f32 0.0, %v6885
        %v6887 = vpop.f32.mrb[0].mxu0
        %6888 = vmatprep.mubr.bf16.mxu0 0
        %6889 = vmatmul.mubr.bf16.gmra.mrb[0].mxu0 %v6834
        %v6890 = vpop.f32.mrb[0].mxu0
        %v6891 = vadd.f32 0.0, %v6890
        %v6892 = vpop.f32.mrb[0].mxu0
        %v6893 = vpop.f32.mrb[0].mxu0
        %v6894 = vadd.f32 0.0, %v6893
        %v6895 = vpop.f32.mrb[0].mxu0
        %6896 = vmatprep.mubr.bf16.mxu0 0
        %6897 = vmatmul.mubr.bf16.gmra.mrb[0].mxu0 %v6835
        %v6898 = vpop.f32.mrb[0].mxu0
        %v6899 = vadd.f32 0.0, %v6898
        %v6900 = vpop.f32.mrb[0].mxu0
        %v6901 = vpop.f32.mrb[0].mxu0
        %v6902 = vadd.f32 0.0, %v6901
        %v6903 = vpop.f32.mrb[0].mxu0
        %6904 = vmatprep.mubr.bf16.mxu0 0
        %6905 = vmatmul.mubr.bf16.gmra.mrb[0].mxu0 %v6836
        %v6906 = vpop.f32.mrb[0].mxu0
        %v6907 = vadd.f32 0.0, %v6906
        %v6908 = vpop.f32.mrb[0].mxu0
        %v6909 = vpop.f32.mrb[0].mxu0
        %v6910 = vadd.f32 0.0, %v6909
        %v6911 = vpop.f32.mrb[0].mxu0
        %6912 = vmatprep.mubr.bf16.mxu0 0
        %6913 = vmatmul.mubr.bf16.gmra.mrb[0].mxu0 %v6837
        %v6914 = vpop.f32.mrb[0].mxu0
        %v6915 = vadd.f32 0.0, %v6914
        %v6916 = vpop.f32.mrb[0].mxu0
        %v6917 = vpop.f32.mrb[0].mxu0
        %v6918 = vadd.f32 0.0, %v6917
        %v6919 = vpop.f32.mrb[0].mxu0
        %6920 = vmatprep.mubr.bf16.mxu0 0
        %6921 = vmatmul.mubr.bf16.gmra.mrb[0].mxu0 %v6838
        %v6922 = vpop.f32.mrb[0].mxu0
        %v6923 = vadd.f32 0.0, %v6922
        %v6924 = vpop.f32.mrb[0].mxu0
        %v6925 = vpop.f32.mrb[0].mxu0
        %v6926 = vadd.f32 0.0, %v6925
        %v6927 = vpop.f32.mrb[0].mxu0
        %6928 = vmatprep.mubr.bf16.mxu0 0
        %6929 = vmatmul.mubr.bf16.gmra.mrb[0].mxu0 %v6839
        %v6930 = vpop.f32.mrb[0].mxu0
        %v6931 = vadd.f32 0.0, %v6930
        %v6932 = vpop.f32.mrb[0].mxu0
        %v6933 = vpop.f32.mrb[0].mxu0
        %v6934 = vadd.f32 0.0, %v6933
        %v6935 = vpop.f32.mrb[0].mxu0
        %6936 = vdwg.mxu0
        %v6937 = vpack.c.bf16 %v6569, %v6566
        %v6938 = vpack.c.bf16 %v6577, %v6574
        %v6939 = vpack.c.bf16 %v6585, %v6582
        %v6940 = vpack.c.bf16 %v6593, %v6590
        %v6941 = vpack.c.bf16 %v6601, %v6598
        %v6942 = vpack.c.bf16 %v6609, %v6606
        %v6943 = vpack.c.bf16 %v6617, %v6614
        %v6944 = vpack.c.bf16 %v6625, %v6622
        %v6945 = vpack.c.bf16 %v6878, %v6875
        %v6946 = vpack.c.bf16 %v6886, %v6883
        %v6947 = vpack.c.bf16 %v6894, %v6891
        %v6948 = vpack.c.bf16 %v6902, %v6899
        %v6949 = vpack.c.bf16 %v6910, %v6907
        %v6950 = vpack.c.bf16 %v6918, %v6915
        %v6951 = vpack.c.bf16 %v6926, %v6923
        %v6952 = vpack.c.bf16 %v6934, %v6931
        %s6953 = scalar_lea.vmem [#allocation6], 192
        %v6954 = vld [vmem:[%s6953] sm:$0xf]
        %v6955 = vld [vmem:[%s6953 + $0x4] sm:$0xf]
        %v6956 = vld [vmem:[%s6953 + $0x8] sm:$0xf]
        %v6957 = vld [vmem:[%s6953 + $0xc] sm:$0xf]
        %v6958 = vld [vmem:[%s6953 + $0x10] sm:$0xf]
        %v6959 = vld [vmem:[%s6953 + $0x14] sm:$0xf]
        %v6960 = vld [vmem:[%s6953 + $0x18] sm:$0xf]
        %v6961 = vld [vmem:[%s6953 + $0x1c] sm:$0xf]
        %v6962 = vld [vmem:[%s6953 + $0x20] sm:$0xf]
        %v6963 = vld [vmem:[%s6953 + $0x24] sm:$0xf]
        %v6964 = vld [vmem:[%s6953 + $0x28] sm:$0xf]
        %v6965 = vld [vmem:[%s6953 + $0x2c] sm:$0xf]
        %v6966 = vld [vmem:[%s6953 + $0x30] sm:$0xf]
        %v6967 = vld [vmem:[%s6953 + $0x34] sm:$0xf]
        %v6968 = vld [vmem:[%s6953 + $0x38] sm:$0xf]
        %v6969 = vld [vmem:[%s6953 + $0x3c] sm:$0xf]
        %s6970 = scalar_lea.vmem %s10, 3
        %v6971 = vld [vmem:[%s6970] sm:$0x1]
        %v6973 = vlaneseq
        %v6974 = vshrl.u32 %v6973, 7
        %v6975 = vsub.s32 0, %v6974
        %v6976 = vrot.slane %v6971, %v6975
        %v6994 = vunpack.c.l.b16 %v6954
        %v6995 = vunpack.c.l.b16 %v6955
        %v6996 = vunpack.c.l.b16 %v6956
        %v6997 = vunpack.c.l.b16 %v6957
        %v6998 = vunpack.c.l.b16 %v6958
        %v6999 = vunpack.c.l.b16 %v6959
        %v7000 = vunpack.c.l.b16 %v6960
        %v7001 = vunpack.c.l.b16 %v6961
        %v7002 = vunpack.c.l.b16 %v6962
        %v7003 = vunpack.c.l.b16 %v6963
        %v7004 = vunpack.c.l.b16 %v6964
        %v7005 = vunpack.c.l.b16 %v6965
        %v7006 = vunpack.c.l.b16 %v6966
        %v7007 = vunpack.c.l.b16 %v6967
        %v7008 = vunpack.c.l.b16 %v6968
        %v7009 = vunpack.c.l.b16 %v6969
        %v7010 = vpack.c.b16 %v6995, %v6994
        %v7011 = vpack.c.b16 %v6997, %v6996
        %v7012 = vpack.c.b16 %v6999, %v6998
        %v7013 = vpack.c.b16 %v7001, %v7000
        %v7014 = vpack.c.b16 %v7003, %v7002
        %v7015 = vpack.c.b16 %v7005, %v7004
        %v7016 = vpack.c.b16 %v7007, %v7006
        %v7017 = vpack.c.b16 %v7009, %v7008
        %7026 = vmatprep.subr.bf16.mxu0 0
        %7027 = vmatpush1.bf16.msra.mxu0 %v7010
        %7028 = vmatprep.subr.bf16.mxu0 0
        %7029 = vmatpush1.bf16.msra.mxu0 %v7011
        %7030 = vmatprep.subr.bf16.mxu0 0
        %7031 = vmatpush1.bf16.msra.mxu0 %v7012
        %7032 = vmatprep.subr.bf16.mxu0 0
        %7033 = vmatpush1.bf16.msra.mxu0 %v7013
        %7034 = vmatprep.subr.bf16.mxu0 0
        %7035 = vmatpush1.bf16.msra.mxu0 %v7014
        %7036 = vmatprep.subr.bf16.mxu0 0
        %7037 = vmatpush1.bf16.msra.mxu0 %v7015
        %7038 = vmatprep.subr.bf16.mxu0 0
        %7039 = vmatpush1.bf16.msra.mxu0 %v7016
        %7040 = vmatprep.subr.bf16.mxu0 0
        %7041 = vmatpush1.bf16.msra.mxu0 %v7017
        %7042 = vmatprep.subr.bf16.mxu0 0
        %7043 = vmatpush1.bf16.msra.mxu0 0
        %7044 = vmatprep.subr.bf16.mxu0 0
        %7045 = vmatpush1.bf16.msra.mxu0 0
        %7046 = vmatprep.subr.bf16.mxu0 0
        %7047 = vmatpush1.bf16.msra.mxu0 0
        %7048 = vmatprep.subr.bf16.mxu0 0
        %7049 = vmatpush1.bf16.msra.mxu0 0
        %7050 = vmatprep.subr.bf16.mxu0 0
        %7051 = vmatpush1.bf16.msra.mxu0 0
        %7052 = vmatprep.subr.bf16.mxu0 0
        %7053 = vmatpush1.bf16.msra.mxu0 0
        %7054 = vmatprep.subr.bf16.mxu0 0
        %7055 = vmatpush1.bf16.msra.mxu0 0
        %7056 = vmatprep.subr.bf16.mxu0 0
        %7057 = vmatpush1.bf16.msra.mxu0 0
        %7058 = vmatprep.mubr.bf16.mxu0 0
        %7059 = vmatmul.mubr.bf16.gmra.mrb[0].mxu0 %v6937
        %v7060 = vpop.f32.mrb[0].mxu0
        %v7061 = vadd.f32 %v6976, %v7060
        %v7062 = vpop.f32.mrb[0].mxu0
        %v7063 = vpop.f32.mrb[0].mxu0
        %v7064 = vadd.f32 %v6976, %v7063
        %v7065 = vpop.f32.mrb[0].mxu0
        %7066 = vmatprep.mubr.bf16.mxu0 0
        %7067 = vmatmul.mubr.bf16.gmra.mrb[0].mxu0 %v6938
        %v7068 = vpop.f32.mrb[0].mxu0
        %v7069 = vadd.f32 %v6976, %v7068
        %v7070 = vpop.f32.mrb[0].mxu0
        %v7071 = vpop.f32.mrb[0].mxu0
        %v7072 = vadd.f32 %v6976, %v7071
        %v7073 = vpop.f32.mrb[0].mxu0
        %7074 = vmatprep.mubr.bf16.mxu0 0
        %7075 = vmatmul.mubr.bf16.gmra.mrb[0].mxu0 %v6939
        %v7076 = vpop.f32.mrb[0].mxu0
        %v7077 = vadd.f32 %v6976, %v7076
        %v7078 = vpop.f32.mrb[0].mxu0
        %v7079 = vpop.f32.mrb[0].mxu0
        %v7080 = vadd.f32 %v6976, %v7079
        %v7081 = vpop.f32.mrb[0].mxu0
        %7082 = vmatprep.mubr.bf16.mxu0 0
        %7083 = vmatmul.mubr.bf16.gmra.mrb[0].mxu0 %v6940
        %v7084 = vpop.f32.mrb[0].mxu0
        %v7085 = vadd.f32 %v6976, %v7084
        %v7086 = vpop.f32.mrb[0].mxu0
        %v7087 = vpop.f32.mrb[0].mxu0
        %v7088 = vadd.f32 %v6976, %v7087
        %v7089 = vpop.f32.mrb[0].mxu0
        %7090 = vmatprep.mubr.bf16.mxu0 0
        %7091 = vmatmul.mubr.bf16.gmra.mrb[0].mxu0 %v6941
        %v7092 = vpop.f32.mrb[0].mxu0
        %v7093 = vadd.f32 %v6976, %v7092
        %v7094 = vpop.f32.mrb[0].mxu0
        %v7095 = vpop.f32.mrb[0].mxu0
        %v7096 = vadd.f32 %v6976, %v7095
        %v7097 = vpop.f32.mrb[0].mxu0
        %7098 = vmatprep.mubr.bf16.mxu0 0
        %7099 = vmatmul.mubr.bf16.gmra.mrb[0].mxu0 %v6942
        %v7100 = vpop.f32.mrb[0].mxu0
        %v7101 = vadd.f32 %v6976, %v7100
        %v7102 = vpop.f32.mrb[0].mxu0
        %v7103 = vpop.f32.mrb[0].mxu0
        %v7104 = vadd.f32 %v6976, %v7103
        %v7105 = vpop.f32.mrb[0].mxu0
        %7106 = vmatprep.mubr.bf16.mxu0 0
        %7107 = vmatmul.mubr.bf16.gmra.mrb[0].mxu0 %v6943
        %v7108 = vpop.f32.mrb[0].mxu0
        %v7109 = vadd.f32 %v6976, %v7108
        %v7110 = vpop.f32.mrb[0].mxu0
        %v7111 = vpop.f32.mrb[0].mxu0
        %v7112 = vadd.f32 %v6976, %v7111
        %v7113 = vpop.f32.mrb[0].mxu0
        %7114 = vmatprep.mubr.bf16.mxu0 0
        %7115 = vmatmul.mubr.bf16.gmra.mrb[0].mxu0 %v6944
        %v7116 = vpop.f32.mrb[0].mxu0
        %v7117 = vadd.f32 %v6976, %v7116
        %v7118 = vpop.f32.mrb[0].mxu0
        %v7119 = vpop.f32.mrb[0].mxu0
        %v7120 = vadd.f32 %v6976, %v7119
        %v7121 = vpop.f32.mrb[0].mxu0
        %7122 = vmatprep.mubr.bf16.mxu0 0
        %7123 = vmatmul.mubr.bf16.gmra.mrb[0].mxu0 %v6945
        %v7124 = vpop.f32.mrb[0].mxu0
        %v7125 = vadd.f32 %v6976, %v7124
        %v7126 = vpop.f32.mrb[0].mxu0
        %v7127 = vpop.f32.mrb[0].mxu0
        %v7128 = vadd.f32 %v6976, %v7127
        %v7129 = vpop.f32.mrb[0].mxu0
        %7130 = vmatprep.mubr.bf16.mxu0 0
        %7131 = vmatmul.mubr.bf16.gmra.mrb[0].mxu0 %v6946
        %v7132 = vpop.f32.mrb[0].mxu0
        %v7133 = vadd.f32 %v6976, %v7132
        %v7134 = vpop.f32.mrb[0].mxu0
        %v7135 = vpop.f32.mrb[0].mxu0
        %v7136 = vadd.f32 %v6976, %v7135
        %v7137 = vpop.f32.mrb[0].mxu0
        %7138 = vmatprep.mubr.bf16.mxu0 0
        %7139 = vmatmul.mubr.bf16.gmra.mrb[0].mxu0 %v6947
        %v7140 = vpop.f32.mrb[0].mxu0
        %v7141 = vadd.f32 %v6976, %v7140
        %v7142 = vpop.f32.mrb[0].mxu0
        %v7143 = vpop.f32.mrb[0].mxu0
        %v7144 = vadd.f32 %v6976, %v7143
        %v7145 = vpop.f32.mrb[0].mxu0
        %7146 = vmatprep.mubr.bf16.mxu0 0
        %7147 = vmatmul.mubr.bf16.gmra.mrb[0].mxu0 %v6948
        %v7148 = vpop.f32.mrb[0].mxu0
        %v7149 = vadd.f32 %v6976, %v7148
        %v7150 = vpop.f32.mrb[0].mxu0
        %v7151 = vpop.f32.mrb[0].mxu0
        %v7152 = vadd.f32 %v6976, %v7151
        %v7153 = vpop.f32.mrb[0].mxu0
        %7154 = vmatprep.mubr.bf16.mxu0 0
        %7155 = vmatmul.mubr.bf16.gmra.mrb[0].mxu0 %v6949
        %v7156 = vpop.f32.mrb[0].mxu0
        %v7157 = vadd.f32 %v6976, %v7156
        %v7158 = vpop.f32.mrb[0].mxu0
        %v7159 = vpop.f32.mrb[0].mxu0
        %v7160 = vadd.f32 %v6976, %v7159
        %v7161 = vpop.f32.mrb[0].mxu0
        %7162 = vmatprep.mubr.bf16.mxu0 0
        %7163 = vmatmul.mubr.bf16.gmra.mrb[0].mxu0 %v6950
        %v7164 = vpop.f32.mrb[0].mxu0
        %v7165 = vadd.f32 %v6976, %v7164
        %v7166 = vpop.f32.mrb[0].mxu0
        %v7167 = vpop.f32.mrb[0].mxu0
        %v7168 = vadd.f32 %v6976, %v7167
        %v7169 = vpop.f32.mrb[0].mxu0
        %7170 = vmatprep.mubr.bf16.mxu0 0
        %7171 = vmatmul.mubr.bf16.gmra.mrb[0].mxu0 %v6951
        %v7172 = vpop.f32.mrb[0].mxu0
        %v7173 = vadd.f32 %v6976, %v7172
        %v7174 = vpop.f32.mrb[0].mxu0
        %v7175 = vpop.f32.mrb[0].mxu0
        %v7176 = vadd.f32 %v6976, %v7175
        %v7177 = vpop.f32.mrb[0].mxu0
        %7178 = vmatprep.mubr.bf16.mxu0 0
        %7179 = vmatmul.mubr.bf16.gmra.mrb[0].mxu0 %v6952
        %v7180 = vpop.f32.mrb[0].mxu0
        %v7181 = vadd.f32 %v6976, %v7180
        %v7182 = vpop.f32.mrb[0].mxu0
        %v7183 = vpop.f32.mrb[0].mxu0
        %v7184 = vadd.f32 %v6976, %v7183
        %v7185 = vpop.f32.mrb[0].mxu0
        %7186 = vdwg.mxu0
        %s7187 = scalar_lea.vmem %s11, 3
        %v7188 = vld [vmem:[%s7187] sm:$0x1]
        %v7190 = vlaneseq
        %v7191 = vshrl.u32 %v7190, 7
        %v7192 = vsub.s32 0, %v7191
        %v7193 = vrot.slane %v7188, %v7192
        %v7195 = vmul.f32 %v7061, %v7193
        %v7196 = vmul.f32 %v7064, %v7193
        %v7197 = vmul.f32 %v7069, %v7193
        %v7198 = vmul.f32 %v7072, %v7193
        %v7199 = vmul.f32 %v7077, %v7193
        %v7200 = vmul.f32 %v7080, %v7193
        %v7201 = vmul.f32 %v7085, %v7193
        %v7202 = vmul.f32 %v7088, %v7193
        %v7203 = vmul.f32 %v7093, %v7193
        %v7204 = vmul.f32 %v7096, %v7193
        %v7205 = vmul.f32 %v7101, %v7193
        %v7206 = vmul.f32 %v7104, %v7193
        %v7207 = vmul.f32 %v7109, %v7193
        %v7208 = vmul.f32 %v7112, %v7193
        %v7209 = vmul.f32 %v7117, %v7193
        %v7210 = vmul.f32 %v7120, %v7193
        %v7211 = vmul.f32 %v7125, %v7193
        %v7212 = vmul.f32 %v7128, %v7193
        %v7213 = vmul.f32 %v7133, %v7193
        %v7214 = vmul.f32 %v7136, %v7193
        %v7215 = vmul.f32 %v7141, %v7193
        %v7216 = vmul.f32 %v7144, %v7193
        %v7217 = vmul.f32 %v7149, %v7193
        %v7218 = vmul.f32 %v7152, %v7193
        %v7219 = vmul.f32 %v7157, %v7193
        %v7220 = vmul.f32 %v7160, %v7193
        %v7221 = vmul.f32 %v7165, %v7193
        %v7222 = vmul.f32 %v7168, %v7193
        %v7223 = vmul.f32 %v7173, %v7193
        %v7224 = vmul.f32 %v7176, %v7193
        %v7225 = vmul.f32 %v7181, %v7193
        %v7226 = vmul.f32 %v7184, %v7193
        %s7227 = scalar_lea.vmem %s12, 3
        %v7228 = vld [vmem:[%s7227] sm:$0x1]
        %v7230 = vlaneseq
        %v7231 = vshrl.u32 %v7230, 7
        %v7232 = vsub.s32 0, %v7231
        %v7233 = vrot.slane %v7228, %v7232
        %v7235 = vadd.f32 %v7195, %v7233
        %v7236 = vadd.f32 %v7196, %v7233
        %v7237 = vadd.f32 %v7197, %v7233
        %v7238 = vadd.f32 %v7198, %v7233
        %v7239 = vadd.f32 %v7199, %v7233
        %v7240 = vadd.f32 %v7200, %v7233
        %v7241 = vadd.f32 %v7201, %v7233
        %v7242 = vadd.f32 %v7202, %v7233
        %v7243 = vadd.f32 %v7203, %v7233
        %v7244 = vadd.f32 %v7204, %v7233
        %v7245 = vadd.f32 %v7205, %v7233
        %v7246 = vadd.f32 %v7206, %v7233
        %v7247 = vadd.f32 %v7207, %v7233
        %v7248 = vadd.f32 %v7208, %v7233
        %v7249 = vadd.f32 %v7209, %v7233
        %v7250 = vadd.f32 %v7210, %v7233
        %v7251 = vadd.f32 %v7211, %v7233
        %v7252 = vadd.f32 %v7212, %v7233
        %v7253 = vadd.f32 %v7213, %v7233
        %v7254 = vadd.f32 %v7214, %v7233
        %v7255 = vadd.f32 %v7215, %v7233
        %v7256 = vadd.f32 %v7216, %v7233
        %v7257 = vadd.f32 %v7217, %v7233
        %v7258 = vadd.f32 %v7218, %v7233
        %v7259 = vadd.f32 %v7219, %v7233
        %v7260 = vadd.f32 %v7220, %v7233
        %v7261 = vadd.f32 %v7221, %v7233
        %v7262 = vadd.f32 %v7222, %v7233
        %v7263 = vadd.f32 %v7223, %v7233
        %v7264 = vadd.f32 %v7224, %v7233
        %v7265 = vadd.f32 %v7225, %v7233
        %v7266 = vadd.f32 %v7226, %v7233
        %v7267 = vmax.f32 %v7235, 0.0
        %v7268 = vmax.f32 %v7236, 0.0
        %v7269 = vmax.f32 %v7237, 0.0
        %v7270 = vmax.f32 %v7238, 0.0
        %v7271 = vmax.f32 %v7239, 0.0
        %v7272 = vmax.f32 %v7240, 0.0
        %v7273 = vmax.f32 %v7241, 0.0
        %v7274 = vmax.f32 %v7242, 0.0
        %v7275 = vmax.f32 %v7243, 0.0
        %v7276 = vmax.f32 %v7244, 0.0
        %v7277 = vmax.f32 %v7245, 0.0
        %v7278 = vmax.f32 %v7246, 0.0
        %v7279 = vmax.f32 %v7247, 0.0
        %v7280 = vmax.f32 %v7248, 0.0
        %v7281 = vmax.f32 %v7249, 0.0
        %v7282 = vmax.f32 %v7250, 0.0
        %v7283 = vmax.f32 %v7251, 0.0
        %v7284 = vmax.f32 %v7252, 0.0
        %v7285 = vmax.f32 %v7253, 0.0
        %v7286 = vmax.f32 %v7254, 0.0
        %v7287 = vmax.f32 %v7255, 0.0
        %v7288 = vmax.f32 %v7256, 0.0
        %v7289 = vmax.f32 %v7257, 0.0
        %v7290 = vmax.f32 %v7258, 0.0
        %v7291 = vmax.f32 %v7259, 0.0
        %v7292 = vmax.f32 %v7260, 0.0
        %v7293 = vmax.f32 %v7261, 0.0
        %v7294 = vmax.f32 %v7262, 0.0
        %v7295 = vmax.f32 %v7263, 0.0
        %v7296 = vmax.f32 %v7264, 0.0
        %v7297 = vmax.f32 %v7265, 0.0
        %v7298 = vmax.f32 %v7266, 0.0
        %v7299 = vadd.f32 %v5893, %v7267
        %v7300 = vadd.f32 %v5894, %v7268
        %v7301 = vadd.f32 %v5895, %v7269
        %v7302 = vadd.f32 %v5896, %v7270
        %v7303 = vadd.f32 %v5897, %v7271
        %v7304 = vadd.f32 %v5898, %v7272
        %v7305 = vadd.f32 %v5899, %v7273
        %v7306 = vadd.f32 %v5900, %v7274
        %v7307 = vadd.f32 %v5901, %v7275
        %v7308 = vadd.f32 %v5902, %v7276
        %v7309 = vadd.f32 %v5903, %v7277
        %v7310 = vadd.f32 %v5904, %v7278
        %v7311 = vadd.f32 %v5905, %v7279
        %v7312 = vadd.f32 %v5906, %v7280
        %v7313 = vadd.f32 %v5907, %v7281
        %v7314 = vadd.f32 %v5908, %v7282
        %v7315 = vadd.f32 %v5909, %v7283
        %v7316 = vadd.f32 %v5910, %v7284
        %v7317 = vadd.f32 %v5911, %v7285
        %v7318 = vadd.f32 %v5912, %v7286
        %v7319 = vadd.f32 %v5913, %v7287
        %v7320 = vadd.f32 %v5914, %v7288
        %v7321 = vadd.f32 %v5915, %v7289
        %v7322 = vadd.f32 %v5916, %v7290
        %v7323 = vadd.f32 %v5917, %v7291
        %v7324 = vadd.f32 %v5918, %v7292
        %v7325 = vadd.f32 %v5919, %v7293
        %v7326 = vadd.f32 %v5920, %v7294
        %v7327 = vadd.f32 %v5921, %v7295
        %v7328 = vadd.f32 %v5922, %v7296
        %v7329 = vadd.f32 %v5923, %v7297
        %v7330 = vadd.f32 %v5924, %v7298
        %v7331 = vpack.c.bf16 %v7300, %v7299
        %v7332 = vpack.c.bf16 %v7302, %v7301
        %v7333 = vpack.c.bf16 %v7304, %v7303
        %v7334 = vpack.c.bf16 %v7306, %v7305
        %v7335 = vpack.c.bf16 %v7308, %v7307
        %v7336 = vpack.c.bf16 %v7310, %v7309
        %v7337 = vpack.c.bf16 %v7312, %v7311
        %v7338 = vpack.c.bf16 %v7314, %v7313
        %v7339 = vpack.c.bf16 %v7316, %v7315
        %v7340 = vpack.c.bf16 %v7318, %v7317
        %v7341 = vpack.c.bf16 %v7320, %v7319
        %v7342 = vpack.c.bf16 %v7322, %v7321
        %v7343 = vpack.c.bf16 %v7324, %v7323
        %v7344 = vpack.c.bf16 %v7326, %v7325
        %v7345 = vpack.c.bf16 %v7328, %v7327
        %v7346 = vpack.c.bf16 %v7330, %v7329
        %7347 = vst [vmem:[#allocation2 + $0x18] sm:$0xff] %v7331
        %7348 = vst [vmem:[#allocation2 + $0x38] sm:$0xff] %v7332
        %7349 = vst [vmem:[#allocation2 + $0x58] sm:$0xff] %v7333
        %7350 = vst [vmem:[#allocation2 + $0x78] sm:$0xff] %v7334
        %7351 = vst [vmem:[#allocation2 + $0x98] sm:$0xff] %v7335
        %7352 = vst [vmem:[#allocation2 + $0xb8] sm:$0xff] %v7336
        %7353 = vst [vmem:[#allocation2 + $0xd8] sm:$0xff] %v7337
        %7354 = vst [vmem:[#allocation2 + $0xf8] sm:$0xff] %v7338
        %7355 = vst [vmem:[#allocation2 + $0x118] sm:$0xff] %v7339
        %7356 = vst [vmem:[#allocation2 + $0x138] sm:$0xff] %v7340
        %7357 = vst [vmem:[#allocation2 + $0x158] sm:$0xff] %v7341
        %7358 = vst [vmem:[#allocation2 + $0x178] sm:$0xff] %v7342
        %7359 = vst [vmem:[#allocation2 + $0x198] sm:$0xff] %v7343
        %7360 = vst [vmem:[#allocation2 + $0x1b8] sm:$0xff] %v7344
        %7361 = vst [vmem:[#allocation2 + $0x1d8] sm:$0xff] %v7345
        %7362 = vst [vmem:[#allocation2 + $0x1f8] sm:$0xff] %v7346
        %v7363 = vld [vmem:[#allocation2] sm:$0xff]
        %v7364 = vld [vmem:[#allocation2 + $0x8] sm:$0xff]
        %v7365 = vld [vmem:[#allocation2 + $0x10] sm:$0xff]
        %v7366 = vld [vmem:[#allocation2 + $0x18] sm:$0xff]
        %v7367 = vld [vmem:[#allocation2 + $0x20] sm:$0xff]
        %v7368 = vld [vmem:[#allocation2 + $0x28] sm:$0xff]
        %v7369 = vld [vmem:[#allocation2 + $0x30] sm:$0xff]
        %v7370 = vld [vmem:[#allocation2 + $0x38] sm:$0xff]
        %v7371 = vld [vmem:[#allocation2 + $0x40] sm:$0xff]
        %v7372 = vld [vmem:[#allocation2 + $0x48] sm:$0xff]
        %v7373 = vld [vmem:[#allocation2 + $0x50] sm:$0xff]
        %v7374 = vld [vmem:[#allocation2 + $0x58] sm:$0xff]
        %v7375 = vld [vmem:[#allocation2 + $0x60] sm:$0xff]
        %v7376 = vld [vmem:[#allocation2 + $0x68] sm:$0xff]
        %v7377 = vld [vmem:[#allocation2 + $0x70] sm:$0xff]
        %v7378 = vld [vmem:[#allocation2 + $0x78] sm:$0xff]
        %v7379 = vld [vmem:[#allocation2 + $0x80] sm:$0xff]
        %v7380 = vld [vmem:[#allocation2 + $0x88] sm:$0xff]
        %v7381 = vld [vmem:[#allocation2 + $0x90] sm:$0xff]
        %v7382 = vld [vmem:[#allocation2 + $0x98] sm:$0xff]
        %v7383 = vld [vmem:[#allocation2 + $0xa0] sm:$0xff]
        %v7384 = vld [vmem:[#allocation2 + $0xa8] sm:$0xff]
        %v7385 = vld [vmem:[#allocation2 + $0xb0] sm:$0xff]
        %v7386 = vld [vmem:[#allocation2 + $0xb8] sm:$0xff]
        %v7387 = vld [vmem:[#allocation2 + $0xc0] sm:$0xff]
        %v7388 = vld [vmem:[#allocation2 + $0xc8] sm:$0xff]
        %v7389 = vld [vmem:[#allocation2 + $0xd0] sm:$0xff]
        %v7390 = vld [vmem:[#allocation2 + $0xd8] sm:$0xff]
        %v7391 = vld [vmem:[#allocation2 + $0xe0] sm:$0xff]
        %v7392 = vld [vmem:[#allocation2 + $0xe8] sm:$0xff]
        %v7393 = vld [vmem:[#allocation2 + $0xf0] sm:$0xff]
        %v7394 = vld [vmem:[#allocation2 + $0xf8] sm:$0xff]
        %v7395 = vld [vmem:[#allocation2 + $0x100] sm:$0xff]
        %v7396 = vld [vmem:[#allocation2 + $0x108] sm:$0xff]
        %v7397 = vld [vmem:[#allocation2 + $0x110] sm:$0xff]
        %v7398 = vld [vmem:[#allocation2 + $0x118] sm:$0xff]
        %v7399 = vld [vmem:[#allocation2 + $0x120] sm:$0xff]
        %v7400 = vld [vmem:[#allocation2 + $0x128] sm:$0xff]
        %v7401 = vld [vmem:[#allocation2 + $0x130] sm:$0xff]
        %v7402 = vld [vmem:[#allocation2 + $0x138] sm:$0xff]
        %v7403 = vld [vmem:[#allocation2 + $0x140] sm:$0xff]
        %v7404 = vld [vmem:[#allocation2 + $0x148] sm:$0xff]
        %v7405 = vld [vmem:[#allocation2 + $0x150] sm:$0xff]
        %v7406 = vld [vmem:[#allocation2 + $0x158] sm:$0xff]
        %v7407 = vld [vmem:[#allocation2 + $0x160] sm:$0xff]
        %v7408 = vld [vmem:[#allocation2 + $0x168] sm:$0xff]
        %v7409 = vld [vmem:[#allocation2 + $0x170] sm:$0xff]
        %v7410 = vld [vmem:[#allocation2 + $0x178] sm:$0xff]
        %v7411 = vld [vmem:[#allocation2 + $0x180] sm:$0xff]
        %v7412 = vld [vmem:[#allocation2 + $0x188] sm:$0xff]
        %v7413 = vld [vmem:[#allocation2 + $0x190] sm:$0xff]
        %v7414 = vld [vmem:[#allocation2 + $0x198] sm:$0xff]
        %v7415 = vld [vmem:[#allocation2 + $0x1a0] sm:$0xff]
        %v7416 = vld [vmem:[#allocation2 + $0x1a8] sm:$0xff]
        %v7417 = vld [vmem:[#allocation2 + $0x1b0] sm:$0xff]
        %v7418 = vld [vmem:[#allocation2 + $0x1b8] sm:$0xff]
        %v7419 = vld [vmem:[#allocation2 + $0x1c0] sm:$0xff]
        %v7420 = vld [vmem:[#allocation2 + $0x1c8] sm:$0xff]
        %v7421 = vld [vmem:[#allocation2 + $0x1d0] sm:$0xff]
        %v7422 = vld [vmem:[#allocation2 + $0x1d8] sm:$0xff]
        %v7423 = vld [vmem:[#allocation2 + $0x1e0] sm:$0xff]
        %v7424 = vld [vmem:[#allocation2 + $0x1e8] sm:$0xff]
        %v7425 = vld [vmem:[#allocation2 + $0x1f0] sm:$0xff]
        %v7426 = vld [vmem:[#allocation2 + $0x1f8] sm:$0xff]
        %v7427 = vld [vmem:[#allocation8] sm:$0xff]
        %v7428 = vld [vmem:[#allocation8 + $0x8] sm:$0xff]
        %v7429 = vld [vmem:[#allocation8 + $0x10] sm:$0xff]
        %v7430 = vld [vmem:[#allocation8 + $0x18] sm:$0xff]
        %v7431 = vld [vmem:[#allocation8 + $0x20] sm:$0xff]
        %v7432 = vld [vmem:[#allocation8 + $0x28] sm:$0xff]
        %v7433 = vld [vmem:[#allocation8 + $0x30] sm:$0xff]
        %v7434 = vld [vmem:[#allocation8 + $0x38] sm:$0xff]
        %v7435 = vld [vmem:[#allocation8 + $0x40] sm:$0xff]
        %v7436 = vld [vmem:[#allocation8 + $0x48] sm:$0xff]
        %v7437 = vld [vmem:[#allocation8 + $0x50] sm:$0xff]
        %v7438 = vld [vmem:[#allocation8 + $0x58] sm:$0xff]
        %v7439 = vld [vmem:[#allocation8 + $0x60] sm:$0xff]
        %v7440 = vld [vmem:[#allocation8 + $0x68] sm:$0xff]
        %v7441 = vld [vmem:[#allocation8 + $0x70] sm:$0xff]
        %v7442 = vld [vmem:[#allocation8 + $0x78] sm:$0xff]
        %v7443 = vld [vmem:[#allocation8 + $0x80] sm:$0xff]
        %v7444 = vld [vmem:[#allocation8 + $0x88] sm:$0xff]
        %v7445 = vld [vmem:[#allocation8 + $0x90] sm:$0xff]
        %v7446 = vld [vmem:[#allocation8 + $0x98] sm:$0xff]
        %v7447 = vld [vmem:[#allocation8 + $0xa0] sm:$0xff]
        %v7448 = vld [vmem:[#allocation8 + $0xa8] sm:$0xff]
        %v7449 = vld [vmem:[#allocation8 + $0xb0] sm:$0xff]
        %v7450 = vld [vmem:[#allocation8 + $0xb8] sm:$0xff]
        %v7451 = vld [vmem:[#allocation8 + $0xc0] sm:$0xff]
        %v7452 = vld [vmem:[#allocation8 + $0xc8] sm:$0xff]
        %v7453 = vld [vmem:[#allocation8 + $0xd0] sm:$0xff]
        %v7454 = vld [vmem:[#allocation8 + $0xd8] sm:$0xff]
        %v7455 = vld [vmem:[#allocation8 + $0xe0] sm:$0xff]
        %v7456 = vld [vmem:[#allocation8 + $0xe8] sm:$0xff]
        %v7457 = vld [vmem:[#allocation8 + $0xf0] sm:$0xff]
        %v7458 = vld [vmem:[#allocation8 + $0xf8] sm:$0xff]
        %v7459 = vld [vmem:[#allocation8 + $0x100] sm:$0xff]
        %v7460 = vld [vmem:[#allocation8 + $0x108] sm:$0xff]
        %v7461 = vld [vmem:[#allocation8 + $0x110] sm:$0xff]
        %v7462 = vld [vmem:[#allocation8 + $0x118] sm:$0xff]
        %v7463 = vld [vmem:[#allocation8 + $0x120] sm:$0xff]
        %v7464 = vld [vmem:[#allocation8 + $0x128] sm:$0xff]
        %v7465 = vld [vmem:[#allocation8 + $0x130] sm:$0xff]
        %v7466 = vld [vmem:[#allocation8 + $0x138] sm:$0xff]
        %v7467 = vld [vmem:[#allocation8 + $0x140] sm:$0xff]
        %v7468 = vld [vmem:[#allocation8 + $0x148] sm:$0xff]
        %v7469 = vld [vmem:[#allocation8 + $0x150] sm:$0xff]
        %v7470 = vld [vmem:[#allocation8 + $0x158] sm:$0xff]
        %v7471 = vld [vmem:[#allocation8 + $0x160] sm:$0xff]
        %v7472 = vld [vmem:[#allocation8 + $0x168] sm:$0xff]
        %v7473 = vld [vmem:[#allocation8 + $0x170] sm:$0xff]
        %v7474 = vld [vmem:[#allocation8 + $0x178] sm:$0xff]
        %v7475 = vld [vmem:[#allocation8 + $0x180] sm:$0xff]
        %v7476 = vld [vmem:[#allocation8 + $0x188] sm:$0xff]
        %v7477 = vld [vmem:[#allocation8 + $0x190] sm:$0xff]
        %v7478 = vld [vmem:[#allocation8 + $0x198] sm:$0xff]
        %v7479 = vld [vmem:[#allocation8 + $0x1a0] sm:$0xff]
        %v7480 = vld [vmem:[#allocation8 + $0x1a8] sm:$0xff]
        %v7481 = vld [vmem:[#allocation8 + $0x1b0] sm:$0xff]
        %v7482 = vld [vmem:[#allocation8 + $0x1b8] sm:$0xff]
        %v7483 = vld [vmem:[#allocation8 + $0x1c0] sm:$0xff]
        %v7484 = vld [vmem:[#allocation8 + $0x1c8] sm:$0xff]
        %v7485 = vld [vmem:[#allocation8 + $0x1d0] sm:$0xff]
        %v7486 = vld [vmem:[#allocation8 + $0x1d8] sm:$0xff]
        %v7487 = vld [vmem:[#allocation8 + $0x1e0] sm:$0xff]
        %v7488 = vld [vmem:[#allocation8 + $0x1e8] sm:$0xff]
        %v7489 = vld [vmem:[#allocation8 + $0x1f0] sm:$0xff]
        %v7490 = vld [vmem:[#allocation8 + $0x1f8] sm:$0xff]
        %v7555 = vunpack.c.l.b16 %v7427
        %v7556 = vunpack.c.h.b16 %v7427
        %v7557 = vunpack.c.l.b16 %v7428
        %v7558 = vunpack.c.h.b16 %v7428
        %v7559 = vunpack.c.l.b16 %v7429
        %v7560 = vunpack.c.h.b16 %v7429
        %v7561 = vunpack.c.l.b16 %v7430
        %v7562 = vunpack.c.h.b16 %v7430
        %v7563 = vunpack.c.l.b16 %v7431
        %v7564 = vunpack.c.h.b16 %v7431
        %v7565 = vunpack.c.l.b16 %v7432
        %v7566 = vunpack.c.h.b16 %v7432
        %v7567 = vunpack.c.l.b16 %v7433
        %v7568 = vunpack.c.h.b16 %v7433
        %v7569 = vunpack.c.l.b16 %v7434
        %v7570 = vunpack.c.h.b16 %v7434
        %v7571 = vunpack.c.l.b16 %v7435
        %v7572 = vunpack.c.h.b16 %v7435
        %v7573 = vunpack.c.l.b16 %v7436
        %v7574 = vunpack.c.h.b16 %v7436
        %v7575 = vunpack.c.l.b16 %v7437
        %v7576 = vunpack.c.h.b16 %v7437
        %v7577 = vunpack.c.l.b16 %v7438
        %v7578 = vunpack.c.h.b16 %v7438
        %v7579 = vunpack.c.l.b16 %v7439
        %v7580 = vunpack.c.h.b16 %v7439
        %v7581 = vunpack.c.l.b16 %v7440
        %v7582 = vunpack.c.h.b16 %v7440
        %v7583 = vunpack.c.l.b16 %v7441
        %v7584 = vunpack.c.h.b16 %v7441
        %v7585 = vunpack.c.l.b16 %v7442
        %v7586 = vunpack.c.h.b16 %v7442
        %v7587 = vunpack.c.l.b16 %v7443
        %v7588 = vunpack.c.h.b16 %v7443
        %v7589 = vunpack.c.l.b16 %v7444
        %v7590 = vunpack.c.h.b16 %v7444
        %v7591 = vunpack.c.l.b16 %v7445
        %v7592 = vunpack.c.h.b16 %v7445
        %v7593 = vunpack.c.l.b16 %v7446
        %v7594 = vunpack.c.h.b16 %v7446
        %v7595 = vunpack.c.l.b16 %v7447
        %v7596 = vunpack.c.h.b16 %v7447
        %v7597 = vunpack.c.l.b16 %v7448
        %v7598 = vunpack.c.h.b16 %v7448
        %v7599 = vunpack.c.l.b16 %v7449
        %v7600 = vunpack.c.h.b16 %v7449
        %v7601 = vunpack.c.l.b16 %v7450
        %v7602 = vunpack.c.h.b16 %v7450
        %v7603 = vunpack.c.l.b16 %v7451
        %v7604 = vunpack.c.h.b16 %v7451
        %v7605 = vunpack.c.l.b16 %v7452
        %v7606 = vunpack.c.h.b16 %v7452
        %v7607 = vunpack.c.l.b16 %v7453
        %v7608 = vunpack.c.h.b16 %v7453
        %v7609 = vunpack.c.l.b16 %v7454
        %v7610 = vunpack.c.h.b16 %v7454
        %v7611 = vunpack.c.l.b16 %v7455
        %v7612 = vunpack.c.h.b16 %v7455
        %v7613 = vunpack.c.l.b16 %v7456
        %v7614 = vunpack.c.h.b16 %v7456
        %v7615 = vunpack.c.l.b16 %v7457
        %v7616 = vunpack.c.h.b16 %v7457
        %v7617 = vunpack.c.l.b16 %v7458
        %v7618 = vunpack.c.h.b16 %v7458
        %v7619 = vunpack.c.l.b16 %v7459
        %v7620 = vunpack.c.h.b16 %v7459
        %v7621 = vunpack.c.l.b16 %v7460
        %v7622 = vunpack.c.h.b16 %v7460
        %v7623 = vunpack.c.l.b16 %v7461
        %v7624 = vunpack.c.h.b16 %v7461
        %v7625 = vunpack.c.l.b16 %v7462
        %v7626 = vunpack.c.h.b16 %v7462
        %v7627 = vunpack.c.l.b16 %v7463
        %v7628 = vunpack.c.h.b16 %v7463
        %v7629 = vunpack.c.l.b16 %v7464
        %v7630 = vunpack.c.h.b16 %v7464
        %v7631 = vunpack.c.l.b16 %v7465
        %v7632 = vunpack.c.h.b16 %v7465
        %v7633 = vunpack.c.l.b16 %v7466
        %v7634 = vunpack.c.h.b16 %v7466
        %v7635 = vunpack.c.l.b16 %v7467
        %v7636 = vunpack.c.h.b16 %v7467
        %v7637 = vunpack.c.l.b16 %v7468
        %v7638 = vunpack.c.h.b16 %v7468
        %v7639 = vunpack.c.l.b16 %v7469
        %v7640 = vunpack.c.h.b16 %v7469
        %v7641 = vunpack.c.l.b16 %v7470
        %v7642 = vunpack.c.h.b16 %v7470
        %v7643 = vunpack.c.l.b16 %v7471
        %v7644 = vunpack.c.h.b16 %v7471
        %v7645 = vunpack.c.l.b16 %v7472
        %v7646 = vunpack.c.h.b16 %v7472
        %v7647 = vunpack.c.l.b16 %v7473
        %v7648 = vunpack.c.h.b16 %v7473
        %v7649 = vunpack.c.l.b16 %v7474
        %v7650 = vunpack.c.h.b16 %v7474
        %v7651 = vunpack.c.l.b16 %v7475
        %v7652 = vunpack.c.h.b16 %v7475
        %v7653 = vunpack.c.l.b16 %v7476
        %v7654 = vunpack.c.h.b16 %v7476
        %v7655 = vunpack.c.l.b16 %v7477
        %v7656 = vunpack.c.h.b16 %v7477
        %v7657 = vunpack.c.l.b16 %v7478
        %v7658 = vunpack.c.h.b16 %v7478
        %v7659 = vunpack.c.l.b16 %v7479
        %v7660 = vunpack.c.h.b16 %v7479
        %v7661 = vunpack.c.l.b16 %v7480
        %v7662 = vunpack.c.h.b16 %v7480
        %v7663 = vunpack.c.l.b16 %v7481
        %v7664 = vunpack.c.h.b16 %v7481
        %v7665 = vunpack.c.l.b16 %v7482
        %v7666 = vunpack.c.h.b16 %v7482
        %v7667 = vunpack.c.l.b16 %v7483
        %v7668 = vunpack.c.h.b16 %v7483
        %v7669 = vunpack.c.l.b16 %v7484
        %v7670 = vunpack.c.h.b16 %v7484
        %v7671 = vunpack.c.l.b16 %v7485
        %v7672 = vunpack.c.h.b16 %v7485
        %v7673 = vunpack.c.l.b16 %v7486
        %v7674 = vunpack.c.h.b16 %v7486
        %v7675 = vunpack.c.l.b16 %v7487
        %v7676 = vunpack.c.h.b16 %v7487
        %v7677 = vunpack.c.l.b16 %v7488
        %v7678 = vunpack.c.h.b16 %v7488
        %v7679 = vunpack.c.l.b16 %v7489
        %v7680 = vunpack.c.h.b16 %v7489
        %v7681 = vunpack.c.l.b16 %v7490
        %v7682 = vunpack.c.h.b16 %v7490
        %v7683 = vpack.c.b16 %v7557, %v7555
        %v7684 = vpack.c.b16 %v7558, %v7556
        %v7685 = vpack.c.b16 %v7561, %v7559
        %v7686 = vpack.c.b16 %v7562, %v7560
        %v7687 = vpack.c.b16 %v7565, %v7563
        %v7688 = vpack.c.b16 %v7566, %v7564
        %v7689 = vpack.c.b16 %v7569, %v7567
        %v7690 = vpack.c.b16 %v7570, %v7568
        %v7691 = vpack.c.b16 %v7573, %v7571
        %v7692 = vpack.c.b16 %v7574, %v7572
        %v7693 = vpack.c.b16 %v7577, %v7575
        %v7694 = vpack.c.b16 %v7578, %v7576
        %v7695 = vpack.c.b16 %v7581, %v7579
        %v7696 = vpack.c.b16 %v7582, %v7580
        %v7697 = vpack.c.b16 %v7585, %v7583
        %v7698 = vpack.c.b16 %v7586, %v7584
        %v7699 = vpack.c.b16 %v7589, %v7587
        %v7700 = vpack.c.b16 %v7590, %v7588
        %v7701 = vpack.c.b16 %v7593, %v7591
        %v7702 = vpack.c.b16 %v7594, %v7592
        %v7703 = vpack.c.b16 %v7597, %v7595
        %v7704 = vpack.c.b16 %v7598, %v7596
        %v7705 = vpack.c.b16 %v7601, %v7599
        %v7706 = vpack.c.b16 %v7602, %v7600
        %v7707 = vpack.c.b16 %v7605, %v7603
        %v7708 = vpack.c.b16 %v7606, %v7604
        %v7709 = vpack.c.b16 %v7609, %v7607
        %v7710 = vpack.c.b16 %v7610, %v7608
        %v7711 = vpack.c.b16 %v7613, %v7611
        %v7712 = vpack.c.b16 %v7614, %v7612
        %v7713 = vpack.c.b16 %v7617, %v7615
        %v7714 = vpack.c.b16 %v7618, %v7616
        %v7715 = vpack.c.b16 %v7621, %v7619
        %v7716 = vpack.c.b16 %v7622, %v7620
        %v7717 = vpack.c.b16 %v7625, %v7623
        %v7718 = vpack.c.b16 %v7626, %v7624
        %v7719 = vpack.c.b16 %v7629, %v7627
        %v7720 = vpack.c.b16 %v7630, %v7628
        %v7721 = vpack.c.b16 %v7633, %v7631
        %v7722 = vpack.c.b16 %v7634, %v7632
        %v7723 = vpack.c.b16 %v7637, %v7635
        %v7724 = vpack.c.b16 %v7638, %v7636
        %v7725 = vpack.c.b16 %v7641, %v7639
        %v7726 = vpack.c.b16 %v7642, %v7640
        %v7727 = vpack.c.b16 %v7645, %v7643
        %v7728 = vpack.c.b16 %v7646, %v7644
        %v7729 = vpack.c.b16 %v7649, %v7647
        %v7730 = vpack.c.b16 %v7650, %v7648
        %v7731 = vpack.c.b16 %v7653, %v7651
        %v7732 = vpack.c.b16 %v7654, %v7652
        %v7733 = vpack.c.b16 %v7657, %v7655
        %v7734 = vpack.c.b16 %v7658, %v7656
        %v7735 = vpack.c.b16 %v7661, %v7659
        %v7736 = vpack.c.b16 %v7662, %v7660
        %v7737 = vpack.c.b16 %v7665, %v7663
        %v7738 = vpack.c.b16 %v7666, %v7664
        %v7739 = vpack.c.b16 %v7669, %v7667
        %v7740 = vpack.c.b16 %v7670, %v7668
        %v7741 = vpack.c.b16 %v7673, %v7671
        %v7742 = vpack.c.b16 %v7674, %v7672
        %v7743 = vpack.c.b16 %v7677, %v7675
        %v7744 = vpack.c.b16 %v7678, %v7676
        %v7745 = vpack.c.b16 %v7681, %v7679
        %v7746 = vpack.c.b16 %v7682, %v7680
        %7811 = vmatprep.subr.bf16.mxu0 %v7684
        %7812 = vmatpush1.bf16.msra.mxu0 %v7683
        %7813 = vmatprep.subr.bf16.mxu0 %v7686
        %7814 = vmatpush1.bf16.msra.mxu0 %v7685
        %7815 = vmatprep.subr.bf16.mxu0 %v7688
        %7816 = vmatpush1.bf16.msra.mxu0 %v7687
        %7817 = vmatprep.subr.bf16.mxu0 %v7690
        %7818 = vmatpush1.bf16.msra.mxu0 %v7689
        %7819 = vmatprep.subr.bf16.mxu0 %v7692
        %7820 = vmatpush1.bf16.msra.mxu0 %v7691
        %7821 = vmatprep.subr.bf16.mxu0 %v7694
        %7822 = vmatpush1.bf16.msra.mxu0 %v7693
        %7823 = vmatprep.subr.bf16.mxu0 %v7696
        %7824 = vmatpush1.bf16.msra.mxu0 %v7695
        %7825 = vmatprep.subr.bf16.mxu0 %v7698
        %7826 = vmatpush1.bf16.msra.mxu0 %v7697
        %7827 = vmatprep.subr.bf16.mxu0 %v7700
        %7828 = vmatpush1.bf16.msra.mxu0 %v7699
        %7829 = vmatprep.subr.bf16.mxu0 %v7702
        %7830 = vmatpush1.bf16.msra.mxu0 %v7701
        %7831 = vmatprep.subr.bf16.mxu0 %v7704
        %7832 = vmatpush1.bf16.msra.mxu0 %v7703
        %7833 = vmatprep.subr.bf16.mxu0 %v7706
        %7834 = vmatpush1.bf16.msra.mxu0 %v7705
        %7835 = vmatprep.subr.bf16.mxu0 %v7708
        %7836 = vmatpush1.bf16.msra.mxu0 %v7707
        %7837 = vmatprep.subr.bf16.mxu0 %v7710
        %7838 = vmatpush1.bf16.msra.mxu0 %v7709
        %7839 = vmatprep.subr.bf16.mxu0 %v7712
        %7840 = vmatpush1.bf16.msra.mxu0 %v7711
        %7841 = vmatprep.subr.bf16.mxu0 %v7714
        %7842 = vmatpush1.bf16.msra.mxu0 %v7713
        %7843 = vmatprep.mubr.bf16.mxu0 %v7364
        %7844 = vmatmul.mubr.bf16.gmra.mrb[0].mxu0 %v7363
        %v7845 = vpop.f32.mrb[0].mxu0
        %v7846 = vadd.f32 0.0, %v7845
        %v7847 = vpop.f32.mrb[0].mxu0
        %v7848 = vadd.f32 0.0, %v7847
        %v7849 = vpop.f32.mrb[0].mxu0
        %v7850 = vadd.f32 0.0, %v7849
        %v7851 = vpop.f32.mrb[0].mxu0
        %v7852 = vadd.f32 0.0, %v7851
        %7853 = vmatprep.mubr.bf16.mxu0 %v7368
        %7854 = vmatmul.mubr.bf16.gmra.mrb[0].mxu0 %v7367
        %v7855 = vpop.f32.mrb[0].mxu0
        %v7856 = vadd.f32 0.0, %v7855
        %v7857 = vpop.f32.mrb[0].mxu0
        %v7858 = vadd.f32 0.0, %v7857
        %v7859 = vpop.f32.mrb[0].mxu0
        %v7860 = vadd.f32 0.0, %v7859
        %v7861 = vpop.f32.mrb[0].mxu0
        %v7862 = vadd.f32 0.0, %v7861
        %7863 = vmatprep.mubr.bf16.mxu0 %v7372
        %7864 = vmatmul.mubr.bf16.gmra.mrb[0].mxu0 %v7371
        %v7865 = vpop.f32.mrb[0].mxu0
        %v7866 = vadd.f32 0.0, %v7865
        %v7867 = vpop.f32.mrb[0].mxu0
        %v7868 = vadd.f32 0.0, %v7867
        %v7869 = vpop.f32.mrb[0].mxu0
        %v7870 = vadd.f32 0.0, %v7869
        %v7871 = vpop.f32.mrb[0].mxu0
        %v7872 = vadd.f32 0.0, %v7871
        %7873 = vmatprep.mubr.bf16.mxu0 %v7376
        %7874 = vmatmul.mubr.bf16.gmra.mrb[0].mxu0 %v7375
        %v7875 = vpop.f32.mrb[0].mxu0
        %v7876 = vadd.f32 0.0, %v7875
        %v7877 = vpop.f32.mrb[0].mxu0
        %v7878 = vadd.f32 0.0, %v7877
        %v7879 = vpop.f32.mrb[0].mxu0
        %v7880 = vadd.f32 0.0, %v7879
        %v7881 = vpop.f32.mrb[0].mxu0
        %v7882 = vadd.f32 0.0, %v7881
        %7883 = vmatprep.mubr.bf16.mxu0 %v7380
        %7884 = vmatmul.mubr.bf16.gmra.mrb[0].mxu0 %v7379
        %v7885 = vpop.f32.mrb[0].mxu0
        %v7886 = vadd.f32 0.0, %v7885
        %v7887 = vpop.f32.mrb[0].mxu0
        %v7888 = vadd.f32 0.0, %v7887
        %v7889 = vpop.f32.mrb[0].mxu0
        %v7890 = vadd.f32 0.0, %v7889
        %v7891 = vpop.f32.mrb[0].mxu0
        %v7892 = vadd.f32 0.0, %v7891
        %7893 = vmatprep.mubr.bf16.mxu0 %v7384
        %7894 = vmatmul.mubr.bf16.gmra.mrb[0].mxu0 %v7383
        %v7895 = vpop.f32.mrb[0].mxu0
        %v7896 = vadd.f32 0.0, %v7895
        %v7897 = vpop.f32.mrb[0].mxu0
        %v7898 = vadd.f32 0.0, %v7897
        %v7899 = vpop.f32.mrb[0].mxu0
        %v7900 = vadd.f32 0.0, %v7899
        %v7901 = vpop.f32.mrb[0].mxu0
        %v7902 = vadd.f32 0.0, %v7901
        %7903 = vmatprep.mubr.bf16.mxu0 %v7388
        %7904 = vmatmul.mubr.bf16.gmra.mrb[0].mxu0 %v7387
        %v7905 = vpop.f32.mrb[0].mxu0
        %v7906 = vadd.f32 0.0, %v7905
        %v7907 = vpop.f32.mrb[0].mxu0
        %v7908 = vadd.f32 0.0, %v7907
        %v7909 = vpop.f32.mrb[0].mxu0
        %v7910 = vadd.f32 0.0, %v7909
        %v7911 = vpop.f32.mrb[0].mxu0
        %v7912 = vadd.f32 0.0, %v7911
        %7913 = vmatprep.mubr.bf16.mxu0 %v7392
        %7914 = vmatmul.mubr.bf16.gmra.mrb[0].mxu0 %v7391
        %v7915 = vpop.f32.mrb[0].mxu0
        %v7916 = vadd.f32 0.0, %v7915
        %v7917 = vpop.f32.mrb[0].mxu0
        %v7918 = vadd.f32 0.0, %v7917
        %v7919 = vpop.f32.mrb[0].mxu0
        %v7920 = vadd.f32 0.0, %v7919
        %v7921 = vpop.f32.mrb[0].mxu0
        %v7922 = vadd.f32 0.0, %v7921
        %7923 = vmatprep.mubr.bf16.mxu0 %v7396
        %7924 = vmatmul.mubr.bf16.gmra.mrb[0].mxu0 %v7395
        %v7925 = vpop.f32.mrb[0].mxu0
        %v7926 = vadd.f32 0.0, %v7925
        %v7927 = vpop.f32.mrb[0].mxu0
        %v7928 = vadd.f32 0.0, %v7927
        %v7929 = vpop.f32.mrb[0].mxu0
        %v7930 = vadd.f32 0.0, %v7929
        %v7931 = vpop.f32.mrb[0].mxu0
        %v7932 = vadd.f32 0.0, %v7931
        %7933 = vmatprep.mubr.bf16.mxu0 %v7400
        %7934 = vmatmul.mubr.bf16.gmra.mrb[0].mxu0 %v7399
        %v7935 = vpop.f32.mrb[0].mxu0
        %v7936 = vadd.f32 0.0, %v7935
        %v7937 = vpop.f32.mrb[0].mxu0
        %v7938 = vadd.f32 0.0, %v7937
        %v7939 = vpop.f32.mrb[0].mxu0
        %v7940 = vadd.f32 0.0, %v7939
        %v7941 = vpop.f32.mrb[0].mxu0
        %v7942 = vadd.f32 0.0, %v7941
        %7943 = vmatprep.mubr.bf16.mxu0 %v7404
        %7944 = vmatmul.mubr.bf16.gmra.mrb[0].mxu0 %v7403
        %v7945 = vpop.f32.mrb[0].mxu0
        %v7946 = vadd.f32 0.0, %v7945
        %v7947 = vpop.f32.mrb[0].mxu0
        %v7948 = vadd.f32 0.0, %v7947
        %v7949 = vpop.f32.mrb[0].mxu0
        %v7950 = vadd.f32 0.0, %v7949
        %v7951 = vpop.f32.mrb[0].mxu0
        %v7952 = vadd.f32 0.0, %v7951
        %7953 = vmatprep.mubr.bf16.mxu0 %v7408
        %7954 = vmatmul.mubr.bf16.gmra.mrb[0].mxu0 %v7407
        %v7955 = vpop.f32.mrb[0].mxu0
        %v7956 = vadd.f32 0.0, %v7955
        %v7957 = vpop.f32.mrb[0].mxu0
        %v7958 = vadd.f32 0.0, %v7957
        %v7959 = vpop.f32.mrb[0].mxu0
        %v7960 = vadd.f32 0.0, %v7959
        %v7961 = vpop.f32.mrb[0].mxu0
        %v7962 = vadd.f32 0.0, %v7961
        %7963 = vmatprep.mubr.bf16.mxu0 %v7412
        %7964 = vmatmul.mubr.bf16.gmra.mrb[0].mxu0 %v7411
        %v7965 = vpop.f32.mrb[0].mxu0
        %v7966 = vadd.f32 0.0, %v7965
        %v7967 = vpop.f32.mrb[0].mxu0
        %v7968 = vadd.f32 0.0, %v7967
        %v7969 = vpop.f32.mrb[0].mxu0
        %v7970 = vadd.f32 0.0, %v7969
        %v7971 = vpop.f32.mrb[0].mxu0
        %v7972 = vadd.f32 0.0, %v7971
        %7973 = vmatprep.mubr.bf16.mxu0 %v7416
        %7974 = vmatmul.mubr.bf16.gmra.mrb[0].mxu0 %v7415
        %v7975 = vpop.f32.mrb[0].mxu0
        %v7976 = vadd.f32 0.0, %v7975
        %v7977 = vpop.f32.mrb[0].mxu0
        %v7978 = vadd.f32 0.0, %v7977
        %v7979 = vpop.f32.mrb[0].mxu0
        %v7980 = vadd.f32 0.0, %v7979
        %v7981 = vpop.f32.mrb[0].mxu0
        %v7982 = vadd.f32 0.0, %v7981
        %7983 = vmatprep.mubr.bf16.mxu0 %v7420
        %7984 = vmatmul.mubr.bf16.gmra.mrb[0].mxu0 %v7419
        %v7985 = vpop.f32.mrb[0].mxu0
        %v7986 = vadd.f32 0.0, %v7985
        %v7987 = vpop.f32.mrb[0].mxu0
        %v7988 = vadd.f32 0.0, %v7987
        %v7989 = vpop.f32.mrb[0].mxu0
        %v7990 = vadd.f32 0.0, %v7989
        %v7991 = vpop.f32.mrb[0].mxu0
        %v7992 = vadd.f32 0.0, %v7991
        %7993 = vmatprep.mubr.bf16.mxu0 %v7424
        %7994 = vmatmul.mubr.bf16.gmra.mrb[0].mxu0 %v7423
        %v7995 = vpop.f32.mrb[0].mxu0
        %v7996 = vadd.f32 0.0, %v7995
        %v7997 = vpop.f32.mrb[0].mxu0
        %v7998 = vadd.f32 0.0, %v7997
        %v7999 = vpop.f32.mrb[0].mxu0
        %v8000 = vadd.f32 0.0, %v7999
        %v8001 = vpop.f32.mrb[0].mxu0
        %v8002 = vadd.f32 0.0, %v8001
        %8003 = vdwg.mxu0
        %8004 = vmatprep.subr.bf16.mxu0 %v7716
        %8005 = vmatpush1.bf16.msra.mxu0 %v7715
        %8006 = vmatprep.subr.bf16.mxu0 %v7718
        %8007 = vmatpush1.bf16.msra.mxu0 %v7717
        %8008 = vmatprep.subr.bf16.mxu0 %v7720
        %8009 = vmatpush1.bf16.msra.mxu0 %v7719
        %8010 = vmatprep.subr.bf16.mxu0 %v7722
        %8011 = vmatpush1.bf16.msra.mxu0 %v7721
        %8012 = vmatprep.subr.bf16.mxu0 %v7724
        %8013 = vmatpush1.bf16.msra.mxu0 %v7723
        %8014 = vmatprep.subr.bf16.mxu0 %v7726
        %8015 = vmatpush1.bf16.msra.mxu0 %v7725
        %8016 = vmatprep.subr.bf16.mxu0 %v7728
        %8017 = vmatpush1.bf16.msra.mxu0 %v7727
        %8018 = vmatprep.subr.bf16.mxu0 %v7730
        %8019 = vmatpush1.bf16.msra.mxu0 %v7729
        %8020 = vmatprep.subr.bf16.mxu0 %v7732
        %8021 = vmatpush1.bf16.msra.mxu0 %v7731
        %8022 = vmatprep.subr.bf16.mxu0 %v7734
        %8023 = vmatpush1.bf16.msra.mxu0 %v7733
        %8024 = vmatprep.subr.bf16.mxu0 %v7736
        %8025 = vmatpush1.bf16.msra.mxu0 %v7735
        %8026 = vmatprep.subr.bf16.mxu0 %v7738
        %8027 = vmatpush1.bf16.msra.mxu0 %v7737
        %8028 = vmatprep.subr.bf16.mxu0 %v7740
        %8029 = vmatpush1.bf16.msra.mxu0 %v7739
        %8030 = vmatprep.subr.bf16.mxu0 %v7742
        %8031 = vmatpush1.bf16.msra.mxu0 %v7741
        %8032 = vmatprep.subr.bf16.mxu0 %v7744
        %8033 = vmatpush1.bf16.msra.mxu0 %v7743
        %8034 = vmatprep.subr.bf16.mxu0 %v7746
        %8035 = vmatpush1.bf16.msra.mxu0 %v7745
        %8036 = vmatprep.mubr.bf16.mxu0 %v7366
        %8037 = vmatmul.mubr.bf16.gmra.mrb[0].mxu0 %v7365
        %v8038 = vpop.f32.mrb[0].mxu0
        %v8039 = vadd.f32 %v7846, %v8038
        %v8040 = vpop.f32.mrb[0].mxu0
        %v8041 = vadd.f32 %v7848, %v8040
        %v8042 = vpop.f32.mrb[0].mxu0
        %v8043 = vadd.f32 %v7850, %v8042
        %v8044 = vpop.f32.mrb[0].mxu0
        %v8045 = vadd.f32 %v7852, %v8044
        %8046 = vmatprep.mubr.bf16.mxu0 %v7370
        %8047 = vmatmul.mubr.bf16.gmra.mrb[0].mxu0 %v7369
        %v8048 = vpop.f32.mrb[0].mxu0
        %v8049 = vadd.f32 %v7856, %v8048
        %v8050 = vpop.f32.mrb[0].mxu0
        %v8051 = vadd.f32 %v7858, %v8050
        %v8052 = vpop.f32.mrb[0].mxu0
        %v8053 = vadd.f32 %v7860, %v8052
        %v8054 = vpop.f32.mrb[0].mxu0
        %v8055 = vadd.f32 %v7862, %v8054
        %8056 = vmatprep.mubr.bf16.mxu0 %v7374
        %8057 = vmatmul.mubr.bf16.gmra.mrb[0].mxu0 %v7373
        %v8058 = vpop.f32.mrb[0].mxu0
        %v8059 = vadd.f32 %v7866, %v8058
        %v8060 = vpop.f32.mrb[0].mxu0
        %v8061 = vadd.f32 %v7868, %v8060
        %v8062 = vpop.f32.mrb[0].mxu0
        %v8063 = vadd.f32 %v7870, %v8062
        %v8064 = vpop.f32.mrb[0].mxu0
        %v8065 = vadd.f32 %v7872, %v8064
        %8066 = vmatprep.mubr.bf16.mxu0 %v7378
        %8067 = vmatmul.mubr.bf16.gmra.mrb[0].mxu0 %v7377
        %v8068 = vpop.f32.mrb[0].mxu0
        %v8069 = vadd.f32 %v7876, %v8068
        %v8070 = vpop.f32.mrb[0].mxu0
        %v8071 = vadd.f32 %v7878, %v8070
        %v8072 = vpop.f32.mrb[0].mxu0
        %v8073 = vadd.f32 %v7880, %v8072
        %v8074 = vpop.f32.mrb[0].mxu0
        %v8075 = vadd.f32 %v7882, %v8074
        %8076 = vmatprep.mubr.bf16.mxu0 %v7382
        %8077 = vmatmul.mubr.bf16.gmra.mrb[0].mxu0 %v7381
        %v8078 = vpop.f32.mrb[0].mxu0
        %v8079 = vadd.f32 %v7886, %v8078
        %v8080 = vpop.f32.mrb[0].mxu0
        %v8081 = vadd.f32 %v7888, %v8080
        %v8082 = vpop.f32.mrb[0].mxu0
        %v8083 = vadd.f32 %v7890, %v8082
        %v8084 = vpop.f32.mrb[0].mxu0
        %v8085 = vadd.f32 %v7892, %v8084
        %8086 = vmatprep.mubr.bf16.mxu0 %v7386
        %8087 = vmatmul.mubr.bf16.gmra.mrb[0].mxu0 %v7385
        %v8088 = vpop.f32.mrb[0].mxu0
        %v8089 = vadd.f32 %v7896, %v8088
        %v8090 = vpop.f32.mrb[0].mxu0
        %v8091 = vadd.f32 %v7898, %v8090
        %v8092 = vpop.f32.mrb[0].mxu0
        %v8093 = vadd.f32 %v7900, %v8092
        %v8094 = vpop.f32.mrb[0].mxu0
        %v8095 = vadd.f32 %v7902, %v8094
        %8096 = vmatprep.mubr.bf16.mxu0 %v7390
        %8097 = vmatmul.mubr.bf16.gmra.mrb[0].mxu0 %v7389
        %v8098 = vpop.f32.mrb[0].mxu0
        %v8099 = vadd.f32 %v7906, %v8098
        %v8100 = vpop.f32.mrb[0].mxu0
        %v8101 = vadd.f32 %v7908, %v8100
        %v8102 = vpop.f32.mrb[0].mxu0
        %v8103 = vadd.f32 %v7910, %v8102
        %v8104 = vpop.f32.mrb[0].mxu0
        %v8105 = vadd.f32 %v7912, %v8104
        %8106 = vmatprep.mubr.bf16.mxu0 %v7394
        %8107 = vmatmul.mubr.bf16.gmra.mrb[0].mxu0 %v7393
        %v8108 = vpop.f32.mrb[0].mxu0
        %v8109 = vadd.f32 %v7916, %v8108
        %v8110 = vpop.f32.mrb[0].mxu0
        %v8111 = vadd.f32 %v7918, %v8110
        %v8112 = vpop.f32.mrb[0].mxu0
        %v8113 = vadd.f32 %v7920, %v8112
        %v8114 = vpop.f32.mrb[0].mxu0
        %v8115 = vadd.f32 %v7922, %v8114
        %8116 = vmatprep.mubr.bf16.mxu0 %v7398
        %8117 = vmatmul.mubr.bf16.gmra.mrb[0].mxu0 %v7397
        %v8118 = vpop.f32.mrb[0].mxu0
        %v8119 = vadd.f32 %v7926, %v8118
        %v8120 = vpop.f32.mrb[0].mxu0
        %v8121 = vadd.f32 %v7928, %v8120
        %v8122 = vpop.f32.mrb[0].mxu0
        %v8123 = vadd.f32 %v7930, %v8122
        %v8124 = vpop.f32.mrb[0].mxu0
        %v8125 = vadd.f32 %v7932, %v8124
        %8126 = vmatprep.mubr.bf16.mxu0 %v7402
        %8127 = vmatmul.mubr.bf16.gmra.mrb[0].mxu0 %v7401
        %v8128 = vpop.f32.mrb[0].mxu0
        %v8129 = vadd.f32 %v7936, %v8128
        %v8130 = vpop.f32.mrb[0].mxu0
        %v8131 = vadd.f32 %v7938, %v8130
        %v8132 = vpop.f32.mrb[0].mxu0
        %v8133 = vadd.f32 %v7940, %v8132
        %v8134 = vpop.f32.mrb[0].mxu0
        %v8135 = vadd.f32 %v7942, %v8134
        %8136 = vmatprep.mubr.bf16.mxu0 %v7406
        %8137 = vmatmul.mubr.bf16.gmra.mrb[0].mxu0 %v7405
        %v8138 = vpop.f32.mrb[0].mxu0
        %v8139 = vadd.f32 %v7946, %v8138
        %v8140 = vpop.f32.mrb[0].mxu0
        %v8141 = vadd.f32 %v7948, %v8140
        %v8142 = vpop.f32.mrb[0].mxu0
        %v8143 = vadd.f32 %v7950, %v8142
        %v8144 = vpop.f32.mrb[0].mxu0
        %v8145 = vadd.f32 %v7952, %v8144
        %8146 = vmatprep.mubr.bf16.mxu0 %v7410
        %8147 = vmatmul.mubr.bf16.gmra.mrb[0].mxu0 %v7409
        %v8148 = vpop.f32.mrb[0].mxu0
        %v8149 = vadd.f32 %v7956, %v8148
        %v8150 = vpop.f32.mrb[0].mxu0
        %v8151 = vadd.f32 %v7958, %v8150
        %v8152 = vpop.f32.mrb[0].mxu0
        %v8153 = vadd.f32 %v7960, %v8152
        %v8154 = vpop.f32.mrb[0].mxu0
        %v8155 = vadd.f32 %v7962, %v8154
        %8156 = vmatprep.mubr.bf16.mxu0 %v7414
        %8157 = vmatmul.mubr.bf16.gmra.mrb[0].mxu0 %v7413
        %v8158 = vpop.f32.mrb[0].mxu0
        %v8159 = vadd.f32 %v7966, %v8158
        %v8160 = vpop.f32.mrb[0].mxu0
        %v8161 = vadd.f32 %v7968, %v8160
        %v8162 = vpop.f32.mrb[0].mxu0
        %v8163 = vadd.f32 %v7970, %v8162
        %v8164 = vpop.f32.mrb[0].mxu0
        %v8165 = vadd.f32 %v7972, %v8164
        %8166 = vmatprep.mubr.bf16.mxu0 %v7418
        %8167 = vmatmul.mubr.bf16.gmra.mrb[0].mxu0 %v7417
        %v8168 = vpop.f32.mrb[0].mxu0
        %v8169 = vadd.f32 %v7976, %v8168
        %v8170 = vpop.f32.mrb[0].mxu0
        %v8171 = vadd.f32 %v7978, %v8170
        %v8172 = vpop.f32.mrb[0].mxu0
        %v8173 = vadd.f32 %v7980, %v8172
        %v8174 = vpop.f32.mrb[0].mxu0
        %v8175 = vadd.f32 %v7982, %v8174
        %8176 = vmatprep.mubr.bf16.mxu0 %v7422
        %8177 = vmatmul.mubr.bf16.gmra.mrb[0].mxu0 %v7421
        %v8178 = vpop.f32.mrb[0].mxu0
        %v8179 = vadd.f32 %v7986, %v8178
        %v8180 = vpop.f32.mrb[0].mxu0
        %v8181 = vadd.f32 %v7988, %v8180
        %v8182 = vpop.f32.mrb[0].mxu0
        %v8183 = vadd.f32 %v7990, %v8182
        %v8184 = vpop.f32.mrb[0].mxu0
        %v8185 = vadd.f32 %v7992, %v8184
        %8186 = vmatprep.mubr.bf16.mxu0 %v7426
        %8187 = vmatmul.mubr.bf16.gmra.mrb[0].mxu0 %v7425
        %v8188 = vpop.f32.mrb[0].mxu0
        %v8189 = vadd.f32 %v7996, %v8188
        %v8190 = vpop.f32.mrb[0].mxu0
        %v8191 = vadd.f32 %v7998, %v8190
        %v8192 = vpop.f32.mrb[0].mxu0
        %v8193 = vadd.f32 %v8000, %v8192
        %v8194 = vpop.f32.mrb[0].mxu0
        %v8195 = vadd.f32 %v8002, %v8194
        %8196 = vdwg.mxu0
        %v8197 = vld [vmem:[%s14] sm:$0x3]
        %v8199 = vlaneseq
        %v8200 = vshrl.u32 %v8199, 7
        %v8201 = vsub.s32 0, %v8200
        %v8202 = vrot.slane %v8197, %v8201
        %v8203 = vlaneseq
        %v8204 = vshrl.u32 %v8203, 7
        %v8205 = vsub.s32 1, %v8204
        %v8206 = vrot.slane %v8197, %v8205
        %v8209 = vmul.f32 %v8039, %v8202
        %v8210 = vmul.f32 %v8041, %v8206
        %v8211 = vmul.f32 %v8043, %v8202
        %v8212 = vmul.f32 %v8045, %v8206
        %v8213 = vmul.f32 %v8049, %v8202
        %v8214 = vmul.f32 %v8051, %v8206
        %v8215 = vmul.f32 %v8053, %v8202
        %v8216 = vmul.f32 %v8055, %v8206
        %v8217 = vmul.f32 %v8059, %v8202
        %v8218 = vmul.f32 %v8061, %v8206
        %v8219 = vmul.f32 %v8063, %v8202
        %v8220 = vmul.f32 %v8065, %v8206
        %v8221 = vmul.f32 %v8069, %v8202
        %v8222 = vmul.f32 %v8071, %v8206
        %v8223 = vmul.f32 %v8073, %v8202
        %v8224 = vmul.f32 %v8075, %v8206
        %v8225 = vmul.f32 %v8079, %v8202
        %v8226 = vmul.f32 %v8081, %v8206
        %v8227 = vmul.f32 %v8083, %v8202
        %v8228 = vmul.f32 %v8085, %v8206
        %v8229 = vmul.f32 %v8089, %v8202
        %v8230 = vmul.f32 %v8091, %v8206
        %v8231 = vmul.f32 %v8093, %v8202
        %v8232 = vmul.f32 %v8095, %v8206
        %v8233 = vmul.f32 %v8099, %v8202
        %v8234 = vmul.f32 %v8101, %v8206
        %v8235 = vmul.f32 %v8103, %v8202
        %v8236 = vmul.f32 %v8105, %v8206
        %v8237 = vmul.f32 %v8109, %v8202
        %v8238 = vmul.f32 %v8111, %v8206
        %v8239 = vmul.f32 %v8113, %v8202
        %v8240 = vmul.f32 %v8115, %v8206
        %v8241 = vmul.f32 %v8119, %v8202
        %v8242 = vmul.f32 %v8121, %v8206
        %v8243 = vmul.f32 %v8123, %v8202
        %v8244 = vmul.f32 %v8125, %v8206
        %v8245 = vmul.f32 %v8129, %v8202
        %v8246 = vmul.f32 %v8131, %v8206
        %v8247 = vmul.f32 %v8133, %v8202
        %v8248 = vmul.f32 %v8135, %v8206
        %v8249 = vmul.f32 %v8139, %v8202
        %v8250 = vmul.f32 %v8141, %v8206
        %v8251 = vmul.f32 %v8143, %v8202
        %v8252 = vmul.f32 %v8145, %v8206
        %v8253 = vmul.f32 %v8149, %v8202
        %v8254 = vmul.f32 %v8151, %v8206
        %v8255 = vmul.f32 %v8153, %v8202
        %v8256 = vmul.f32 %v8155, %v8206
        %v8257 = vmul.f32 %v8159, %v8202
        %v8258 = vmul.f32 %v8161, %v8206
        %v8259 = vmul.f32 %v8163, %v8202
        %v8260 = vmul.f32 %v8165, %v8206
        %v8261 = vmul.f32 %v8169, %v8202
        %v8262 = vmul.f32 %v8171, %v8206
        %v8263 = vmul.f32 %v8173, %v8202
        %v8264 = vmul.f32 %v8175, %v8206
        %v8265 = vmul.f32 %v8179, %v8202
        %v8266 = vmul.f32 %v8181, %v8206
        %v8267 = vmul.f32 %v8183, %v8202
        %v8268 = vmul.f32 %v8185, %v8206
        %v8269 = vmul.f32 %v8189, %v8202
        %v8270 = vmul.f32 %v8191, %v8206
        %v8271 = vmul.f32 %v8193, %v8202
        %v8272 = vmul.f32 %v8195, %v8206
        %v8273 = vld [vmem:[%s15] sm:$0x3]
        %v8275 = vlaneseq
        %v8276 = vshrl.u32 %v8275, 7
        %v8277 = vsub.s32 0, %v8276
        %v8278 = vrot.slane %v8273, %v8277
        %v8279 = vlaneseq
        %v8280 = vshrl.u32 %v8279, 7
        %v8281 = vsub.s32 1, %v8280
        %v8282 = vrot.slane %v8273, %v8281
        %v8285 = vadd.f32 %v8209, %v8278
        %v8286 = vadd.f32 %v8210, %v8282
        %v8287 = vadd.f32 %v8211, %v8278
        %v8288 = vadd.f32 %v8212, %v8282
        %v8289 = vadd.f32 %v8213, %v8278
        %v8290 = vadd.f32 %v8214, %v8282
        %v8291 = vadd.f32 %v8215, %v8278
        %v8292 = vadd.f32 %v8216, %v8282
        %v8293 = vadd.f32 %v8217, %v8278
        %v8294 = vadd.f32 %v8218, %v8282
        %v8295 = vadd.f32 %v8219, %v8278
        %v8296 = vadd.f32 %v8220, %v8282
        %v8297 = vadd.f32 %v8221, %v8278
        %v8298 = vadd.f32 %v8222, %v8282
        %v8299 = vadd.f32 %v8223, %v8278
        %v8300 = vadd.f32 %v8224, %v8282
        %v8301 = vadd.f32 %v8225, %v8278
        %v8302 = vadd.f32 %v8226, %v8282
        %v8303 = vadd.f32 %v8227, %v8278
        %v8304 = vadd.f32 %v8228, %v8282
        %v8305 = vadd.f32 %v8229, %v8278
        %v8306 = vadd.f32 %v8230, %v8282
        %v8307 = vadd.f32 %v8231, %v8278
        %v8308 = vadd.f32 %v8232, %v8282
        %v8309 = vadd.f32 %v8233, %v8278
        %v8310 = vadd.f32 %v8234, %v8282
        %v8311 = vadd.f32 %v8235, %v8278
        %v8312 = vadd.f32 %v8236, %v8282
        %v8313 = vadd.f32 %v8237, %v8278
        %v8314 = vadd.f32 %v8238, %v8282
        %v8315 = vadd.f32 %v8239, %v8278
        %v8316 = vadd.f32 %v8240, %v8282
        %v8317 = vadd.f32 %v8241, %v8278
        %v8318 = vadd.f32 %v8242, %v8282
        %v8319 = vadd.f32 %v8243, %v8278
        %v8320 = vadd.f32 %v8244, %v8282
        %v8321 = vadd.f32 %v8245, %v8278
        %v8322 = vadd.f32 %v8246, %v8282
        %v8323 = vadd.f32 %v8247, %v8278
        %v8324 = vadd.f32 %v8248, %v8282
        %v8325 = vadd.f32 %v8249, %v8278
        %v8326 = vadd.f32 %v8250, %v8282
        %v8327 = vadd.f32 %v8251, %v8278
        %v8328 = vadd.f32 %v8252, %v8282
        %v8329 = vadd.f32 %v8253, %v8278
        %v8330 = vadd.f32 %v8254, %v8282
        %v8331 = vadd.f32 %v8255, %v8278
        %v8332 = vadd.f32 %v8256, %v8282
        %v8333 = vadd.f32 %v8257, %v8278
        %v8334 = vadd.f32 %v8258, %v8282
        %v8335 = vadd.f32 %v8259, %v8278
        %v8336 = vadd.f32 %v8260, %v8282
        %v8337 = vadd.f32 %v8261, %v8278
        %v8338 = vadd.f32 %v8262, %v8282
        %v8339 = vadd.f32 %v8263, %v8278
        %v8340 = vadd.f32 %v8264, %v8282
        %v8341 = vadd.f32 %v8265, %v8278
        %v8342 = vadd.f32 %v8266, %v8282
        %v8343 = vadd.f32 %v8267, %v8278
        %v8344 = vadd.f32 %v8268, %v8282
        %v8345 = vadd.f32 %v8269, %v8278
        %v8346 = vadd.f32 %v8270, %v8282
        %v8347 = vadd.f32 %v8271, %v8278
        %v8348 = vadd.f32 %v8272, %v8282
        %vm8349 = vcmp.ge.f32.partialorder %v8285, 0.0
        %vm8350 = vcmp.ge.f32.partialorder %v8286, 0.0
        %vm8351 = vcmp.ge.f32.partialorder %v8287, 0.0
        %vm8352 = vcmp.ge.f32.partialorder %v8288, 0.0
        %vm8353 = vcmp.ge.f32.partialorder %v8289, 0.0
        %vm8354 = vcmp.ge.f32.partialorder %v8290, 0.0
        %vm8355 = vcmp.ge.f32.partialorder %v8291, 0.0
        %vm8356 = vcmp.ge.f32.partialorder %v8292, 0.0
        %vm8357 = vcmp.ge.f32.partialorder %v8293, 0.0
        %vm8358 = vcmp.ge.f32.partialorder %v8294, 0.0
        %vm8359 = vcmp.ge.f32.partialorder %v8295, 0.0
        %vm8360 = vcmp.ge.f32.partialorder %v8296, 0.0
        %vm8361 = vcmp.ge.f32.partialorder %v8297, 0.0
        %vm8362 = vcmp.ge.f32.partialorder %v8298, 0.0
        %vm8363 = vcmp.ge.f32.partialorder %v8299, 0.0
        %vm8364 = vcmp.ge.f32.partialorder %v8300, 0.0
        %vm8365 = vcmp.ge.f32.partialorder %v8301, 0.0
        %vm8366 = vcmp.ge.f32.partialorder %v8302, 0.0
        %vm8367 = vcmp.ge.f32.partialorder %v8303, 0.0
        %vm8368 = vcmp.ge.f32.partialorder %v8304, 0.0
        %vm8369 = vcmp.ge.f32.partialorder %v8305, 0.0
        %vm8370 = vcmp.ge.f32.partialorder %v8306, 0.0
        %vm8371 = vcmp.ge.f32.partialorder %v8307, 0.0
        %vm8372 = vcmp.ge.f32.partialorder %v8308, 0.0
        %vm8373 = vcmp.ge.f32.partialorder %v8309, 0.0
        %vm8374 = vcmp.ge.f32.partialorder %v8310, 0.0
        %vm8375 = vcmp.ge.f32.partialorder %v8311, 0.0
        %vm8376 = vcmp.ge.f32.partialorder %v8312, 0.0
        %vm8377 = vcmp.ge.f32.partialorder %v8313, 0.0
        %vm8378 = vcmp.ge.f32.partialorder %v8314, 0.0
        %vm8379 = vcmp.ge.f32.partialorder %v8315, 0.0
        %vm8380 = vcmp.ge.f32.partialorder %v8316, 0.0
        %vm8381 = vcmp.ge.f32.partialorder %v8317, 0.0
        %vm8382 = vcmp.ge.f32.partialorder %v8318, 0.0
        %vm8383 = vcmp.ge.f32.partialorder %v8319, 0.0
        %vm8384 = vcmp.ge.f32.partialorder %v8320, 0.0
        %vm8385 = vcmp.ge.f32.partialorder %v8321, 0.0
        %vm8386 = vcmp.ge.f32.partialorder %v8322, 0.0
        %vm8387 = vcmp.ge.f32.partialorder %v8323, 0.0
        %vm8388 = vcmp.ge.f32.partialorder %v8324, 0.0
        %vm8389 = vcmp.ge.f32.partialorder %v8325, 0.0
        %vm8390 = vcmp.ge.f32.partialorder %v8326, 0.0
        %vm8391 = vcmp.ge.f32.partialorder %v8327, 0.0
        %vm8392 = vcmp.ge.f32.partialorder %v8328, 0.0
        %vm8393 = vcmp.ge.f32.partialorder %v8329, 0.0
        %vm8394 = vcmp.ge.f32.partialorder %v8330, 0.0
        %vm8395 = vcmp.ge.f32.partialorder %v8331, 0.0
        %vm8396 = vcmp.ge.f32.partialorder %v8332, 0.0
        %vm8397 = vcmp.ge.f32.partialorder %v8333, 0.0
        %vm8398 = vcmp.ge.f32.partialorder %v8334, 0.0
        %vm8399 = vcmp.ge.f32.partialorder %v8335, 0.0
        %vm8400 = vcmp.ge.f32.partialorder %v8336, 0.0
        %vm8401 = vcmp.ge.f32.partialorder %v8337, 0.0
        %vm8402 = vcmp.ge.f32.partialorder %v8338, 0.0
        %vm8403 = vcmp.ge.f32.partialorder %v8339, 0.0
        %vm8404 = vcmp.ge.f32.partialorder %v8340, 0.0
        %vm8405 = vcmp.ge.f32.partialorder %v8341, 0.0
        %vm8406 = vcmp.ge.f32.partialorder %v8342, 0.0
        %vm8407 = vcmp.ge.f32.partialorder %v8343, 0.0
        %vm8408 = vcmp.ge.f32.partialorder %v8344, 0.0
        %vm8409 = vcmp.ge.f32.partialorder %v8345, 0.0
        %vm8410 = vcmp.ge.f32.partialorder %v8346, 0.0
        %vm8411 = vcmp.ge.f32.partialorder %v8347, 0.0
        %vm8412 = vcmp.ge.f32.partialorder %v8348, 0.0
        %v8413 = vmul.f32 %v8285, 0.2
        %v8414 = vmul.f32 %v8286, 0.2
        %v8415 = vmul.f32 %v8287, 0.2
        %v8416 = vmul.f32 %v8288, 0.2
        %v8417 = vmul.f32 %v8289, 0.2
        %v8418 = vmul.f32 %v8290, 0.2
        %v8419 = vmul.f32 %v8291, 0.2
        %v8420 = vmul.f32 %v8292, 0.2
        %v8421 = vmul.f32 %v8293, 0.2
        %v8422 = vmul.f32 %v8294, 0.2
        %v8423 = vmul.f32 %v8295, 0.2
        %v8424 = vmul.f32 %v8296, 0.2
        %v8425 = vmul.f32 %v8297, 0.2
        %v8426 = vmul.f32 %v8298, 0.2
        %v8427 = vmul.f32 %v8299, 0.2
        %v8428 = vmul.f32 %v8300, 0.2
        %v8429 = vmul.f32 %v8301, 0.2
        %v8430 = vmul.f32 %v8302, 0.2
        %v8431 = vmul.f32 %v8303, 0.2
        %v8432 = vmul.f32 %v8304, 0.2
        %v8433 = vmul.f32 %v8305, 0.2
        %v8434 = vmul.f32 %v8306, 0.2
        %v8435 = vmul.f32 %v8307, 0.2
        %v8436 = vmul.f32 %v8308, 0.2
        %v8437 = vmul.f32 %v8309, 0.2
        %v8438 = vmul.f32 %v8310, 0.2
        %v8439 = vmul.f32 %v8311, 0.2
        %v8440 = vmul.f32 %v8312, 0.2
        %v8441 = vmul.f32 %v8313, 0.2
        %v8442 = vmul.f32 %v8314, 0.2
        %v8443 = vmul.f32 %v8315, 0.2
        %v8444 = vmul.f32 %v8316, 0.2
        %v8445 = vmul.f32 %v8317, 0.2
        %v8446 = vmul.f32 %v8318, 0.2
        %v8447 = vmul.f32 %v8319, 0.2
        %v8448 = vmul.f32 %v8320, 0.2
        %v8449 = vmul.f32 %v8321, 0.2
        %v8450 = vmul.f32 %v8322, 0.2
        %v8451 = vmul.f32 %v8323, 0.2
        %v8452 = vmul.f32 %v8324, 0.2
        %v8453 = vmul.f32 %v8325, 0.2
        %v8454 = vmul.f32 %v8326, 0.2
        %v8455 = vmul.f32 %v8327, 0.2
        %v8456 = vmul.f32 %v8328, 0.2
        %v8457 = vmul.f32 %v8329, 0.2
        %v8458 = vmul.f32 %v8330, 0.2
        %v8459 = vmul.f32 %v8331, 0.2
        %v8460 = vmul.f32 %v8332, 0.2
        %v8461 = vmul.f32 %v8333, 0.2
        %v8462 = vmul.f32 %v8334, 0.2
        %v8463 = vmul.f32 %v8335, 0.2
        %v8464 = vmul.f32 %v8336, 0.2
        %v8465 = vmul.f32 %v8337, 0.2
        %v8466 = vmul.f32 %v8338, 0.2
        %v8467 = vmul.f32 %v8339, 0.2
        %v8468 = vmul.f32 %v8340, 0.2
        %v8469 = vmul.f32 %v8341, 0.2
        %v8470 = vmul.f32 %v8342, 0.2
        %v8471 = vmul.f32 %v8343, 0.2
        %v8472 = vmul.f32 %v8344, 0.2
        %v8473 = vmul.f32 %v8345, 0.2
        %v8474 = vmul.f32 %v8346, 0.2
        %v8475 = vmul.f32 %v8347, 0.2
        %v8476 = vmul.f32 %v8348, 0.2
        %v8477 = vsel %vm8349, %v8285, %v8413
        %v8478 = vsel %vm8350, %v8286, %v8414
        %v8479 = vsel %vm8351, %v8287, %v8415
        %v8480 = vsel %vm8352, %v8288, %v8416
        %v8481 = vsel %vm8353, %v8289, %v8417
        %v8482 = vsel %vm8354, %v8290, %v8418
        %v8483 = vsel %vm8355, %v8291, %v8419
        %v8484 = vsel %vm8356, %v8292, %v8420
        %v8485 = vsel %vm8357, %v8293, %v8421
        %v8486 = vsel %vm8358, %v8294, %v8422
        %v8487 = vsel %vm8359, %v8295, %v8423
        %v8488 = vsel %vm8360, %v8296, %v8424
        %v8489 = vsel %vm8361, %v8297, %v8425
        %v8490 = vsel %vm8362, %v8298, %v8426
        %v8491 = vsel %vm8363, %v8299, %v8427
        %v8492 = vsel %vm8364, %v8300, %v8428
        %v8493 = vsel %vm8365, %v8301, %v8429
        %v8494 = vsel %vm8366, %v8302, %v8430
        %v8495 = vsel %vm8367, %v8303, %v8431
        %v8496 = vsel %vm8368, %v8304, %v8432
        %v8497 = vsel %vm8369, %v8305, %v8433
        %v8498 = vsel %vm8370, %v8306, %v8434
        %v8499 = vsel %vm8371, %v8307, %v8435
        %v8500 = vsel %vm8372, %v8308, %v8436
        %v8501 = vsel %vm8373, %v8309, %v8437
        %v8502 = vsel %vm8374, %v8310, %v8438
        %v8503 = vsel %vm8375, %v8311, %v8439
        %v8504 = vsel %vm8376, %v8312, %v8440
        %v8505 = vsel %vm8377, %v8313, %v8441
        %v8506 = vsel %vm8378, %v8314, %v8442
        %v8507 = vsel %vm8379, %v8315, %v8443
        %v8508 = vsel %vm8380, %v8316, %v8444
        %v8509 = vsel %vm8381, %v8317, %v8445
        %v8510 = vsel %vm8382, %v8318, %v8446
        %v8511 = vsel %vm8383, %v8319, %v8447
        %v8512 = vsel %vm8384, %v8320, %v8448
        %v8513 = vsel %vm8385, %v8321, %v8449
        %v8514 = vsel %vm8386, %v8322, %v8450
        %v8515 = vsel %vm8387, %v8323, %v8451
        %v8516 = vsel %vm8388, %v8324, %v8452
        %v8517 = vsel %vm8389, %v8325, %v8453
        %v8518 = vsel %vm8390, %v8326, %v8454
        %v8519 = vsel %vm8391, %v8327, %v8455
        %v8520 = vsel %vm8392, %v8328, %v8456
        %v8521 = vsel %vm8393, %v8329, %v8457
        %v8522 = vsel %vm8394, %v8330, %v8458
        %v8523 = vsel %vm8395, %v8331, %v8459
        %v8524 = vsel %vm8396, %v8332, %v8460
        %v8525 = vsel %vm8397, %v8333, %v8461
        %v8526 = vsel %vm8398, %v8334, %v8462
        %v8527 = vsel %vm8399, %v8335, %v8463
        %v8528 = vsel %vm8400, %v8336, %v8464
        %v8529 = vsel %vm8401, %v8337, %v8465
        %v8530 = vsel %vm8402, %v8338, %v8466
        %v8531 = vsel %vm8403, %v8339, %v8467
        %v8532 = vsel %vm8404, %v8340, %v8468
        %v8533 = vsel %vm8405, %v8341, %v8469
        %v8534 = vsel %vm8406, %v8342, %v8470
        %v8535 = vsel %vm8407, %v8343, %v8471
        %v8536 = vsel %vm8408, %v8344, %v8472
        %v8537 = vsel %vm8409, %v8345, %v8473
        %v8538 = vsel %vm8410, %v8346, %v8474
        %v8539 = vsel %vm8411, %v8347, %v8475
        %v8540 = vsel %vm8412, %v8348, %v8476
        %8541 = vst [vmem:[%s619] sm:$0xff] %v8477
        %8542 = vst [vmem:[%s619 + $0x8] sm:$0xff] %v8478
        %8543 = vst [vmem:[%s619 + $0x10] sm:$0xff] %v8479
        %8544 = vst [vmem:[%s619 + $0x18] sm:$0xff] %v8480
        %8545 = vst [vmem:[%s619 + $0x20] sm:$0xff] %v8481
        %8546 = vst [vmem:[%s619 + $0x28] sm:$0xff] %v8482
        %8547 = vst [vmem:[%s619 + $0x30] sm:$0xff] %v8483
        %8548 = vst [vmem:[%s619 + $0x38] sm:$0xff] %v8484
        %8549 = vst [vmem:[%s619 + $0x40] sm:$0xff] %v8485
        %8550 = vst [vmem:[%s619 + $0x48] sm:$0xff] %v8486
        %8551 = vst [vmem:[%s619 + $0x50] sm:$0xff] %v8487
        %8552 = vst [vmem:[%s619 + $0x58] sm:$0xff] %v8488
        %8553 = vst [vmem:[%s619 + $0x60] sm:$0xff] %v8489
        %8554 = vst [vmem:[%s619 + $0x68] sm:$0xff] %v8490
        %8555 = vst [vmem:[%s619 + $0x70] sm:$0xff] %v8491
        %8556 = vst [vmem:[%s619 + $0x78] sm:$0xff] %v8492
        %8557 = vst [vmem:[%s619 + $0x80] sm:$0xff] %v8493
        %8558 = vst [vmem:[%s619 + $0x88] sm:$0xff] %v8494
        %8559 = vst [vmem:[%s619 + $0x90] sm:$0xff] %v8495
        %8560 = vst [vmem:[%s619 + $0x98] sm:$0xff] %v8496
        %8561 = vst [vmem:[%s619 + $0xa0] sm:$0xff] %v8497
        %8562 = vst [vmem:[%s619 + $0xa8] sm:$0xff] %v8498
        %8563 = vst [vmem:[%s619 + $0xb0] sm:$0xff] %v8499
        %8564 = vst [vmem:[%s619 + $0xb8] sm:$0xff] %v8500
        %8565 = vst [vmem:[%s619 + $0xc0] sm:$0xff] %v8501
        %8566 = vst [vmem:[%s619 + $0xc8] sm:$0xff] %v8502
        %8567 = vst [vmem:[%s619 + $0xd0] sm:$0xff] %v8503
        %8568 = vst [vmem:[%s619 + $0xd8] sm:$0xff] %v8504
        %8569 = vst [vmem:[%s619 + $0xe0] sm:$0xff] %v8505
        %8570 = vst [vmem:[%s619 + $0xe8] sm:$0xff] %v8506
        %8571 = vst [vmem:[%s619 + $0xf0] sm:$0xff] %v8507
        %8572 = vst [vmem:[%s619 + $0xf8] sm:$0xff] %v8508
        %v8573 = vmax.f32 %v8477, %v8481
        %v8574 = vmax.f32 %v8479, %v8483
        %v8575 = vmax.f32 %v8573, %v8485
        %v8576 = vmax.f32 %v8574, %v8487
        %v8577 = vmax.f32 %v8575, %v8489
        %v8578 = vmax.f32 %v8576, %v8491
        %v8579 = vmax.f32 %v8577, %v8493
        %v8580 = vmax.f32 %v8578, %v8495
        %v8581 = vmax.f32 %v8579, %v8497
        %v8582 = vmax.f32 %v8580, %v8499
        %v8583 = vmax.f32 %v8581, %v8501
        %v8584 = vmax.f32 %v8582, %v8503
        %v8585 = vmax.f32 %v8583, %v8505
        %v8586 = vmax.f32 %v8584, %v8507
        %v8587 = vmax.f32 %v8585, %v8586
        %v8588 = vrot.slane %v8587, 4
        %v8589 = vmax.f32 %v8587, %v8588
        %v8590 = vrot.slane %v8589, 2
        %v8591 = vmax.f32 %v8589, %v8590
        %v8592 = vrot.slane %v8591, 1
        %v8593 = vmax.f32 %v8591, %v8592
        %v8594 = vmax.f32 %v8478, %v8482
        %v8595 = vmax.f32 %v8480, %v8484
        %v8596 = vmax.f32 %v8594, %v8486
        %v8597 = vmax.f32 %v8595, %v8488
        %v8598 = vmax.f32 %v8596, %v8490
        %v8599 = vmax.f32 %v8597, %v8492
        %v8600 = vmax.f32 %v8598, %v8494
        %v8601 = vmax.f32 %v8599, %v8496
        %v8602 = vmax.f32 %v8600, %v8498
        %v8603 = vmax.f32 %v8601, %v8500
        %v8604 = vmax.f32 %v8602, %v8502
        %v8605 = vmax.f32 %v8603, %v8504
        %v8606 = vmax.f32 %v8604, %v8506
        %v8607 = vmax.f32 %v8605, %v8508
        %v8608 = vmax.f32 %v8606, %v8607
        %v8609 = vrot.slane %v8608, 4
        %v8610 = vmax.f32 %v8608, %v8609
        %v8611 = vrot.slane %v8610, 2
        %v8612 = vmax.f32 %v8610, %v8611
        %v8613 = vrot.slane %v8612, 1
        %v8614 = vmax.f32 %v8612, %v8613
        %v8617 = vcombine.low %v8593, %v8614
        %v8619 = vunpack.c.l.s4 1966171168
        %v8620 = vunpack.c.0.s8 %v8619
        %v8621 = vlaneseq
        %v8622 = vshrl.u32 %v8621, 7
        %v8623 = vsub.s32 %v8620, %v8622
        %v8624 = vrot.slane %v8617, %v8623
        %v8626 = vunpack.c.l.s4 1966171168
        %v8627 = vunpack.c.0.s8 %v8626
        %v8628 = vlaneseq
        %v8629 = vshrl.u32 %v8628, 7
        %v8630 = vsub.s32 %v8627, %v8629
        %v8631 = vrot.slane %v8624, %v8630
        %v8633 = vlaneseq
        %vm8634 = vcmp.ge.s32.totalorder %v8633, 0
        %vm8635 = vcmp.lt.s32.totalorder %v8633, 256
        %vm8636 = vmand %vm8634, %vm8635
        %8637 = vst.msk [vmem:[%s626] sm:$0x3] %vm8636, %v8631
        %v8638 = vadd.f32 %v8477, %v8479
        %v8639 = vadd.f32 %v8638, %v8481
        %v8640 = vadd.f32 %v8639, %v8483
        %v8641 = vadd.f32 %v8640, %v8485
        %v8642 = vadd.f32 %v8641, %v8487
        %v8643 = vadd.f32 %v8642, %v8489
        %v8644 = vadd.f32 %v8643, %v8491
        %v8645 = vadd.f32 %v8644, %v8493
        %v8646 = vadd.f32 %v8645, %v8495
        %v8647 = vadd.f32 %v8646, %v8497
        %v8648 = vadd.f32 %v8647, %v8499
        %v8649 = vadd.f32 %v8648, %v8501
        %v8650 = vadd.f32 %v8649, %v8503
        %v8651 = vadd.f32 %v8650, %v8505
        %v8652 = vadd.f32 %v8651, %v8507
        %v8653 = vrot.slane %v8652, 4
        %v8654 = vadd.f32 %v8652, %v8653
        %v8655 = vrot.slane %v8654, 2
        %v8656 = vadd.f32 %v8654, %v8655
        %v8657 = vrot.slane %v8656, 1
        %v8658 = vadd.f32 %v8656, %v8657
        %v8659 = vadd.f32 %v8478, %v8480
        %v8660 = vadd.f32 %v8659, %v8482
        %v8661 = vadd.f32 %v8660, %v8484
        %v8662 = vadd.f32 %v8661, %v8486
        %v8663 = vadd.f32 %v8662, %v8488
        %v8664 = vadd.f32 %v8663, %v8490
        %v8665 = vadd.f32 %v8664, %v8492
        %v8666 = vadd.f32 %v8665, %v8494
        %v8667 = vadd.f32 %v8666, %v8496
        %v8668 = vadd.f32 %v8667, %v8498
        %v8669 = vadd.f32 %v8668, %v8500
        %v8670 = vadd.f32 %v8669, %v8502
        %v8671 = vadd.f32 %v8670, %v8504
        %v8672 = vadd.f32 %v8671, %v8506
        %v8673 = vadd.f32 %v8672, %v8508
        %v8674 = vrot.slane %v8673, 4
        %v8675 = vadd.f32 %v8673, %v8674
        %v8676 = vrot.slane %v8675, 2
        %v8677 = vadd.f32 %v8675, %v8676
        %v8678 = vrot.slane %v8677, 1
        %v8679 = vadd.f32 %v8677, %v8678
        %v8680 = vrcp.pop 128.0
        %v8681 = vmul.f32 %v8658, %v8680
        %v8682 = vmul.f32 %v8679, %v8680
        %v8685 = vcombine.low %v8681, %v8682
        %v8687 = vunpack.c.l.s4 1966171168
        %v8688 = vunpack.c.0.s8 %v8687
        %v8689 = vlaneseq
        %v8690 = vshrl.u32 %v8689, 7
        %v8691 = vsub.s32 %v8688, %v8690
        %v8692 = vrot.slane %v8685, %v8691
        %v8694 = vunpack.c.l.s4 1966171168
        %v8695 = vunpack.c.0.s8 %v8694
        %v8696 = vlaneseq
        %v8697 = vshrl.u32 %v8696, 7
        %v8698 = vsub.s32 %v8695, %v8697
        %v8699 = vrot.slane %v8692, %v8698
        %8701 = vst.msk [vmem:[%s633] sm:$0x3] %vm8636, %v8699
        %s8702 = scalar_lea.vmem %s619, 256 [#allocation9]
        %8703 = vst [vmem:[%s8702] sm:$0xff] %v8509
        %8704 = vst [vmem:[%s8702 + $0x8] sm:$0xff] %v8510
        %8705 = vst [vmem:[%s8702 + $0x10] sm:$0xff] %v8511
        %8706 = vst [vmem:[%s8702 + $0x18] sm:$0xff] %v8512
        %8707 = vst [vmem:[%s8702 + $0x20] sm:$0xff] %v8513
        %8708 = vst [vmem:[%s8702 + $0x28] sm:$0xff] %v8514
        %8709 = vst [vmem:[%s8702 + $0x30] sm:$0xff] %v8515
        %8710 = vst [vmem:[%s8702 + $0x38] sm:$0xff] %v8516
        %8711 = vst [vmem:[%s8702 + $0x40] sm:$0xff] %v8517
        %8712 = vst [vmem:[%s8702 + $0x48] sm:$0xff] %v8518
        %8713 = vst [vmem:[%s8702 + $0x50] sm:$0xff] %v8519
        %8714 = vst [vmem:[%s8702 + $0x58] sm:$0xff] %v8520
        %8715 = vst [vmem:[%s8702 + $0x60] sm:$0xff] %v8521
        %8716 = vst [vmem:[%s8702 + $0x68] sm:$0xff] %v8522
        %8717 = vst [vmem:[%s8702 + $0x70] sm:$0xff] %v8523
        %8718 = vst [vmem:[%s8702 + $0x78] sm:$0xff] %v8524
        %8719 = vst [vmem:[%s8702 + $0x80] sm:$0xff] %v8525
        %8720 = vst [vmem:[%s8702 + $0x88] sm:$0xff] %v8526
        %8721 = vst [vmem:[%s8702 + $0x90] sm:$0xff] %v8527
        %8722 = vst [vmem:[%s8702 + $0x98] sm:$0xff] %v8528
        %8723 = vst [vmem:[%s8702 + $0xa0] sm:$0xff] %v8529
        %8724 = vst [vmem:[%s8702 + $0xa8] sm:$0xff] %v8530
        %8725 = vst [vmem:[%s8702 + $0xb0] sm:$0xff] %v8531
        %8726 = vst [vmem:[%s8702 + $0xb8] sm:$0xff] %v8532
        %8727 = vst [vmem:[%s8702 + $0xc0] sm:$0xff] %v8533
        %8728 = vst [vmem:[%s8702 + $0xc8] sm:$0xff] %v8534
        %8729 = vst [vmem:[%s8702 + $0xd0] sm:$0xff] %v8535
        %8730 = vst [vmem:[%s8702 + $0xd8] sm:$0xff] %v8536
        %8731 = vst [vmem:[%s8702 + $0xe0] sm:$0xff] %v8537
        %8732 = vst [vmem:[%s8702 + $0xe8] sm:$0xff] %v8538
        %8733 = vst [vmem:[%s8702 + $0xf0] sm:$0xff] %v8539
        %8734 = vst [vmem:[%s8702 + $0xf8] sm:$0xff] %v8540
        %v8735 = vmax.f32 %v8509, %v8513
        %v8736 = vmax.f32 %v8511, %v8515
        %v8737 = vmax.f32 %v8735, %v8517
        %v8738 = vmax.f32 %v8736, %v8519
        %v8739 = vmax.f32 %v8737, %v8521
        %v8740 = vmax.f32 %v8738, %v8523
        %v8741 = vmax.f32 %v8739, %v8525
        %v8742 = vmax.f32 %v8740, %v8527
        %v8743 = vmax.f32 %v8741, %v8529
        %v8744 = vmax.f32 %v8742, %v8531
        %v8745 = vmax.f32 %v8743, %v8533
        %v8746 = vmax.f32 %v8744, %v8535
        %v8747 = vmax.f32 %v8745, %v8537
        %v8748 = vmax.f32 %v8746, %v8539
        %v8749 = vmax.f32 %v8747, %v8748
        %v8750 = vrot.slane %v8749, 4
        %v8751 = vmax.f32 %v8749, %v8750
        %v8752 = vrot.slane %v8751, 2
        %v8753 = vmax.f32 %v8751, %v8752
        %v8754 = vrot.slane %v8753, 1
        %v8755 = vmax.f32 %v8753, %v8754
        %v8756 = vmax.f32 %v8510, %v8514
        %v8757 = vmax.f32 %v8512, %v8516
        %v8758 = vmax.f32 %v8756, %v8518
        %v8759 = vmax.f32 %v8757, %v8520
        %v8760 = vmax.f32 %v8758, %v8522
        %v8761 = vmax.f32 %v8759, %v8524
        %v8762 = vmax.f32 %v8760, %v8526
        %v8763 = vmax.f32 %v8761, %v8528
        %v8764 = vmax.f32 %v8762, %v8530
        %v8765 = vmax.f32 %v8763, %v8532
        %v8766 = vmax.f32 %v8764, %v8534
        %v8767 = vmax.f32 %v8765, %v8536
        %v8768 = vmax.f32 %v8766, %v8538
        %v8769 = vmax.f32 %v8767, %v8540
        %v8770 = vmax.f32 %v8768, %v8769
        %v8771 = vrot.slane %v8770, 4
        %v8772 = vmax.f32 %v8770, %v8771
        %v8773 = vrot.slane %v8772, 2
        %v8774 = vmax.f32 %v8772, %v8773
        %v8775 = vrot.slane %v8774, 1
        %v8776 = vmax.f32 %v8774, %v8775
        %v8779 = vcombine.low %v8755, %v8776
        %v8781 = vunpack.c.l.s4 1966171168
        %v8782 = vunpack.c.0.s8 %v8781
        %v8783 = vlaneseq
        %v8784 = vshrl.u32 %v8783, 7
        %v8785 = vsub.s32 %v8782, %v8784
        %v8786 = vrot.slane %v8779, %v8785
        %v8788 = vunpack.c.l.s4 1966171168
        %v8789 = vunpack.c.0.s8 %v8788
        %v8790 = vlaneseq
        %v8791 = vshrl.u32 %v8790, 7
        %v8792 = vsub.s32 %v8789, %v8791
        %v8793 = vrot.slane %v8786, %v8792
        %s8795 = scalar_lea.vmem %s626, 2 [#allocation10]
        %8796 = vst.msk [vmem:[%s8795] sm:$0x3] %vm8636, %v8793
        %v8797 = vadd.f32 %v8509, %v8511
        %v8798 = vadd.f32 %v8797, %v8513
        %v8799 = vadd.f32 %v8798, %v8515
        %v8800 = vadd.f32 %v8799, %v8517
        %v8801 = vadd.f32 %v8800, %v8519
        %v8802 = vadd.f32 %v8801, %v8521
        %v8803 = vadd.f32 %v8802, %v8523
        %v8804 = vadd.f32 %v8803, %v8525
        %v8805 = vadd.f32 %v8804, %v8527
        %v8806 = vadd.f32 %v8805, %v8529
        %v8807 = vadd.f32 %v8806, %v8531
        %v8808 = vadd.f32 %v8807, %v8533
        %v8809 = vadd.f32 %v8808, %v8535
        %v8810 = vadd.f32 %v8809, %v8537
        %v8811 = vadd.f32 %v8810, %v8539
        %v8812 = vrot.slane %v8811, 4
        %v8813 = vadd.f32 %v8811, %v8812
        %v8814 = vrot.slane %v8813, 2
        %v8815 = vadd.f32 %v8813, %v8814
        %v8816 = vrot.slane %v8815, 1
        %v8817 = vadd.f32 %v8815, %v8816
        %v8818 = vadd.f32 %v8510, %v8512
        %v8819 = vadd.f32 %v8818, %v8514
        %v8820 = vadd.f32 %v8819, %v8516
        %v8821 = vadd.f32 %v8820, %v8518
        %v8822 = vadd.f32 %v8821, %v8520
        %v8823 = vadd.f32 %v8822, %v8522
        %v8824 = vadd.f32 %v8823, %v8524
        %v8825 = vadd.f32 %v8824, %v8526
        %v8826 = vadd.f32 %v8825, %v8528
        %v8827 = vadd.f32 %v8826, %v8530
        %v8828 = vadd.f32 %v8827, %v8532
        %v8829 = vadd.f32 %v8828, %v8534
        %v8830 = vadd.f32 %v8829, %v8536
        %v8831 = vadd.f32 %v8830, %v8538
        %v8832 = vadd.f32 %v8831, %v8540
        %v8833 = vrot.slane %v8832, 4
        %v8834 = vadd.f32 %v8832, %v8833
        %v8835 = vrot.slane %v8834, 2
        %v8836 = vadd.f32 %v8834, %v8835
        %v8837 = vrot.slane %v8836, 1
        %v8838 = vadd.f32 %v8836, %v8837
        %v8839 = vmul.f32 %v8817, %v8680
        %v8840 = vmul.f32 %v8838, %v8680
        %v8843 = vcombine.low %v8839, %v8840
        %v8845 = vunpack.c.l.s4 1966171168
        %v8846 = vunpack.c.0.s8 %v8845
        %v8847 = vlaneseq
        %v8848 = vshrl.u32 %v8847, 7
        %v8849 = vsub.s32 %v8846, %v8848
        %v8850 = vrot.slane %v8843, %v8849
        %v8852 = vunpack.c.l.s4 1966171168
        %v8853 = vunpack.c.0.s8 %v8852
        %v8854 = vlaneseq
        %v8855 = vshrl.u32 %v8854, 7
        %v8856 = vsub.s32 %v8853, %v8855
        %v8857 = vrot.slane %v8850, %v8856
        %s8859 = scalar_lea.vmem %s633, 2 [#allocation12]
        %8860 = vst.msk [vmem:[%s8859] sm:$0x3] %vm8636, %v8857
        %s8861 = sand.u32 %s387, 1
        %s8862 = scalar_lea.sflag [#allocation5], %s8861
        %s8863 = sand.u32 %s387, 1
        %s8864 = smul.addr %s8863, 512
        %s8865 = scalar_lea.vmem [#allocation9], %s8864
        %s8866 = sand.u32 %s38, 1
        %s8867 = scalar_lea.sflag [#allocation11], %s8866
        %s8868 = sand.u32 %s413, 1
        %s8869 = smul.addr %s8868, 4
        %s8870 = scalar_lea.vmem [#allocation10], %s8869
        %s8871 = sand.u32 %s38, 1
        %s8872 = scalar_lea.sflag [#allocation11], %s8871
        %s8873 = sand.u32 %s439, 1
        %s8874 = smul.addr %s8873, 4
        %s8875 = scalar_lea.vmem [#allocation12], %s8874
        // Predicated region
        $region97: #{tpu_custom_call.1} parent=83 // pred_check
          %p8876 = pneg %p397
        $region98: #{tpu_custom_call.1} parent=83 // pred_check_branch
          %8878 = sbr.rel (%p8876) target = $region100
        $region99: #{tpu_custom_call.1} parent=83 // pred_region
          %s8879 = smul.u32 2, %s38
          %s8881 = ssub.s32 8192, 8192
          %8882 = vsyncadd %s8862, %s8881
          %s8883 = smul.addr %s8879, 32
          %s8884 = smul.addr %s8883, 128
          %s8885 = scalar_lea.hbm %s16, %s8884
          %s8886 = sshll.u32 %s8865, 4
          %s8887 = int_to_ptr.vmem [resolvable:$true] %s8886
          %8892 = dma.vmem_to_hbm [thread:$0]  %s8887, 8192, %s8885, %s8862, 256, 256, 16
        $region100: #{tpu_custom_call.1} parent=83 // pred_fallthru
          _
        // Predicated region
        $region101: #{tpu_custom_call.1} parent=83 // pred_check
          %p8893 = pneg %p423
        $region102: #{tpu_custom_call.1} parent=83 // pred_check_branch
          %8895 = sbr.rel (%p8893) target = $region104
        $region103: #{tpu_custom_call.1} parent=83 // pred_region
          %s8896 = smul.u32 2, %s38
          %s8898 = ssub.s32 64, 64
          %8899 = vsyncadd %s8867, %s8898
          %s8900 = smul.addr %s8896, 2
          %s8901 = smul.addr %s8900, 16
          %s8902 = scalar_lea.hbm %s17, %s8901
          %s8903 = sshll.u32 %s8870, 4
          %s8904 = int_to_ptr.vmem [resolvable:$true] %s8903
          %8909 = dma.vmem_to_hbm [thread:$0]  %s8904, 64, %s8902, %s8867, 32, 32, 2
        $region104: #{tpu_custom_call.1} parent=83 // pred_fallthru
          _
        // Predicated region
        $region105: #{tpu_custom_call.1} parent=83 // pred_check
          %p8910 = pneg %p449
        $region106: #{tpu_custom_call.1} parent=83 // pred_check_branch
          %8912 = sbr.rel (%p8910) target = $region108
        $region107: #{tpu_custom_call.1} parent=83 // pred_region
          %s8913 = smul.u32 2, %s38
          %s8915 = ssub.s32 64, 64
          %8916 = vsyncadd %s8872, %s8915
          %s8917 = smul.addr %s8913, 2
          %s8918 = smul.addr %s8917, 16
          %s8919 = scalar_lea.hbm %s18, %s8918
          %s8920 = sshll.u32 %s8875, 4
          %s8921 = int_to_ptr.vmem [resolvable:$true] %s8920
          %8926 = dma.vmem_to_hbm [thread:$0]  %s8921, 64, %s8919, %s8872, 32, 32, 2
        $region108: #{tpu_custom_call.1} parent=83 // pred_fallthru
          _
      $region84: #{tpu_custom_call.1} parent=5 // pred_fallthru
        _
      %p8927 = scmp.le.s32.totalorder 2, %s33
      // Predicated region
      $region109: #{tpu_custom_call.1} parent=5 // pred_check
        %p8928 = pneg %p8927
      $region110: #{tpu_custom_call.1} parent=5 // pred_check_branch
        %8930 = sbr.rel (%p8928) target = $region112
      $region111: #{tpu_custom_call.1} parent=5 // pred_region
        %s8931 = ssub.s32 %s33, 2
        // Predicated region
        $region113: #{tpu_custom_call.1} parent=111 // pred_check
          %p8932 = pneg %p403
        $region114: #{tpu_custom_call.1} parent=111 // pred_check_branch
          %8934 = sbr.rel (%p8932) target = $region116
        $region115: #{tpu_custom_call.1} parent=111 // pred_region
          %s8935 = sand.u32 %s388, 1
          %s8936 = scalar_lea.sflag [#allocation5], %s8935
          %s8937 = sand.u32 %s388, 1
          %s8938 = smul.addr %s8937, 512
          %s8939 = scalar_lea.vmem [#allocation9], %s8938
          %8940 = dma.done %s8936, 8192
        $region116: #{tpu_custom_call.1} parent=111 // pred_fallthru
          _
        // Predicated region
        $region117: #{tpu_custom_call.1} parent=111 // pred_check
          %p8941 = pneg %p429
        $region118: #{tpu_custom_call.1} parent=111 // pred_check_branch
          %8943 = sbr.rel (%p8941) target = $region120
        $region119: #{tpu_custom_call.1} parent=111 // pred_region
          %s8944 = sand.u32 %s39, 1
          %s8945 = scalar_lea.sflag [#allocation11], %s8944
          %s8946 = sand.u32 %s414, 1
          %s8947 = smul.addr %s8946, 4
          %s8948 = scalar_lea.vmem [#allocation10], %s8947
          %8949 = dma.done %s8945, 64
        $region120: #{tpu_custom_call.1} parent=111 // pred_fallthru
          _
        // Predicated region
        $region121: #{tpu_custom_call.1} parent=111 // pred_check
          %p8950 = pneg %p455
        $region122: #{tpu_custom_call.1} parent=111 // pred_check_branch
          %8952 = sbr.rel (%p8950) target = $region124
        $region123: #{tpu_custom_call.1} parent=111 // pred_region
          %s8953 = sand.u32 %s39, 1
          %s8954 = scalar_lea.sflag [#allocation11], %s8953
          %s8955 = sand.u32 %s440, 1
          %s8956 = smul.addr %s8955, 4
          %s8957 = scalar_lea.vmem [#allocation12], %s8956
          %8958 = dma.done %s8954, 64
        $region124: #{tpu_custom_call.1} parent=111 // pred_fallthru
          _
      $region112: #{tpu_custom_call.1} parent=5 // pred_fallthru
        _
    $region6: #{tpu_custom_call.1} parent=1 // loop_footer
      %s37 = sadd.s32 1, %s33
    $region7: #{tpu_custom_call.1} parent=1 // loop_footer_branch
      %32 = sbr.rel target = $region3
    $region8: #{tpu_custom_call.1} parent=1 // loop_exit
      _
    %8959 = vsyncpa [#allocation4], 1
    %s8960 = scalar_lea.sflag [#allocation4], 1
    %8961 = vsyncpa %s8960, 1
    %8962 = vsyncpa [#allocation7], 1
    %8963 = vsyncpa [#allocation5], 1
    %s8964 = scalar_lea.sflag [#allocation5], 1
    %8965 = vsyncpa %s8964, 1
    %8966 = vsyncpa [#allocation11], 1
    %s8967 = scalar_lea.sflag [#allocation11], 1
    %8968 = vsyncpa %s8967, 1

</llo_original>
